<compile_context>
chip_gen: v5e
topology: v5e:2x2
jax: 0.10.0
libtpu: 0.0.40
codegen_flags: <defaults>
</compile_context>

<pallas_src>
import jax
import jax.numpy as jnp
from jax import lax
from jax.experimental import pallas as pl
from jax.experimental.pallas import tpu as pltpu


# ------------------------- in-kernel building blocks -------------------------

def _conv3_bn_relu(h, w3, b):
    """kernel=3 / stride=1 / pad=1 Conv1d + folded BN + ReLU on a (Ci, L) value.

    w3: (Co, 3*Ci), rows of the stacked operand ordered [tap k=0 | k=1 | k=2],
        i.e. w3[co, k*Ci + ci] = (bn_scale * conv_w)[co, ci, k].
    b : (Co, 1) folded BN bias.
    """
    ci, l = h.shape
    z = jnp.zeros((ci, 1), jnp.float32)
    h_m1 = jnp.concatenate([z, h[:, :l - 1]], axis=1)      # x[t-1]  (tap k=0)
    h_p1 = jnp.concatenate([h[:, 1:], z], axis=1)          # x[t+1]  (tap k=2)
    stacked = jnp.concatenate([h_m1, h, h_p1], axis=0)     # (3*Ci, L)
    y = jnp.dot(w3, stacked, preferred_element_type=jnp.float32) + b
    return jnp.maximum(y, 0.0)


def _maxpool4(h):
    """MaxPool1d(kernel=4, stride=4) on a (C, L) value (L % 4 == 0)."""
    c, l = h.shape
    lq = l // 4

    def shift_left(a, s):
        return jnp.concatenate([a[:, s:], jnp.zeros((c, s), jnp.float32)], axis=1)

    # running window max: m[:, t] = max(h[:, t:t+4]) for every column we keep
    m = jnp.maximum(jnp.maximum(h, shift_left(h, 1)),
                    jnp.maximum(shift_left(h, 2), shift_left(h, 3)))
    # stride-4 subsample as an MXU dot with a 0/1 selection matrix
    rows = lax.broadcasted_iota(jnp.int32, (l, 1), 0)
    cols = lax.broadcasted_iota(jnp.int32, (1, lq), 1)
    sel = (rows == 4 * cols).astype(jnp.float32)           # (L, L//4)
    return jnp.dot(m, sel, preferred_element_type=jnp.float32)


def make_m18_kernel(plan, k_over_s):
    """plan: static tuple of 'conv' / 'pool' tokens for everything after the stem."""

    def kernel(xph_ref, stem_w_ref, stem_b_ref, *rest):
        *conv_refs, fc_w_ref, fc_b_ref, out_ref = rest

        # ---- stem: Conv1d(1, C0, k=80, stride=4, pad=38) + BN + ReLU --------
        xph = xph_ref[0]                          # (stride, Lph) phase-split input
        n_phase = xph.shape[0]
        l_out = xph.shape[1] - (k_over_s - 1)
        w_stem = stem_w_ref[...]                  # (C0, K); column k = n_phase*j + r
        acc = jnp.dot(w_stem[:, 0:n_phase], xph[:, 0:l_out],
                      preferred_element_type=jnp.float32)
        for j in range(1, k_over_s):
            acc = acc + jnp.dot(w_stem[:, j * n_phase:(j + 1) * n_phase],
                                xph[:, j:j + l_out],
                                preferred_element_type=jnp.float32)
        h = jnp.maximum(acc + stem_b_ref[...], 0.0)

        # ---- VGG body: conv3 blocks and MaxPool(4,4), all resident in VMEM --
        li = 0
        for tok in plan:
            if tok == 'conv':
                h = _conv3_bn_relu(h, conv_refs[2 * li][...],
                                   conv_refs[2 * li + 1][...])
                li += 1
            else:
                h = _maxpool4(h)

        # ---- head: global avg-pool + Linear + log_softmax over n_out --------
        l_f = h.shape[1]
        feats = jnp.sum(h, axis=-1, keepdims=True) * (1.0 / l_f)        # (C, 1)
        logits = jnp.dot(fc_w_ref[...], feats,
                         preferred_element_type=jnp.float32) + fc_b_ref[...]
        mx = jnp.max(logits, axis=0, keepdims=True)
        z = logits - mx
        lse = jnp.log(jnp.sum(jnp.exp(z), axis=0, keepdims=True))
        out_ref[0] = z - lse                                            # (n_out, 1)

    return kernel


# ----------------------------- fused forward pass ----------------------------

def pallas_forward(x, params):
    """Fused Pallas forward. x: (B, 1, L) float32 -> (B, 1, n_out) log-probs."""
    ops = params['feature_ops']
    fc_w, fc_b = params['fc_w'], params['fc_b']
    B, c_in, L = x.shape
    n_out = fc_w.shape[0]

    # ---- stem parameters (Conv1d(c_in, C0, 80, stride=4, pad=38)) -----------
    tag, w0, s0, b0, stride0, pad0 = ops[0]
    assert tag == 'conv'
    co0, ci0, k0 = w0.shape
    # TODO(synk): in-kernel stem phase decomposition assumes a single input
    # channel (raw waveform) and kernel_size % stride == 0, as in M18.
    assert ci0 == c_in == 1 and k0 % stride0 == 0
    lp = L + 2 * pad0
    assert L % stride0 == 0 and lp % stride0 == 0
    k_over_s = k0 // stride0

    # phase-split padded waveform: xph[b, r, m] = pad(x)[b, 0, stride0*m + r]
    xpad = jnp.pad(x, ((0, 0), (0, 0), (pad0, pad0)))
    lph = lp // stride0
    xph = xpad.reshape(B, lph, stride0).transpose(0, 2, 1)      # (B, stride, Lph)

    w_stem = (w0 * s0[:, :, None]).reshape(co0, ci0 * k0)       # BN scale folded in
    b_stem = b0

    # ---- conv3 layers: fold BN scale, reshape weights to (Co, 3*Ci) ----------
    plan = []
    conv_arrays = []
    l_run = (L + 2 * pad0 - k0) // stride0 + 1
    for op in ops[1:]:
        if op[0] == 'conv':
            _, w, s, b, stride, pad = op
            co, ci, k = w.shape
            assert k == 3 and stride == 1 and pad == 1
            ws = w * s[:, :, None]
            w3 = jnp.transpose(ws, (0, 2, 1)).reshape(co, 3 * ci)
            conv_arrays += [w3, b]
            plan.append('conv')
        else:
            assert l_run % 4 == 0, "MaxPool1d(4,4) needs length divisible by 4"
            l_run //= 4
            plan.append('pool')

    fc_b2 = fc_b.reshape(n_out, 1)

    # ---- one fused pallas_call over the batch --------------------------------
    kernel = make_m18_kernel(tuple(plan), k_over_s)
    inputs = [xph, w_stem, b_stem] + conv_arrays + [fc_w, fc_b2]
    in_specs = [pl.BlockSpec((1, stride0, lph), lambda b: (b, 0, 0))]
    for a in inputs[1:]:
        in_specs.append(pl.BlockSpec(a.shape, lambda b: (0, 0)))

    out = pl.pallas_call(
        kernel,
        out_shape=jax.ShapeDtypeStruct((B, n_out, 1), jnp.float32),
        grid=(B,),
        in_specs=in_specs,
        out_specs=pl.BlockSpec((1, n_out, 1), lambda b: (b, 0, 0)),
        compiler_params=pltpu.CompilerParams(
            dimension_semantics=("parallel",)),
    )(*inputs)
    return jnp.transpose(out, (0, 2, 1))                        # (B, 1, n_out)


# ----------------------------- model definition ------------------------------

def make_params(key, c_in=1, nc=8, n_out=10):
    """Deterministic synthetic parameters for M18 (eval-mode BN folded to scale/bias)."""
    specs = [('conv', c_in, nc, 80, 38, 4), ('pool',)]
    for _ in range(4):
        specs.append(('conv', nc, nc, 3, 1, 1))
    specs.append(('pool',))
    for ci in [nc, 2 * nc, 2 * nc, 2 * nc]:
        specs.append(('conv', ci, 2 * nc, 3, 1, 1))
    specs.append(('pool',))
    for ci in [2 * nc, 4 * nc, 4 * nc, 4 * nc]:
        specs.append(('conv', ci, 4 * nc, 3, 1, 1))
    specs.append(('pool',))
    for ci in [4 * nc, 8 * nc, 8 * nc, 8 * nc]:
        specs.append(('conv', ci, 8 * nc, 3, 1, 1))
    specs.append(('pool',))

    keys = jax.random.split(key, len(specs) + 2)
    ops = []
    for s, kk in zip(specs, keys[: len(specs)]):
        if s[0] == 'conv':
            _, ci, co, k, pad, stride = s
            k1, k2, k3, k4, k5 = jax.random.split(kk, 5)
            w = jax.random.normal(k1, (co, ci, k), jnp.float32) / float((ci * k) ** 0.5)
            gamma = 1.0 + 0.1 * jax.random.normal(k2, (co,), jnp.float32)
            beta = 0.1 * jax.random.normal(k3, (co,), jnp.float32)
            mean = 0.1 * jax.random.normal(k4, (co,), jnp.float32)
            var = 0.5 + jax.random.uniform(k5, (co,), jnp.float32)
            inv = gamma / jnp.sqrt(var + 1e-5)
            scale = inv.reshape(co, 1)
            bias = (beta - mean * inv).reshape(co, 1)
            ops.append(('conv', w, scale, bias, stride, pad))
        else:
            ops.append(('pool',))
    fc_w = jax.random.normal(keys[-2], (n_out, 8 * nc), jnp.float32) / float((8 * nc) ** 0.5)
    fc_b = 0.1 * jax.random.normal(keys[-1], (n_out,), jnp.float32)
    return {'feature_ops': ops, 'fc_w': fc_w, 'fc_b': fc_b}


# ----------------------------- pure-JAX reference ----------------------------

def ref_forward(x, params):
    h = x
    for op in params['feature_ops']:
        if op[0] == 'conv':
            _, w, scale, bias, stride, pad = op
            h = lax.conv_general_dilated(h, w, (stride,), [(pad, pad)],
                                         dimension_numbers=('NCH', 'OIH', 'NCH'))
            h = jnp.maximum(h * scale[None] + bias[None], 0.0)
        else:
            h = lax.reduce_window(h, -jnp.inf, lax.max, (1, 1, 4), (1, 1, 4), 'VALID')
    h = jnp.mean(h, axis=-1, keepdims=True)          # avg_pool1d over full length
    h = jnp.transpose(h, (0, 2, 1))                  # (B, 1, C)
    logits = jnp.einsum('blc,nc->bln', h, params['fc_w']) + params['fc_b']
    return jax.nn.log_softmax(logits, axis=2)


# ----------------------------------- main -------------------------------------

if __name__ == "__main__":
    # Small shapes consistent with the module: B=2, 1 input channel, L=4096
    # (minimum length that survives the 5 pooling stages), n_channel=8, n_output=10.
    key = jax.random.PRNGKey(0)
    k_x, k_p = jax.random.split(key)
    x = jax.random.normal(k_x, (2, 1, 4096), jnp.float32)
    params = make_params(k_p, c_in=1, nc=8, n_out=10)

    fwd = jax.jit(lambda inp: pallas_forward(inp, params))
    out = jax.block_until_ready(fwd(x))              # (2, 1, 10) log-probabilities

    ref = jax.block_until_ready(ref_forward(x, params))
    assert out.shape == ref.shape == (2, 1, 10)
    assert bool(jnp.all(jnp.isfinite(out)))
    assert bool(jnp.allclose(out, ref, atol=3e-2, rtol=3e-2)), (
        f"max abs diff {float(jnp.max(jnp.abs(out - ref)))}")

    print("KERNEL_OK")
</pallas_src>

<mosaic_0001>
module attributes {stable_mosaic.version = 11 : i64} {
  func.func @kernel(%arg0: i32, %arg1: memref<1x4x1043xf32, #tpu.memory_space<vmem>>, %arg2: memref<8x80xf32, #tpu.memory_space<vmem>>, %arg3: memref<8x1xf32, #tpu.memory_space<vmem>>, %arg4: memref<8x24xf32, #tpu.memory_space<vmem>>, %arg5: memref<8x1xf32, #tpu.memory_space<vmem>>, %arg6: memref<8x24xf32, #tpu.memory_space<vmem>>, %arg7: memref<8x1xf32, #tpu.memory_space<vmem>>, %arg8: memref<8x24xf32, #tpu.memory_space<vmem>>, %arg9: memref<8x1xf32, #tpu.memory_space<vmem>>, %arg10: memref<8x24xf32, #tpu.memory_space<vmem>>, %arg11: memref<8x1xf32, #tpu.memory_space<vmem>>, %arg12: memref<16x24xf32, #tpu.memory_space<vmem>>, %arg13: memref<16x1xf32, #tpu.memory_space<vmem>>, %arg14: memref<16x48xf32, #tpu.memory_space<vmem>>, %arg15: memref<16x1xf32, #tpu.memory_space<vmem>>, %arg16: memref<16x48xf32, #tpu.memory_space<vmem>>, %arg17: memref<16x1xf32, #tpu.memory_space<vmem>>, %arg18: memref<16x48xf32, #tpu.memory_space<vmem>>, %arg19: memref<16x1xf32, #tpu.memory_space<vmem>>, %arg20: memref<32x48xf32, #tpu.memory_space<vmem>>, %arg21: memref<32x1xf32, #tpu.memory_space<vmem>>, %arg22: memref<32x96xf32, #tpu.memory_space<vmem>>, %arg23: memref<32x1xf32, #tpu.memory_space<vmem>>, %arg24: memref<32x96xf32, #tpu.memory_space<vmem>>, %arg25: memref<32x1xf32, #tpu.memory_space<vmem>>, %arg26: memref<32x96xf32, #tpu.memory_space<vmem>>, %arg27: memref<32x1xf32, #tpu.memory_space<vmem>>, %arg28: memref<64x96xf32, #tpu.memory_space<vmem>>, %arg29: memref<64x1xf32, #tpu.memory_space<vmem>>, %arg30: memref<64x192xf32, #tpu.memory_space<vmem>>, %arg31: memref<64x1xf32, #tpu.memory_space<vmem>>, %arg32: memref<64x192xf32, #tpu.memory_space<vmem>>, %arg33: memref<64x1xf32, #tpu.memory_space<vmem>>, %arg34: memref<64x192xf32, #tpu.memory_space<vmem>>, %arg35: memref<64x1xf32, #tpu.memory_space<vmem>>, %arg36: memref<10x64xf32, #tpu.memory_space<vmem>>, %arg37: memref<10x1xf32, #tpu.memory_space<vmem>>, %arg38: memref<1x10x1xf32, #tpu.memory_space<vmem>>) attributes {dimension_semantics = [#tpu.dimension_semantics<parallel>], iteration_bounds = array<i64: 2>, scalar_prefetch = 0 : i64, scratch_operands = 0 : i64, tpu.core_type = #tpu.core_type<tc>, window_params = [{transform_indices = @transform_0, window_bounds = array<i64: 1, 4, 1043>}, {pipeline_mode = #tpu.pipeline_mode<synchronous>, transform_indices = @transform_1, window_bounds = array<i64: 8, 80>}, {pipeline_mode = #tpu.pipeline_mode<synchronous>, transform_indices = @transform_2, window_bounds = array<i64: 8, 1>}, {pipeline_mode = #tpu.pipeline_mode<synchronous>, transform_indices = @transform_3, window_bounds = array<i64: 8, 24>}, {pipeline_mode = #tpu.pipeline_mode<synchronous>, transform_indices = @transform_4, window_bounds = array<i64: 8, 1>}, {pipeline_mode = #tpu.pipeline_mode<synchronous>, transform_indices = @transform_5, window_bounds = array<i64: 8, 24>}, {pipeline_mode = #tpu.pipeline_mode<synchronous>, transform_indices = @transform_6, window_bounds = array<i64: 8, 1>}, {pipeline_mode = #tpu.pipeline_mode<synchronous>, transform_indices = @transform_7, window_bounds = array<i64: 8, 24>}, {pipeline_mode = #tpu.pipeline_mode<synchronous>, transform_indices = @transform_8, window_bounds = array<i64: 8, 1>}, {pipeline_mode = #tpu.pipeline_mode<synchronous>, transform_indices = @transform_9, window_bounds = array<i64: 8, 24>}, {pipeline_mode = #tpu.pipeline_mode<synchronous>, transform_indices = @transform_10, window_bounds = array<i64: 8, 1>}, {pipeline_mode = #tpu.pipeline_mode<synchronous>, transform_indices = @transform_11, window_bounds = array<i64: 16, 24>}, {pipeline_mode = #tpu.pipeline_mode<synchronous>, transform_indices = @transform_12, window_bounds = array<i64: 16, 1>}, {pipeline_mode = #tpu.pipeline_mode<synchronous>, transform_indices = @transform_13, window_bounds = array<i64: 16, 48>}, {pipeline_mode = #tpu.pipeline_mode<synchronous>, transform_indices = @transform_14, window_bounds = array<i64: 16, 1>}, {pipeline_mode = #tpu.pipeline_mode<synchronous>, transform_indices = @transform_15, window_bounds = array<i64: 16, 48>}, {pipeline_mode = #tpu.pipeline_mode<synchronous>, transform_indices = @transform_16, window_bounds = array<i64: 16, 1>}, {pipeline_mode = #tpu.pipeline_mode<synchronous>, transform_indices = @transform_17, window_bounds = array<i64: 16, 48>}, {pipeline_mode = #tpu.pipeline_mode<synchronous>, transform_indices = @transform_18, window_bounds = array<i64: 16, 1>}, {pipeline_mode = #tpu.pipeline_mode<synchronous>, transform_indices = @transform_19, window_bounds = array<i64: 32, 48>}, {pipeline_mode = #tpu.pipeline_mode<synchronous>, transform_indices = @transform_20, window_bounds = array<i64: 32, 1>}, {pipeline_mode = #tpu.pipeline_mode<synchronous>, transform_indices = @transform_21, window_bounds = array<i64: 32, 96>}, {pipeline_mode = #tpu.pipeline_mode<synchronous>, transform_indices = @transform_22, window_bounds = array<i64: 32, 1>}, {pipeline_mode = #tpu.pipeline_mode<synchronous>, transform_indices = @transform_23, window_bounds = array<i64: 32, 96>}, {pipeline_mode = #tpu.pipeline_mode<synchronous>, transform_indices = @transform_24, window_bounds = array<i64: 32, 1>}, {pipeline_mode = #tpu.pipeline_mode<synchronous>, transform_indices = @transform_25, window_bounds = array<i64: 32, 96>}, {pipeline_mode = #tpu.pipeline_mode<synchronous>, transform_indices = @transform_26, window_bounds = array<i64: 32, 1>}, {pipeline_mode = #tpu.pipeline_mode<synchronous>, transform_indices = @transform_27, window_bounds = array<i64: 64, 96>}, {pipeline_mode = #tpu.pipeline_mode<synchronous>, transform_indices = @transform_28, window_bounds = array<i64: 64, 1>}, {pipeline_mode = #tpu.pipeline_mode<synchronous>, transform_indices = @transform_29, window_bounds = array<i64: 64, 192>}, {pipeline_mode = #tpu.pipeline_mode<synchronous>, transform_indices = @transform_30, window_bounds = array<i64: 64, 1>}, {pipeline_mode = #tpu.pipeline_mode<synchronous>, transform_indices = @transform_31, window_bounds = array<i64: 64, 192>}, {pipeline_mode = #tpu.pipeline_mode<synchronous>, transform_indices = @transform_32, window_bounds = array<i64: 64, 1>}, {pipeline_mode = #tpu.pipeline_mode<synchronous>, transform_indices = @transform_33, window_bounds = array<i64: 64, 192>}, {pipeline_mode = #tpu.pipeline_mode<synchronous>, transform_indices = @transform_34, window_bounds = array<i64: 64, 1>}, {pipeline_mode = #tpu.pipeline_mode<synchronous>, transform_indices = @transform_35, window_bounds = array<i64: 10, 64>}, {pipeline_mode = #tpu.pipeline_mode<synchronous>, transform_indices = @transform_36, window_bounds = array<i64: 10, 1>}, {transform_indices = @transform_37, window_bounds = array<i64: 1, 10, 1>}]} {
    %c0 = arith.constant 0 : index
    %c0_0 = arith.constant 0 : index
    %c0_1 = arith.constant 0 : index
    %0 = vector.load %arg1[%c0, %c0_0, %c0_1] : memref<1x4x1043xf32, #tpu.memory_space<vmem>>, vector<1x4x1043xf32>
    %1 = vector.shape_cast %0 : vector<1x4x1043xf32> to vector<4x1043xf32>
    %c0_2 = arith.constant 0 : index
    %c0_3 = arith.constant 0 : index
    %2 = vector.load %arg2[%c0_2, %c0_3] : memref<8x80xf32, #tpu.memory_space<vmem>>, vector<8x80xf32>
    %3 = vector.extract_strided_slice %2 {offsets = [0, 0], sizes = [8, 4], strides = [1, 1]} : vector<8x80xf32> to vector<8x4xf32>
    %4 = vector.extract_strided_slice %1 {offsets = [0, 0], sizes = [4, 1024], strides = [1, 1]} : vector<4x1043xf32> to vector<4x1024xf32>
    %cst = arith.constant dense<0.000000e+00> : vector<8x1024xf32>
    %5 = tpu.matmul %3, %4, %cst {dimension_numbers = #tpu.dot_dimension_numbers<[1], [0], [0], [1], [0, 0, 1, 1], [], []>} : vector<8x4xf32>, vector<4x1024xf32>, vector<8x1024xf32> -> vector<8x1024xf32>
    %6 = vector.extract_strided_slice %2 {offsets = [0, 4], sizes = [8, 4], strides = [1, 1]} : vector<8x80xf32> to vector<8x4xf32>
    %7 = vector.extract_strided_slice %1 {offsets = [0, 1], sizes = [4, 1024], strides = [1, 1]} : vector<4x1043xf32> to vector<4x1024xf32>
    %cst_4 = arith.constant dense<0.000000e+00> : vector<8x1024xf32>
    %8 = tpu.matmul %6, %7, %cst_4 {dimension_numbers = #tpu.dot_dimension_numbers<[1], [0], [0], [1], [0, 0, 1, 1], [], []>} : vector<8x4xf32>, vector<4x1024xf32>, vector<8x1024xf32> -> vector<8x1024xf32>
    %9 = arith.addf %5, %8 : vector<8x1024xf32>
    %10 = vector.extract_strided_slice %2 {offsets = [0, 8], sizes = [8, 4], strides = [1, 1]} : vector<8x80xf32> to vector<8x4xf32>
    %11 = vector.extract_strided_slice %1 {offsets = [0, 2], sizes = [4, 1024], strides = [1, 1]} : vector<4x1043xf32> to vector<4x1024xf32>
    %cst_5 = arith.constant dense<0.000000e+00> : vector<8x1024xf32>
    %12 = tpu.matmul %10, %11, %cst_5 {dimension_numbers = #tpu.dot_dimension_numbers<[1], [0], [0], [1], [0, 0, 1, 1], [], []>} : vector<8x4xf32>, vector<4x1024xf32>, vector<8x1024xf32> -> vector<8x1024xf32>
    %13 = arith.addf %9, %12 : vector<8x1024xf32>
    %14 = vector.extract_strided_slice %2 {offsets = [0, 12], sizes = [8, 4], strides = [1, 1]} : vector<8x80xf32> to vector<8x4xf32>
    %15 = vector.extract_strided_slice %1 {offsets = [0, 3], sizes = [4, 1024], strides = [1, 1]} : vector<4x1043xf32> to vector<4x1024xf32>
    %cst_6 = arith.constant dense<0.000000e+00> : vector<8x1024xf32>
    %16 = tpu.matmul %14, %15, %cst_6 {dimension_numbers = #tpu.dot_dimension_numbers<[1], [0], [0], [1], [0, 0, 1, 1], [], []>} : vector<8x4xf32>, vector<4x1024xf32>, vector<8x1024xf32> -> vector<8x1024xf32>
    %17 = arith.addf %13, %16 : vector<8x1024xf32>
    %18 = vector.extract_strided_slice %2 {offsets = [0, 16], sizes = [8, 4], strides = [1, 1]} : vector<8x80xf32> to vector<8x4xf32>
    %19 = vector.extract_strided_slice %1 {offsets = [0, 4], sizes = [4, 1024], strides = [1, 1]} : vector<4x1043xf32> to vector<4x1024xf32>
    %cst_7 = arith.constant dense<0.000000e+00> : vector<8x1024xf32>
    %20 = tpu.matmul %18, %19, %cst_7 {dimension_numbers = #tpu.dot_dimension_numbers<[1], [0], [0], [1], [0, 0, 1, 1], [], []>} : vector<8x4xf32>, vector<4x1024xf32>, vector<8x1024xf32> -> vector<8x1024xf32>
    %21 = arith.addf %17, %20 : vector<8x1024xf32>
    %22 = vector.extract_strided_slice %2 {offsets = [0, 20], sizes = [8, 4], strides = [1, 1]} : vector<8x80xf32> to vector<8x4xf32>
    %23 = vector.extract_strided_slice %1 {offsets = [0, 5], sizes = [4, 1024], strides = [1, 1]} : vector<4x1043xf32> to vector<4x1024xf32>
    %cst_8 = arith.constant dense<0.000000e+00> : vector<8x1024xf32>
    %24 = tpu.matmul %22, %23, %cst_8 {dimension_numbers = #tpu.dot_dimension_numbers<[1], [0], [0], [1], [0, 0, 1, 1], [], []>} : vector<8x4xf32>, vector<4x1024xf32>, vector<8x1024xf32> -> vector<8x1024xf32>
    %25 = arith.addf %21, %24 : vector<8x1024xf32>
    %26 = vector.extract_strided_slice %2 {offsets = [0, 24], sizes = [8, 4], strides = [1, 1]} : vector<8x80xf32> to vector<8x4xf32>
    %27 = vector.extract_strided_slice %1 {offsets = [0, 6], sizes = [4, 1024], strides = [1, 1]} : vector<4x1043xf32> to vector<4x1024xf32>
    %cst_9 = arith.constant dense<0.000000e+00> : vector<8x1024xf32>
    %28 = tpu.matmul %26, %27, %cst_9 {dimension_numbers = #tpu.dot_dimension_numbers<[1], [0], [0], [1], [0, 0, 1, 1], [], []>} : vector<8x4xf32>, vector<4x1024xf32>, vector<8x1024xf32> -> vector<8x1024xf32>
    %29 = arith.addf %25, %28 : vector<8x1024xf32>
    %30 = vector.extract_strided_slice %2 {offsets = [0, 28], sizes = [8, 4], strides = [1, 1]} : vector<8x80xf32> to vector<8x4xf32>
    %31 = vector.extract_strided_slice %1 {offsets = [0, 7], sizes = [4, 1024], strides = [1, 1]} : vector<4x1043xf32> to vector<4x1024xf32>
    %cst_10 = arith.constant dense<0.000000e+00> : vector<8x1024xf32>
    %32 = tpu.matmul %30, %31, %cst_10 {dimension_numbers = #tpu.dot_dimension_numbers<[1], [0], [0], [1], [0, 0, 1, 1], [], []>} : vector<8x4xf32>, vector<4x1024xf32>, vector<8x1024xf32> -> vector<8x1024xf32>
    %33 = arith.addf %29, %32 : vector<8x1024xf32>
    %34 = vector.extract_strided_slice %2 {offsets = [0, 32], sizes = [8, 4], strides = [1, 1]} : vector<8x80xf32> to vector<8x4xf32>
    %35 = vector.extract_strided_slice %1 {offsets = [0, 8], sizes = [4, 1024], strides = [1, 1]} : vector<4x1043xf32> to vector<4x1024xf32>
    %cst_11 = arith.constant dense<0.000000e+00> : vector<8x1024xf32>
    %36 = tpu.matmul %34, %35, %cst_11 {dimension_numbers = #tpu.dot_dimension_numbers<[1], [0], [0], [1], [0, 0, 1, 1], [], []>} : vector<8x4xf32>, vector<4x1024xf32>, vector<8x1024xf32> -> vector<8x1024xf32>
    %37 = arith.addf %33, %36 : vector<8x1024xf32>
    %38 = vector.extract_strided_slice %2 {offsets = [0, 36], sizes = [8, 4], strides = [1, 1]} : vector<8x80xf32> to vector<8x4xf32>
    %39 = vector.extract_strided_slice %1 {offsets = [0, 9], sizes = [4, 1024], strides = [1, 1]} : vector<4x1043xf32> to vector<4x1024xf32>
    %cst_12 = arith.constant dense<0.000000e+00> : vector<8x1024xf32>
    %40 = tpu.matmul %38, %39, %cst_12 {dimension_numbers = #tpu.dot_dimension_numbers<[1], [0], [0], [1], [0, 0, 1, 1], [], []>} : vector<8x4xf32>, vector<4x1024xf32>, vector<8x1024xf32> -> vector<8x1024xf32>
    %41 = arith.addf %37, %40 : vector<8x1024xf32>
    %42 = vector.extract_strided_slice %2 {offsets = [0, 40], sizes = [8, 4], strides = [1, 1]} : vector<8x80xf32> to vector<8x4xf32>
    %43 = vector.extract_strided_slice %1 {offsets = [0, 10], sizes = [4, 1024], strides = [1, 1]} : vector<4x1043xf32> to vector<4x1024xf32>
    %cst_13 = arith.constant dense<0.000000e+00> : vector<8x1024xf32>
    %44 = tpu.matmul %42, %43, %cst_13 {dimension_numbers = #tpu.dot_dimension_numbers<[1], [0], [0], [1], [0, 0, 1, 1], [], []>} : vector<8x4xf32>, vector<4x1024xf32>, vector<8x1024xf32> -> vector<8x1024xf32>
    %45 = arith.addf %41, %44 : vector<8x1024xf32>
    %46 = vector.extract_strided_slice %2 {offsets = [0, 44], sizes = [8, 4], strides = [1, 1]} : vector<8x80xf32> to vector<8x4xf32>
    %47 = vector.extract_strided_slice %1 {offsets = [0, 11], sizes = [4, 1024], strides = [1, 1]} : vector<4x1043xf32> to vector<4x1024xf32>
    %cst_14 = arith.constant dense<0.000000e+00> : vector<8x1024xf32>
    %48 = tpu.matmul %46, %47, %cst_14 {dimension_numbers = #tpu.dot_dimension_numbers<[1], [0], [0], [1], [0, 0, 1, 1], [], []>} : vector<8x4xf32>, vector<4x1024xf32>, vector<8x1024xf32> -> vector<8x1024xf32>
    %49 = arith.addf %45, %48 : vector<8x1024xf32>
    %50 = vector.extract_strided_slice %2 {offsets = [0, 48], sizes = [8, 4], strides = [1, 1]} : vector<8x80xf32> to vector<8x4xf32>
    %51 = vector.extract_strided_slice %1 {offsets = [0, 12], sizes = [4, 1024], strides = [1, 1]} : vector<4x1043xf32> to vector<4x1024xf32>
    %cst_15 = arith.constant dense<0.000000e+00> : vector<8x1024xf32>
    %52 = tpu.matmul %50, %51, %cst_15 {dimension_numbers = #tpu.dot_dimension_numbers<[1], [0], [0], [1], [0, 0, 1, 1], [], []>} : vector<8x4xf32>, vector<4x1024xf32>, vector<8x1024xf32> -> vector<8x1024xf32>
    %53 = arith.addf %49, %52 : vector<8x1024xf32>
    %54 = vector.extract_strided_slice %2 {offsets = [0, 52], sizes = [8, 4], strides = [1, 1]} : vector<8x80xf32> to vector<8x4xf32>
    %55 = vector.extract_strided_slice %1 {offsets = [0, 13], sizes = [4, 1024], strides = [1, 1]} : vector<4x1043xf32> to vector<4x1024xf32>
    %cst_16 = arith.constant dense<0.000000e+00> : vector<8x1024xf32>
    %56 = tpu.matmul %54, %55, %cst_16 {dimension_numbers = #tpu.dot_dimension_numbers<[1], [0], [0], [1], [0, 0, 1, 1], [], []>} : vector<8x4xf32>, vector<4x1024xf32>, vector<8x1024xf32> -> vector<8x1024xf32>
    %57 = arith.addf %53, %56 : vector<8x1024xf32>
    %58 = vector.extract_strided_slice %2 {offsets = [0, 56], sizes = [8, 4], strides = [1, 1]} : vector<8x80xf32> to vector<8x4xf32>
    %59 = vector.extract_strided_slice %1 {offsets = [0, 14], sizes = [4, 1024], strides = [1, 1]} : vector<4x1043xf32> to vector<4x1024xf32>
    %cst_17 = arith.constant dense<0.000000e+00> : vector<8x1024xf32>
    %60 = tpu.matmul %58, %59, %cst_17 {dimension_numbers = #tpu.dot_dimension_numbers<[1], [0], [0], [1], [0, 0, 1, 1], [], []>} : vector<8x4xf32>, vector<4x1024xf32>, vector<8x1024xf32> -> vector<8x1024xf32>
    %61 = arith.addf %57, %60 : vector<8x1024xf32>
    %62 = vector.extract_strided_slice %2 {offsets = [0, 60], sizes = [8, 4], strides = [1, 1]} : vector<8x80xf32> to vector<8x4xf32>
    %63 = vector.extract_strided_slice %1 {offsets = [0, 15], sizes = [4, 1024], strides = [1, 1]} : vector<4x1043xf32> to vector<4x1024xf32>
    %cst_18 = arith.constant dense<0.000000e+00> : vector<8x1024xf32>
    %64 = tpu.matmul %62, %63, %cst_18 {dimension_numbers = #tpu.dot_dimension_numbers<[1], [0], [0], [1], [0, 0, 1, 1], [], []>} : vector<8x4xf32>, vector<4x1024xf32>, vector<8x1024xf32> -> vector<8x1024xf32>
    %65 = arith.addf %61, %64 : vector<8x1024xf32>
    %66 = vector.extract_strided_slice %2 {offsets = [0, 64], sizes = [8, 4], strides = [1, 1]} : vector<8x80xf32> to vector<8x4xf32>
    %67 = vector.extract_strided_slice %1 {offsets = [0, 16], sizes = [4, 1024], strides = [1, 1]} : vector<4x1043xf32> to vector<4x1024xf32>
    %cst_19 = arith.constant dense<0.000000e+00> : vector<8x1024xf32>
    %68 = tpu.matmul %66, %67, %cst_19 {dimension_numbers = #tpu.dot_dimension_numbers<[1], [0], [0], [1], [0, 0, 1, 1], [], []>} : vector<8x4xf32>, vector<4x1024xf32>, vector<8x1024xf32> -> vector<8x1024xf32>
    %69 = arith.addf %65, %68 : vector<8x1024xf32>
    %70 = vector.extract_strided_slice %2 {offsets = [0, 68], sizes = [8, 4], strides = [1, 1]} : vector<8x80xf32> to vector<8x4xf32>
    %71 = vector.extract_strided_slice %1 {offsets = [0, 17], sizes = [4, 1024], strides = [1, 1]} : vector<4x1043xf32> to vector<4x1024xf32>
    %cst_20 = arith.constant dense<0.000000e+00> : vector<8x1024xf32>
    %72 = tpu.matmul %70, %71, %cst_20 {dimension_numbers = #tpu.dot_dimension_numbers<[1], [0], [0], [1], [0, 0, 1, 1], [], []>} : vector<8x4xf32>, vector<4x1024xf32>, vector<8x1024xf32> -> vector<8x1024xf32>
    %73 = arith.addf %69, %72 : vector<8x1024xf32>
    %74 = vector.extract_strided_slice %2 {offsets = [0, 72], sizes = [8, 4], strides = [1, 1]} : vector<8x80xf32> to vector<8x4xf32>
    %75 = vector.extract_strided_slice %1 {offsets = [0, 18], sizes = [4, 1024], strides = [1, 1]} : vector<4x1043xf32> to vector<4x1024xf32>
    %cst_21 = arith.constant dense<0.000000e+00> : vector<8x1024xf32>
    %76 = tpu.matmul %74, %75, %cst_21 {dimension_numbers = #tpu.dot_dimension_numbers<[1], [0], [0], [1], [0, 0, 1, 1], [], []>} : vector<8x4xf32>, vector<4x1024xf32>, vector<8x1024xf32> -> vector<8x1024xf32>
    %77 = arith.addf %73, %76 : vector<8x1024xf32>
    %78 = vector.extract_strided_slice %2 {offsets = [0, 76], sizes = [8, 4], strides = [1, 1]} : vector<8x80xf32> to vector<8x4xf32>
    %79 = vector.extract_strided_slice %1 {offsets = [0, 19], sizes = [4, 1024], strides = [1, 1]} : vector<4x1043xf32> to vector<4x1024xf32>
    %cst_22 = arith.constant dense<0.000000e+00> : vector<8x1024xf32>
    %80 = tpu.matmul %78, %79, %cst_22 {dimension_numbers = #tpu.dot_dimension_numbers<[1], [0], [0], [1], [0, 0, 1, 1], [], []>} : vector<8x4xf32>, vector<4x1024xf32>, vector<8x1024xf32> -> vector<8x1024xf32>
    %81 = arith.addf %77, %80 : vector<8x1024xf32>
    %c0_23 = arith.constant 0 : index
    %c0_24 = arith.constant 0 : index
    %82 = vector.load %arg3[%c0_23, %c0_24] : memref<8x1xf32, #tpu.memory_space<vmem>>, vector<8x1xf32>
    %83 = vector.broadcast %82 : vector<8x1xf32> to vector<8x1024xf32>
    %84 = arith.addf %81, %83 : vector<8x1024xf32>
    %cst_25 = arith.constant 0.000000e+00 : f32
    %85 = vector.broadcast %cst_25 : f32 to vector<8x1024xf32>
    %86 = arith.maximumf %84, %85 : vector<8x1024xf32>
    %87 = vector.extract_strided_slice %86 {offsets = [0, 1], sizes = [8, 1023], strides = [1, 1]} : vector<8x1024xf32> to vector<8x1023xf32>
    %cst_26 = arith.constant 0.000000e+00 : f32
    %88 = vector.broadcast %cst_26 : f32 to vector<8x1xf32>
    %89 = tpu.concatenate %87, %88 in 1 : vector<8x1023xf32>, vector<8x1xf32> -> vector<8x1024xf32>
    %90 = arith.maximumf %86, %89 : vector<8x1024xf32>
    %91 = vector.extract_strided_slice %86 {offsets = [0, 2], sizes = [8, 1022], strides = [1, 1]} : vector<8x1024xf32> to vector<8x1022xf32>
    %cst_27 = arith.constant 0.000000e+00 : f32
    %92 = vector.broadcast %cst_27 : f32 to vector<8x2xf32>
    %93 = tpu.concatenate %91, %92 in 1 : vector<8x1022xf32>, vector<8x2xf32> -> vector<8x1024xf32>
    %94 = vector.extract_strided_slice %86 {offsets = [0, 3], sizes = [8, 1021], strides = [1, 1]} : vector<8x1024xf32> to vector<8x1021xf32>
    %cst_28 = arith.constant 0.000000e+00 : f32
    %95 = vector.broadcast %cst_28 : f32 to vector<8x3xf32>
    %96 = tpu.concatenate %94, %95 in 1 : vector<8x1021xf32>, vector<8x3xf32> -> vector<8x1024xf32>
    %97 = arith.maximumf %93, %96 : vector<8x1024xf32>
    %98 = arith.maximumf %90, %97 : vector<8x1024xf32>
    %99 = tpu.iota {dimensions = array<i32: 0>} : vector<1024x1xi32>
    %100 = tpu.iota {dimensions = array<i32: 1>} : vector<1x256xi32>
    %c4_i32 = arith.constant 4 : i32
    %101 = vector.broadcast %c4_i32 : i32 to vector<1x256xi32>
    %102 = arith.muli %101, %100 : vector<1x256xi32>
    %103 = vector.broadcast %99 : vector<1024x1xi32> to vector<1024x256xi32>
    %104 = vector.broadcast %102 : vector<1x256xi32> to vector<1024x256xi32>
    %105 = arith.cmpi eq, %103, %104 : vector<1024x256xi32>
    %106 = arith.extui %105 : vector<1024x256xi1> to vector<1024x256xi32>
    %107 = arith.sitofp %106 : vector<1024x256xi32> to vector<1024x256xf32>
    %cst_29 = arith.constant dense<0.000000e+00> : vector<8x256xf32>
    %108 = tpu.matmul %98, %107, %cst_29 {dimension_numbers = #tpu.dot_dimension_numbers<[1], [0], [0], [1], [0, 0, 1, 1], [], []>} : vector<8x1024xf32>, vector<1024x256xf32>, vector<8x256xf32> -> vector<8x256xf32>
    %c0_30 = arith.constant 0 : index
    %c0_31 = arith.constant 0 : index
    %109 = vector.load %arg4[%c0_30, %c0_31] : memref<8x24xf32, #tpu.memory_space<vmem>>, vector<8x24xf32>
    %c0_32 = arith.constant 0 : index
    %c0_33 = arith.constant 0 : index
    %110 = vector.load %arg5[%c0_32, %c0_33] : memref<8x1xf32, #tpu.memory_space<vmem>>, vector<8x1xf32>
    %cst_34 = arith.constant 0.000000e+00 : f32
    %111 = vector.broadcast %cst_34 : f32 to vector<8x1xf32>
    %112 = vector.extract_strided_slice %108 {offsets = [0, 0], sizes = [8, 255], strides = [1, 1]} : vector<8x256xf32> to vector<8x255xf32>
    %113 = tpu.concatenate %111, %112 in 1 : vector<8x1xf32>, vector<8x255xf32> -> vector<8x256xf32>
    %114 = vector.extract_strided_slice %108 {offsets = [0, 1], sizes = [8, 255], strides = [1, 1]} : vector<8x256xf32> to vector<8x255xf32>
    %115 = tpu.concatenate %114, %111 in 1 : vector<8x255xf32>, vector<8x1xf32> -> vector<8x256xf32>
    %116 = tpu.concatenate %113, %108, %115 in 0 : vector<8x256xf32>, vector<8x256xf32>, vector<8x256xf32> -> vector<24x256xf32>
    %cst_35 = arith.constant dense<0.000000e+00> : vector<8x256xf32>
    %117 = tpu.matmul %109, %116, %cst_35 {dimension_numbers = #tpu.dot_dimension_numbers<[1], [0], [0], [1], [0, 0, 1, 1], [], []>} : vector<8x24xf32>, vector<24x256xf32>, vector<8x256xf32> -> vector<8x256xf32>
    %118 = vector.broadcast %110 : vector<8x1xf32> to vector<8x256xf32>
    %119 = arith.addf %117, %118 : vector<8x256xf32>
    %cst_36 = arith.constant 0.000000e+00 : f32
    %120 = vector.broadcast %cst_36 : f32 to vector<8x256xf32>
    %121 = arith.maximumf %119, %120 : vector<8x256xf32>
    %c0_37 = arith.constant 0 : index
    %c0_38 = arith.constant 0 : index
    %122 = vector.load %arg6[%c0_37, %c0_38] : memref<8x24xf32, #tpu.memory_space<vmem>>, vector<8x24xf32>
    %c0_39 = arith.constant 0 : index
    %c0_40 = arith.constant 0 : index
    %123 = vector.load %arg7[%c0_39, %c0_40] : memref<8x1xf32, #tpu.memory_space<vmem>>, vector<8x1xf32>
    %cst_41 = arith.constant 0.000000e+00 : f32
    %124 = vector.broadcast %cst_41 : f32 to vector<8x1xf32>
    %125 = vector.extract_strided_slice %121 {offsets = [0, 0], sizes = [8, 255], strides = [1, 1]} : vector<8x256xf32> to vector<8x255xf32>
    %126 = tpu.concatenate %124, %125 in 1 : vector<8x1xf32>, vector<8x255xf32> -> vector<8x256xf32>
    %127 = vector.extract_strided_slice %121 {offsets = [0, 1], sizes = [8, 255], strides = [1, 1]} : vector<8x256xf32> to vector<8x255xf32>
    %128 = tpu.concatenate %127, %124 in 1 : vector<8x255xf32>, vector<8x1xf32> -> vector<8x256xf32>
    %129 = tpu.concatenate %126, %121, %128 in 0 : vector<8x256xf32>, vector<8x256xf32>, vector<8x256xf32> -> vector<24x256xf32>
    %cst_42 = arith.constant dense<0.000000e+00> : vector<8x256xf32>
    %130 = tpu.matmul %122, %129, %cst_42 {dimension_numbers = #tpu.dot_dimension_numbers<[1], [0], [0], [1], [0, 0, 1, 1], [], []>} : vector<8x24xf32>, vector<24x256xf32>, vector<8x256xf32> -> vector<8x256xf32>
    %131 = vector.broadcast %123 : vector<8x1xf32> to vector<8x256xf32>
    %132 = arith.addf %130, %131 : vector<8x256xf32>
    %cst_43 = arith.constant 0.000000e+00 : f32
    %133 = vector.broadcast %cst_43 : f32 to vector<8x256xf32>
    %134 = arith.maximumf %132, %133 : vector<8x256xf32>
    %c0_44 = arith.constant 0 : index
    %c0_45 = arith.constant 0 : index
    %135 = vector.load %arg8[%c0_44, %c0_45] : memref<8x24xf32, #tpu.memory_space<vmem>>, vector<8x24xf32>
    %c0_46 = arith.constant 0 : index
    %c0_47 = arith.constant 0 : index
    %136 = vector.load %arg9[%c0_46, %c0_47] : memref<8x1xf32, #tpu.memory_space<vmem>>, vector<8x1xf32>
    %cst_48 = arith.constant 0.000000e+00 : f32
    %137 = vector.broadcast %cst_48 : f32 to vector<8x1xf32>
    %138 = vector.extract_strided_slice %134 {offsets = [0, 0], sizes = [8, 255], strides = [1, 1]} : vector<8x256xf32> to vector<8x255xf32>
    %139 = tpu.concatenate %137, %138 in 1 : vector<8x1xf32>, vector<8x255xf32> -> vector<8x256xf32>
    %140 = vector.extract_strided_slice %134 {offsets = [0, 1], sizes = [8, 255], strides = [1, 1]} : vector<8x256xf32> to vector<8x255xf32>
    %141 = tpu.concatenate %140, %137 in 1 : vector<8x255xf32>, vector<8x1xf32> -> vector<8x256xf32>
    %142 = tpu.concatenate %139, %134, %141 in 0 : vector<8x256xf32>, vector<8x256xf32>, vector<8x256xf32> -> vector<24x256xf32>
    %cst_49 = arith.constant dense<0.000000e+00> : vector<8x256xf32>
    %143 = tpu.matmul %135, %142, %cst_49 {dimension_numbers = #tpu.dot_dimension_numbers<[1], [0], [0], [1], [0, 0, 1, 1], [], []>} : vector<8x24xf32>, vector<24x256xf32>, vector<8x256xf32> -> vector<8x256xf32>
    %144 = vector.broadcast %136 : vector<8x1xf32> to vector<8x256xf32>
    %145 = arith.addf %143, %144 : vector<8x256xf32>
    %cst_50 = arith.constant 0.000000e+00 : f32
    %146 = vector.broadcast %cst_50 : f32 to vector<8x256xf32>
    %147 = arith.maximumf %145, %146 : vector<8x256xf32>
    %c0_51 = arith.constant 0 : index
    %c0_52 = arith.constant 0 : index
    %148 = vector.load %arg10[%c0_51, %c0_52] : memref<8x24xf32, #tpu.memory_space<vmem>>, vector<8x24xf32>
    %c0_53 = arith.constant 0 : index
    %c0_54 = arith.constant 0 : index
    %149 = vector.load %arg11[%c0_53, %c0_54] : memref<8x1xf32, #tpu.memory_space<vmem>>, vector<8x1xf32>
    %cst_55 = arith.constant 0.000000e+00 : f32
    %150 = vector.broadcast %cst_55 : f32 to vector<8x1xf32>
    %151 = vector.extract_strided_slice %147 {offsets = [0, 0], sizes = [8, 255], strides = [1, 1]} : vector<8x256xf32> to vector<8x255xf32>
    %152 = tpu.concatenate %150, %151 in 1 : vector<8x1xf32>, vector<8x255xf32> -> vector<8x256xf32>
    %153 = vector.extract_strided_slice %147 {offsets = [0, 1], sizes = [8, 255], strides = [1, 1]} : vector<8x256xf32> to vector<8x255xf32>
    %154 = tpu.concatenate %153, %150 in 1 : vector<8x255xf32>, vector<8x1xf32> -> vector<8x256xf32>
    %155 = tpu.concatenate %152, %147, %154 in 0 : vector<8x256xf32>, vector<8x256xf32>, vector<8x256xf32> -> vector<24x256xf32>
    %cst_56 = arith.constant dense<0.000000e+00> : vector<8x256xf32>
    %156 = tpu.matmul %148, %155, %cst_56 {dimension_numbers = #tpu.dot_dimension_numbers<[1], [0], [0], [1], [0, 0, 1, 1], [], []>} : vector<8x24xf32>, vector<24x256xf32>, vector<8x256xf32> -> vector<8x256xf32>
    %157 = vector.broadcast %149 : vector<8x1xf32> to vector<8x256xf32>
    %158 = arith.addf %156, %157 : vector<8x256xf32>
    %cst_57 = arith.constant 0.000000e+00 : f32
    %159 = vector.broadcast %cst_57 : f32 to vector<8x256xf32>
    %160 = arith.maximumf %158, %159 : vector<8x256xf32>
    %161 = vector.extract_strided_slice %160 {offsets = [0, 1], sizes = [8, 255], strides = [1, 1]} : vector<8x256xf32> to vector<8x255xf32>
    %cst_58 = arith.constant 0.000000e+00 : f32
    %162 = vector.broadcast %cst_58 : f32 to vector<8x1xf32>
    %163 = tpu.concatenate %161, %162 in 1 : vector<8x255xf32>, vector<8x1xf32> -> vector<8x256xf32>
    %164 = arith.maximumf %160, %163 : vector<8x256xf32>
    %165 = vector.extract_strided_slice %160 {offsets = [0, 2], sizes = [8, 254], strides = [1, 1]} : vector<8x256xf32> to vector<8x254xf32>
    %cst_59 = arith.constant 0.000000e+00 : f32
    %166 = vector.broadcast %cst_59 : f32 to vector<8x2xf32>
    %167 = tpu.concatenate %165, %166 in 1 : vector<8x254xf32>, vector<8x2xf32> -> vector<8x256xf32>
    %168 = vector.extract_strided_slice %160 {offsets = [0, 3], sizes = [8, 253], strides = [1, 1]} : vector<8x256xf32> to vector<8x253xf32>
    %cst_60 = arith.constant 0.000000e+00 : f32
    %169 = vector.broadcast %cst_60 : f32 to vector<8x3xf32>
    %170 = tpu.concatenate %168, %169 in 1 : vector<8x253xf32>, vector<8x3xf32> -> vector<8x256xf32>
    %171 = arith.maximumf %167, %170 : vector<8x256xf32>
    %172 = arith.maximumf %164, %171 : vector<8x256xf32>
    %173 = tpu.iota {dimensions = array<i32: 0>} : vector<256x1xi32>
    %174 = tpu.iota {dimensions = array<i32: 1>} : vector<1x64xi32>
    %c4_i32_61 = arith.constant 4 : i32
    %175 = vector.broadcast %c4_i32_61 : i32 to vector<1x64xi32>
    %176 = arith.muli %175, %174 : vector<1x64xi32>
    %177 = vector.broadcast %173 : vector<256x1xi32> to vector<256x64xi32>
    %178 = vector.broadcast %176 : vector<1x64xi32> to vector<256x64xi32>
    %179 = arith.cmpi eq, %177, %178 : vector<256x64xi32>
    %180 = arith.extui %179 : vector<256x64xi1> to vector<256x64xi32>
    %181 = arith.sitofp %180 : vector<256x64xi32> to vector<256x64xf32>
    %cst_62 = arith.constant dense<0.000000e+00> : vector<8x64xf32>
    %182 = tpu.matmul %172, %181, %cst_62 {dimension_numbers = #tpu.dot_dimension_numbers<[1], [0], [0], [1], [0, 0, 1, 1], [], []>} : vector<8x256xf32>, vector<256x64xf32>, vector<8x64xf32> -> vector<8x64xf32>
    %c0_63 = arith.constant 0 : index
    %c0_64 = arith.constant 0 : index
    %183 = vector.load %arg12[%c0_63, %c0_64] : memref<16x24xf32, #tpu.memory_space<vmem>>, vector<16x24xf32>
    %c0_65 = arith.constant 0 : index
    %c0_66 = arith.constant 0 : index
    %184 = vector.load %arg13[%c0_65, %c0_66] : memref<16x1xf32, #tpu.memory_space<vmem>>, vector<16x1xf32>
    %cst_67 = arith.constant 0.000000e+00 : f32
    %185 = vector.broadcast %cst_67 : f32 to vector<8x1xf32>
    %186 = vector.extract_strided_slice %182 {offsets = [0, 0], sizes = [8, 63], strides = [1, 1]} : vector<8x64xf32> to vector<8x63xf32>
    %187 = tpu.concatenate %185, %186 in 1 : vector<8x1xf32>, vector<8x63xf32> -> vector<8x64xf32>
    %188 = vector.extract_strided_slice %182 {offsets = [0, 1], sizes = [8, 63], strides = [1, 1]} : vector<8x64xf32> to vector<8x63xf32>
    %189 = tpu.concatenate %188, %185 in 1 : vector<8x63xf32>, vector<8x1xf32> -> vector<8x64xf32>
    %190 = tpu.concatenate %187, %182, %189 in 0 : vector<8x64xf32>, vector<8x64xf32>, vector<8x64xf32> -> vector<24x64xf32>
    %cst_68 = arith.constant dense<0.000000e+00> : vector<16x64xf32>
    %191 = tpu.matmul %183, %190, %cst_68 {dimension_numbers = #tpu.dot_dimension_numbers<[1], [0], [0], [1], [0, 0, 1, 1], [], []>} : vector<16x24xf32>, vector<24x64xf32>, vector<16x64xf32> -> vector<16x64xf32>
    %192 = vector.broadcast %184 : vector<16x1xf32> to vector<16x64xf32>
    %193 = arith.addf %191, %192 : vector<16x64xf32>
    %cst_69 = arith.constant 0.000000e+00 : f32
    %194 = vector.broadcast %cst_69 : f32 to vector<16x64xf32>
    %195 = arith.maximumf %193, %194 : vector<16x64xf32>
    %c0_70 = arith.constant 0 : index
    %c0_71 = arith.constant 0 : index
    %196 = vector.load %arg14[%c0_70, %c0_71] : memref<16x48xf32, #tpu.memory_space<vmem>>, vector<16x48xf32>
    %c0_72 = arith.constant 0 : index
    %c0_73 = arith.constant 0 : index
    %197 = vector.load %arg15[%c0_72, %c0_73] : memref<16x1xf32, #tpu.memory_space<vmem>>, vector<16x1xf32>
    %cst_74 = arith.constant 0.000000e+00 : f32
    %198 = vector.broadcast %cst_74 : f32 to vector<16x1xf32>
    %199 = vector.extract_strided_slice %195 {offsets = [0, 0], sizes = [16, 63], strides = [1, 1]} : vector<16x64xf32> to vector<16x63xf32>
    %200 = tpu.concatenate %198, %199 in 1 : vector<16x1xf32>, vector<16x63xf32> -> vector<16x64xf32>
    %201 = vector.extract_strided_slice %195 {offsets = [0, 1], sizes = [16, 63], strides = [1, 1]} : vector<16x64xf32> to vector<16x63xf32>
    %202 = tpu.concatenate %201, %198 in 1 : vector<16x63xf32>, vector<16x1xf32> -> vector<16x64xf32>
    %203 = tpu.concatenate %200, %195, %202 in 0 : vector<16x64xf32>, vector<16x64xf32>, vector<16x64xf32> -> vector<48x64xf32>
    %cst_75 = arith.constant dense<0.000000e+00> : vector<16x64xf32>
    %204 = tpu.matmul %196, %203, %cst_75 {dimension_numbers = #tpu.dot_dimension_numbers<[1], [0], [0], [1], [0, 0, 1, 1], [], []>} : vector<16x48xf32>, vector<48x64xf32>, vector<16x64xf32> -> vector<16x64xf32>
    %205 = vector.broadcast %197 : vector<16x1xf32> to vector<16x64xf32>
    %206 = arith.addf %204, %205 : vector<16x64xf32>
    %cst_76 = arith.constant 0.000000e+00 : f32
    %207 = vector.broadcast %cst_76 : f32 to vector<16x64xf32>
    %208 = arith.maximumf %206, %207 : vector<16x64xf32>
    %c0_77 = arith.constant 0 : index
    %c0_78 = arith.constant 0 : index
    %209 = vector.load %arg16[%c0_77, %c0_78] : memref<16x48xf32, #tpu.memory_space<vmem>>, vector<16x48xf32>
    %c0_79 = arith.constant 0 : index
    %c0_80 = arith.constant 0 : index
    %210 = vector.load %arg17[%c0_79, %c0_80] : memref<16x1xf32, #tpu.memory_space<vmem>>, vector<16x1xf32>
    %cst_81 = arith.constant 0.000000e+00 : f32
    %211 = vector.broadcast %cst_81 : f32 to vector<16x1xf32>
    %212 = vector.extract_strided_slice %208 {offsets = [0, 0], sizes = [16, 63], strides = [1, 1]} : vector<16x64xf32> to vector<16x63xf32>
    %213 = tpu.concatenate %211, %212 in 1 : vector<16x1xf32>, vector<16x63xf32> -> vector<16x64xf32>
    %214 = vector.extract_strided_slice %208 {offsets = [0, 1], sizes = [16, 63], strides = [1, 1]} : vector<16x64xf32> to vector<16x63xf32>
    %215 = tpu.concatenate %214, %211 in 1 : vector<16x63xf32>, vector<16x1xf32> -> vector<16x64xf32>
    %216 = tpu.concatenate %213, %208, %215 in 0 : vector<16x64xf32>, vector<16x64xf32>, vector<16x64xf32> -> vector<48x64xf32>
    %cst_82 = arith.constant dense<0.000000e+00> : vector<16x64xf32>
    %217 = tpu.matmul %209, %216, %cst_82 {dimension_numbers = #tpu.dot_dimension_numbers<[1], [0], [0], [1], [0, 0, 1, 1], [], []>} : vector<16x48xf32>, vector<48x64xf32>, vector<16x64xf32> -> vector<16x64xf32>
    %218 = vector.broadcast %210 : vector<16x1xf32> to vector<16x64xf32>
    %219 = arith.addf %217, %218 : vector<16x64xf32>
    %cst_83 = arith.constant 0.000000e+00 : f32
    %220 = vector.broadcast %cst_83 : f32 to vector<16x64xf32>
    %221 = arith.maximumf %219, %220 : vector<16x64xf32>
    %c0_84 = arith.constant 0 : index
    %c0_85 = arith.constant 0 : index
    %222 = vector.load %arg18[%c0_84, %c0_85] : memref<16x48xf32, #tpu.memory_space<vmem>>, vector<16x48xf32>
    %c0_86 = arith.constant 0 : index
    %c0_87 = arith.constant 0 : index
    %223 = vector.load %arg19[%c0_86, %c0_87] : memref<16x1xf32, #tpu.memory_space<vmem>>, vector<16x1xf32>
    %cst_88 = arith.constant 0.000000e+00 : f32
    %224 = vector.broadcast %cst_88 : f32 to vector<16x1xf32>
    %225 = vector.extract_strided_slice %221 {offsets = [0, 0], sizes = [16, 63], strides = [1, 1]} : vector<16x64xf32> to vector<16x63xf32>
    %226 = tpu.concatenate %224, %225 in 1 : vector<16x1xf32>, vector<16x63xf32> -> vector<16x64xf32>
    %227 = vector.extract_strided_slice %221 {offsets = [0, 1], sizes = [16, 63], strides = [1, 1]} : vector<16x64xf32> to vector<16x63xf32>
    %228 = tpu.concatenate %227, %224 in 1 : vector<16x63xf32>, vector<16x1xf32> -> vector<16x64xf32>
    %229 = tpu.concatenate %226, %221, %228 in 0 : vector<16x64xf32>, vector<16x64xf32>, vector<16x64xf32> -> vector<48x64xf32>
    %cst_89 = arith.constant dense<0.000000e+00> : vector<16x64xf32>
    %230 = tpu.matmul %222, %229, %cst_89 {dimension_numbers = #tpu.dot_dimension_numbers<[1], [0], [0], [1], [0, 0, 1, 1], [], []>} : vector<16x48xf32>, vector<48x64xf32>, vector<16x64xf32> -> vector<16x64xf32>
    %231 = vector.broadcast %223 : vector<16x1xf32> to vector<16x64xf32>
    %232 = arith.addf %230, %231 : vector<16x64xf32>
    %cst_90 = arith.constant 0.000000e+00 : f32
    %233 = vector.broadcast %cst_90 : f32 to vector<16x64xf32>
    %234 = arith.maximumf %232, %233 : vector<16x64xf32>
    %235 = vector.extract_strided_slice %234 {offsets = [0, 1], sizes = [16, 63], strides = [1, 1]} : vector<16x64xf32> to vector<16x63xf32>
    %cst_91 = arith.constant 0.000000e+00 : f32
    %236 = vector.broadcast %cst_91 : f32 to vector<16x1xf32>
    %237 = tpu.concatenate %235, %236 in 1 : vector<16x63xf32>, vector<16x1xf32> -> vector<16x64xf32>
    %238 = arith.maximumf %234, %237 : vector<16x64xf32>
    %239 = vector.extract_strided_slice %234 {offsets = [0, 2], sizes = [16, 62], strides = [1, 1]} : vector<16x64xf32> to vector<16x62xf32>
    %cst_92 = arith.constant 0.000000e+00 : f32
    %240 = vector.broadcast %cst_92 : f32 to vector<16x2xf32>
    %241 = tpu.concatenate %239, %240 in 1 : vector<16x62xf32>, vector<16x2xf32> -> vector<16x64xf32>
    %242 = vector.extract_strided_slice %234 {offsets = [0, 3], sizes = [16, 61], strides = [1, 1]} : vector<16x64xf32> to vector<16x61xf32>
    %cst_93 = arith.constant 0.000000e+00 : f32
    %243 = vector.broadcast %cst_93 : f32 to vector<16x3xf32>
    %244 = tpu.concatenate %242, %243 in 1 : vector<16x61xf32>, vector<16x3xf32> -> vector<16x64xf32>
    %245 = arith.maximumf %241, %244 : vector<16x64xf32>
    %246 = arith.maximumf %238, %245 : vector<16x64xf32>
    %247 = tpu.iota {dimensions = array<i32: 0>} : vector<64x1xi32>
    %248 = tpu.iota {dimensions = array<i32: 1>} : vector<1x16xi32>
    %c4_i32_94 = arith.constant 4 : i32
    %249 = vector.broadcast %c4_i32_94 : i32 to vector<1x16xi32>
    %250 = arith.muli %249, %248 : vector<1x16xi32>
    %251 = vector.broadcast %247 : vector<64x1xi32> to vector<64x16xi32>
    %252 = vector.broadcast %250 : vector<1x16xi32> to vector<64x16xi32>
    %253 = arith.cmpi eq, %251, %252 : vector<64x16xi32>
    %254 = arith.extui %253 : vector<64x16xi1> to vector<64x16xi32>
    %255 = arith.sitofp %254 : vector<64x16xi32> to vector<64x16xf32>
    %cst_95 = arith.constant dense<0.000000e+00> : vector<16x16xf32>
    %256 = tpu.matmul %246, %255, %cst_95 {dimension_numbers = #tpu.dot_dimension_numbers<[1], [0], [0], [1], [0, 0, 1, 1], [], []>} : vector<16x64xf32>, vector<64x16xf32>, vector<16x16xf32> -> vector<16x16xf32>
    %c0_96 = arith.constant 0 : index
    %c0_97 = arith.constant 0 : index
    %257 = vector.load %arg20[%c0_96, %c0_97] : memref<32x48xf32, #tpu.memory_space<vmem>>, vector<32x48xf32>
    %c0_98 = arith.constant 0 : index
    %c0_99 = arith.constant 0 : index
    %258 = vector.load %arg21[%c0_98, %c0_99] : memref<32x1xf32, #tpu.memory_space<vmem>>, vector<32x1xf32>
    %cst_100 = arith.constant 0.000000e+00 : f32
    %259 = vector.broadcast %cst_100 : f32 to vector<16x1xf32>
    %260 = vector.extract_strided_slice %256 {offsets = [0, 0], sizes = [16, 15], strides = [1, 1]} : vector<16x16xf32> to vector<16x15xf32>
    %261 = tpu.concatenate %259, %260 in 1 : vector<16x1xf32>, vector<16x15xf32> -> vector<16x16xf32>
    %262 = vector.extract_strided_slice %256 {offsets = [0, 1], sizes = [16, 15], strides = [1, 1]} : vector<16x16xf32> to vector<16x15xf32>
    %263 = tpu.concatenate %262, %259 in 1 : vector<16x15xf32>, vector<16x1xf32> -> vector<16x16xf32>
    %264 = tpu.concatenate %261, %256, %263 in 0 : vector<16x16xf32>, vector<16x16xf32>, vector<16x16xf32> -> vector<48x16xf32>
    %cst_101 = arith.constant dense<0.000000e+00> : vector<32x16xf32>
    %265 = tpu.matmul %257, %264, %cst_101 {dimension_numbers = #tpu.dot_dimension_numbers<[1], [0], [0], [1], [0, 0, 1, 1], [], []>} : vector<32x48xf32>, vector<48x16xf32>, vector<32x16xf32> -> vector<32x16xf32>
    %266 = vector.broadcast %258 : vector<32x1xf32> to vector<32x16xf32>
    %267 = arith.addf %265, %266 : vector<32x16xf32>
    %cst_102 = arith.constant 0.000000e+00 : f32
    %268 = vector.broadcast %cst_102 : f32 to vector<32x16xf32>
    %269 = arith.maximumf %267, %268 : vector<32x16xf32>
    %c0_103 = arith.constant 0 : index
    %c0_104 = arith.constant 0 : index
    %270 = vector.load %arg22[%c0_103, %c0_104] : memref<32x96xf32, #tpu.memory_space<vmem>>, vector<32x96xf32>
    %c0_105 = arith.constant 0 : index
    %c0_106 = arith.constant 0 : index
    %271 = vector.load %arg23[%c0_105, %c0_106] : memref<32x1xf32, #tpu.memory_space<vmem>>, vector<32x1xf32>
    %cst_107 = arith.constant 0.000000e+00 : f32
    %272 = vector.broadcast %cst_107 : f32 to vector<32x1xf32>
    %273 = vector.extract_strided_slice %269 {offsets = [0, 0], sizes = [32, 15], strides = [1, 1]} : vector<32x16xf32> to vector<32x15xf32>
    %274 = tpu.concatenate %272, %273 in 1 : vector<32x1xf32>, vector<32x15xf32> -> vector<32x16xf32>
    %275 = vector.extract_strided_slice %269 {offsets = [0, 1], sizes = [32, 15], strides = [1, 1]} : vector<32x16xf32> to vector<32x15xf32>
    %276 = tpu.concatenate %275, %272 in 1 : vector<32x15xf32>, vector<32x1xf32> -> vector<32x16xf32>
    %277 = tpu.concatenate %274, %269, %276 in 0 : vector<32x16xf32>, vector<32x16xf32>, vector<32x16xf32> -> vector<96x16xf32>
    %cst_108 = arith.constant dense<0.000000e+00> : vector<32x16xf32>
    %278 = tpu.matmul %270, %277, %cst_108 {dimension_numbers = #tpu.dot_dimension_numbers<[1], [0], [0], [1], [0, 0, 1, 1], [], []>} : vector<32x96xf32>, vector<96x16xf32>, vector<32x16xf32> -> vector<32x16xf32>
    %279 = vector.broadcast %271 : vector<32x1xf32> to vector<32x16xf32>
    %280 = arith.addf %278, %279 : vector<32x16xf32>
    %cst_109 = arith.constant 0.000000e+00 : f32
    %281 = vector.broadcast %cst_109 : f32 to vector<32x16xf32>
    %282 = arith.maximumf %280, %281 : vector<32x16xf32>
    %c0_110 = arith.constant 0 : index
    %c0_111 = arith.constant 0 : index
    %283 = vector.load %arg24[%c0_110, %c0_111] : memref<32x96xf32, #tpu.memory_space<vmem>>, vector<32x96xf32>
    %c0_112 = arith.constant 0 : index
    %c0_113 = arith.constant 0 : index
    %284 = vector.load %arg25[%c0_112, %c0_113] : memref<32x1xf32, #tpu.memory_space<vmem>>, vector<32x1xf32>
    %cst_114 = arith.constant 0.000000e+00 : f32
    %285 = vector.broadcast %cst_114 : f32 to vector<32x1xf32>
    %286 = vector.extract_strided_slice %282 {offsets = [0, 0], sizes = [32, 15], strides = [1, 1]} : vector<32x16xf32> to vector<32x15xf32>
    %287 = tpu.concatenate %285, %286 in 1 : vector<32x1xf32>, vector<32x15xf32> -> vector<32x16xf32>
    %288 = vector.extract_strided_slice %282 {offsets = [0, 1], sizes = [32, 15], strides = [1, 1]} : vector<32x16xf32> to vector<32x15xf32>
    %289 = tpu.concatenate %288, %285 in 1 : vector<32x15xf32>, vector<32x1xf32> -> vector<32x16xf32>
    %290 = tpu.concatenate %287, %282, %289 in 0 : vector<32x16xf32>, vector<32x16xf32>, vector<32x16xf32> -> vector<96x16xf32>
    %cst_115 = arith.constant dense<0.000000e+00> : vector<32x16xf32>
    %291 = tpu.matmul %283, %290, %cst_115 {dimension_numbers = #tpu.dot_dimension_numbers<[1], [0], [0], [1], [0, 0, 1, 1], [], []>} : vector<32x96xf32>, vector<96x16xf32>, vector<32x16xf32> -> vector<32x16xf32>
    %292 = vector.broadcast %284 : vector<32x1xf32> to vector<32x16xf32>
    %293 = arith.addf %291, %292 : vector<32x16xf32>
    %cst_116 = arith.constant 0.000000e+00 : f32
    %294 = vector.broadcast %cst_116 : f32 to vector<32x16xf32>
    %295 = arith.maximumf %293, %294 : vector<32x16xf32>
    %c0_117 = arith.constant 0 : index
    %c0_118 = arith.constant 0 : index
    %296 = vector.load %arg26[%c0_117, %c0_118] : memref<32x96xf32, #tpu.memory_space<vmem>>, vector<32x96xf32>
    %c0_119 = arith.constant 0 : index
    %c0_120 = arith.constant 0 : index
    %297 = vector.load %arg27[%c0_119, %c0_120] : memref<32x1xf32, #tpu.memory_space<vmem>>, vector<32x1xf32>
    %cst_121 = arith.constant 0.000000e+00 : f32
    %298 = vector.broadcast %cst_121 : f32 to vector<32x1xf32>
    %299 = vector.extract_strided_slice %295 {offsets = [0, 0], sizes = [32, 15], strides = [1, 1]} : vector<32x16xf32> to vector<32x15xf32>
    %300 = tpu.concatenate %298, %299 in 1 : vector<32x1xf32>, vector<32x15xf32> -> vector<32x16xf32>
    %301 = vector.extract_strided_slice %295 {offsets = [0, 1], sizes = [32, 15], strides = [1, 1]} : vector<32x16xf32> to vector<32x15xf32>
    %302 = tpu.concatenate %301, %298 in 1 : vector<32x15xf32>, vector<32x1xf32> -> vector<32x16xf32>
    %303 = tpu.concatenate %300, %295, %302 in 0 : vector<32x16xf32>, vector<32x16xf32>, vector<32x16xf32> -> vector<96x16xf32>
    %cst_122 = arith.constant dense<0.000000e+00> : vector<32x16xf32>
    %304 = tpu.matmul %296, %303, %cst_122 {dimension_numbers = #tpu.dot_dimension_numbers<[1], [0], [0], [1], [0, 0, 1, 1], [], []>} : vector<32x96xf32>, vector<96x16xf32>, vector<32x16xf32> -> vector<32x16xf32>
    %305 = vector.broadcast %297 : vector<32x1xf32> to vector<32x16xf32>
    %306 = arith.addf %304, %305 : vector<32x16xf32>
    %cst_123 = arith.constant 0.000000e+00 : f32
    %307 = vector.broadcast %cst_123 : f32 to vector<32x16xf32>
    %308 = arith.maximumf %306, %307 : vector<32x16xf32>
    %309 = vector.extract_strided_slice %308 {offsets = [0, 1], sizes = [32, 15], strides = [1, 1]} : vector<32x16xf32> to vector<32x15xf32>
    %cst_124 = arith.constant 0.000000e+00 : f32
    %310 = vector.broadcast %cst_124 : f32 to vector<32x1xf32>
    %311 = tpu.concatenate %309, %310 in 1 : vector<32x15xf32>, vector<32x1xf32> -> vector<32x16xf32>
    %312 = arith.maximumf %308, %311 : vector<32x16xf32>
    %313 = vector.extract_strided_slice %308 {offsets = [0, 2], sizes = [32, 14], strides = [1, 1]} : vector<32x16xf32> to vector<32x14xf32>
    %cst_125 = arith.constant 0.000000e+00 : f32
    %314 = vector.broadcast %cst_125 : f32 to vector<32x2xf32>
    %315 = tpu.concatenate %313, %314 in 1 : vector<32x14xf32>, vector<32x2xf32> -> vector<32x16xf32>
    %316 = vector.extract_strided_slice %308 {offsets = [0, 3], sizes = [32, 13], strides = [1, 1]} : vector<32x16xf32> to vector<32x13xf32>
    %cst_126 = arith.constant 0.000000e+00 : f32
    %317 = vector.broadcast %cst_126 : f32 to vector<32x3xf32>
    %318 = tpu.concatenate %316, %317 in 1 : vector<32x13xf32>, vector<32x3xf32> -> vector<32x16xf32>
    %319 = arith.maximumf %315, %318 : vector<32x16xf32>
    %320 = arith.maximumf %312, %319 : vector<32x16xf32>
    %321 = tpu.iota {dimensions = array<i32: 0>} : vector<16x1xi32>
    %322 = tpu.iota {dimensions = array<i32: 1>} : vector<1x4xi32>
    %c4_i32_127 = arith.constant 4 : i32
    %323 = vector.broadcast %c4_i32_127 : i32 to vector<1x4xi32>
    %324 = arith.muli %323, %322 : vector<1x4xi32>
    %325 = vector.broadcast %321 : vector<16x1xi32> to vector<16x4xi32>
    %326 = vector.broadcast %324 : vector<1x4xi32> to vector<16x4xi32>
    %327 = arith.cmpi eq, %325, %326 : vector<16x4xi32>
    %328 = arith.extui %327 : vector<16x4xi1> to vector<16x4xi32>
    %329 = arith.sitofp %328 : vector<16x4xi32> to vector<16x4xf32>
    %cst_128 = arith.constant dense<0.000000e+00> : vector<32x4xf32>
    %330 = tpu.matmul %320, %329, %cst_128 {dimension_numbers = #tpu.dot_dimension_numbers<[1], [0], [0], [1], [0, 0, 1, 1], [], []>} : vector<32x16xf32>, vector<16x4xf32>, vector<32x4xf32> -> vector<32x4xf32>
    %c0_129 = arith.constant 0 : index
    %c0_130 = arith.constant 0 : index
    %331 = vector.load %arg28[%c0_129, %c0_130] : memref<64x96xf32, #tpu.memory_space<vmem>>, vector<64x96xf32>
    %c0_131 = arith.constant 0 : index
    %c0_132 = arith.constant 0 : index
    %332 = vector.load %arg29[%c0_131, %c0_132] : memref<64x1xf32, #tpu.memory_space<vmem>>, vector<64x1xf32>
    %cst_133 = arith.constant 0.000000e+00 : f32
    %333 = vector.broadcast %cst_133 : f32 to vector<32x1xf32>
    %334 = vector.extract_strided_slice %330 {offsets = [0, 0], sizes = [32, 3], strides = [1, 1]} : vector<32x4xf32> to vector<32x3xf32>
    %335 = tpu.concatenate %333, %334 in 1 : vector<32x1xf32>, vector<32x3xf32> -> vector<32x4xf32>
    %336 = vector.extract_strided_slice %330 {offsets = [0, 1], sizes = [32, 3], strides = [1, 1]} : vector<32x4xf32> to vector<32x3xf32>
    %337 = tpu.concatenate %336, %333 in 1 : vector<32x3xf32>, vector<32x1xf32> -> vector<32x4xf32>
    %338 = tpu.concatenate %335, %330, %337 in 0 : vector<32x4xf32>, vector<32x4xf32>, vector<32x4xf32> -> vector<96x4xf32>
    %cst_134 = arith.constant dense<0.000000e+00> : vector<64x4xf32>
    %339 = tpu.matmul %331, %338, %cst_134 {dimension_numbers = #tpu.dot_dimension_numbers<[1], [0], [0], [1], [0, 0, 1, 1], [], []>} : vector<64x96xf32>, vector<96x4xf32>, vector<64x4xf32> -> vector<64x4xf32>
    %340 = vector.broadcast %332 : vector<64x1xf32> to vector<64x4xf32>
    %341 = arith.addf %339, %340 : vector<64x4xf32>
    %cst_135 = arith.constant 0.000000e+00 : f32
    %342 = vector.broadcast %cst_135 : f32 to vector<64x4xf32>
    %343 = arith.maximumf %341, %342 : vector<64x4xf32>
    %c0_136 = arith.constant 0 : index
    %c0_137 = arith.constant 0 : index
    %344 = vector.load %arg30[%c0_136, %c0_137] : memref<64x192xf32, #tpu.memory_space<vmem>>, vector<64x192xf32>
    %c0_138 = arith.constant 0 : index
    %c0_139 = arith.constant 0 : index
    %345 = vector.load %arg31[%c0_138, %c0_139] : memref<64x1xf32, #tpu.memory_space<vmem>>, vector<64x1xf32>
    %cst_140 = arith.constant 0.000000e+00 : f32
    %346 = vector.broadcast %cst_140 : f32 to vector<64x1xf32>
    %347 = vector.extract_strided_slice %343 {offsets = [0, 0], sizes = [64, 3], strides = [1, 1]} : vector<64x4xf32> to vector<64x3xf32>
    %348 = tpu.concatenate %346, %347 in 1 : vector<64x1xf32>, vector<64x3xf32> -> vector<64x4xf32>
    %349 = vector.extract_strided_slice %343 {offsets = [0, 1], sizes = [64, 3], strides = [1, 1]} : vector<64x4xf32> to vector<64x3xf32>
    %350 = tpu.concatenate %349, %346 in 1 : vector<64x3xf32>, vector<64x1xf32> -> vector<64x4xf32>
    %351 = tpu.concatenate %348, %343, %350 in 0 : vector<64x4xf32>, vector<64x4xf32>, vector<64x4xf32> -> vector<192x4xf32>
    %cst_141 = arith.constant dense<0.000000e+00> : vector<64x4xf32>
    %352 = tpu.matmul %344, %351, %cst_141 {dimension_numbers = #tpu.dot_dimension_numbers<[1], [0], [0], [1], [0, 0, 1, 1], [], []>} : vector<64x192xf32>, vector<192x4xf32>, vector<64x4xf32> -> vector<64x4xf32>
    %353 = vector.broadcast %345 : vector<64x1xf32> to vector<64x4xf32>
    %354 = arith.addf %352, %353 : vector<64x4xf32>
    %cst_142 = arith.constant 0.000000e+00 : f32
    %355 = vector.broadcast %cst_142 : f32 to vector<64x4xf32>
    %356 = arith.maximumf %354, %355 : vector<64x4xf32>
    %c0_143 = arith.constant 0 : index
    %c0_144 = arith.constant 0 : index
    %357 = vector.load %arg32[%c0_143, %c0_144] : memref<64x192xf32, #tpu.memory_space<vmem>>, vector<64x192xf32>
    %c0_145 = arith.constant 0 : index
    %c0_146 = arith.constant 0 : index
    %358 = vector.load %arg33[%c0_145, %c0_146] : memref<64x1xf32, #tpu.memory_space<vmem>>, vector<64x1xf32>
    %cst_147 = arith.constant 0.000000e+00 : f32
    %359 = vector.broadcast %cst_147 : f32 to vector<64x1xf32>
    %360 = vector.extract_strided_slice %356 {offsets = [0, 0], sizes = [64, 3], strides = [1, 1]} : vector<64x4xf32> to vector<64x3xf32>
    %361 = tpu.concatenate %359, %360 in 1 : vector<64x1xf32>, vector<64x3xf32> -> vector<64x4xf32>
    %362 = vector.extract_strided_slice %356 {offsets = [0, 1], sizes = [64, 3], strides = [1, 1]} : vector<64x4xf32> to vector<64x3xf32>
    %363 = tpu.concatenate %362, %359 in 1 : vector<64x3xf32>, vector<64x1xf32> -> vector<64x4xf32>
    %364 = tpu.concatenate %361, %356, %363 in 0 : vector<64x4xf32>, vector<64x4xf32>, vector<64x4xf32> -> vector<192x4xf32>
    %cst_148 = arith.constant dense<0.000000e+00> : vector<64x4xf32>
    %365 = tpu.matmul %357, %364, %cst_148 {dimension_numbers = #tpu.dot_dimension_numbers<[1], [0], [0], [1], [0, 0, 1, 1], [], []>} : vector<64x192xf32>, vector<192x4xf32>, vector<64x4xf32> -> vector<64x4xf32>
    %366 = vector.broadcast %358 : vector<64x1xf32> to vector<64x4xf32>
    %367 = arith.addf %365, %366 : vector<64x4xf32>
    %cst_149 = arith.constant 0.000000e+00 : f32
    %368 = vector.broadcast %cst_149 : f32 to vector<64x4xf32>
    %369 = arith.maximumf %367, %368 : vector<64x4xf32>
    %c0_150 = arith.constant 0 : index
    %c0_151 = arith.constant 0 : index
    %370 = vector.load %arg34[%c0_150, %c0_151] : memref<64x192xf32, #tpu.memory_space<vmem>>, vector<64x192xf32>
    %c0_152 = arith.constant 0 : index
    %c0_153 = arith.constant 0 : index
    %371 = vector.load %arg35[%c0_152, %c0_153] : memref<64x1xf32, #tpu.memory_space<vmem>>, vector<64x1xf32>
    %cst_154 = arith.constant 0.000000e+00 : f32
    %372 = vector.broadcast %cst_154 : f32 to vector<64x1xf32>
    %373 = vector.extract_strided_slice %369 {offsets = [0, 0], sizes = [64, 3], strides = [1, 1]} : vector<64x4xf32> to vector<64x3xf32>
    %374 = tpu.concatenate %372, %373 in 1 : vector<64x1xf32>, vector<64x3xf32> -> vector<64x4xf32>
    %375 = vector.extract_strided_slice %369 {offsets = [0, 1], sizes = [64, 3], strides = [1, 1]} : vector<64x4xf32> to vector<64x3xf32>
    %376 = tpu.concatenate %375, %372 in 1 : vector<64x3xf32>, vector<64x1xf32> -> vector<64x4xf32>
    %377 = tpu.concatenate %374, %369, %376 in 0 : vector<64x4xf32>, vector<64x4xf32>, vector<64x4xf32> -> vector<192x4xf32>
    %cst_155 = arith.constant dense<0.000000e+00> : vector<64x4xf32>
    %378 = tpu.matmul %370, %377, %cst_155 {dimension_numbers = #tpu.dot_dimension_numbers<[1], [0], [0], [1], [0, 0, 1, 1], [], []>} : vector<64x192xf32>, vector<192x4xf32>, vector<64x4xf32> -> vector<64x4xf32>
    %379 = vector.broadcast %371 : vector<64x1xf32> to vector<64x4xf32>
    %380 = arith.addf %378, %379 : vector<64x4xf32>
    %cst_156 = arith.constant 0.000000e+00 : f32
    %381 = vector.broadcast %cst_156 : f32 to vector<64x4xf32>
    %382 = arith.maximumf %380, %381 : vector<64x4xf32>
    %383 = vector.extract_strided_slice %382 {offsets = [0, 1], sizes = [64, 3], strides = [1, 1]} : vector<64x4xf32> to vector<64x3xf32>
    %cst_157 = arith.constant 0.000000e+00 : f32
    %384 = vector.broadcast %cst_157 : f32 to vector<64x1xf32>
    %385 = tpu.concatenate %383, %384 in 1 : vector<64x3xf32>, vector<64x1xf32> -> vector<64x4xf32>
    %386 = arith.maximumf %382, %385 : vector<64x4xf32>
    %387 = vector.extract_strided_slice %382 {offsets = [0, 2], sizes = [64, 2], strides = [1, 1]} : vector<64x4xf32> to vector<64x2xf32>
    %cst_158 = arith.constant 0.000000e+00 : f32
    %388 = vector.broadcast %cst_158 : f32 to vector<64x2xf32>
    %389 = tpu.concatenate %387, %388 in 1 : vector<64x2xf32>, vector<64x2xf32> -> vector<64x4xf32>
    %390 = vector.extract_strided_slice %382 {offsets = [0, 3], sizes = [64, 1], strides = [1, 1]} : vector<64x4xf32> to vector<64x1xf32>
    %cst_159 = arith.constant 0.000000e+00 : f32
    %391 = vector.broadcast %cst_159 : f32 to vector<64x3xf32>
    %392 = tpu.concatenate %390, %391 in 1 : vector<64x1xf32>, vector<64x3xf32> -> vector<64x4xf32>
    %393 = arith.maximumf %389, %392 : vector<64x4xf32>
    %394 = arith.maximumf %386, %393 : vector<64x4xf32>
    %395 = tpu.iota {dimensions = array<i32: 0>} : vector<4x1xi32>
    %396 = tpu.iota {dimensions = array<i32: 1>} : vector<1x1xi32>
    %c4_i32_160 = arith.constant 4 : i32
    %397 = vector.broadcast %c4_i32_160 : i32 to vector<1x1xi32>
    %398 = arith.muli %397, %396 : vector<1x1xi32>
    %399 = vector.broadcast %398 : vector<1x1xi32> to vector<4x1xi32>
    %400 = arith.cmpi eq, %395, %399 : vector<4x1xi32>
    %401 = arith.extui %400 : vector<4x1xi1> to vector<4x1xi32>
    %402 = arith.sitofp %401 : vector<4x1xi32> to vector<4x1xf32>
    %cst_161 = arith.constant dense<0.000000e+00> : vector<64x1xf32>
    %403 = tpu.matmul %394, %402, %cst_161 {dimension_numbers = #tpu.dot_dimension_numbers<[1], [0], [0], [1], [0, 0, 1, 1], [], []>} : vector<64x4xf32>, vector<4x1xf32>, vector<64x1xf32> -> vector<64x1xf32>
    %cst_162 = arith.constant dense<0.000000e+00> : vector<64xf32>
    %404 = vector.multi_reduction <add>, %403, %cst_162 [1] : vector<64x1xf32> to vector<64xf32>
    %405 = vector.shape_cast %404 : vector<64xf32> to vector<64x1xf32>
    %cst_163 = arith.constant 1.000000e+00 : f32
    %406 = vector.broadcast %cst_163 : f32 to vector<64x1xf32>
    %407 = arith.mulf %405, %406 : vector<64x1xf32>
    %c0_164 = arith.constant 0 : index
    %c0_165 = arith.constant 0 : index
    %408 = vector.load %arg36[%c0_164, %c0_165] : memref<10x64xf32, #tpu.memory_space<vmem>>, vector<10x64xf32>
    %cst_166 = arith.constant dense<0.000000e+00> : vector<10x1xf32>
    %409 = tpu.matmul %408, %407, %cst_166 {dimension_numbers = #tpu.dot_dimension_numbers<[1], [0], [0], [1], [0, 0, 1, 1], [], []>} : vector<10x64xf32>, vector<64x1xf32>, vector<10x1xf32> -> vector<10x1xf32>
    %c0_167 = arith.constant 0 : index
    %c0_168 = arith.constant 0 : index
    %410 = vector.load %arg37[%c0_167, %c0_168] : memref<10x1xf32, #tpu.memory_space<vmem>>, vector<10x1xf32>
    %411 = arith.addf %409, %410 : vector<10x1xf32>
    %cst_169 = arith.constant dense<0xFF800000> : vector<1xf32>
    %412 = vector.multi_reduction <maximumf>, %411, %cst_169 [0] : vector<10x1xf32> to vector<1xf32>
    %413 = vector.shape_cast %412 : vector<1xf32> to vector<1x1xf32>
    %414 = vector.broadcast %413 : vector<1x1xf32> to vector<10x1xf32>
    %415 = arith.subf %411, %414 : vector<10x1xf32>
    %416 = math.exp %415 : vector<10x1xf32>
    %cst_170 = arith.constant dense<0.000000e+00> : vector<1xf32>
    %417 = vector.multi_reduction <add>, %416, %cst_170 [0] : vector<10x1xf32> to vector<1xf32>
    %418 = vector.shape_cast %417 : vector<1xf32> to vector<1x1xf32>
    %419 = math.log %418 : vector<1x1xf32>
    %420 = vector.broadcast %419 : vector<1x1xf32> to vector<10x1xf32>
    %421 = arith.subf %415, %420 : vector<10x1xf32>
    %c0_171 = arith.constant 0 : index
    %c0_172 = arith.constant 0 : index
    %c0_173 = arith.constant 0 : index
    %422 = vector.load %arg38[%c0_171, %c0_172, %c0_173] : memref<1x10x1xf32, #tpu.memory_space<vmem>>, vector<1x10x1xf32>
    %423 = vector.shape_cast %422 : vector<1x10x1xf32> to vector<10x1xf32>
    %424 = vector.shape_cast %421 : vector<10x1xf32> to vector<1x10x1xf32>
    tpu.vector_store %arg38[%c0_171, %c0_172, %c0_173], %424 {strides = array<i32>} : memref<1x10x1xf32, #tpu.memory_space<vmem>>, vector<1x10x1xf32>,
    return
  }
  func.func @transform_0(%arg0: i32) -> (i32, i32, i32) {
    %c0_i32 = arith.constant 0 : i32
    %c0_i32_0 = arith.constant 0 : i32
    %c0_i32_1 = arith.constant 0 : i32
    return %arg0, %c0_i32, %c0_i32_0 : i32, i32, i32
  }
  func.func @transform_1(%arg0: i32) -> (i32, i32) {
    %c0_i32 = arith.constant 0 : i32
    %c0_i32_0 = arith.constant 0 : i32
    %c0_i32_1 = arith.constant 0 : i32
    return %c0_i32, %c0_i32_0 : i32, i32
  }
  func.func @transform_2(%arg0: i32) -> (i32, i32) {
    %c0_i32 = arith.constant 0 : i32
    %c0_i32_0 = arith.constant 0 : i32
    %c0_i32_1 = arith.constant 0 : i32
    return %c0_i32, %c0_i32_0 : i32, i32
  }
  func.func @transform_3(%arg0: i32) -> (i32, i32) {
    %c0_i32 = arith.constant 0 : i32
    %c0_i32_0 = arith.constant 0 : i32
    %c0_i32_1 = arith.constant 0 : i32
    return %c0_i32, %c0_i32_0 : i32, i32
  }
  func.func @transform_4(%arg0: i32) -> (i32, i32) {
    %c0_i32 = arith.constant 0 : i32
    %c0_i32_0 = arith.constant 0 : i32
    %c0_i32_1 = arith.constant 0 : i32
    return %c0_i32, %c0_i32_0 : i32, i32
  }
  func.func @transform_5(%arg0: i32) -> (i32, i32) {
    %c0_i32 = arith.constant 0 : i32
    %c0_i32_0 = arith.constant 0 : i32
    %c0_i32_1 = arith.constant 0 : i32
    return %c0_i32, %c0_i32_0 : i32, i32
  }
  func.func @transform_6(%arg0: i32) -> (i32, i32) {
    %c0_i32 = arith.constant 0 : i32
    %c0_i32_0 = arith.constant 0 : i32
    %c0_i32_1 = arith.constant 0 : i32
    return %c0_i32, %c0_i32_0 : i32, i32
  }
  func.func @transform_7(%arg0: i32) -> (i32, i32) {
    %c0_i32 = arith.constant 0 : i32
    %c0_i32_0 = arith.constant 0 : i32
    %c0_i32_1 = arith.constant 0 : i32
    return %c0_i32, %c0_i32_0 : i32, i32
  }
  func.func @transform_8(%arg0: i32) -> (i32, i32) {
    %c0_i32 = arith.constant 0 : i32
    %c0_i32_0 = arith.constant 0 : i32
    %c0_i32_1 = arith.constant 0 : i32
    return %c0_i32, %c0_i32_0 : i32, i32
  }
  func.func @transform_9(%arg0: i32) -> (i32, i32) {
    %c0_i32 = arith.constant 0 : i32
    %c0_i32_0 = arith.constant 0 : i32
    %c0_i32_1 = arith.constant 0 : i32
    return %c0_i32, %c0_i32_0 : i32, i32
  }
  func.func @transform_10(%arg0: i32) -> (i32, i32) {
    %c0_i32 = arith.constant 0 : i32
    %c0_i32_0 = arith.constant 0 : i32
    %c0_i32_1 = arith.constant 0 : i32
    return %c0_i32, %c0_i32_0 : i32, i32
  }
  func.func @transform_11(%arg0: i32) -> (i32, i32) {
    %c0_i32 = arith.constant 0 : i32
    %c0_i32_0 = arith.constant 0 : i32
    %c0_i32_1 = arith.constant 0 : i32
    return %c0_i32, %c0_i32_0 : i32, i32
  }
  func.func @transform_12(%arg0: i32) -> (i32, i32) {
    %c0_i32 = arith.constant 0 : i32
    %c0_i32_0 = arith.constant 0 : i32
    %c0_i32_1 = arith.constant 0 : i32
    return %c0_i32, %c0_i32_0 : i32, i32
  }
  func.func @transform_13(%arg0: i32) -> (i32, i32) {
    %c0_i32 = arith.constant 0 : i32
    %c0_i32_0 = arith.constant 0 : i32
    %c0_i32_1 = arith.constant 0 : i32
    return %c0_i32, %c0_i32_0 : i32, i32
  }
  func.func @transform_14(%arg0: i32) -> (i32, i32) {
    %c0_i32 = arith.constant 0 : i32
    %c0_i32_0 = arith.constant 0 : i32
    %c0_i32_1 = arith.constant 0 : i32
    return %c0_i32, %c0_i32_0 : i32, i32
  }
  func.func @transform_15(%arg0: i32) -> (i32, i32) {
    %c0_i32 = arith.constant 0 : i32
    %c0_i32_0 = arith.constant 0 : i32
    %c0_i32_1 = arith.constant 0 : i32
    return %c0_i32, %c0_i32_0 : i32, i32
  }
  func.func @transform_16(%arg0: i32) -> (i32, i32) {
    %c0_i32 = arith.constant 0 : i32
    %c0_i32_0 = arith.constant 0 : i32
    %c0_i32_1 = arith.constant 0 : i32
    return %c0_i32, %c0_i32_0 : i32, i32
  }
  func.func @transform_17(%arg0: i32) -> (i32, i32) {
    %c0_i32 = arith.constant 0 : i32
    %c0_i32_0 = arith.constant 0 : i32
    %c0_i32_1 = arith.constant 0 : i32
    return %c0_i32, %c0_i32_0 : i32, i32
  }
  func.func @transform_18(%arg0: i32) -> (i32, i32) {
    %c0_i32 = arith.constant 0 : i32
    %c0_i32_0 = arith.constant 0 : i32
    %c0_i32_1 = arith.constant 0 : i32
    return %c0_i32, %c0_i32_0 : i32, i32
  }
  func.func @transform_19(%arg0: i32) -> (i32, i32) {
    %c0_i32 = arith.constant 0 : i32
    %c0_i32_0 = arith.constant 0 : i32
    %c0_i32_1 = arith.constant 0 : i32
    return %c0_i32, %c0_i32_0 : i32, i32
  }
  func.func @transform_20(%arg0: i32) -> (i32, i32) {
    %c0_i32 = arith.constant 0 : i32
    %c0_i32_0 = arith.constant 0 : i32
    %c0_i32_1 = arith.constant 0 : i32
    return %c0_i32, %c0_i32_0 : i32, i32
  }
  func.func @transform_21(%arg0: i32) -> (i32, i32) {
    %c0_i32 = arith.constant 0 : i32
    %c0_i32_0 = arith.constant 0 : i32
    %c0_i32_1 = arith.constant 0 : i32
    return %c0_i32, %c0_i32_0 : i32, i32
  }
  func.func @transform_22(%arg0: i32) -> (i32, i32) {
    %c0_i32 = arith.constant 0 : i32
    %c0_i32_0 = arith.constant 0 : i32
    %c0_i32_1 = arith.constant 0 : i32
    return %c0_i32, %c0_i32_0 : i32, i32
  }
  func.func @transform_23(%arg0: i32) -> (i32, i32) {
    %c0_i32 = arith.constant 0 : i32
    %c0_i32_0 = arith.constant 0 : i32
    %c0_i32_1 = arith.constant 0 : i32
    return %c0_i32, %c0_i32_0 : i32, i32
  }
  func.func @transform_24(%arg0: i32) -> (i32, i32) {
    %c0_i32 = arith.constant 0 : i32
    %c0_i32_0 = arith.constant 0 : i32
    %c0_i32_1 = arith.constant 0 : i32
    return %c0_i32, %c0_i32_0 : i32, i32
  }
  func.func @transform_25(%arg0: i32) -> (i32, i32) {
    %c0_i32 = arith.constant 0 : i32
    %c0_i32_0 = arith.constant 0 : i32
    %c0_i32_1 = arith.constant 0 : i32
    return %c0_i32, %c0_i32_0 : i32, i32
  }
  func.func @transform_26(%arg0: i32) -> (i32, i32) {
    %c0_i32 = arith.constant 0 : i32
    %c0_i32_0 = arith.constant 0 : i32
    %c0_i32_1 = arith.constant 0 : i32
    return %c0_i32, %c0_i32_0 : i32, i32
  }
  func.func @transform_27(%arg0: i32) -> (i32, i32) {
    %c0_i32 = arith.constant 0 : i32
    %c0_i32_0 = arith.constant 0 : i32
    %c0_i32_1 = arith.constant 0 : i32
    return %c0_i32, %c0_i32_0 : i32, i32
  }
  func.func @transform_28(%arg0: i32) -> (i32, i32) {
    %c0_i32 = arith.constant 0 : i32
    %c0_i32_0 = arith.constant 0 : i32
    %c0_i32_1 = arith.constant 0 : i32
    return %c0_i32, %c0_i32_0 : i32, i32
  }
  func.func @transform_29(%arg0: i32) -> (i32, i32) {
    %c0_i32 = arith.constant 0 : i32
    %c0_i32_0 = arith.constant 0 : i32
    %c0_i32_1 = arith.constant 0 : i32
    return %c0_i32, %c0_i32_0 : i32, i32
  }
  func.func @transform_30(%arg0: i32) -> (i32, i32) {
    %c0_i32 = arith.constant 0 : i32
    %c0_i32_0 = arith.constant 0 : i32
    %c0_i32_1 = arith.constant 0 : i32
    return %c0_i32, %c0_i32_0 : i32, i32
  }
  func.func @transform_31(%arg0: i32) -> (i32, i32) {
    %c0_i32 = arith.constant 0 : i32
    %c0_i32_0 = arith.constant 0 : i32
    %c0_i32_1 = arith.constant 0 : i32
    return %c0_i32, %c0_i32_0 : i32, i32
  }
  func.func @transform_32(%arg0: i32) -> (i32, i32) {
    %c0_i32 = arith.constant 0 : i32
    %c0_i32_0 = arith.constant 0 : i32
    %c0_i32_1 = arith.constant 0 : i32
    return %c0_i32, %c0_i32_0 : i32, i32
  }
  func.func @transform_33(%arg0: i32) -> (i32, i32) {
    %c0_i32 = arith.constant 0 : i32
    %c0_i32_0 = arith.constant 0 : i32
    %c0_i32_1 = arith.constant 0 : i32
    return %c0_i32, %c0_i32_0 : i32, i32
  }
  func.func @transform_34(%arg0: i32) -> (i32, i32) {
    %c0_i32 = arith.constant 0 : i32
    %c0_i32_0 = arith.constant 0 : i32
    %c0_i32_1 = arith.constant 0 : i32
    return %c0_i32, %c0_i32_0 : i32, i32
  }
  func.func @transform_35(%arg0: i32) -> (i32, i32) {
    %c0_i32 = arith.constant 0 : i32
    %c0_i32_0 = arith.constant 0 : i32
    %c0_i32_1 = arith.constant 0 : i32
    return %c0_i32, %c0_i32_0 : i32, i32
  }
  func.func @transform_36(%arg0: i32) -> (i32, i32) {
    %c0_i32 = arith.constant 0 : i32
    %c0_i32_0 = arith.constant 0 : i32
    %c0_i32_1 = arith.constant 0 : i32
    return %c0_i32, %c0_i32_0 : i32, i32
  }
  func.func @transform_37(%arg0: i32) -> (i32, i32, i32) {
    %c0_i32 = arith.constant 0 : i32
    %c0_i32_0 = arith.constant 0 : i32
    %c0_i32_1 = arith.constant 0 : i32
    return %arg0, %c0_i32, %c0_i32_0 : i32, i32, i32
  }
}

</mosaic_0001>

<llo_original>
// kernel: _lambda_.1
$region0: #{_lambda_.1}
  #allocation0 [shape = 'u32[]', space=smem, size = 0x4, offset = 0x4, fixed_abs, tag = 'smem constant byte address 0x4 - core index']
  #allocation1 [shape = 'u32[72,128]{1,0:T(1,128)}', space=vmem, size = 0x9000, scoped, tag = 'internal scratch']
  %s0 = inlined_call_operand.smem [shape: u32[38], index: -1, kind: input, shape index: {}]
  %s1 = sld [smem:[%s0]]
  %s2 = scalar_lea.smem %s0, 1
  %s3 = sld [smem:[%s2]]
  %s4 = scalar_lea.smem %s0, 2
  %s5 = sld [smem:[%s4]]
  %s6 = scalar_lea.smem %s0, 3
  %s7 = sld [smem:[%s6]]
  %s8 = scalar_lea.smem %s0, 4
  %s9 = sld [smem:[%s8]]
  %s10 = scalar_lea.smem %s0, 5
  %s11 = sld [smem:[%s10]]
  %s12 = scalar_lea.smem %s0, 6
  %s13 = sld [smem:[%s12]]
  %s14 = scalar_lea.smem %s0, 7
  %s15 = sld [smem:[%s14]]
  %s16 = scalar_lea.smem %s0, 8
  %s17 = sld [smem:[%s16]]
  %s18 = scalar_lea.smem %s0, 9
  %s19 = sld [smem:[%s18]]
  %s20 = scalar_lea.smem %s0, 10
  %s21 = sld [smem:[%s20]]
  %s22 = scalar_lea.smem %s0, 11
  %s23 = sld [smem:[%s22]]
  %s24 = scalar_lea.smem %s0, 12
  %s25 = sld [smem:[%s24]]
  %s26 = scalar_lea.smem %s0, 13
  %s27 = sld [smem:[%s26]]
  %s28 = scalar_lea.smem %s0, 14
  %s29 = sld [smem:[%s28]]
  %s30 = scalar_lea.smem %s0, 15
  %s31 = sld [smem:[%s30]]
  %s32 = scalar_lea.smem %s0, 16
  %s33 = sld [smem:[%s32]]
  %s34 = scalar_lea.smem %s0, 17
  %s35 = sld [smem:[%s34]]
  %s36 = scalar_lea.smem %s0, 18
  %s37 = sld [smem:[%s36]]
  %s38 = scalar_lea.smem %s0, 19
  %s39 = sld [smem:[%s38]]
  %s40 = scalar_lea.smem %s0, 20
  %s41 = sld [smem:[%s40]]
  %s42 = scalar_lea.smem %s0, 21
  %s43 = sld [smem:[%s42]]
  %s44 = scalar_lea.smem %s0, 22
  %s45 = sld [smem:[%s44]]
  %s46 = scalar_lea.smem %s0, 23
  %s47 = sld [smem:[%s46]]
  %s48 = scalar_lea.smem %s0, 24
  %s49 = sld [smem:[%s48]]
  %s50 = scalar_lea.smem %s0, 25
  %s51 = sld [smem:[%s50]]
  %s52 = scalar_lea.smem %s0, 26
  %s53 = sld [smem:[%s52]]
  %s54 = scalar_lea.smem %s0, 27
  %s55 = sld [smem:[%s54]]
  %s56 = scalar_lea.smem %s0, 28
  %s57 = sld [smem:[%s56]]
  %s58 = scalar_lea.smem %s0, 29
  %s59 = sld [smem:[%s58]]
  %s60 = scalar_lea.smem %s0, 30
  %s61 = sld [smem:[%s60]]
  %s62 = scalar_lea.smem %s0, 31
  %s63 = sld [smem:[%s62]]
  %s64 = scalar_lea.smem %s0, 32
  %s65 = sld [smem:[%s64]]
  %s66 = scalar_lea.smem %s0, 33
  %s67 = sld [smem:[%s66]]
  %s68 = scalar_lea.smem %s0, 34
  %s69 = sld [smem:[%s68]]
  %s70 = scalar_lea.smem %s0, 35
  %s71 = sld [smem:[%s70]]
  %s72 = scalar_lea.smem %s0, 36
  %s73 = sld [smem:[%s72]]
  %s74 = scalar_lea.smem %s0, 37
  %s75 = sld [smem:[%s74]]
  %s76 = sld [smem:[#allocation0]]
  $region181: #{_lambda_.1} parent=0
    _
  %s78 = ssub.s32 1, %s76
  %s79 = scalar_select 0, %s78, %s76
  loop: start=0, step=1, limit=4
  $region2: #{_lambda_.1} parent=0 // loop_pre_header
    _
  $region3: #{_lambda_.1} parent=0 // loop_header
    %s81 = sphi 0, %s85
    %p82 = scmp.ge.s32.totalorder %s81, 4
    %s91 = sphi 0, %s93
    %s94 = sphi 0, %s91
    %s95 = sphi 0, %s94
    %s111 = sphi 0, %s95
    %s115 = sphi 0, %s115
    %s117 = sphi 0, %s115
    %s118 = sphi 0, %s117
    %s132 = sphi 0, %s118
    %s136 = sphi 0, %s136
    %s138 = sphi 0, %s136
    %s139 = sphi 0, %s138
    %s153 = sphi 0, %s139
    %s157 = sphi 0, %s157
    %s159 = sphi 0, %s157
    %s160 = sphi 0, %s159
    %s174 = sphi 0, %s160
    %s178 = sphi 0, %s178
    %s180 = sphi 0, %s178
    %s181 = sphi 0, %s180
    %s195 = sphi 0, %s181
    %s199 = sphi 0, %s199
    %s201 = sphi 0, %s199
    %s202 = sphi 0, %s201
    %s216 = sphi 0, %s202
    %s220 = sphi 0, %s220
    %s222 = sphi 0, %s220
    %s223 = sphi 0, %s222
    %s237 = sphi 0, %s223
    %s241 = sphi 0, %s241
    %s243 = sphi 0, %s241
    %s244 = sphi 0, %s243
    %s258 = sphi 0, %s244
    %s262 = sphi 0, %s262
    %s264 = sphi 0, %s262
    %s265 = sphi 0, %s264
    %s279 = sphi 0, %s265
    %s283 = sphi 0, %s283
    %s285 = sphi 0, %s283
    %s286 = sphi 0, %s285
    %s300 = sphi 0, %s286
    %s304 = sphi 0, %s304
    %s306 = sphi 0, %s304
    %s307 = sphi 0, %s306
    %s321 = sphi 0, %s307
    %s325 = sphi 0, %s325
    %s327 = sphi 0, %s325
    %s328 = sphi 0, %s327
    %s342 = sphi 0, %s328
    %s346 = sphi 0, %s346
    %s348 = sphi 0, %s346
    %s349 = sphi 0, %s348
    %s363 = sphi 0, %s349
    %s367 = sphi 0, %s367
    %s369 = sphi 0, %s367
    %s370 = sphi 0, %s369
    %s384 = sphi 0, %s370
    %s388 = sphi 0, %s388
    %s390 = sphi 0, %s388
    %s391 = sphi 0, %s390
    %s405 = sphi 0, %s391
    %s409 = sphi 0, %s409
    %s411 = sphi 0, %s409
    %s412 = sphi 0, %s411
    %s426 = sphi 0, %s412
    %s430 = sphi 0, %s430
    %s432 = sphi 0, %s430
    %s433 = sphi 0, %s432
    %s447 = sphi 0, %s433
    %s451 = sphi 0, %s451
    %s453 = sphi 0, %s451
    %s454 = sphi 0, %s453
    %s468 = sphi 0, %s454
    %s472 = sphi 0, %s472
    %s474 = sphi 0, %s472
    %s475 = sphi 0, %s474
    %s489 = sphi 0, %s475
    %s493 = sphi 0, %s493
    %s495 = sphi 0, %s493
    %s496 = sphi 0, %s495
    %s510 = sphi 0, %s496
    %s514 = sphi 0, %s514
    %s516 = sphi 0, %s514
    %s517 = sphi 0, %s516
    %s531 = sphi 0, %s517
    %s535 = sphi 0, %s535
    %s537 = sphi 0, %s535
    %s538 = sphi 0, %s537
    %s552 = sphi 0, %s538
    %s556 = sphi 0, %s556
    %s558 = sphi 0, %s556
    %s559 = sphi 0, %s558
    %s573 = sphi 0, %s559
    %s577 = sphi 0, %s577
    %s579 = sphi 0, %s577
    %s580 = sphi 0, %s579
    %s594 = sphi 0, %s580
    %s598 = sphi 0, %s598
    %s600 = sphi 0, %s598
    %s601 = sphi 0, %s600
    %s615 = sphi 0, %s601
    %s619 = sphi 0, %s619
    %s621 = sphi 0, %s619
    %s622 = sphi 0, %s621
    %s636 = sphi 0, %s622
    %s640 = sphi 0, %s640
    %s642 = sphi 0, %s640
    %s643 = sphi 0, %s642
    %s657 = sphi 0, %s643
    %s661 = sphi 0, %s661
    %s663 = sphi 0, %s661
    %s664 = sphi 0, %s663
    %s678 = sphi 0, %s664
    %s682 = sphi 0, %s682
    %s684 = sphi 0, %s682
    %s685 = sphi 0, %s684
    %s699 = sphi 0, %s685
    %s703 = sphi 0, %s703
    %s705 = sphi 0, %s703
    %s706 = sphi 0, %s705
    %s720 = sphi 0, %s706
    %s724 = sphi 0, %s724
    %s726 = sphi 0, %s724
    %s727 = sphi 0, %s726
    %s741 = sphi 0, %s727
    %s745 = sphi 0, %s745
    %s747 = sphi 0, %s745
    %s748 = sphi 0, %s747
    %s762 = sphi 0, %s748
    %s766 = sphi 0, %s766
    %s768 = sphi 0, %s766
    %s769 = sphi 0, %s768
    %s783 = sphi 0, %s769
    %s787 = sphi 0, %s787
    %s789 = sphi 0, %s787
    %s790 = sphi 0, %s789
    %s804 = sphi 0, %s790
    %s808 = sphi 0, %s808
    %s810 = sphi 0, %s808
    %s811 = sphi 0, %s810
    %s825 = sphi 0, %s811
    %s829 = sphi 0, %s829
    %s831 = sphi 0, %s829
    %s832 = sphi 0, %s831
    %s846 = sphi 0, %s832
    %s850 = sphi 0, %s850
    %s852 = sphi 0, %s850
    %s853 = sphi 0, %s852
    %s867 = sphi 0, %s853
    %s873 = sphi 0, %s875
    %s876 = sphi 0, %s873
    %s877 = sphi 0, %s876
    %s893 = sphi 0, %s877
  $region4: #{_lambda_.1} parent=0 // loop_header_branch
    %84 = sbr.rel (%p82) target = $region8
  $region5: #{_lambda_.1} parent=0 // loop_body
    %s86 = ssub.s32 %s81, 1
    %s87 = ssub.s32 %s81, 2
    %s88 = sadd.s32 %s81, 1
    %s89 = ssub.s32 %s81, %s88
    %p90 = scmp.eq.s32.totalorder %s89, 0
    %s92 = sadd.s32 %s91, 1
    %s93 = scalar_select %p90, %s91, %s92
    %p96 = pneg %p90
    %p97 = scmp.eq.s32.totalorder %s81, 1
    %p98 = por %p96, %p97
    %p99 = scmp.ne.s32.totalorder %s91, %s94
    %p100 = scmp.eq.s32.totalorder %s81, 0
    %p101 = por %p99, %p100
    %p102 = scmp.ne.s32.totalorder %s91, %s94
    %p103 = scmp.eq.s32.totalorder %s86, 1
    %p104 = por %p102, %p103
    %p105 = scmp.ne.s32.totalorder %s94, %s95
    %p106 = scmp.eq.s32.totalorder %s86, 0
    %p107 = por %p105, %p106
    %p108 = scmp.ne.s32.totalorder %s94, %s95
    %p109 = scmp.eq.s32.totalorder %s87, 1
    %p110 = por %p108, %p109
    %p112 = scmp.ne.s32.totalorder %s95, %s111
    %p113 = scmp.eq.s32.totalorder %s87, 0
    %p114 = por %p112, %p113
    %s116 = sadd.s32 %s115, 1
    %p119 = scmp.eq.s32.totalorder %s81, 1
    %p120 = scmp.ne.s32.totalorder %s115, %s117
    %p121 = scmp.eq.s32.totalorder %s81, 0
    %p122 = por %p120, %p121
    %p123 = scmp.ne.s32.totalorder %s115, %s117
    %p124 = scmp.eq.s32.totalorder %s86, 1
    %p125 = por %p123, %p124
    %p126 = scmp.ne.s32.totalorder %s117, %s118
    %p127 = scmp.eq.s32.totalorder %s86, 0
    %p128 = por %p126, %p127
    %p129 = scmp.ne.s32.totalorder %s117, %s118
    %p130 = scmp.eq.s32.totalorder %s87, 1
    %p131 = por %p129, %p130
    %p133 = scmp.ne.s32.totalorder %s118, %s132
    %p134 = scmp.eq.s32.totalorder %s87, 0
    %p135 = por %p133, %p134
    %s137 = sadd.s32 %s136, 1
    %p140 = scmp.eq.s32.totalorder %s81, 1
    %p141 = scmp.ne.s32.totalorder %s136, %s138
    %p142 = scmp.eq.s32.totalorder %s81, 0
    %p143 = por %p141, %p142
    %p144 = scmp.ne.s32.totalorder %s136, %s138
    %p145 = scmp.eq.s32.totalorder %s86, 1
    %p146 = por %p144, %p145
    %p147 = scmp.ne.s32.totalorder %s138, %s139
    %p148 = scmp.eq.s32.totalorder %s86, 0
    %p149 = por %p147, %p148
    %p150 = scmp.ne.s32.totalorder %s138, %s139
    %p151 = scmp.eq.s32.totalorder %s87, 1
    %p152 = por %p150, %p151
    %p154 = scmp.ne.s32.totalorder %s139, %s153
    %p155 = scmp.eq.s32.totalorder %s87, 0
    %p156 = por %p154, %p155
    %s158 = sadd.s32 %s157, 1
    %p161 = scmp.eq.s32.totalorder %s81, 1
    %p162 = scmp.ne.s32.totalorder %s157, %s159
    %p163 = scmp.eq.s32.totalorder %s81, 0
    %p164 = por %p162, %p163
    %p165 = scmp.ne.s32.totalorder %s157, %s159
    %p166 = scmp.eq.s32.totalorder %s86, 1
    %p167 = por %p165, %p166
    %p168 = scmp.ne.s32.totalorder %s159, %s160
    %p169 = scmp.eq.s32.totalorder %s86, 0
    %p170 = por %p168, %p169
    %p171 = scmp.ne.s32.totalorder %s159, %s160
    %p172 = scmp.eq.s32.totalorder %s87, 1
    %p173 = por %p171, %p172
    %p175 = scmp.ne.s32.totalorder %s160, %s174
    %p176 = scmp.eq.s32.totalorder %s87, 0
    %p177 = por %p175, %p176
    %s179 = sadd.s32 %s178, 1
    %p182 = scmp.eq.s32.totalorder %s81, 1
    %p183 = scmp.ne.s32.totalorder %s178, %s180
    %p184 = scmp.eq.s32.totalorder %s81, 0
    %p185 = por %p183, %p184
    %p186 = scmp.ne.s32.totalorder %s178, %s180
    %p187 = scmp.eq.s32.totalorder %s86, 1
    %p188 = por %p186, %p187
    %p189 = scmp.ne.s32.totalorder %s180, %s181
    %p190 = scmp.eq.s32.totalorder %s86, 0
    %p191 = por %p189, %p190
    %p192 = scmp.ne.s32.totalorder %s180, %s181
    %p193 = scmp.eq.s32.totalorder %s87, 1
    %p194 = por %p192, %p193
    %p196 = scmp.ne.s32.totalorder %s181, %s195
    %p197 = scmp.eq.s32.totalorder %s87, 0
    %p198 = por %p196, %p197
    %s200 = sadd.s32 %s199, 1
    %p203 = scmp.eq.s32.totalorder %s81, 1
    %p204 = scmp.ne.s32.totalorder %s199, %s201
    %p205 = scmp.eq.s32.totalorder %s81, 0
    %p206 = por %p204, %p205
    %p207 = scmp.ne.s32.totalorder %s199, %s201
    %p208 = scmp.eq.s32.totalorder %s86, 1
    %p209 = por %p207, %p208
    %p210 = scmp.ne.s32.totalorder %s201, %s202
    %p211 = scmp.eq.s32.totalorder %s86, 0
    %p212 = por %p210, %p211
    %p213 = scmp.ne.s32.totalorder %s201, %s202
    %p214 = scmp.eq.s32.totalorder %s87, 1
    %p215 = por %p213, %p214
    %p217 = scmp.ne.s32.totalorder %s202, %s216
    %p218 = scmp.eq.s32.totalorder %s87, 0
    %p219 = por %p217, %p218
    %s221 = sadd.s32 %s220, 1
    %p224 = scmp.eq.s32.totalorder %s81, 1
    %p225 = scmp.ne.s32.totalorder %s220, %s222
    %p226 = scmp.eq.s32.totalorder %s81, 0
    %p227 = por %p225, %p226
    %p228 = scmp.ne.s32.totalorder %s220, %s222
    %p229 = scmp.eq.s32.totalorder %s86, 1
    %p230 = por %p228, %p229
    %p231 = scmp.ne.s32.totalorder %s222, %s223
    %p232 = scmp.eq.s32.totalorder %s86, 0
    %p233 = por %p231, %p232
    %p234 = scmp.ne.s32.totalorder %s222, %s223
    %p235 = scmp.eq.s32.totalorder %s87, 1
    %p236 = por %p234, %p235
    %p238 = scmp.ne.s32.totalorder %s223, %s237
    %p239 = scmp.eq.s32.totalorder %s87, 0
    %p240 = por %p238, %p239
    %s242 = sadd.s32 %s241, 1
    %p245 = scmp.eq.s32.totalorder %s81, 1
    %p246 = scmp.ne.s32.totalorder %s241, %s243
    %p247 = scmp.eq.s32.totalorder %s81, 0
    %p248 = por %p246, %p247
    %p249 = scmp.ne.s32.totalorder %s241, %s243
    %p250 = scmp.eq.s32.totalorder %s86, 1
    %p251 = por %p249, %p250
    %p252 = scmp.ne.s32.totalorder %s243, %s244
    %p253 = scmp.eq.s32.totalorder %s86, 0
    %p254 = por %p252, %p253
    %p255 = scmp.ne.s32.totalorder %s243, %s244
    %p256 = scmp.eq.s32.totalorder %s87, 1
    %p257 = por %p255, %p256
    %p259 = scmp.ne.s32.totalorder %s244, %s258
    %p260 = scmp.eq.s32.totalorder %s87, 0
    %p261 = por %p259, %p260
    %s263 = sadd.s32 %s262, 1
    %p266 = scmp.eq.s32.totalorder %s81, 1
    %p267 = scmp.ne.s32.totalorder %s262, %s264
    %p268 = scmp.eq.s32.totalorder %s81, 0
    %p269 = por %p267, %p268
    %p270 = scmp.ne.s32.totalorder %s262, %s264
    %p271 = scmp.eq.s32.totalorder %s86, 1
    %p272 = por %p270, %p271
    %p273 = scmp.ne.s32.totalorder %s264, %s265
    %p274 = scmp.eq.s32.totalorder %s86, 0
    %p275 = por %p273, %p274
    %p276 = scmp.ne.s32.totalorder %s264, %s265
    %p277 = scmp.eq.s32.totalorder %s87, 1
    %p278 = por %p276, %p277
    %p280 = scmp.ne.s32.totalorder %s265, %s279
    %p281 = scmp.eq.s32.totalorder %s87, 0
    %p282 = por %p280, %p281
    %s284 = sadd.s32 %s283, 1
    %p287 = scmp.eq.s32.totalorder %s81, 1
    %p288 = scmp.ne.s32.totalorder %s283, %s285
    %p289 = scmp.eq.s32.totalorder %s81, 0
    %p290 = por %p288, %p289
    %p291 = scmp.ne.s32.totalorder %s283, %s285
    %p292 = scmp.eq.s32.totalorder %s86, 1
    %p293 = por %p291, %p292
    %p294 = scmp.ne.s32.totalorder %s285, %s286
    %p295 = scmp.eq.s32.totalorder %s86, 0
    %p296 = por %p294, %p295
    %p297 = scmp.ne.s32.totalorder %s285, %s286
    %p298 = scmp.eq.s32.totalorder %s87, 1
    %p299 = por %p297, %p298
    %p301 = scmp.ne.s32.totalorder %s286, %s300
    %p302 = scmp.eq.s32.totalorder %s87, 0
    %p303 = por %p301, %p302
    %s305 = sadd.s32 %s304, 1
    %p308 = scmp.eq.s32.totalorder %s81, 1
    %p309 = scmp.ne.s32.totalorder %s304, %s306
    %p310 = scmp.eq.s32.totalorder %s81, 0
    %p311 = por %p309, %p310
    %p312 = scmp.ne.s32.totalorder %s304, %s306
    %p313 = scmp.eq.s32.totalorder %s86, 1
    %p314 = por %p312, %p313
    %p315 = scmp.ne.s32.totalorder %s306, %s307
    %p316 = scmp.eq.s32.totalorder %s86, 0
    %p317 = por %p315, %p316
    %p318 = scmp.ne.s32.totalorder %s306, %s307
    %p319 = scmp.eq.s32.totalorder %s87, 1
    %p320 = por %p318, %p319
    %p322 = scmp.ne.s32.totalorder %s307, %s321
    %p323 = scmp.eq.s32.totalorder %s87, 0
    %p324 = por %p322, %p323
    %s326 = sadd.s32 %s325, 1
    %p329 = scmp.eq.s32.totalorder %s81, 1
    %p330 = scmp.ne.s32.totalorder %s325, %s327
    %p331 = scmp.eq.s32.totalorder %s81, 0
    %p332 = por %p330, %p331
    %p333 = scmp.ne.s32.totalorder %s325, %s327
    %p334 = scmp.eq.s32.totalorder %s86, 1
    %p335 = por %p333, %p334
    %p336 = scmp.ne.s32.totalorder %s327, %s328
    %p337 = scmp.eq.s32.totalorder %s86, 0
    %p338 = por %p336, %p337
    %p339 = scmp.ne.s32.totalorder %s327, %s328
    %p340 = scmp.eq.s32.totalorder %s87, 1
    %p341 = por %p339, %p340
    %p343 = scmp.ne.s32.totalorder %s328, %s342
    %p344 = scmp.eq.s32.totalorder %s87, 0
    %p345 = por %p343, %p344
    %s347 = sadd.s32 %s346, 1
    %p350 = scmp.eq.s32.totalorder %s81, 1
    %p351 = scmp.ne.s32.totalorder %s346, %s348
    %p352 = scmp.eq.s32.totalorder %s81, 0
    %p353 = por %p351, %p352
    %p354 = scmp.ne.s32.totalorder %s346, %s348
    %p355 = scmp.eq.s32.totalorder %s86, 1
    %p356 = por %p354, %p355
    %p357 = scmp.ne.s32.totalorder %s348, %s349
    %p358 = scmp.eq.s32.totalorder %s86, 0
    %p359 = por %p357, %p358
    %p360 = scmp.ne.s32.totalorder %s348, %s349
    %p361 = scmp.eq.s32.totalorder %s87, 1
    %p362 = por %p360, %p361
    %p364 = scmp.ne.s32.totalorder %s349, %s363
    %p365 = scmp.eq.s32.totalorder %s87, 0
    %p366 = por %p364, %p365
    %s368 = sadd.s32 %s367, 1
    %p371 = scmp.eq.s32.totalorder %s81, 1
    %p372 = scmp.ne.s32.totalorder %s367, %s369
    %p373 = scmp.eq.s32.totalorder %s81, 0
    %p374 = por %p372, %p373
    %p375 = scmp.ne.s32.totalorder %s367, %s369
    %p376 = scmp.eq.s32.totalorder %s86, 1
    %p377 = por %p375, %p376
    %p378 = scmp.ne.s32.totalorder %s369, %s370
    %p379 = scmp.eq.s32.totalorder %s86, 0
    %p380 = por %p378, %p379
    %p381 = scmp.ne.s32.totalorder %s369, %s370
    %p382 = scmp.eq.s32.totalorder %s87, 1
    %p383 = por %p381, %p382
    %p385 = scmp.ne.s32.totalorder %s370, %s384
    %p386 = scmp.eq.s32.totalorder %s87, 0
    %p387 = por %p385, %p386
    %s389 = sadd.s32 %s388, 1
    %p392 = scmp.eq.s32.totalorder %s81, 1
    %p393 = scmp.ne.s32.totalorder %s388, %s390
    %p394 = scmp.eq.s32.totalorder %s81, 0
    %p395 = por %p393, %p394
    %p396 = scmp.ne.s32.totalorder %s388, %s390
    %p397 = scmp.eq.s32.totalorder %s86, 1
    %p398 = por %p396, %p397
    %p399 = scmp.ne.s32.totalorder %s390, %s391
    %p400 = scmp.eq.s32.totalorder %s86, 0
    %p401 = por %p399, %p400
    %p402 = scmp.ne.s32.totalorder %s390, %s391
    %p403 = scmp.eq.s32.totalorder %s87, 1
    %p404 = por %p402, %p403
    %p406 = scmp.ne.s32.totalorder %s391, %s405
    %p407 = scmp.eq.s32.totalorder %s87, 0
    %p408 = por %p406, %p407
    %s410 = sadd.s32 %s409, 1
    %p413 = scmp.eq.s32.totalorder %s81, 1
    %p414 = scmp.ne.s32.totalorder %s409, %s411
    %p415 = scmp.eq.s32.totalorder %s81, 0
    %p416 = por %p414, %p415
    %p417 = scmp.ne.s32.totalorder %s409, %s411
    %p418 = scmp.eq.s32.totalorder %s86, 1
    %p419 = por %p417, %p418
    %p420 = scmp.ne.s32.totalorder %s411, %s412
    %p421 = scmp.eq.s32.totalorder %s86, 0
    %p422 = por %p420, %p421
    %p423 = scmp.ne.s32.totalorder %s411, %s412
    %p424 = scmp.eq.s32.totalorder %s87, 1
    %p425 = por %p423, %p424
    %p427 = scmp.ne.s32.totalorder %s412, %s426
    %p428 = scmp.eq.s32.totalorder %s87, 0
    %p429 = por %p427, %p428
    %s431 = sadd.s32 %s430, 1
    %p434 = scmp.eq.s32.totalorder %s81, 1
    %p435 = scmp.ne.s32.totalorder %s430, %s432
    %p436 = scmp.eq.s32.totalorder %s81, 0
    %p437 = por %p435, %p436
    %p438 = scmp.ne.s32.totalorder %s430, %s432
    %p439 = scmp.eq.s32.totalorder %s86, 1
    %p440 = por %p438, %p439
    %p441 = scmp.ne.s32.totalorder %s432, %s433
    %p442 = scmp.eq.s32.totalorder %s86, 0
    %p443 = por %p441, %p442
    %p444 = scmp.ne.s32.totalorder %s432, %s433
    %p445 = scmp.eq.s32.totalorder %s87, 1
    %p446 = por %p444, %p445
    %p448 = scmp.ne.s32.totalorder %s433, %s447
    %p449 = scmp.eq.s32.totalorder %s87, 0
    %p450 = por %p448, %p449
    %s452 = sadd.s32 %s451, 1
    %p455 = scmp.eq.s32.totalorder %s81, 1
    %p456 = scmp.ne.s32.totalorder %s451, %s453
    %p457 = scmp.eq.s32.totalorder %s81, 0
    %p458 = por %p456, %p457
    %p459 = scmp.ne.s32.totalorder %s451, %s453
    %p460 = scmp.eq.s32.totalorder %s86, 1
    %p461 = por %p459, %p460
    %p462 = scmp.ne.s32.totalorder %s453, %s454
    %p463 = scmp.eq.s32.totalorder %s86, 0
    %p464 = por %p462, %p463
    %p465 = scmp.ne.s32.totalorder %s453, %s454
    %p466 = scmp.eq.s32.totalorder %s87, 1
    %p467 = por %p465, %p466
    %p469 = scmp.ne.s32.totalorder %s454, %s468
    %p470 = scmp.eq.s32.totalorder %s87, 0
    %p471 = por %p469, %p470
    %s473 = sadd.s32 %s472, 1
    %p476 = scmp.eq.s32.totalorder %s81, 1
    %p477 = scmp.ne.s32.totalorder %s472, %s474
    %p478 = scmp.eq.s32.totalorder %s81, 0
    %p479 = por %p477, %p478
    %p480 = scmp.ne.s32.totalorder %s472, %s474
    %p481 = scmp.eq.s32.totalorder %s86, 1
    %p482 = por %p480, %p481
    %p483 = scmp.ne.s32.totalorder %s474, %s475
    %p484 = scmp.eq.s32.totalorder %s86, 0
    %p485 = por %p483, %p484
    %p486 = scmp.ne.s32.totalorder %s474, %s475
    %p487 = scmp.eq.s32.totalorder %s87, 1
    %p488 = por %p486, %p487
    %p490 = scmp.ne.s32.totalorder %s475, %s489
    %p491 = scmp.eq.s32.totalorder %s87, 0
    %p492 = por %p490, %p491
    %s494 = sadd.s32 %s493, 1
    %p497 = scmp.eq.s32.totalorder %s81, 1
    %p498 = scmp.ne.s32.totalorder %s493, %s495
    %p499 = scmp.eq.s32.totalorder %s81, 0
    %p500 = por %p498, %p499
    %p501 = scmp.ne.s32.totalorder %s493, %s495
    %p502 = scmp.eq.s32.totalorder %s86, 1
    %p503 = por %p501, %p502
    %p504 = scmp.ne.s32.totalorder %s495, %s496
    %p505 = scmp.eq.s32.totalorder %s86, 0
    %p506 = por %p504, %p505
    %p507 = scmp.ne.s32.totalorder %s495, %s496
    %p508 = scmp.eq.s32.totalorder %s87, 1
    %p509 = por %p507, %p508
    %p511 = scmp.ne.s32.totalorder %s496, %s510
    %p512 = scmp.eq.s32.totalorder %s87, 0
    %p513 = por %p511, %p512
    %s515 = sadd.s32 %s514, 1
    %p518 = scmp.eq.s32.totalorder %s81, 1
    %p519 = scmp.ne.s32.totalorder %s514, %s516
    %p520 = scmp.eq.s32.totalorder %s81, 0
    %p521 = por %p519, %p520
    %p522 = scmp.ne.s32.totalorder %s514, %s516
    %p523 = scmp.eq.s32.totalorder %s86, 1
    %p524 = por %p522, %p523
    %p525 = scmp.ne.s32.totalorder %s516, %s517
    %p526 = scmp.eq.s32.totalorder %s86, 0
    %p527 = por %p525, %p526
    %p528 = scmp.ne.s32.totalorder %s516, %s517
    %p529 = scmp.eq.s32.totalorder %s87, 1
    %p530 = por %p528, %p529
    %p532 = scmp.ne.s32.totalorder %s517, %s531
    %p533 = scmp.eq.s32.totalorder %s87, 0
    %p534 = por %p532, %p533
    %s536 = sadd.s32 %s535, 1
    %p539 = scmp.eq.s32.totalorder %s81, 1
    %p540 = scmp.ne.s32.totalorder %s535, %s537
    %p541 = scmp.eq.s32.totalorder %s81, 0
    %p542 = por %p540, %p541
    %p543 = scmp.ne.s32.totalorder %s535, %s537
    %p544 = scmp.eq.s32.totalorder %s86, 1
    %p545 = por %p543, %p544
    %p546 = scmp.ne.s32.totalorder %s537, %s538
    %p547 = scmp.eq.s32.totalorder %s86, 0
    %p548 = por %p546, %p547
    %p549 = scmp.ne.s32.totalorder %s537, %s538
    %p550 = scmp.eq.s32.totalorder %s87, 1
    %p551 = por %p549, %p550
    %p553 = scmp.ne.s32.totalorder %s538, %s552
    %p554 = scmp.eq.s32.totalorder %s87, 0
    %p555 = por %p553, %p554
    %s557 = sadd.s32 %s556, 1
    %p560 = scmp.eq.s32.totalorder %s81, 1
    %p561 = scmp.ne.s32.totalorder %s556, %s558
    %p562 = scmp.eq.s32.totalorder %s81, 0
    %p563 = por %p561, %p562
    %p564 = scmp.ne.s32.totalorder %s556, %s558
    %p565 = scmp.eq.s32.totalorder %s86, 1
    %p566 = por %p564, %p565
    %p567 = scmp.ne.s32.totalorder %s558, %s559
    %p568 = scmp.eq.s32.totalorder %s86, 0
    %p569 = por %p567, %p568
    %p570 = scmp.ne.s32.totalorder %s558, %s559
    %p571 = scmp.eq.s32.totalorder %s87, 1
    %p572 = por %p570, %p571
    %p574 = scmp.ne.s32.totalorder %s559, %s573
    %p575 = scmp.eq.s32.totalorder %s87, 0
    %p576 = por %p574, %p575
    %s578 = sadd.s32 %s577, 1
    %p581 = scmp.eq.s32.totalorder %s81, 1
    %p582 = scmp.ne.s32.totalorder %s577, %s579
    %p583 = scmp.eq.s32.totalorder %s81, 0
    %p584 = por %p582, %p583
    %p585 = scmp.ne.s32.totalorder %s577, %s579
    %p586 = scmp.eq.s32.totalorder %s86, 1
    %p587 = por %p585, %p586
    %p588 = scmp.ne.s32.totalorder %s579, %s580
    %p589 = scmp.eq.s32.totalorder %s86, 0
    %p590 = por %p588, %p589
    %p591 = scmp.ne.s32.totalorder %s579, %s580
    %p592 = scmp.eq.s32.totalorder %s87, 1
    %p593 = por %p591, %p592
    %p595 = scmp.ne.s32.totalorder %s580, %s594
    %p596 = scmp.eq.s32.totalorder %s87, 0
    %p597 = por %p595, %p596
    %s599 = sadd.s32 %s598, 1
    %p602 = scmp.eq.s32.totalorder %s81, 1
    %p603 = scmp.ne.s32.totalorder %s598, %s600
    %p604 = scmp.eq.s32.totalorder %s81, 0
    %p605 = por %p603, %p604
    %p606 = scmp.ne.s32.totalorder %s598, %s600
    %p607 = scmp.eq.s32.totalorder %s86, 1
    %p608 = por %p606, %p607
    %p609 = scmp.ne.s32.totalorder %s600, %s601
    %p610 = scmp.eq.s32.totalorder %s86, 0
    %p611 = por %p609, %p610
    %p612 = scmp.ne.s32.totalorder %s600, %s601
    %p613 = scmp.eq.s32.totalorder %s87, 1
    %p614 = por %p612, %p613
    %p616 = scmp.ne.s32.totalorder %s601, %s615
    %p617 = scmp.eq.s32.totalorder %s87, 0
    %p618 = por %p616, %p617
    %s620 = sadd.s32 %s619, 1
    %p623 = scmp.eq.s32.totalorder %s81, 1
    %p624 = scmp.ne.s32.totalorder %s619, %s621
    %p625 = scmp.eq.s32.totalorder %s81, 0
    %p626 = por %p624, %p625
    %p627 = scmp.ne.s32.totalorder %s619, %s621
    %p628 = scmp.eq.s32.totalorder %s86, 1
    %p629 = por %p627, %p628
    %p630 = scmp.ne.s32.totalorder %s621, %s622
    %p631 = scmp.eq.s32.totalorder %s86, 0
    %p632 = por %p630, %p631
    %p633 = scmp.ne.s32.totalorder %s621, %s622
    %p634 = scmp.eq.s32.totalorder %s87, 1
    %p635 = por %p633, %p634
    %p637 = scmp.ne.s32.totalorder %s622, %s636
    %p638 = scmp.eq.s32.totalorder %s87, 0
    %p639 = por %p637, %p638
    %s641 = sadd.s32 %s640, 1
    %p644 = scmp.eq.s32.totalorder %s81, 1
    %p645 = scmp.ne.s32.totalorder %s640, %s642
    %p646 = scmp.eq.s32.totalorder %s81, 0
    %p647 = por %p645, %p646
    %p648 = scmp.ne.s32.totalorder %s640, %s642
    %p649 = scmp.eq.s32.totalorder %s86, 1
    %p650 = por %p648, %p649
    %p651 = scmp.ne.s32.totalorder %s642, %s643
    %p652 = scmp.eq.s32.totalorder %s86, 0
    %p653 = por %p651, %p652
    %p654 = scmp.ne.s32.totalorder %s642, %s643
    %p655 = scmp.eq.s32.totalorder %s87, 1
    %p656 = por %p654, %p655
    %p658 = scmp.ne.s32.totalorder %s643, %s657
    %p659 = scmp.eq.s32.totalorder %s87, 0
    %p660 = por %p658, %p659
    %s662 = sadd.s32 %s661, 1
    %p665 = scmp.eq.s32.totalorder %s81, 1
    %p666 = scmp.ne.s32.totalorder %s661, %s663
    %p667 = scmp.eq.s32.totalorder %s81, 0
    %p668 = por %p666, %p667
    %p669 = scmp.ne.s32.totalorder %s661, %s663
    %p670 = scmp.eq.s32.totalorder %s86, 1
    %p671 = por %p669, %p670
    %p672 = scmp.ne.s32.totalorder %s663, %s664
    %p673 = scmp.eq.s32.totalorder %s86, 0
    %p674 = por %p672, %p673
    %p675 = scmp.ne.s32.totalorder %s663, %s664
    %p676 = scmp.eq.s32.totalorder %s87, 1
    %p677 = por %p675, %p676
    %p679 = scmp.ne.s32.totalorder %s664, %s678
    %p680 = scmp.eq.s32.totalorder %s87, 0
    %p681 = por %p679, %p680
    %s683 = sadd.s32 %s682, 1
    %p686 = scmp.eq.s32.totalorder %s81, 1
    %p687 = scmp.ne.s32.totalorder %s682, %s684
    %p688 = scmp.eq.s32.totalorder %s81, 0
    %p689 = por %p687, %p688
    %p690 = scmp.ne.s32.totalorder %s682, %s684
    %p691 = scmp.eq.s32.totalorder %s86, 1
    %p692 = por %p690, %p691
    %p693 = scmp.ne.s32.totalorder %s684, %s685
    %p694 = scmp.eq.s32.totalorder %s86, 0
    %p695 = por %p693, %p694
    %p696 = scmp.ne.s32.totalorder %s684, %s685
    %p697 = scmp.eq.s32.totalorder %s87, 1
    %p698 = por %p696, %p697
    %p700 = scmp.ne.s32.totalorder %s685, %s699
    %p701 = scmp.eq.s32.totalorder %s87, 0
    %p702 = por %p700, %p701
    %s704 = sadd.s32 %s703, 1
    %p707 = scmp.eq.s32.totalorder %s81, 1
    %p708 = scmp.ne.s32.totalorder %s703, %s705
    %p709 = scmp.eq.s32.totalorder %s81, 0
    %p710 = por %p708, %p709
    %p711 = scmp.ne.s32.totalorder %s703, %s705
    %p712 = scmp.eq.s32.totalorder %s86, 1
    %p713 = por %p711, %p712
    %p714 = scmp.ne.s32.totalorder %s705, %s706
    %p715 = scmp.eq.s32.totalorder %s86, 0
    %p716 = por %p714, %p715
    %p717 = scmp.ne.s32.totalorder %s705, %s706
    %p718 = scmp.eq.s32.totalorder %s87, 1
    %p719 = por %p717, %p718
    %p721 = scmp.ne.s32.totalorder %s706, %s720
    %p722 = scmp.eq.s32.totalorder %s87, 0
    %p723 = por %p721, %p722
    %s725 = sadd.s32 %s724, 1
    %p728 = scmp.eq.s32.totalorder %s81, 1
    %p729 = scmp.ne.s32.totalorder %s724, %s726
    %p730 = scmp.eq.s32.totalorder %s81, 0
    %p731 = por %p729, %p730
    %p732 = scmp.ne.s32.totalorder %s724, %s726
    %p733 = scmp.eq.s32.totalorder %s86, 1
    %p734 = por %p732, %p733
    %p735 = scmp.ne.s32.totalorder %s726, %s727
    %p736 = scmp.eq.s32.totalorder %s86, 0
    %p737 = por %p735, %p736
    %p738 = scmp.ne.s32.totalorder %s726, %s727
    %p739 = scmp.eq.s32.totalorder %s87, 1
    %p740 = por %p738, %p739
    %p742 = scmp.ne.s32.totalorder %s727, %s741
    %p743 = scmp.eq.s32.totalorder %s87, 0
    %p744 = por %p742, %p743
    %s746 = sadd.s32 %s745, 1
    %p749 = scmp.eq.s32.totalorder %s81, 1
    %p750 = scmp.ne.s32.totalorder %s745, %s747
    %p751 = scmp.eq.s32.totalorder %s81, 0
    %p752 = por %p750, %p751
    %p753 = scmp.ne.s32.totalorder %s745, %s747
    %p754 = scmp.eq.s32.totalorder %s86, 1
    %p755 = por %p753, %p754
    %p756 = scmp.ne.s32.totalorder %s747, %s748
    %p757 = scmp.eq.s32.totalorder %s86, 0
    %p758 = por %p756, %p757
    %p759 = scmp.ne.s32.totalorder %s747, %s748
    %p760 = scmp.eq.s32.totalorder %s87, 1
    %p761 = por %p759, %p760
    %p763 = scmp.ne.s32.totalorder %s748, %s762
    %p764 = scmp.eq.s32.totalorder %s87, 0
    %p765 = por %p763, %p764
    %s767 = sadd.s32 %s766, 1
    %p770 = scmp.eq.s32.totalorder %s81, 1
    %p771 = scmp.ne.s32.totalorder %s766, %s768
    %p772 = scmp.eq.s32.totalorder %s81, 0
    %p773 = por %p771, %p772
    %p774 = scmp.ne.s32.totalorder %s766, %s768
    %p775 = scmp.eq.s32.totalorder %s86, 1
    %p776 = por %p774, %p775
    %p777 = scmp.ne.s32.totalorder %s768, %s769
    %p778 = scmp.eq.s32.totalorder %s86, 0
    %p779 = por %p777, %p778
    %p780 = scmp.ne.s32.totalorder %s768, %s769
    %p781 = scmp.eq.s32.totalorder %s87, 1
    %p782 = por %p780, %p781
    %p784 = scmp.ne.s32.totalorder %s769, %s783
    %p785 = scmp.eq.s32.totalorder %s87, 0
    %p786 = por %p784, %p785
    %s788 = sadd.s32 %s787, 1
    %p791 = scmp.eq.s32.totalorder %s81, 1
    %p792 = scmp.ne.s32.totalorder %s787, %s789
    %p793 = scmp.eq.s32.totalorder %s81, 0
    %p794 = por %p792, %p793
    %p795 = scmp.ne.s32.totalorder %s787, %s789
    %p796 = scmp.eq.s32.totalorder %s86, 1
    %p797 = por %p795, %p796
    %p798 = scmp.ne.s32.totalorder %s789, %s790
    %p799 = scmp.eq.s32.totalorder %s86, 0
    %p800 = por %p798, %p799
    %p801 = scmp.ne.s32.totalorder %s789, %s790
    %p802 = scmp.eq.s32.totalorder %s87, 1
    %p803 = por %p801, %p802
    %p805 = scmp.ne.s32.totalorder %s790, %s804
    %p806 = scmp.eq.s32.totalorder %s87, 0
    %p807 = por %p805, %p806
    %s809 = sadd.s32 %s808, 1
    %p812 = scmp.eq.s32.totalorder %s81, 1
    %p813 = scmp.ne.s32.totalorder %s808, %s810
    %p814 = scmp.eq.s32.totalorder %s81, 0
    %p815 = por %p813, %p814
    %p816 = scmp.ne.s32.totalorder %s808, %s810
    %p817 = scmp.eq.s32.totalorder %s86, 1
    %p818 = por %p816, %p817
    %p819 = scmp.ne.s32.totalorder %s810, %s811
    %p820 = scmp.eq.s32.totalorder %s86, 0
    %p821 = por %p819, %p820
    %p822 = scmp.ne.s32.totalorder %s810, %s811
    %p823 = scmp.eq.s32.totalorder %s87, 1
    %p824 = por %p822, %p823
    %p826 = scmp.ne.s32.totalorder %s811, %s825
    %p827 = scmp.eq.s32.totalorder %s87, 0
    %p828 = por %p826, %p827
    %s830 = sadd.s32 %s829, 1
    %p833 = scmp.eq.s32.totalorder %s81, 1
    %p834 = scmp.ne.s32.totalorder %s829, %s831
    %p835 = scmp.eq.s32.totalorder %s81, 0
    %p836 = por %p834, %p835
    %p837 = scmp.ne.s32.totalorder %s829, %s831
    %p838 = scmp.eq.s32.totalorder %s86, 1
    %p839 = por %p837, %p838
    %p840 = scmp.ne.s32.totalorder %s831, %s832
    %p841 = scmp.eq.s32.totalorder %s86, 0
    %p842 = por %p840, %p841
    %p843 = scmp.ne.s32.totalorder %s831, %s832
    %p844 = scmp.eq.s32.totalorder %s87, 1
    %p845 = por %p843, %p844
    %p847 = scmp.ne.s32.totalorder %s832, %s846
    %p848 = scmp.eq.s32.totalorder %s87, 0
    %p849 = por %p847, %p848
    %s851 = sadd.s32 %s850, 1
    %p854 = scmp.eq.s32.totalorder %s81, 1
    %p855 = scmp.ne.s32.totalorder %s850, %s852
    %p856 = scmp.eq.s32.totalorder %s81, 0
    %p857 = por %p855, %p856
    %p858 = scmp.ne.s32.totalorder %s850, %s852
    %p859 = scmp.eq.s32.totalorder %s86, 1
    %p860 = por %p858, %p859
    %p861 = scmp.ne.s32.totalorder %s852, %s853
    %p862 = scmp.eq.s32.totalorder %s86, 0
    %p863 = por %p861, %p862
    %p864 = scmp.ne.s32.totalorder %s852, %s853
    %p865 = scmp.eq.s32.totalorder %s87, 1
    %p866 = por %p864, %p865
    %p868 = scmp.ne.s32.totalorder %s853, %s867
    %p869 = scmp.eq.s32.totalorder %s87, 0
    %p870 = por %p868, %p869
    %s871 = ssub.s32 %s81, %s88
    %p872 = scmp.eq.s32.totalorder %s871, 0
    %s874 = sadd.s32 %s873, 1
    %s875 = scalar_select %p872, %s873, %s874
    %p878 = pneg %p872
    %p879 = scmp.eq.s32.totalorder %s81, 1
    %p880 = por %p878, %p879
    %p881 = scmp.ne.s32.totalorder %s873, %s876
    %p882 = scmp.eq.s32.totalorder %s81, 0
    %p883 = por %p881, %p882
    %p884 = scmp.ne.s32.totalorder %s873, %s876
    %p885 = scmp.eq.s32.totalorder %s86, 1
    %p886 = por %p884, %p885
    %p887 = scmp.ne.s32.totalorder %s876, %s877
    %p888 = scmp.eq.s32.totalorder %s86, 0
    %p889 = por %p887, %p888
    %p890 = scmp.ne.s32.totalorder %s876, %s877
    %p891 = scmp.eq.s32.totalorder %s87, 1
    %p892 = por %p890, %p891
    %p894 = scmp.ne.s32.totalorder %s877, %s893
    %p895 = scmp.eq.s32.totalorder %s87, 0
    %p896 = por %p894, %p895
    %p897 = scmp.le.s32.totalorder 1, %s81
    %p898 = scmp.lt.s32.totalorder %s81, 3
    %p899 = pnand %p897, %p898
    %p900 = pneg %p899
    // Predicated region
    $region9: #{_lambda_.1} parent=5 // pred_check
      _
    $region10: #{_lambda_.1} parent=5 // pred_check_branch
      %902 = sbr.rel (%p899) target = $region12
    $region11: #{_lambda_.1} parent=5 // pred_region
      %s903 = ssub.s32 %s81, 1
      // Predicated region
      $region13: #{_lambda_.1} parent=11 // pred_check
        %p904 = pneg %p128
      $region14: #{_lambda_.1} parent=11 // pred_check_branch
        %906 = sbr.rel (%p904) target = $region16
      $region15: #{_lambda_.1} parent=11 // pred_region
        _
      $region16: #{_lambda_.1} parent=11 // pred_fallthru
        _
      // Predicated region
      $region17: #{_lambda_.1} parent=11 // pred_check
        %p907 = pneg %p149
      $region18: #{_lambda_.1} parent=11 // pred_check_branch
        %909 = sbr.rel (%p907) target = $region20
      $region19: #{_lambda_.1} parent=11 // pred_region
        _
      $region20: #{_lambda_.1} parent=11 // pred_fallthru
        _
      // Predicated region
      $region21: #{_lambda_.1} parent=11 // pred_check
        %p910 = pneg %p170
      $region22: #{_lambda_.1} parent=11 // pred_check_branch
        %912 = sbr.rel (%p910) target = $region24
      $region23: #{_lambda_.1} parent=11 // pred_region
        _
      $region24: #{_lambda_.1} parent=11 // pred_fallthru
        _
      // Predicated region
      $region25: #{_lambda_.1} parent=11 // pred_check
        %p913 = pneg %p191
      $region26: #{_lambda_.1} parent=11 // pred_check_branch
        %915 = sbr.rel (%p913) target = $region28
      $region27: #{_lambda_.1} parent=11 // pred_region
        _
      $region28: #{_lambda_.1} parent=11 // pred_fallthru
        _
      // Predicated region
      $region29: #{_lambda_.1} parent=11 // pred_check
        %p916 = pneg %p212
      $region30: #{_lambda_.1} parent=11 // pred_check_branch
        %918 = sbr.rel (%p916) target = $region32
      $region31: #{_lambda_.1} parent=11 // pred_region
        _
      $region32: #{_lambda_.1} parent=11 // pred_fallthru
        _
      // Predicated region
      $region33: #{_lambda_.1} parent=11 // pred_check
        %p919 = pneg %p233
      $region34: #{_lambda_.1} parent=11 // pred_check_branch
        %921 = sbr.rel (%p919) target = $region36
      $region35: #{_lambda_.1} parent=11 // pred_region
        _
      $region36: #{_lambda_.1} parent=11 // pred_fallthru
        _
      // Predicated region
      $region37: #{_lambda_.1} parent=11 // pred_check
        %p922 = pneg %p254
      $region38: #{_lambda_.1} parent=11 // pred_check_branch
        %924 = sbr.rel (%p922) target = $region40
      $region39: #{_lambda_.1} parent=11 // pred_region
        _
      $region40: #{_lambda_.1} parent=11 // pred_fallthru
        _
      // Predicated region
      $region41: #{_lambda_.1} parent=11 // pred_check
        %p925 = pneg %p275
      $region42: #{_lambda_.1} parent=11 // pred_check_branch
        %927 = sbr.rel (%p925) target = $region44
      $region43: #{_lambda_.1} parent=11 // pred_region
        _
      $region44: #{_lambda_.1} parent=11 // pred_fallthru
        _
      // Predicated region
      $region45: #{_lambda_.1} parent=11 // pred_check
        %p928 = pneg %p296
      $region46: #{_lambda_.1} parent=11 // pred_check_branch
        %930 = sbr.rel (%p928) target = $region48
      $region47: #{_lambda_.1} parent=11 // pred_region
        _
      $region48: #{_lambda_.1} parent=11 // pred_fallthru
        _
      // Predicated region
      $region49: #{_lambda_.1} parent=11 // pred_check
        %p931 = pneg %p317
      $region50: #{_lambda_.1} parent=11 // pred_check_branch
        %933 = sbr.rel (%p931) target = $region52
      $region51: #{_lambda_.1} parent=11 // pred_region
        _
      $region52: #{_lambda_.1} parent=11 // pred_fallthru
        _
      // Predicated region
      $region53: #{_lambda_.1} parent=11 // pred_check
        %p934 = pneg %p338
      $region54: #{_lambda_.1} parent=11 // pred_check_branch
        %936 = sbr.rel (%p934) target = $region56
      $region55: #{_lambda_.1} parent=11 // pred_region
        _
      $region56: #{_lambda_.1} parent=11 // pred_fallthru
        _
      // Predicated region
      $region57: #{_lambda_.1} parent=11 // pred_check
        %p937 = pneg %p359
      $region58: #{_lambda_.1} parent=11 // pred_check_branch
        %939 = sbr.rel (%p937) target = $region60
      $region59: #{_lambda_.1} parent=11 // pred_region
        _
      $region60: #{_lambda_.1} parent=11 // pred_fallthru
        _
      // Predicated region
      $region61: #{_lambda_.1} parent=11 // pred_check
        %p940 = pneg %p380
      $region62: #{_lambda_.1} parent=11 // pred_check_branch
        %942 = sbr.rel (%p940) target = $region64
      $region63: #{_lambda_.1} parent=11 // pred_region
        _
      $region64: #{_lambda_.1} parent=11 // pred_fallthru
        _
      // Predicated region
      $region65: #{_lambda_.1} parent=11 // pred_check
        %p943 = pneg %p401
      $region66: #{_lambda_.1} parent=11 // pred_check_branch
        %945 = sbr.rel (%p943) target = $region68
      $region67: #{_lambda_.1} parent=11 // pred_region
        _
      $region68: #{_lambda_.1} parent=11 // pred_fallthru
        _
      // Predicated region
      $region69: #{_lambda_.1} parent=11 // pred_check
        %p946 = pneg %p422
      $region70: #{_lambda_.1} parent=11 // pred_check_branch
        %948 = sbr.rel (%p946) target = $region72
      $region71: #{_lambda_.1} parent=11 // pred_region
        _
      $region72: #{_lambda_.1} parent=11 // pred_fallthru
        _
      // Predicated region
      $region73: #{_lambda_.1} parent=11 // pred_check
        %p949 = pneg %p443
      $region74: #{_lambda_.1} parent=11 // pred_check_branch
        %951 = sbr.rel (%p949) target = $region76
      $region75: #{_lambda_.1} parent=11 // pred_region
        _
      $region76: #{_lambda_.1} parent=11 // pred_fallthru
        _
      // Predicated region
      $region77: #{_lambda_.1} parent=11 // pred_check
        %p952 = pneg %p464
      $region78: #{_lambda_.1} parent=11 // pred_check_branch
        %954 = sbr.rel (%p952) target = $region80
      $region79: #{_lambda_.1} parent=11 // pred_region
        _
      $region80: #{_lambda_.1} parent=11 // pred_fallthru
        _
      // Predicated region
      $region81: #{_lambda_.1} parent=11 // pred_check
        %p955 = pneg %p485
      $region82: #{_lambda_.1} parent=11 // pred_check_branch
        %957 = sbr.rel (%p955) target = $region84
      $region83: #{_lambda_.1} parent=11 // pred_region
        _
      $region84: #{_lambda_.1} parent=11 // pred_fallthru
        _
      // Predicated region
      $region85: #{_lambda_.1} parent=11 // pred_check
        %p958 = pneg %p506
      $region86: #{_lambda_.1} parent=11 // pred_check_branch
        %960 = sbr.rel (%p958) target = $region88
      $region87: #{_lambda_.1} parent=11 // pred_region
        _
      $region88: #{_lambda_.1} parent=11 // pred_fallthru
        _
      // Predicated region
      $region89: #{_lambda_.1} parent=11 // pred_check
        %p961 = pneg %p527
      $region90: #{_lambda_.1} parent=11 // pred_check_branch
        %963 = sbr.rel (%p961) target = $region92
      $region91: #{_lambda_.1} parent=11 // pred_region
        _
      $region92: #{_lambda_.1} parent=11 // pred_fallthru
        _
      // Predicated region
      $region93: #{_lambda_.1} parent=11 // pred_check
        %p964 = pneg %p548
      $region94: #{_lambda_.1} parent=11 // pred_check_branch
        %966 = sbr.rel (%p964) target = $region96
      $region95: #{_lambda_.1} parent=11 // pred_region
        _
      $region96: #{_lambda_.1} parent=11 // pred_fallthru
        _
      // Predicated region
      $region97: #{_lambda_.1} parent=11 // pred_check
        %p967 = pneg %p569
      $region98: #{_lambda_.1} parent=11 // pred_check_branch
        %969 = sbr.rel (%p967) target = $region100
      $region99: #{_lambda_.1} parent=11 // pred_region
        _
      $region100: #{_lambda_.1} parent=11 // pred_fallthru
        _
      // Predicated region
      $region101: #{_lambda_.1} parent=11 // pred_check
        %p970 = pneg %p590
      $region102: #{_lambda_.1} parent=11 // pred_check_branch
        %972 = sbr.rel (%p970) target = $region104
      $region103: #{_lambda_.1} parent=11 // pred_region
        _
      $region104: #{_lambda_.1} parent=11 // pred_fallthru
        _
      // Predicated region
      $region105: #{_lambda_.1} parent=11 // pred_check
        %p973 = pneg %p611
      $region106: #{_lambda_.1} parent=11 // pred_check_branch
        %975 = sbr.rel (%p973) target = $region108
      $region107: #{_lambda_.1} parent=11 // pred_region
        _
      $region108: #{_lambda_.1} parent=11 // pred_fallthru
        _
      // Predicated region
      $region109: #{_lambda_.1} parent=11 // pred_check
        %p976 = pneg %p632
      $region110: #{_lambda_.1} parent=11 // pred_check_branch
        %978 = sbr.rel (%p976) target = $region112
      $region111: #{_lambda_.1} parent=11 // pred_region
        _
      $region112: #{_lambda_.1} parent=11 // pred_fallthru
        _
      // Predicated region
      $region113: #{_lambda_.1} parent=11 // pred_check
        %p979 = pneg %p653
      $region114: #{_lambda_.1} parent=11 // pred_check_branch
        %981 = sbr.rel (%p979) target = $region116
      $region115: #{_lambda_.1} parent=11 // pred_region
        _
      $region116: #{_lambda_.1} parent=11 // pred_fallthru
        _
      // Predicated region
      $region117: #{_lambda_.1} parent=11 // pred_check
        %p982 = pneg %p674
      $region118: #{_lambda_.1} parent=11 // pred_check_branch
        %984 = sbr.rel (%p982) target = $region120
      $region119: #{_lambda_.1} parent=11 // pred_region
        _
      $region120: #{_lambda_.1} parent=11 // pred_fallthru
        _
      // Predicated region
      $region121: #{_lambda_.1} parent=11 // pred_check
        %p985 = pneg %p695
      $region122: #{_lambda_.1} parent=11 // pred_check_branch
        %987 = sbr.rel (%p985) target = $region124
      $region123: #{_lambda_.1} parent=11 // pred_region
        _
      $region124: #{_lambda_.1} parent=11 // pred_fallthru
        _
      // Predicated region
      $region125: #{_lambda_.1} parent=11 // pred_check
        %p988 = pneg %p716
      $region126: #{_lambda_.1} parent=11 // pred_check_branch
        %990 = sbr.rel (%p988) target = $region128
      $region127: #{_lambda_.1} parent=11 // pred_region
        _
      $region128: #{_lambda_.1} parent=11 // pred_fallthru
        _
      // Predicated region
      $region129: #{_lambda_.1} parent=11 // pred_check
        %p991 = pneg %p737
      $region130: #{_lambda_.1} parent=11 // pred_check_branch
        %993 = sbr.rel (%p991) target = $region132
      $region131: #{_lambda_.1} parent=11 // pred_region
        _
      $region132: #{_lambda_.1} parent=11 // pred_fallthru
        _
      // Predicated region
      $region133: #{_lambda_.1} parent=11 // pred_check
        %p994 = pneg %p758
      $region134: #{_lambda_.1} parent=11 // pred_check_branch
        %996 = sbr.rel (%p994) target = $region136
      $region135: #{_lambda_.1} parent=11 // pred_region
        _
      $region136: #{_lambda_.1} parent=11 // pred_fallthru
        _
      // Predicated region
      $region137: #{_lambda_.1} parent=11 // pred_check
        %p997 = pneg %p779
      $region138: #{_lambda_.1} parent=11 // pred_check_branch
        %999 = sbr.rel (%p997) target = $region140
      $region139: #{_lambda_.1} parent=11 // pred_region
        _
      $region140: #{_lambda_.1} parent=11 // pred_fallthru
        _
      // Predicated region
      $region141: #{_lambda_.1} parent=11 // pred_check
        %p1000 = pneg %p800
      $region142: #{_lambda_.1} parent=11 // pred_check_branch
        %1002 = sbr.rel (%p1000) target = $region144
      $region143: #{_lambda_.1} parent=11 // pred_region
        _
      $region144: #{_lambda_.1} parent=11 // pred_fallthru
        _
      // Predicated region
      $region145: #{_lambda_.1} parent=11 // pred_check
        %p1003 = pneg %p821
      $region146: #{_lambda_.1} parent=11 // pred_check_branch
        %1005 = sbr.rel (%p1003) target = $region148
      $region147: #{_lambda_.1} parent=11 // pred_region
        _
      $region148: #{_lambda_.1} parent=11 // pred_fallthru
        _
      // Predicated region
      $region149: #{_lambda_.1} parent=11 // pred_check
        %p1006 = pneg %p842
      $region150: #{_lambda_.1} parent=11 // pred_check_branch
        %1008 = sbr.rel (%p1006) target = $region152
      $region151: #{_lambda_.1} parent=11 // pred_region
        _
      $region152: #{_lambda_.1} parent=11 // pred_fallthru
        _
      // Predicated region
      $region153: #{_lambda_.1} parent=11 // pred_check
        %p1009 = pneg %p863
      $region154: #{_lambda_.1} parent=11 // pred_check_branch
        %1011 = sbr.rel (%p1009) target = $region156
      $region155: #{_lambda_.1} parent=11 // pred_region
        _
      $region156: #{_lambda_.1} parent=11 // pred_fallthru
        _
    $region12: #{_lambda_.1} parent=5 // pred_fallthru
      _
    %p1012 = scmp.lt.s32.totalorder %s81, 2
    // Predicated region
    $region157: #{_lambda_.1} parent=5 // pred_check
      %p1013 = pneg %p1012
    $region158: #{_lambda_.1} parent=5 // pred_check_branch
      %1015 = sbr.rel (%p1013) target = $region160
    $region159: #{_lambda_.1} parent=5 // pred_region
      // Predicated region
      $region161: #{_lambda_.1} parent=159 // pred_check
        %p1016 = pneg %p101
      $region162: #{_lambda_.1} parent=159 // pred_check_branch
        %1018 = sbr.rel (%p1016) target = $region164
      $region163: #{_lambda_.1} parent=159 // pred_region
        %p1019 = scmp.lt.s32.totalorder %s81, 1
        %s1020 = scalar_select %p1019, %s81, 1
        %s1021 = smul.addr %s1020, 9
        %s1022 = smul.addr %s1021, 4
        %s1023 = scalar_lea.vmem %s1, %s1022
      $region164: #{_lambda_.1} parent=159 // pred_fallthru
        _
    $region160: #{_lambda_.1} parent=5 // pred_fallthru
      _
    %p1024 = scmp.le.s32.totalorder 1, %s81
    %p1025 = scmp.lt.s32.totalorder %s81, 3
    %p1026 = pnand %p1024, %p1025
    %p1027 = pneg %p1026
    // Predicated region
    $region165: #{_lambda_.1} parent=5 // pred_check
      _
    $region166: #{_lambda_.1} parent=5 // pred_check_branch
      %1029 = sbr.rel (%p1026) target = $region168
    $region167: #{_lambda_.1} parent=5 // pred_region
      %s1030 = ssub.s32 %s81, 1
      %p1031 = scmp.lt.s32.totalorder %s86, 1
      %s1032 = scalar_select %p1031, %s86, 1
      %s1033 = smul.addr %s1032, 9
      %s1034 = smul.addr %s1033, 4
      %s1035 = scalar_lea.vmem %s1, %s1034
      %p1036 = pneg %p107
      %p1037 = pneg %p104
      %p1038 = pneg %p128
      %p1039 = pneg %p125
      %p1040 = pneg %p149
      %p1041 = pneg %p146
      %p1042 = pneg %p170
      %p1043 = pneg %p167
      %p1044 = pneg %p191
      %p1045 = pneg %p188
      %p1046 = pneg %p212
      %p1047 = pneg %p209
      %p1048 = pneg %p233
      %p1049 = pneg %p230
      %p1050 = pneg %p254
      %p1051 = pneg %p251
      %p1052 = pneg %p275
      %p1053 = pneg %p272
      %p1054 = pneg %p296
      %p1055 = pneg %p293
      %p1056 = pneg %p317
      %p1057 = pneg %p314
      %p1058 = pneg %p338
      %p1059 = pneg %p335
      %p1060 = pneg %p359
      %p1061 = pneg %p356
      %p1062 = pneg %p380
      %p1063 = pneg %p377
      %p1064 = pneg %p401
      %p1065 = pneg %p398
      %p1066 = pneg %p422
      %p1067 = pneg %p419
      %p1068 = pneg %p443
      %p1069 = pneg %p440
      %p1070 = pneg %p464
      %p1071 = pneg %p461
      %p1072 = pneg %p485
      %p1073 = pneg %p482
      %p1074 = pneg %p506
      %p1075 = pneg %p503
      %p1076 = pneg %p527
      %p1077 = pneg %p524
      %p1078 = pneg %p548
      %p1079 = pneg %p545
      %p1080 = pneg %p569
      %p1081 = pneg %p566
      %p1082 = pneg %p590
      %p1083 = pneg %p587
      %p1084 = pneg %p611
      %p1085 = pneg %p608
      %p1086 = pneg %p632
      %p1087 = pneg %p629
      %p1088 = pneg %p653
      %p1089 = pneg %p650
      %p1090 = pneg %p674
      %p1091 = pneg %p671
      %p1092 = pneg %p695
      %p1093 = pneg %p692
      %p1094 = pneg %p716
      %p1095 = pneg %p713
      %p1096 = pneg %p737
      %p1097 = pneg %p734
      %p1098 = pneg %p758
      %p1099 = pneg %p755
      %p1100 = pneg %p779
      %p1101 = pneg %p776
      %p1102 = pneg %p800
      %p1103 = pneg %p797
      %p1104 = pneg %p821
      %p1105 = pneg %p818
      %p1106 = pneg %p842
      %p1107 = pneg %p839
      %p1108 = pneg %p863
      %p1109 = pneg %p860
      %p1110 = pneg %p889
      %p1111 = pneg %p886
      %p1112 = scmp.lt.s32.totalorder %s86, 1
      %s1113 = scalar_select %p1112, %s86, 1
      %s1114 = smul.addr %s1113, 2
      %s1115 = smul.addr %s1114, 8
      %s1116 = scalar_lea.vmem %s75, %s1115
      %p1117 = scmp.lt.s32.totalorder %s86, 1
      %s1118 = scalar_select %p1117, %s86, 1
      %s1119 = smul.addr %s1118, 9
      %s1120 = smul.addr %s1119, 4
      %s1121 = scalar_lea.vmem %s1, %s1120
      %p1122 = scmp.lt.s32.totalorder %s86, 1
      %s1123 = scalar_select %p1122, %s86, 1
      %s1124 = smul.addr %s1123, 2
      %s1125 = smul.addr %s1124, 8
      %s1126 = scalar_lea.vmem %s75, %s1125
      %v1127 = vld [vmem:[%s1121] sm:$0xff]
      %v1128 = vld [vmem:[%s1121 + $0x8] sm:$0xff]
      %v1129 = vld [vmem:[%s1121 + $0x10] sm:$0xff]
      %v1130 = vld [vmem:[%s1121 + $0x18] sm:$0xff]
      %v1131 = vld [vmem:[%s1121 + $0x20] sm:$0xf]
      %v1132 = vld [vmem:[%s3] sm:$0xff]
      %1134 = vrot.lane.b32.xlu0 %v1132, 124
      %v1135 = vpop.permute.xlu0 %1134
      %1141 = vst [vmem:[#allocation1] ss:$2 sm:$0xff] %v1127
      %s1142 = scalar_lea.vmem [#allocation1], 16
      %1143 = vst [vmem:[%s1142] ss:$2 sm:$0xff] %v1128
      %s1144 = scalar_lea.vmem [#allocation1], 32
      %1145 = vst [vmem:[%s1144] ss:$2 sm:$0xff] %v1129
      %s1146 = scalar_lea.vmem [#allocation1], 48
      %1147 = vst [vmem:[%s1146] ss:$2 sm:$0xff] %v1130
      %v1148 = vld.sshfl [vmem:[#allocation1] sm:$0xff pattern:$0x75316420]
      %v1149 = vld.sshfl [vmem:[#allocation1 + $0x8] sm:$0xff pattern:$0x75316420]
      %v1150 = vld.sshfl [vmem:[#allocation1 + $0x10] sm:$0xff pattern:$0x75316420]
      %v1151 = vld.sshfl [vmem:[#allocation1 + $0x18] sm:$0xff pattern:$0x75316420]
      %v1152 = vld.sshfl [vmem:[#allocation1 + $0x20] sm:$0xff pattern:$0x75316420]
      %v1153 = vld.sshfl [vmem:[#allocation1 + $0x28] sm:$0xff pattern:$0x75316420]
      %v1154 = vld.sshfl [vmem:[#allocation1 + $0x30] sm:$0xff pattern:$0x75316420]
      %v1155 = vld.sshfl [vmem:[#allocation1 + $0x38] sm:$0xff pattern:$0x75316420]
      %1156 = vst [vmem:[#allocation1] ss:$2 sm:$0xff] %v1131
      %v1157 = vld.sshfl [vmem:[#allocation1] sm:$0xff pattern:$0x75316420]
      %1158 = vrot.lane.b32.xlu0 %v1148, 127
      %v1159 = vpop.permute.xlu0 %1158
      %1160 = vrot.lane.b32.xlu0 %v1149, 127
      %v1161 = vpop.permute.xlu0 %1160
      %1162 = vrot.lane.b32.xlu0 %v1150, 127
      %v1163 = vpop.permute.xlu0 %1162
      %1164 = vrot.lane.b32.xlu0 %v1151, 127
      %v1165 = vpop.permute.xlu0 %1164
      %1166 = vrot.lane.b32.xlu0 %v1152, 127
      %v1167 = vpop.permute.xlu0 %1166
      %1168 = vrot.lane.b32.xlu0 %v1153, 127
      %v1169 = vpop.permute.xlu0 %1168
      %1170 = vrot.lane.b32.xlu0 %v1154, 127
      %v1171 = vpop.permute.xlu0 %1170
      %1172 = vrot.lane.b32.xlu0 %v1155, 127
      %v1173 = vpop.permute.xlu0 %1172
      %1174 = vrot.lane.b32.xlu0 %v1157, 127
      %v1175 = vpop.permute.xlu0 %1174
      %vm1176 = vcmask 1039360
      %v1177 = vsel %vm1176, %v1159, %v1161
      %v1178 = vsel %vm1176, %v1161, %v1163
      %v1179 = vsel %vm1176, %v1163, %v1165
      %v1180 = vsel %vm1176, %v1165, %v1167
      %v1181 = vsel %vm1176, %v1167, %v1169
      %v1182 = vsel %vm1176, %v1169, %v1171
      %v1183 = vsel %vm1176, %v1171, %v1173
      %v1184 = vsel %vm1176, %v1173, %v1175
      %vm1185 = vcmask 31744
      %v1186 = vsel %vm1185, %v1135, 0
      %vm1188 = vcmask 1043456
      %v1189 = vsel %vm1188, %v1177, 0
      %v1191 = vsel %vm1188, %v1178, 0
      %v1193 = vsel %vm1188, %v1179, 0
      %v1195 = vsel %vm1188, %v1180, 0
      %v1197 = vsel %vm1188, %v1181, 0
      %v1199 = vsel %vm1188, %v1182, 0
      %v1201 = vsel %vm1188, %v1183, 0
      %v1203 = vsel %vm1188, %v1184, 0
      %1205 = vmatpush.msra.mxu0 0.0
      %1206 = vmatpush.msra.mxu0 0.0
      %1207 = vmatpush.msra.mxu0 0.0
      %1208 = vmatpush.msra.mxu0 0.0
      %1209 = vmatpush.msra.mxu0 0.0
      %1210 = vmatpush.msra.mxu0 0.0
      %1211 = vmatpush.msra.mxu0 0.0
      %1212 = vmatpush.msra.mxu0 0.0
      %1213 = vmatpush.msra.mxu0 0.0
      %1214 = vmatpush.msra.mxu0 0.0
      %1215 = vmatpush.msra.mxu0 0.0
      %1216 = vmatpush.msra.mxu0 0.0
      %1217 = vmatpush.msra.mxu0 0.0
      %1218 = vmatpush.msra.mxu0 0.0
      %1219 = vmatpush.msra.mxu0 0.0
      %1220 = vmatpush.msra.mxu0 %v1189
      %1221 = vmatmul.f32.gmra.mxu0 %v1186
      %v1222 = vpop.f32.mrf.mxu0
      %v1223 = vadd.f32 0.0, %v1222
      %1224 = vdwg.mxu0
      %1225 = vmatpush.msra.mxu0 0.0
      %1226 = vmatpush.msra.mxu0 0.0
      %1227 = vmatpush.msra.mxu0 0.0
      %1228 = vmatpush.msra.mxu0 0.0
      %1229 = vmatpush.msra.mxu0 0.0
      %1230 = vmatpush.msra.mxu0 0.0
      %1231 = vmatpush.msra.mxu0 0.0
      %1232 = vmatpush.msra.mxu0 0.0
      %1233 = vmatpush.msra.mxu0 0.0
      %1234 = vmatpush.msra.mxu0 0.0
      %1235 = vmatpush.msra.mxu0 0.0
      %1236 = vmatpush.msra.mxu0 0.0
      %1237 = vmatpush.msra.mxu0 0.0
      %1238 = vmatpush.msra.mxu0 0.0
      %1239 = vmatpush.msra.mxu0 0.0
      %1240 = vmatpush.msra.mxu0 %v1191
      %1241 = vmatmul.f32.gmra.mxu0 %v1186
      %v1242 = vpop.f32.mrf.mxu0
      %v1243 = vadd.f32 0.0, %v1242
      %1244 = vdwg.mxu0
      %1245 = vmatpush.msra.mxu0 0.0
      %1246 = vmatpush.msra.mxu0 0.0
      %1247 = vmatpush.msra.mxu0 0.0
      %1248 = vmatpush.msra.mxu0 0.0
      %1249 = vmatpush.msra.mxu0 0.0
      %1250 = vmatpush.msra.mxu0 0.0
      %1251 = vmatpush.msra.mxu0 0.0
      %1252 = vmatpush.msra.mxu0 0.0
      %1253 = vmatpush.msra.mxu0 0.0
      %1254 = vmatpush.msra.mxu0 0.0
      %1255 = vmatpush.msra.mxu0 0.0
      %1256 = vmatpush.msra.mxu0 0.0
      %1257 = vmatpush.msra.mxu0 0.0
      %1258 = vmatpush.msra.mxu0 0.0
      %1259 = vmatpush.msra.mxu0 0.0
      %1260 = vmatpush.msra.mxu0 %v1193
      %1261 = vmatmul.f32.gmra.mxu0 %v1186
      %v1262 = vpop.f32.mrf.mxu0
      %v1263 = vadd.f32 0.0, %v1262
      %1264 = vdwg.mxu0
      %1265 = vmatpush.msra.mxu0 0.0
      %1266 = vmatpush.msra.mxu0 0.0
      %1267 = vmatpush.msra.mxu0 0.0
      %1268 = vmatpush.msra.mxu0 0.0
      %1269 = vmatpush.msra.mxu0 0.0
      %1270 = vmatpush.msra.mxu0 0.0
      %1271 = vmatpush.msra.mxu0 0.0
      %1272 = vmatpush.msra.mxu0 0.0
      %1273 = vmatpush.msra.mxu0 0.0
      %1274 = vmatpush.msra.mxu0 0.0
      %1275 = vmatpush.msra.mxu0 0.0
      %1276 = vmatpush.msra.mxu0 0.0
      %1277 = vmatpush.msra.mxu0 0.0
      %1278 = vmatpush.msra.mxu0 0.0
      %1279 = vmatpush.msra.mxu0 0.0
      %1280 = vmatpush.msra.mxu0 %v1195
      %1281 = vmatmul.f32.gmra.mxu0 %v1186
      %v1282 = vpop.f32.mrf.mxu0
      %v1283 = vadd.f32 0.0, %v1282
      %1284 = vdwg.mxu0
      %1285 = vmatpush.msra.mxu0 0.0
      %1286 = vmatpush.msra.mxu0 0.0
      %1287 = vmatpush.msra.mxu0 0.0
      %1288 = vmatpush.msra.mxu0 0.0
      %1289 = vmatpush.msra.mxu0 0.0
      %1290 = vmatpush.msra.mxu0 0.0
      %1291 = vmatpush.msra.mxu0 0.0
      %1292 = vmatpush.msra.mxu0 0.0
      %1293 = vmatpush.msra.mxu0 0.0
      %1294 = vmatpush.msra.mxu0 0.0
      %1295 = vmatpush.msra.mxu0 0.0
      %1296 = vmatpush.msra.mxu0 0.0
      %1297 = vmatpush.msra.mxu0 0.0
      %1298 = vmatpush.msra.mxu0 0.0
      %1299 = vmatpush.msra.mxu0 0.0
      %1300 = vmatpush.msra.mxu0 %v1197
      %1301 = vmatmul.f32.gmra.mxu0 %v1186
      %v1302 = vpop.f32.mrf.mxu0
      %v1303 = vadd.f32 0.0, %v1302
      %1304 = vdwg.mxu0
      %1305 = vmatpush.msra.mxu0 0.0
      %1306 = vmatpush.msra.mxu0 0.0
      %1307 = vmatpush.msra.mxu0 0.0
      %1308 = vmatpush.msra.mxu0 0.0
      %1309 = vmatpush.msra.mxu0 0.0
      %1310 = vmatpush.msra.mxu0 0.0
      %1311 = vmatpush.msra.mxu0 0.0
      %1312 = vmatpush.msra.mxu0 0.0
      %1313 = vmatpush.msra.mxu0 0.0
      %1314 = vmatpush.msra.mxu0 0.0
      %1315 = vmatpush.msra.mxu0 0.0
      %1316 = vmatpush.msra.mxu0 0.0
      %1317 = vmatpush.msra.mxu0 0.0
      %1318 = vmatpush.msra.mxu0 0.0
      %1319 = vmatpush.msra.mxu0 0.0
      %1320 = vmatpush.msra.mxu0 %v1199
      %1321 = vmatmul.f32.gmra.mxu0 %v1186
      %v1322 = vpop.f32.mrf.mxu0
      %v1323 = vadd.f32 0.0, %v1322
      %1324 = vdwg.mxu0
      %1325 = vmatpush.msra.mxu0 0.0
      %1326 = vmatpush.msra.mxu0 0.0
      %1327 = vmatpush.msra.mxu0 0.0
      %1328 = vmatpush.msra.mxu0 0.0
      %1329 = vmatpush.msra.mxu0 0.0
      %1330 = vmatpush.msra.mxu0 0.0
      %1331 = vmatpush.msra.mxu0 0.0
      %1332 = vmatpush.msra.mxu0 0.0
      %1333 = vmatpush.msra.mxu0 0.0
      %1334 = vmatpush.msra.mxu0 0.0
      %1335 = vmatpush.msra.mxu0 0.0
      %1336 = vmatpush.msra.mxu0 0.0
      %1337 = vmatpush.msra.mxu0 0.0
      %1338 = vmatpush.msra.mxu0 0.0
      %1339 = vmatpush.msra.mxu0 0.0
      %1340 = vmatpush.msra.mxu0 %v1201
      %1341 = vmatmul.f32.gmra.mxu0 %v1186
      %v1342 = vpop.f32.mrf.mxu0
      %v1343 = vadd.f32 0.0, %v1342
      %1344 = vdwg.mxu0
      %1345 = vmatpush.msra.mxu0 0.0
      %1346 = vmatpush.msra.mxu0 0.0
      %1347 = vmatpush.msra.mxu0 0.0
      %1348 = vmatpush.msra.mxu0 0.0
      %1349 = vmatpush.msra.mxu0 0.0
      %1350 = vmatpush.msra.mxu0 0.0
      %1351 = vmatpush.msra.mxu0 0.0
      %1352 = vmatpush.msra.mxu0 0.0
      %1353 = vmatpush.msra.mxu0 0.0
      %1354 = vmatpush.msra.mxu0 0.0
      %1355 = vmatpush.msra.mxu0 0.0
      %1356 = vmatpush.msra.mxu0 0.0
      %1357 = vmatpush.msra.mxu0 0.0
      %1358 = vmatpush.msra.mxu0 0.0
      %1359 = vmatpush.msra.mxu0 0.0
      %1360 = vmatpush.msra.mxu0 %v1203
      %1361 = vmatmul.f32.gmra.mxu0 %v1186
      %v1362 = vpop.f32.mrf.mxu0
      %v1363 = vadd.f32 0.0, %v1362
      %1364 = vdwg.mxu0
      %1365 = vst [vmem:[#allocation1] ss:$2 sm:$0xff] %v1127
      %s1366 = scalar_lea.vmem [#allocation1], 16
      %1367 = vst [vmem:[%s1366] ss:$2 sm:$0xff] %v1128
      %s1368 = scalar_lea.vmem [#allocation1], 32
      %1369 = vst [vmem:[%s1368] ss:$2 sm:$0xff] %v1129
      %s1370 = scalar_lea.vmem [#allocation1], 48
      %1371 = vst [vmem:[%s1370] ss:$2 sm:$0xff] %v1130
      %v1372 = vld.sshfl [vmem:[#allocation1] sm:$0xff pattern:$0x75316420]
      %v1373 = vld.sshfl [vmem:[#allocation1 + $0x8] sm:$0xff pattern:$0x75316420]
      %v1374 = vld.sshfl [vmem:[#allocation1 + $0x10] sm:$0xff pattern:$0x75316420]
      %v1375 = vld.sshfl [vmem:[#allocation1 + $0x18] sm:$0xff pattern:$0x75316420]
      %v1376 = vld.sshfl [vmem:[#allocation1 + $0x20] sm:$0xff pattern:$0x75316420]
      %v1377 = vld.sshfl [vmem:[#allocation1 + $0x28] sm:$0xff pattern:$0x75316420]
      %v1378 = vld.sshfl [vmem:[#allocation1 + $0x30] sm:$0xff pattern:$0x75316420]
      %v1379 = vld.sshfl [vmem:[#allocation1 + $0x38] sm:$0xff pattern:$0x75316420]
      %v1380 = vsel %vm1185, %v1132, 0
      %v1382 = vsel %vm1188, %v1372, 0
      %v1384 = vsel %vm1188, %v1373, 0
      %v1386 = vsel %vm1188, %v1374, 0
      %v1388 = vsel %vm1188, %v1375, 0
      %v1390 = vsel %vm1188, %v1376, 0
      %v1392 = vsel %vm1188, %v1377, 0
      %v1394 = vsel %vm1188, %v1378, 0
      %v1396 = vsel %vm1188, %v1379, 0
      %1398 = vmatpush.msra.mxu0 0.0
      %1399 = vmatpush.msra.mxu0 0.0
      %1400 = vmatpush.msra.mxu0 0.0
      %1401 = vmatpush.msra.mxu0 0.0
      %1402 = vmatpush.msra.mxu0 0.0
      %1403 = vmatpush.msra.mxu0 0.0
      %1404 = vmatpush.msra.mxu0 0.0
      %1405 = vmatpush.msra.mxu0 0.0
      %1406 = vmatpush.msra.mxu0 0.0
      %1407 = vmatpush.msra.mxu0 0.0
      %1408 = vmatpush.msra.mxu0 0.0
      %1409 = vmatpush.msra.mxu0 0.0
      %1410 = vmatpush.msra.mxu0 0.0
      %1411 = vmatpush.msra.mxu0 0.0
      %1412 = vmatpush.msra.mxu0 0.0
      %1413 = vmatpush.msra.mxu0 %v1382
      %1414 = vmatmul.f32.gmra.mxu0 %v1380
      %v1415 = vpop.f32.mrf.mxu0
      %v1416 = vadd.f32 %v1223, %v1415
      %1417 = vdwg.mxu0
      %1418 = vmatpush.msra.mxu0 0.0
      %1419 = vmatpush.msra.mxu0 0.0
      %1420 = vmatpush.msra.mxu0 0.0
      %1421 = vmatpush.msra.mxu0 0.0
      %1422 = vmatpush.msra.mxu0 0.0
      %1423 = vmatpush.msra.mxu0 0.0
      %1424 = vmatpush.msra.mxu0 0.0
      %1425 = vmatpush.msra.mxu0 0.0
      %1426 = vmatpush.msra.mxu0 0.0
      %1427 = vmatpush.msra.mxu0 0.0
      %1428 = vmatpush.msra.mxu0 0.0
      %1429 = vmatpush.msra.mxu0 0.0
      %1430 = vmatpush.msra.mxu0 0.0
      %1431 = vmatpush.msra.mxu0 0.0
      %1432 = vmatpush.msra.mxu0 0.0
      %1433 = vmatpush.msra.mxu0 %v1384
      %1434 = vmatmul.f32.gmra.mxu0 %v1380
      %v1435 = vpop.f32.mrf.mxu0
      %v1436 = vadd.f32 %v1243, %v1435
      %1437 = vdwg.mxu0
      %1438 = vmatpush.msra.mxu0 0.0
      %1439 = vmatpush.msra.mxu0 0.0
      %1440 = vmatpush.msra.mxu0 0.0
      %1441 = vmatpush.msra.mxu0 0.0
      %1442 = vmatpush.msra.mxu0 0.0
      %1443 = vmatpush.msra.mxu0 0.0
      %1444 = vmatpush.msra.mxu0 0.0
      %1445 = vmatpush.msra.mxu0 0.0
      %1446 = vmatpush.msra.mxu0 0.0
      %1447 = vmatpush.msra.mxu0 0.0
      %1448 = vmatpush.msra.mxu0 0.0
      %1449 = vmatpush.msra.mxu0 0.0
      %1450 = vmatpush.msra.mxu0 0.0
      %1451 = vmatpush.msra.mxu0 0.0
      %1452 = vmatpush.msra.mxu0 0.0
      %1453 = vmatpush.msra.mxu0 %v1386
      %1454 = vmatmul.f32.gmra.mxu0 %v1380
      %v1455 = vpop.f32.mrf.mxu0
      %v1456 = vadd.f32 %v1263, %v1455
      %1457 = vdwg.mxu0
      %1458 = vmatpush.msra.mxu0 0.0
      %1459 = vmatpush.msra.mxu0 0.0
      %1460 = vmatpush.msra.mxu0 0.0
      %1461 = vmatpush.msra.mxu0 0.0
      %1462 = vmatpush.msra.mxu0 0.0
      %1463 = vmatpush.msra.mxu0 0.0
      %1464 = vmatpush.msra.mxu0 0.0
      %1465 = vmatpush.msra.mxu0 0.0
      %1466 = vmatpush.msra.mxu0 0.0
      %1467 = vmatpush.msra.mxu0 0.0
      %1468 = vmatpush.msra.mxu0 0.0
      %1469 = vmatpush.msra.mxu0 0.0
      %1470 = vmatpush.msra.mxu0 0.0
      %1471 = vmatpush.msra.mxu0 0.0
      %1472 = vmatpush.msra.mxu0 0.0
      %1473 = vmatpush.msra.mxu0 %v1388
      %1474 = vmatmul.f32.gmra.mxu0 %v1380
      %v1475 = vpop.f32.mrf.mxu0
      %v1476 = vadd.f32 %v1283, %v1475
      %1477 = vdwg.mxu0
      %1478 = vmatpush.msra.mxu0 0.0
      %1479 = vmatpush.msra.mxu0 0.0
      %1480 = vmatpush.msra.mxu0 0.0
      %1481 = vmatpush.msra.mxu0 0.0
      %1482 = vmatpush.msra.mxu0 0.0
      %1483 = vmatpush.msra.mxu0 0.0
      %1484 = vmatpush.msra.mxu0 0.0
      %1485 = vmatpush.msra.mxu0 0.0
      %1486 = vmatpush.msra.mxu0 0.0
      %1487 = vmatpush.msra.mxu0 0.0
      %1488 = vmatpush.msra.mxu0 0.0
      %1489 = vmatpush.msra.mxu0 0.0
      %1490 = vmatpush.msra.mxu0 0.0
      %1491 = vmatpush.msra.mxu0 0.0
      %1492 = vmatpush.msra.mxu0 0.0
      %1493 = vmatpush.msra.mxu0 %v1390
      %1494 = vmatmul.f32.gmra.mxu0 %v1380
      %v1495 = vpop.f32.mrf.mxu0
      %v1496 = vadd.f32 %v1303, %v1495
      %1497 = vdwg.mxu0
      %1498 = vmatpush.msra.mxu0 0.0
      %1499 = vmatpush.msra.mxu0 0.0
      %1500 = vmatpush.msra.mxu0 0.0
      %1501 = vmatpush.msra.mxu0 0.0
      %1502 = vmatpush.msra.mxu0 0.0
      %1503 = vmatpush.msra.mxu0 0.0
      %1504 = vmatpush.msra.mxu0 0.0
      %1505 = vmatpush.msra.mxu0 0.0
      %1506 = vmatpush.msra.mxu0 0.0
      %1507 = vmatpush.msra.mxu0 0.0
      %1508 = vmatpush.msra.mxu0 0.0
      %1509 = vmatpush.msra.mxu0 0.0
      %1510 = vmatpush.msra.mxu0 0.0
      %1511 = vmatpush.msra.mxu0 0.0
      %1512 = vmatpush.msra.mxu0 0.0
      %1513 = vmatpush.msra.mxu0 %v1392
      %1514 = vmatmul.f32.gmra.mxu0 %v1380
      %v1515 = vpop.f32.mrf.mxu0
      %v1516 = vadd.f32 %v1323, %v1515
      %1517 = vdwg.mxu0
      %1518 = vmatpush.msra.mxu0 0.0
      %1519 = vmatpush.msra.mxu0 0.0
      %1520 = vmatpush.msra.mxu0 0.0
      %1521 = vmatpush.msra.mxu0 0.0
      %1522 = vmatpush.msra.mxu0 0.0
      %1523 = vmatpush.msra.mxu0 0.0
      %1524 = vmatpush.msra.mxu0 0.0
      %1525 = vmatpush.msra.mxu0 0.0
      %1526 = vmatpush.msra.mxu0 0.0
      %1527 = vmatpush.msra.mxu0 0.0
      %1528 = vmatpush.msra.mxu0 0.0
      %1529 = vmatpush.msra.mxu0 0.0
      %1530 = vmatpush.msra.mxu0 0.0
      %1531 = vmatpush.msra.mxu0 0.0
      %1532 = vmatpush.msra.mxu0 0.0
      %1533 = vmatpush.msra.mxu0 %v1394
      %1534 = vmatmul.f32.gmra.mxu0 %v1380
      %v1535 = vpop.f32.mrf.mxu0
      %v1536 = vadd.f32 %v1343, %v1535
      %1537 = vdwg.mxu0
      %1538 = vmatpush.msra.mxu0 0.0
      %1539 = vmatpush.msra.mxu0 0.0
      %1540 = vmatpush.msra.mxu0 0.0
      %1541 = vmatpush.msra.mxu0 0.0
      %1542 = vmatpush.msra.mxu0 0.0
      %1543 = vmatpush.msra.mxu0 0.0
      %1544 = vmatpush.msra.mxu0 0.0
      %1545 = vmatpush.msra.mxu0 0.0
      %1546 = vmatpush.msra.mxu0 0.0
      %1547 = vmatpush.msra.mxu0 0.0
      %1548 = vmatpush.msra.mxu0 0.0
      %1549 = vmatpush.msra.mxu0 0.0
      %1550 = vmatpush.msra.mxu0 0.0
      %1551 = vmatpush.msra.mxu0 0.0
      %1552 = vmatpush.msra.mxu0 0.0
      %1553 = vmatpush.msra.mxu0 %v1396
      %1554 = vmatmul.f32.gmra.mxu0 %v1380
      %v1555 = vpop.f32.mrf.mxu0
      %v1556 = vadd.f32 %v1363, %v1555
      %1557 = vdwg.mxu0
      %1558 = vrot.lane.b32.xlu0 %v1132, 120
      %v1559 = vpop.permute.xlu0 %1558
      %1560 = vst [vmem:[#allocation1] ss:$2 sm:$0xff] %v1127
      %s1561 = scalar_lea.vmem [#allocation1], 16
      %1562 = vst [vmem:[%s1561] ss:$2 sm:$0xff] %v1128
      %s1563 = scalar_lea.vmem [#allocation1], 32
      %1564 = vst [vmem:[%s1563] ss:$2 sm:$0xff] %v1129
      %s1565 = scalar_lea.vmem [#allocation1], 48
      %1566 = vst [vmem:[%s1565] ss:$2 sm:$0xff] %v1130
      %v1567 = vld.sshfl [vmem:[#allocation1] sm:$0xff pattern:$0x75316420]
      %v1568 = vld.sshfl [vmem:[#allocation1 + $0x8] sm:$0xff pattern:$0x75316420]
      %v1569 = vld.sshfl [vmem:[#allocation1 + $0x10] sm:$0xff pattern:$0x75316420]
      %v1570 = vld.sshfl [vmem:[#allocation1 + $0x18] sm:$0xff pattern:$0x75316420]
      %v1571 = vld.sshfl [vmem:[#allocation1 + $0x20] sm:$0xff pattern:$0x75316420]
      %v1572 = vld.sshfl [vmem:[#allocation1 + $0x28] sm:$0xff pattern:$0x75316420]
      %v1573 = vld.sshfl [vmem:[#allocation1 + $0x30] sm:$0xff pattern:$0x75316420]
      %v1574 = vld.sshfl [vmem:[#allocation1 + $0x38] sm:$0xff pattern:$0x75316420]
      %1575 = vst [vmem:[#allocation1] ss:$2 sm:$0xff] %v1131
      %v1576 = vld.sshfl [vmem:[#allocation1] sm:$0xff pattern:$0x75316420]
      %1577 = vrot.lane.b32.xlu0 %v1567, 126
      %v1578 = vpop.permute.xlu0 %1577
      %1579 = vrot.lane.b32.xlu0 %v1568, 126
      %v1580 = vpop.permute.xlu0 %1579
      %1581 = vrot.lane.b32.xlu0 %v1569, 126
      %v1582 = vpop.permute.xlu0 %1581
      %1583 = vrot.lane.b32.xlu0 %v1570, 126
      %v1584 = vpop.permute.xlu0 %1583
      %1585 = vrot.lane.b32.xlu0 %v1571, 126
      %v1586 = vpop.permute.xlu0 %1585
      %1587 = vrot.lane.b32.xlu0 %v1572, 126
      %v1588 = vpop.permute.xlu0 %1587
      %1589 = vrot.lane.b32.xlu0 %v1573, 126
      %v1590 = vpop.permute.xlu0 %1589
      %1591 = vrot.lane.b32.xlu0 %v1574, 126
      %v1592 = vpop.permute.xlu0 %1591
      %1593 = vrot.lane.b32.xlu0 %v1576, 126
      %v1594 = vpop.permute.xlu0 %1593
      %vm1595 = vcmask 1031168
      %v1596 = vsel %vm1595, %v1578, %v1580
      %v1597 = vsel %vm1595, %v1580, %v1582
      %v1598 = vsel %vm1595, %v1582, %v1584
      %v1599 = vsel %vm1595, %v1584, %v1586
      %v1600 = vsel %vm1595, %v1586, %v1588
      %v1601 = vsel %vm1595, %v1588, %v1590
      %v1602 = vsel %vm1595, %v1590, %v1592
      %v1603 = vsel %vm1595, %v1592, %v1594
      %v1604 = vsel %vm1185, %v1559, 0
      %v1606 = vsel %vm1188, %v1596, 0
      %v1608 = vsel %vm1188, %v1597, 0
      %v1610 = vsel %vm1188, %v1598, 0
      %v1612 = vsel %vm1188, %v1599, 0
      %v1614 = vsel %vm1188, %v1600, 0
      %v1616 = vsel %vm1188, %v1601, 0
      %v1618 = vsel %vm1188, %v1602, 0
      %v1620 = vsel %vm1188, %v1603, 0
      %1622 = vmatpush.msra.mxu0 0.0
      %1623 = vmatpush.msra.mxu0 0.0
      %1624 = vmatpush.msra.mxu0 0.0
      %1625 = vmatpush.msra.mxu0 0.0
      %1626 = vmatpush.msra.mxu0 0.0
      %1627 = vmatpush.msra.mxu0 0.0
      %1628 = vmatpush.msra.mxu0 0.0
      %1629 = vmatpush.msra.mxu0 0.0
      %1630 = vmatpush.msra.mxu0 0.0
      %1631 = vmatpush.msra.mxu0 0.0
      %1632 = vmatpush.msra.mxu0 0.0
      %1633 = vmatpush.msra.mxu0 0.0
      %1634 = vmatpush.msra.mxu0 0.0
      %1635 = vmatpush.msra.mxu0 0.0
      %1636 = vmatpush.msra.mxu0 0.0
      %1637 = vmatpush.msra.mxu0 %v1606
      %1638 = vmatmul.f32.gmra.mxu0 %v1604
      %v1639 = vpop.f32.mrf.mxu0
      %v1640 = vadd.f32 0.0, %v1639
      %1641 = vdwg.mxu0
      %1642 = vmatpush.msra.mxu0 0.0
      %1643 = vmatpush.msra.mxu0 0.0
      %1644 = vmatpush.msra.mxu0 0.0
      %1645 = vmatpush.msra.mxu0 0.0
      %1646 = vmatpush.msra.mxu0 0.0
      %1647 = vmatpush.msra.mxu0 0.0
      %1648 = vmatpush.msra.mxu0 0.0
      %1649 = vmatpush.msra.mxu0 0.0
      %1650 = vmatpush.msra.mxu0 0.0
      %1651 = vmatpush.msra.mxu0 0.0
      %1652 = vmatpush.msra.mxu0 0.0
      %1653 = vmatpush.msra.mxu0 0.0
      %1654 = vmatpush.msra.mxu0 0.0
      %1655 = vmatpush.msra.mxu0 0.0
      %1656 = vmatpush.msra.mxu0 0.0
      %1657 = vmatpush.msra.mxu0 %v1608
      %1658 = vmatmul.f32.gmra.mxu0 %v1604
      %v1659 = vpop.f32.mrf.mxu0
      %v1660 = vadd.f32 0.0, %v1659
      %1661 = vdwg.mxu0
      %1662 = vmatpush.msra.mxu0 0.0
      %1663 = vmatpush.msra.mxu0 0.0
      %1664 = vmatpush.msra.mxu0 0.0
      %1665 = vmatpush.msra.mxu0 0.0
      %1666 = vmatpush.msra.mxu0 0.0
      %1667 = vmatpush.msra.mxu0 0.0
      %1668 = vmatpush.msra.mxu0 0.0
      %1669 = vmatpush.msra.mxu0 0.0
      %1670 = vmatpush.msra.mxu0 0.0
      %1671 = vmatpush.msra.mxu0 0.0
      %1672 = vmatpush.msra.mxu0 0.0
      %1673 = vmatpush.msra.mxu0 0.0
      %1674 = vmatpush.msra.mxu0 0.0
      %1675 = vmatpush.msra.mxu0 0.0
      %1676 = vmatpush.msra.mxu0 0.0
      %1677 = vmatpush.msra.mxu0 %v1610
      %1678 = vmatmul.f32.gmra.mxu0 %v1604
      %v1679 = vpop.f32.mrf.mxu0
      %v1680 = vadd.f32 0.0, %v1679
      %1681 = vdwg.mxu0
      %1682 = vmatpush.msra.mxu0 0.0
      %1683 = vmatpush.msra.mxu0 0.0
      %1684 = vmatpush.msra.mxu0 0.0
      %1685 = vmatpush.msra.mxu0 0.0
      %1686 = vmatpush.msra.mxu0 0.0
      %1687 = vmatpush.msra.mxu0 0.0
      %1688 = vmatpush.msra.mxu0 0.0
      %1689 = vmatpush.msra.mxu0 0.0
      %1690 = vmatpush.msra.mxu0 0.0
      %1691 = vmatpush.msra.mxu0 0.0
      %1692 = vmatpush.msra.mxu0 0.0
      %1693 = vmatpush.msra.mxu0 0.0
      %1694 = vmatpush.msra.mxu0 0.0
      %1695 = vmatpush.msra.mxu0 0.0
      %1696 = vmatpush.msra.mxu0 0.0
      %1697 = vmatpush.msra.mxu0 %v1612
      %1698 = vmatmul.f32.gmra.mxu0 %v1604
      %v1699 = vpop.f32.mrf.mxu0
      %v1700 = vadd.f32 0.0, %v1699
      %1701 = vdwg.mxu0
      %1702 = vmatpush.msra.mxu0 0.0
      %1703 = vmatpush.msra.mxu0 0.0
      %1704 = vmatpush.msra.mxu0 0.0
      %1705 = vmatpush.msra.mxu0 0.0
      %1706 = vmatpush.msra.mxu0 0.0
      %1707 = vmatpush.msra.mxu0 0.0
      %1708 = vmatpush.msra.mxu0 0.0
      %1709 = vmatpush.msra.mxu0 0.0
      %1710 = vmatpush.msra.mxu0 0.0
      %1711 = vmatpush.msra.mxu0 0.0
      %1712 = vmatpush.msra.mxu0 0.0
      %1713 = vmatpush.msra.mxu0 0.0
      %1714 = vmatpush.msra.mxu0 0.0
      %1715 = vmatpush.msra.mxu0 0.0
      %1716 = vmatpush.msra.mxu0 0.0
      %1717 = vmatpush.msra.mxu0 %v1614
      %1718 = vmatmul.f32.gmra.mxu0 %v1604
      %v1719 = vpop.f32.mrf.mxu0
      %v1720 = vadd.f32 0.0, %v1719
      %1721 = vdwg.mxu0
      %1722 = vmatpush.msra.mxu0 0.0
      %1723 = vmatpush.msra.mxu0 0.0
      %1724 = vmatpush.msra.mxu0 0.0
      %1725 = vmatpush.msra.mxu0 0.0
      %1726 = vmatpush.msra.mxu0 0.0
      %1727 = vmatpush.msra.mxu0 0.0
      %1728 = vmatpush.msra.mxu0 0.0
      %1729 = vmatpush.msra.mxu0 0.0
      %1730 = vmatpush.msra.mxu0 0.0
      %1731 = vmatpush.msra.mxu0 0.0
      %1732 = vmatpush.msra.mxu0 0.0
      %1733 = vmatpush.msra.mxu0 0.0
      %1734 = vmatpush.msra.mxu0 0.0
      %1735 = vmatpush.msra.mxu0 0.0
      %1736 = vmatpush.msra.mxu0 0.0
      %1737 = vmatpush.msra.mxu0 %v1616
      %1738 = vmatmul.f32.gmra.mxu0 %v1604
      %v1739 = vpop.f32.mrf.mxu0
      %v1740 = vadd.f32 0.0, %v1739
      %1741 = vdwg.mxu0
      %1742 = vmatpush.msra.mxu0 0.0
      %1743 = vmatpush.msra.mxu0 0.0
      %1744 = vmatpush.msra.mxu0 0.0
      %1745 = vmatpush.msra.mxu0 0.0
      %1746 = vmatpush.msra.mxu0 0.0
      %1747 = vmatpush.msra.mxu0 0.0
      %1748 = vmatpush.msra.mxu0 0.0
      %1749 = vmatpush.msra.mxu0 0.0
      %1750 = vmatpush.msra.mxu0 0.0
      %1751 = vmatpush.msra.mxu0 0.0
      %1752 = vmatpush.msra.mxu0 0.0
      %1753 = vmatpush.msra.mxu0 0.0
      %1754 = vmatpush.msra.mxu0 0.0
      %1755 = vmatpush.msra.mxu0 0.0
      %1756 = vmatpush.msra.mxu0 0.0
      %1757 = vmatpush.msra.mxu0 %v1618
      %1758 = vmatmul.f32.gmra.mxu0 %v1604
      %v1759 = vpop.f32.mrf.mxu0
      %v1760 = vadd.f32 0.0, %v1759
      %1761 = vdwg.mxu0
      %1762 = vmatpush.msra.mxu0 0.0
      %1763 = vmatpush.msra.mxu0 0.0
      %1764 = vmatpush.msra.mxu0 0.0
      %1765 = vmatpush.msra.mxu0 0.0
      %1766 = vmatpush.msra.mxu0 0.0
      %1767 = vmatpush.msra.mxu0 0.0
      %1768 = vmatpush.msra.mxu0 0.0
      %1769 = vmatpush.msra.mxu0 0.0
      %1770 = vmatpush.msra.mxu0 0.0
      %1771 = vmatpush.msra.mxu0 0.0
      %1772 = vmatpush.msra.mxu0 0.0
      %1773 = vmatpush.msra.mxu0 0.0
      %1774 = vmatpush.msra.mxu0 0.0
      %1775 = vmatpush.msra.mxu0 0.0
      %1776 = vmatpush.msra.mxu0 0.0
      %1777 = vmatpush.msra.mxu0 %v1620
      %1778 = vmatmul.f32.gmra.mxu0 %v1604
      %v1779 = vpop.f32.mrf.mxu0
      %v1780 = vadd.f32 0.0, %v1779
      %1781 = vdwg.mxu0
      %v1782 = vadd.f32 %v1416, %v1640
      %v1783 = vadd.f32 %v1436, %v1660
      %v1784 = vadd.f32 %v1456, %v1680
      %v1785 = vadd.f32 %v1476, %v1700
      %v1786 = vadd.f32 %v1496, %v1720
      %v1787 = vadd.f32 %v1516, %v1740
      %v1788 = vadd.f32 %v1536, %v1760
      %v1789 = vadd.f32 %v1556, %v1780
      %1790 = vrot.lane.b32.xlu0 %v1132, 116
      %v1791 = vpop.permute.xlu0 %1790
      %1792 = vst [vmem:[#allocation1] ss:$2 sm:$0xff] %v1127
      %s1793 = scalar_lea.vmem [#allocation1], 16
      %1794 = vst [vmem:[%s1793] ss:$2 sm:$0xff] %v1128
      %s1795 = scalar_lea.vmem [#allocation1], 32
      %1796 = vst [vmem:[%s1795] ss:$2 sm:$0xff] %v1129
      %s1797 = scalar_lea.vmem [#allocation1], 48
      %1798 = vst [vmem:[%s1797] ss:$2 sm:$0xff] %v1130
      %v1799 = vld.sshfl [vmem:[#allocation1] sm:$0xff pattern:$0x75316420]
      %v1800 = vld.sshfl [vmem:[#allocation1 + $0x8] sm:$0xff pattern:$0x75316420]
      %v1801 = vld.sshfl [vmem:[#allocation1 + $0x10] sm:$0xff pattern:$0x75316420]
      %v1802 = vld.sshfl [vmem:[#allocation1 + $0x18] sm:$0xff pattern:$0x75316420]
      %v1803 = vld.sshfl [vmem:[#allocation1 + $0x20] sm:$0xff pattern:$0x75316420]
      %v1804 = vld.sshfl [vmem:[#allocation1 + $0x28] sm:$0xff pattern:$0x75316420]
      %v1805 = vld.sshfl [vmem:[#allocation1 + $0x30] sm:$0xff pattern:$0x75316420]
      %v1806 = vld.sshfl [vmem:[#allocation1 + $0x38] sm:$0xff pattern:$0x75316420]
      %1807 = vst [vmem:[#allocation1] ss:$2 sm:$0xff] %v1131
      %v1808 = vld.sshfl [vmem:[#allocation1] sm:$0xff pattern:$0x75316420]
      %1809 = vrot.lane.b32.xlu0 %v1799, 125
      %v1810 = vpop.permute.xlu0 %1809
      %1811 = vrot.lane.b32.xlu0 %v1800, 125
      %v1812 = vpop.permute.xlu0 %1811
      %1813 = vrot.lane.b32.xlu0 %v1801, 125
      %v1814 = vpop.permute.xlu0 %1813
      %1815 = vrot.lane.b32.xlu0 %v1802, 125
      %v1816 = vpop.permute.xlu0 %1815
      %1817 = vrot.lane.b32.xlu0 %v1803, 125
      %v1818 = vpop.permute.xlu0 %1817
      %1819 = vrot.lane.b32.xlu0 %v1804, 125
      %v1820 = vpop.permute.xlu0 %1819
      %1821 = vrot.lane.b32.xlu0 %v1805, 125
      %v1822 = vpop.permute.xlu0 %1821
      %1823 = vrot.lane.b32.xlu0 %v1806, 125
      %v1824 = vpop.permute.xlu0 %1823
      %1825 = vrot.lane.b32.xlu0 %v1808, 125
      %v1826 = vpop.permute.xlu0 %1825
      %vm1827 = vcmask 1022976
      %v1828 = vsel %vm1827, %v1810, %v1812
      %v1829 = vsel %vm1827, %v1812, %v1814
      %v1830 = vsel %vm1827, %v1814, %v1816
      %v1831 = vsel %vm1827, %v1816, %v1818
      %v1832 = vsel %vm1827, %v1818, %v1820
      %v1833 = vsel %vm1827, %v1820, %v1822
      %v1834 = vsel %vm1827, %v1822, %v1824
      %v1835 = vsel %vm1827, %v1824, %v1826
      %v1836 = vsel %vm1185, %v1791, 0
      %v1838 = vsel %vm1188, %v1828, 0
      %v1840 = vsel %vm1188, %v1829, 0
      %v1842 = vsel %vm1188, %v1830, 0
      %v1844 = vsel %vm1188, %v1831, 0
      %v1846 = vsel %vm1188, %v1832, 0
      %v1848 = vsel %vm1188, %v1833, 0
      %v1850 = vsel %vm1188, %v1834, 0
      %v1852 = vsel %vm1188, %v1835, 0
      %1854 = vmatpush.msra.mxu0 0.0
      %1855 = vmatpush.msra.mxu0 0.0
      %1856 = vmatpush.msra.mxu0 0.0
      %1857 = vmatpush.msra.mxu0 0.0
      %1858 = vmatpush.msra.mxu0 0.0
      %1859 = vmatpush.msra.mxu0 0.0
      %1860 = vmatpush.msra.mxu0 0.0
      %1861 = vmatpush.msra.mxu0 0.0
      %1862 = vmatpush.msra.mxu0 0.0
      %1863 = vmatpush.msra.mxu0 0.0
      %1864 = vmatpush.msra.mxu0 0.0
      %1865 = vmatpush.msra.mxu0 0.0
      %1866 = vmatpush.msra.mxu0 0.0
      %1867 = vmatpush.msra.mxu0 0.0
      %1868 = vmatpush.msra.mxu0 0.0
      %1869 = vmatpush.msra.mxu0 %v1838
      %1870 = vmatmul.f32.gmra.mxu0 %v1836
      %v1871 = vpop.f32.mrf.mxu0
      %v1872 = vadd.f32 0.0, %v1871
      %1873 = vdwg.mxu0
      %1874 = vmatpush.msra.mxu0 0.0
      %1875 = vmatpush.msra.mxu0 0.0
      %1876 = vmatpush.msra.mxu0 0.0
      %1877 = vmatpush.msra.mxu0 0.0
      %1878 = vmatpush.msra.mxu0 0.0
      %1879 = vmatpush.msra.mxu0 0.0
      %1880 = vmatpush.msra.mxu0 0.0
      %1881 = vmatpush.msra.mxu0 0.0
      %1882 = vmatpush.msra.mxu0 0.0
      %1883 = vmatpush.msra.mxu0 0.0
      %1884 = vmatpush.msra.mxu0 0.0
      %1885 = vmatpush.msra.mxu0 0.0
      %1886 = vmatpush.msra.mxu0 0.0
      %1887 = vmatpush.msra.mxu0 0.0
      %1888 = vmatpush.msra.mxu0 0.0
      %1889 = vmatpush.msra.mxu0 %v1840
      %1890 = vmatmul.f32.gmra.mxu0 %v1836
      %v1891 = vpop.f32.mrf.mxu0
      %v1892 = vadd.f32 0.0, %v1891
      %1893 = vdwg.mxu0
      %1894 = vmatpush.msra.mxu0 0.0
      %1895 = vmatpush.msra.mxu0 0.0
      %1896 = vmatpush.msra.mxu0 0.0
      %1897 = vmatpush.msra.mxu0 0.0
      %1898 = vmatpush.msra.mxu0 0.0
      %1899 = vmatpush.msra.mxu0 0.0
      %1900 = vmatpush.msra.mxu0 0.0
      %1901 = vmatpush.msra.mxu0 0.0
      %1902 = vmatpush.msra.mxu0 0.0
      %1903 = vmatpush.msra.mxu0 0.0
      %1904 = vmatpush.msra.mxu0 0.0
      %1905 = vmatpush.msra.mxu0 0.0
      %1906 = vmatpush.msra.mxu0 0.0
      %1907 = vmatpush.msra.mxu0 0.0
      %1908 = vmatpush.msra.mxu0 0.0
      %1909 = vmatpush.msra.mxu0 %v1842
      %1910 = vmatmul.f32.gmra.mxu0 %v1836
      %v1911 = vpop.f32.mrf.mxu0
      %v1912 = vadd.f32 0.0, %v1911
      %1913 = vdwg.mxu0
      %1914 = vmatpush.msra.mxu0 0.0
      %1915 = vmatpush.msra.mxu0 0.0
      %1916 = vmatpush.msra.mxu0 0.0
      %1917 = vmatpush.msra.mxu0 0.0
      %1918 = vmatpush.msra.mxu0 0.0
      %1919 = vmatpush.msra.mxu0 0.0
      %1920 = vmatpush.msra.mxu0 0.0
      %1921 = vmatpush.msra.mxu0 0.0
      %1922 = vmatpush.msra.mxu0 0.0
      %1923 = vmatpush.msra.mxu0 0.0
      %1924 = vmatpush.msra.mxu0 0.0
      %1925 = vmatpush.msra.mxu0 0.0
      %1926 = vmatpush.msra.mxu0 0.0
      %1927 = vmatpush.msra.mxu0 0.0
      %1928 = vmatpush.msra.mxu0 0.0
      %1929 = vmatpush.msra.mxu0 %v1844
      %1930 = vmatmul.f32.gmra.mxu0 %v1836
      %v1931 = vpop.f32.mrf.mxu0
      %v1932 = vadd.f32 0.0, %v1931
      %1933 = vdwg.mxu0
      %1934 = vmatpush.msra.mxu0 0.0
      %1935 = vmatpush.msra.mxu0 0.0
      %1936 = vmatpush.msra.mxu0 0.0
      %1937 = vmatpush.msra.mxu0 0.0
      %1938 = vmatpush.msra.mxu0 0.0
      %1939 = vmatpush.msra.mxu0 0.0
      %1940 = vmatpush.msra.mxu0 0.0
      %1941 = vmatpush.msra.mxu0 0.0
      %1942 = vmatpush.msra.mxu0 0.0
      %1943 = vmatpush.msra.mxu0 0.0
      %1944 = vmatpush.msra.mxu0 0.0
      %1945 = vmatpush.msra.mxu0 0.0
      %1946 = vmatpush.msra.mxu0 0.0
      %1947 = vmatpush.msra.mxu0 0.0
      %1948 = vmatpush.msra.mxu0 0.0
      %1949 = vmatpush.msra.mxu0 %v1846
      %1950 = vmatmul.f32.gmra.mxu0 %v1836
      %v1951 = vpop.f32.mrf.mxu0
      %v1952 = vadd.f32 0.0, %v1951
      %1953 = vdwg.mxu0
      %1954 = vmatpush.msra.mxu0 0.0
      %1955 = vmatpush.msra.mxu0 0.0
      %1956 = vmatpush.msra.mxu0 0.0
      %1957 = vmatpush.msra.mxu0 0.0
      %1958 = vmatpush.msra.mxu0 0.0
      %1959 = vmatpush.msra.mxu0 0.0
      %1960 = vmatpush.msra.mxu0 0.0
      %1961 = vmatpush.msra.mxu0 0.0
      %1962 = vmatpush.msra.mxu0 0.0
      %1963 = vmatpush.msra.mxu0 0.0
      %1964 = vmatpush.msra.mxu0 0.0
      %1965 = vmatpush.msra.mxu0 0.0
      %1966 = vmatpush.msra.mxu0 0.0
      %1967 = vmatpush.msra.mxu0 0.0
      %1968 = vmatpush.msra.mxu0 0.0
      %1969 = vmatpush.msra.mxu0 %v1848
      %1970 = vmatmul.f32.gmra.mxu0 %v1836
      %v1971 = vpop.f32.mrf.mxu0
      %v1972 = vadd.f32 0.0, %v1971
      %1973 = vdwg.mxu0
      %1974 = vmatpush.msra.mxu0 0.0
      %1975 = vmatpush.msra.mxu0 0.0
      %1976 = vmatpush.msra.mxu0 0.0
      %1977 = vmatpush.msra.mxu0 0.0
      %1978 = vmatpush.msra.mxu0 0.0
      %1979 = vmatpush.msra.mxu0 0.0
      %1980 = vmatpush.msra.mxu0 0.0
      %1981 = vmatpush.msra.mxu0 0.0
      %1982 = vmatpush.msra.mxu0 0.0
      %1983 = vmatpush.msra.mxu0 0.0
      %1984 = vmatpush.msra.mxu0 0.0
      %1985 = vmatpush.msra.mxu0 0.0
      %1986 = vmatpush.msra.mxu0 0.0
      %1987 = vmatpush.msra.mxu0 0.0
      %1988 = vmatpush.msra.mxu0 0.0
      %1989 = vmatpush.msra.mxu0 %v1850
      %1990 = vmatmul.f32.gmra.mxu0 %v1836
      %v1991 = vpop.f32.mrf.mxu0
      %v1992 = vadd.f32 0.0, %v1991
      %1993 = vdwg.mxu0
      %1994 = vmatpush.msra.mxu0 0.0
      %1995 = vmatpush.msra.mxu0 0.0
      %1996 = vmatpush.msra.mxu0 0.0
      %1997 = vmatpush.msra.mxu0 0.0
      %1998 = vmatpush.msra.mxu0 0.0
      %1999 = vmatpush.msra.mxu0 0.0
      %2000 = vmatpush.msra.mxu0 0.0
      %2001 = vmatpush.msra.mxu0 0.0
      %2002 = vmatpush.msra.mxu0 0.0
      %2003 = vmatpush.msra.mxu0 0.0
      %2004 = vmatpush.msra.mxu0 0.0
      %2005 = vmatpush.msra.mxu0 0.0
      %2006 = vmatpush.msra.mxu0 0.0
      %2007 = vmatpush.msra.mxu0 0.0
      %2008 = vmatpush.msra.mxu0 0.0
      %2009 = vmatpush.msra.mxu0 %v1852
      %2010 = vmatmul.f32.gmra.mxu0 %v1836
      %v2011 = vpop.f32.mrf.mxu0
      %v2012 = vadd.f32 0.0, %v2011
      %2013 = vdwg.mxu0
      %v2014 = vadd.f32 %v1782, %v1872
      %v2015 = vadd.f32 %v1783, %v1892
      %v2016 = vadd.f32 %v1784, %v1912
      %v2017 = vadd.f32 %v1785, %v1932
      %v2018 = vadd.f32 %v1786, %v1952
      %v2019 = vadd.f32 %v1787, %v1972
      %v2020 = vadd.f32 %v1788, %v1992
      %v2021 = vadd.f32 %v1789, %v2012
      %2022 = vrot.lane.b32.xlu0 %v1132, 112
      %v2023 = vpop.permute.xlu0 %2022
      %2024 = vst [vmem:[#allocation1] ss:$2 sm:$0xff] %v1127
      %s2025 = scalar_lea.vmem [#allocation1], 16
      %2026 = vst [vmem:[%s2025] ss:$2 sm:$0xff] %v1128
      %s2027 = scalar_lea.vmem [#allocation1], 32
      %2028 = vst [vmem:[%s2027] ss:$2 sm:$0xff] %v1129
      %s2029 = scalar_lea.vmem [#allocation1], 48
      %2030 = vst [vmem:[%s2029] ss:$2 sm:$0xff] %v1130
      %v2031 = vld.sshfl [vmem:[#allocation1] sm:$0xff pattern:$0x75316420]
      %v2032 = vld.sshfl [vmem:[#allocation1 + $0x8] sm:$0xff pattern:$0x75316420]
      %v2033 = vld.sshfl [vmem:[#allocation1 + $0x10] sm:$0xff pattern:$0x75316420]
      %v2034 = vld.sshfl [vmem:[#allocation1 + $0x18] sm:$0xff pattern:$0x75316420]
      %v2035 = vld.sshfl [vmem:[#allocation1 + $0x20] sm:$0xff pattern:$0x75316420]
      %v2036 = vld.sshfl [vmem:[#allocation1 + $0x28] sm:$0xff pattern:$0x75316420]
      %v2037 = vld.sshfl [vmem:[#allocation1 + $0x30] sm:$0xff pattern:$0x75316420]
      %v2038 = vld.sshfl [vmem:[#allocation1 + $0x38] sm:$0xff pattern:$0x75316420]
      %2039 = vst [vmem:[#allocation1] ss:$2 sm:$0xff] %v1131
      %v2040 = vld.sshfl [vmem:[#allocation1] sm:$0xff pattern:$0x75316420]
      %2041 = vrot.lane.b32.xlu0 %v2031, 124
      %v2042 = vpop.permute.xlu0 %2041
      %2043 = vrot.lane.b32.xlu0 %v2032, 124
      %v2044 = vpop.permute.xlu0 %2043
      %2045 = vrot.lane.b32.xlu0 %v2033, 124
      %v2046 = vpop.permute.xlu0 %2045
      %2047 = vrot.lane.b32.xlu0 %v2034, 124
      %v2048 = vpop.permute.xlu0 %2047
      %2049 = vrot.lane.b32.xlu0 %v2035, 124
      %v2050 = vpop.permute.xlu0 %2049
      %2051 = vrot.lane.b32.xlu0 %v2036, 124
      %v2052 = vpop.permute.xlu0 %2051
      %2053 = vrot.lane.b32.xlu0 %v2037, 124
      %v2054 = vpop.permute.xlu0 %2053
      %2055 = vrot.lane.b32.xlu0 %v2038, 124
      %v2056 = vpop.permute.xlu0 %2055
      %2057 = vrot.lane.b32.xlu0 %v2040, 124
      %v2058 = vpop.permute.xlu0 %2057
      %vm2059 = vcmask 1014784
      %v2060 = vsel %vm2059, %v2042, %v2044
      %v2061 = vsel %vm2059, %v2044, %v2046
      %v2062 = vsel %vm2059, %v2046, %v2048
      %v2063 = vsel %vm2059, %v2048, %v2050
      %v2064 = vsel %vm2059, %v2050, %v2052
      %v2065 = vsel %vm2059, %v2052, %v2054
      %v2066 = vsel %vm2059, %v2054, %v2056
      %v2067 = vsel %vm2059, %v2056, %v2058
      %v2068 = vsel %vm1185, %v2023, 0
      %v2070 = vsel %vm1188, %v2060, 0
      %v2072 = vsel %vm1188, %v2061, 0
      %v2074 = vsel %vm1188, %v2062, 0
      %v2076 = vsel %vm1188, %v2063, 0
      %v2078 = vsel %vm1188, %v2064, 0
      %v2080 = vsel %vm1188, %v2065, 0
      %v2082 = vsel %vm1188, %v2066, 0
      %v2084 = vsel %vm1188, %v2067, 0
      %2086 = vmatpush.msra.mxu0 0.0
      %2087 = vmatpush.msra.mxu0 0.0
      %2088 = vmatpush.msra.mxu0 0.0
      %2089 = vmatpush.msra.mxu0 0.0
      %2090 = vmatpush.msra.mxu0 0.0
      %2091 = vmatpush.msra.mxu0 0.0
      %2092 = vmatpush.msra.mxu0 0.0
      %2093 = vmatpush.msra.mxu0 0.0
      %2094 = vmatpush.msra.mxu0 0.0
      %2095 = vmatpush.msra.mxu0 0.0
      %2096 = vmatpush.msra.mxu0 0.0
      %2097 = vmatpush.msra.mxu0 0.0
      %2098 = vmatpush.msra.mxu0 0.0
      %2099 = vmatpush.msra.mxu0 0.0
      %2100 = vmatpush.msra.mxu0 0.0
      %2101 = vmatpush.msra.mxu0 %v2070
      %2102 = vmatmul.f32.gmra.mxu0 %v2068
      %v2103 = vpop.f32.mrf.mxu0
      %v2104 = vadd.f32 0.0, %v2103
      %2105 = vdwg.mxu0
      %2106 = vmatpush.msra.mxu0 0.0
      %2107 = vmatpush.msra.mxu0 0.0
      %2108 = vmatpush.msra.mxu0 0.0
      %2109 = vmatpush.msra.mxu0 0.0
      %2110 = vmatpush.msra.mxu0 0.0
      %2111 = vmatpush.msra.mxu0 0.0
      %2112 = vmatpush.msra.mxu0 0.0
      %2113 = vmatpush.msra.mxu0 0.0
      %2114 = vmatpush.msra.mxu0 0.0
      %2115 = vmatpush.msra.mxu0 0.0
      %2116 = vmatpush.msra.mxu0 0.0
      %2117 = vmatpush.msra.mxu0 0.0
      %2118 = vmatpush.msra.mxu0 0.0
      %2119 = vmatpush.msra.mxu0 0.0
      %2120 = vmatpush.msra.mxu0 0.0
      %2121 = vmatpush.msra.mxu0 %v2072
      %2122 = vmatmul.f32.gmra.mxu0 %v2068
      %v2123 = vpop.f32.mrf.mxu0
      %v2124 = vadd.f32 0.0, %v2123
      %2125 = vdwg.mxu0
      %2126 = vmatpush.msra.mxu0 0.0
      %2127 = vmatpush.msra.mxu0 0.0
      %2128 = vmatpush.msra.mxu0 0.0
      %2129 = vmatpush.msra.mxu0 0.0
      %2130 = vmatpush.msra.mxu0 0.0
      %2131 = vmatpush.msra.mxu0 0.0
      %2132 = vmatpush.msra.mxu0 0.0
      %2133 = vmatpush.msra.mxu0 0.0
      %2134 = vmatpush.msra.mxu0 0.0
      %2135 = vmatpush.msra.mxu0 0.0
      %2136 = vmatpush.msra.mxu0 0.0
      %2137 = vmatpush.msra.mxu0 0.0
      %2138 = vmatpush.msra.mxu0 0.0
      %2139 = vmatpush.msra.mxu0 0.0
      %2140 = vmatpush.msra.mxu0 0.0
      %2141 = vmatpush.msra.mxu0 %v2074
      %2142 = vmatmul.f32.gmra.mxu0 %v2068
      %v2143 = vpop.f32.mrf.mxu0
      %v2144 = vadd.f32 0.0, %v2143
      %2145 = vdwg.mxu0
      %2146 = vmatpush.msra.mxu0 0.0
      %2147 = vmatpush.msra.mxu0 0.0
      %2148 = vmatpush.msra.mxu0 0.0
      %2149 = vmatpush.msra.mxu0 0.0
      %2150 = vmatpush.msra.mxu0 0.0
      %2151 = vmatpush.msra.mxu0 0.0
      %2152 = vmatpush.msra.mxu0 0.0
      %2153 = vmatpush.msra.mxu0 0.0
      %2154 = vmatpush.msra.mxu0 0.0
      %2155 = vmatpush.msra.mxu0 0.0
      %2156 = vmatpush.msra.mxu0 0.0
      %2157 = vmatpush.msra.mxu0 0.0
      %2158 = vmatpush.msra.mxu0 0.0
      %2159 = vmatpush.msra.mxu0 0.0
      %2160 = vmatpush.msra.mxu0 0.0
      %2161 = vmatpush.msra.mxu0 %v2076
      %2162 = vmatmul.f32.gmra.mxu0 %v2068
      %v2163 = vpop.f32.mrf.mxu0
      %v2164 = vadd.f32 0.0, %v2163
      %2165 = vdwg.mxu0
      %2166 = vmatpush.msra.mxu0 0.0
      %2167 = vmatpush.msra.mxu0 0.0
      %2168 = vmatpush.msra.mxu0 0.0
      %2169 = vmatpush.msra.mxu0 0.0
      %2170 = vmatpush.msra.mxu0 0.0
      %2171 = vmatpush.msra.mxu0 0.0
      %2172 = vmatpush.msra.mxu0 0.0
      %2173 = vmatpush.msra.mxu0 0.0
      %2174 = vmatpush.msra.mxu0 0.0
      %2175 = vmatpush.msra.mxu0 0.0
      %2176 = vmatpush.msra.mxu0 0.0
      %2177 = vmatpush.msra.mxu0 0.0
      %2178 = vmatpush.msra.mxu0 0.0
      %2179 = vmatpush.msra.mxu0 0.0
      %2180 = vmatpush.msra.mxu0 0.0
      %2181 = vmatpush.msra.mxu0 %v2078
      %2182 = vmatmul.f32.gmra.mxu0 %v2068
      %v2183 = vpop.f32.mrf.mxu0
      %v2184 = vadd.f32 0.0, %v2183
      %2185 = vdwg.mxu0
      %2186 = vmatpush.msra.mxu0 0.0
      %2187 = vmatpush.msra.mxu0 0.0
      %2188 = vmatpush.msra.mxu0 0.0
      %2189 = vmatpush.msra.mxu0 0.0
      %2190 = vmatpush.msra.mxu0 0.0
      %2191 = vmatpush.msra.mxu0 0.0
      %2192 = vmatpush.msra.mxu0 0.0
      %2193 = vmatpush.msra.mxu0 0.0
      %2194 = vmatpush.msra.mxu0 0.0
      %2195 = vmatpush.msra.mxu0 0.0
      %2196 = vmatpush.msra.mxu0 0.0
      %2197 = vmatpush.msra.mxu0 0.0
      %2198 = vmatpush.msra.mxu0 0.0
      %2199 = vmatpush.msra.mxu0 0.0
      %2200 = vmatpush.msra.mxu0 0.0
      %2201 = vmatpush.msra.mxu0 %v2080
      %2202 = vmatmul.f32.gmra.mxu0 %v2068
      %v2203 = vpop.f32.mrf.mxu0
      %v2204 = vadd.f32 0.0, %v2203
      %2205 = vdwg.mxu0
      %2206 = vmatpush.msra.mxu0 0.0
      %2207 = vmatpush.msra.mxu0 0.0
      %2208 = vmatpush.msra.mxu0 0.0
      %2209 = vmatpush.msra.mxu0 0.0
      %2210 = vmatpush.msra.mxu0 0.0
      %2211 = vmatpush.msra.mxu0 0.0
      %2212 = vmatpush.msra.mxu0 0.0
      %2213 = vmatpush.msra.mxu0 0.0
      %2214 = vmatpush.msra.mxu0 0.0
      %2215 = vmatpush.msra.mxu0 0.0
      %2216 = vmatpush.msra.mxu0 0.0
      %2217 = vmatpush.msra.mxu0 0.0
      %2218 = vmatpush.msra.mxu0 0.0
      %2219 = vmatpush.msra.mxu0 0.0
      %2220 = vmatpush.msra.mxu0 0.0
      %2221 = vmatpush.msra.mxu0 %v2082
      %2222 = vmatmul.f32.gmra.mxu0 %v2068
      %v2223 = vpop.f32.mrf.mxu0
      %v2224 = vadd.f32 0.0, %v2223
      %2225 = vdwg.mxu0
      %2226 = vmatpush.msra.mxu0 0.0
      %2227 = vmatpush.msra.mxu0 0.0
      %2228 = vmatpush.msra.mxu0 0.0
      %2229 = vmatpush.msra.mxu0 0.0
      %2230 = vmatpush.msra.mxu0 0.0
      %2231 = vmatpush.msra.mxu0 0.0
      %2232 = vmatpush.msra.mxu0 0.0
      %2233 = vmatpush.msra.mxu0 0.0
      %2234 = vmatpush.msra.mxu0 0.0
      %2235 = vmatpush.msra.mxu0 0.0
      %2236 = vmatpush.msra.mxu0 0.0
      %2237 = vmatpush.msra.mxu0 0.0
      %2238 = vmatpush.msra.mxu0 0.0
      %2239 = vmatpush.msra.mxu0 0.0
      %2240 = vmatpush.msra.mxu0 0.0
      %2241 = vmatpush.msra.mxu0 %v2084
      %2242 = vmatmul.f32.gmra.mxu0 %v2068
      %v2243 = vpop.f32.mrf.mxu0
      %v2244 = vadd.f32 0.0, %v2243
      %2245 = vdwg.mxu0
      %v2246 = vadd.f32 %v2014, %v2104
      %v2247 = vadd.f32 %v2015, %v2124
      %v2248 = vadd.f32 %v2016, %v2144
      %v2249 = vadd.f32 %v2017, %v2164
      %v2250 = vadd.f32 %v2018, %v2184
      %v2251 = vadd.f32 %v2019, %v2204
      %v2252 = vadd.f32 %v2020, %v2224
      %v2253 = vadd.f32 %v2021, %v2244
      %2254 = vrot.lane.b32.xlu0 %v1132, 108
      %v2255 = vpop.permute.xlu0 %2254
      %2256 = vst [vmem:[#allocation1] ss:$2 sm:$0xff] %v1127
      %s2257 = scalar_lea.vmem [#allocation1], 16
      %2258 = vst [vmem:[%s2257] ss:$2 sm:$0xff] %v1128
      %s2259 = scalar_lea.vmem [#allocation1], 32
      %2260 = vst [vmem:[%s2259] ss:$2 sm:$0xff] %v1129
      %s2261 = scalar_lea.vmem [#allocation1], 48
      %2262 = vst [vmem:[%s2261] ss:$2 sm:$0xff] %v1130
      %v2263 = vld.sshfl [vmem:[#allocation1] sm:$0xff pattern:$0x75316420]
      %v2264 = vld.sshfl [vmem:[#allocation1 + $0x8] sm:$0xff pattern:$0x75316420]
      %v2265 = vld.sshfl [vmem:[#allocation1 + $0x10] sm:$0xff pattern:$0x75316420]
      %v2266 = vld.sshfl [vmem:[#allocation1 + $0x18] sm:$0xff pattern:$0x75316420]
      %v2267 = vld.sshfl [vmem:[#allocation1 + $0x20] sm:$0xff pattern:$0x75316420]
      %v2268 = vld.sshfl [vmem:[#allocation1 + $0x28] sm:$0xff pattern:$0x75316420]
      %v2269 = vld.sshfl [vmem:[#allocation1 + $0x30] sm:$0xff pattern:$0x75316420]
      %v2270 = vld.sshfl [vmem:[#allocation1 + $0x38] sm:$0xff pattern:$0x75316420]
      %2271 = vst [vmem:[#allocation1] ss:$2 sm:$0xff] %v1131
      %v2272 = vld.sshfl [vmem:[#allocation1] sm:$0xff pattern:$0x75316420]
      %2273 = vrot.lane.b32.xlu0 %v2263, 123
      %v2274 = vpop.permute.xlu0 %2273
      %2275 = vrot.lane.b32.xlu0 %v2264, 123
      %v2276 = vpop.permute.xlu0 %2275
      %2277 = vrot.lane.b32.xlu0 %v2265, 123
      %v2278 = vpop.permute.xlu0 %2277
      %2279 = vrot.lane.b32.xlu0 %v2266, 123
      %v2280 = vpop.permute.xlu0 %2279
      %2281 = vrot.lane.b32.xlu0 %v2267, 123
      %v2282 = vpop.permute.xlu0 %2281
      %2283 = vrot.lane.b32.xlu0 %v2268, 123
      %v2284 = vpop.permute.xlu0 %2283
      %2285 = vrot.lane.b32.xlu0 %v2269, 123
      %v2286 = vpop.permute.xlu0 %2285
      %2287 = vrot.lane.b32.xlu0 %v2270, 123
      %v2288 = vpop.permute.xlu0 %2287
      %2289 = vrot.lane.b32.xlu0 %v2272, 123
      %v2290 = vpop.permute.xlu0 %2289
      %vm2291 = vcmask 1006592
      %v2292 = vsel %vm2291, %v2274, %v2276
      %v2293 = vsel %vm2291, %v2276, %v2278
      %v2294 = vsel %vm2291, %v2278, %v2280
      %v2295 = vsel %vm2291, %v2280, %v2282
      %v2296 = vsel %vm2291, %v2282, %v2284
      %v2297 = vsel %vm2291, %v2284, %v2286
      %v2298 = vsel %vm2291, %v2286, %v2288
      %v2299 = vsel %vm2291, %v2288, %v2290
      %v2300 = vsel %vm1185, %v2255, 0
      %v2302 = vsel %vm1188, %v2292, 0
      %v2304 = vsel %vm1188, %v2293, 0
      %v2306 = vsel %vm1188, %v2294, 0
      %v2308 = vsel %vm1188, %v2295, 0
      %v2310 = vsel %vm1188, %v2296, 0
      %v2312 = vsel %vm1188, %v2297, 0
      %v2314 = vsel %vm1188, %v2298, 0
      %v2316 = vsel %vm1188, %v2299, 0
      %2318 = vmatpush.msra.mxu0 0.0
      %2319 = vmatpush.msra.mxu0 0.0
      %2320 = vmatpush.msra.mxu0 0.0
      %2321 = vmatpush.msra.mxu0 0.0
      %2322 = vmatpush.msra.mxu0 0.0
      %2323 = vmatpush.msra.mxu0 0.0
      %2324 = vmatpush.msra.mxu0 0.0
      %2325 = vmatpush.msra.mxu0 0.0
      %2326 = vmatpush.msra.mxu0 0.0
      %2327 = vmatpush.msra.mxu0 0.0
      %2328 = vmatpush.msra.mxu0 0.0
      %2329 = vmatpush.msra.mxu0 0.0
      %2330 = vmatpush.msra.mxu0 0.0
      %2331 = vmatpush.msra.mxu0 0.0
      %2332 = vmatpush.msra.mxu0 0.0
      %2333 = vmatpush.msra.mxu0 %v2302
      %2334 = vmatmul.f32.gmra.mxu0 %v2300
      %v2335 = vpop.f32.mrf.mxu0
      %v2336 = vadd.f32 0.0, %v2335
      %2337 = vdwg.mxu0
      %2338 = vmatpush.msra.mxu0 0.0
      %2339 = vmatpush.msra.mxu0 0.0
      %2340 = vmatpush.msra.mxu0 0.0
      %2341 = vmatpush.msra.mxu0 0.0
      %2342 = vmatpush.msra.mxu0 0.0
      %2343 = vmatpush.msra.mxu0 0.0
      %2344 = vmatpush.msra.mxu0 0.0
      %2345 = vmatpush.msra.mxu0 0.0
      %2346 = vmatpush.msra.mxu0 0.0
      %2347 = vmatpush.msra.mxu0 0.0
      %2348 = vmatpush.msra.mxu0 0.0
      %2349 = vmatpush.msra.mxu0 0.0
      %2350 = vmatpush.msra.mxu0 0.0
      %2351 = vmatpush.msra.mxu0 0.0
      %2352 = vmatpush.msra.mxu0 0.0
      %2353 = vmatpush.msra.mxu0 %v2304
      %2354 = vmatmul.f32.gmra.mxu0 %v2300
      %v2355 = vpop.f32.mrf.mxu0
      %v2356 = vadd.f32 0.0, %v2355
      %2357 = vdwg.mxu0
      %2358 = vmatpush.msra.mxu0 0.0
      %2359 = vmatpush.msra.mxu0 0.0
      %2360 = vmatpush.msra.mxu0 0.0
      %2361 = vmatpush.msra.mxu0 0.0
      %2362 = vmatpush.msra.mxu0 0.0
      %2363 = vmatpush.msra.mxu0 0.0
      %2364 = vmatpush.msra.mxu0 0.0
      %2365 = vmatpush.msra.mxu0 0.0
      %2366 = vmatpush.msra.mxu0 0.0
      %2367 = vmatpush.msra.mxu0 0.0
      %2368 = vmatpush.msra.mxu0 0.0
      %2369 = vmatpush.msra.mxu0 0.0
      %2370 = vmatpush.msra.mxu0 0.0
      %2371 = vmatpush.msra.mxu0 0.0
      %2372 = vmatpush.msra.mxu0 0.0
      %2373 = vmatpush.msra.mxu0 %v2306
      %2374 = vmatmul.f32.gmra.mxu0 %v2300
      %v2375 = vpop.f32.mrf.mxu0
      %v2376 = vadd.f32 0.0, %v2375
      %2377 = vdwg.mxu0
      %2378 = vmatpush.msra.mxu0 0.0
      %2379 = vmatpush.msra.mxu0 0.0
      %2380 = vmatpush.msra.mxu0 0.0
      %2381 = vmatpush.msra.mxu0 0.0
      %2382 = vmatpush.msra.mxu0 0.0
      %2383 = vmatpush.msra.mxu0 0.0
      %2384 = vmatpush.msra.mxu0 0.0
      %2385 = vmatpush.msra.mxu0 0.0
      %2386 = vmatpush.msra.mxu0 0.0
      %2387 = vmatpush.msra.mxu0 0.0
      %2388 = vmatpush.msra.mxu0 0.0
      %2389 = vmatpush.msra.mxu0 0.0
      %2390 = vmatpush.msra.mxu0 0.0
      %2391 = vmatpush.msra.mxu0 0.0
      %2392 = vmatpush.msra.mxu0 0.0
      %2393 = vmatpush.msra.mxu0 %v2308
      %2394 = vmatmul.f32.gmra.mxu0 %v2300
      %v2395 = vpop.f32.mrf.mxu0
      %v2396 = vadd.f32 0.0, %v2395
      %2397 = vdwg.mxu0
      %2398 = vmatpush.msra.mxu0 0.0
      %2399 = vmatpush.msra.mxu0 0.0
      %2400 = vmatpush.msra.mxu0 0.0
      %2401 = vmatpush.msra.mxu0 0.0
      %2402 = vmatpush.msra.mxu0 0.0
      %2403 = vmatpush.msra.mxu0 0.0
      %2404 = vmatpush.msra.mxu0 0.0
      %2405 = vmatpush.msra.mxu0 0.0
      %2406 = vmatpush.msra.mxu0 0.0
      %2407 = vmatpush.msra.mxu0 0.0
      %2408 = vmatpush.msra.mxu0 0.0
      %2409 = vmatpush.msra.mxu0 0.0
      %2410 = vmatpush.msra.mxu0 0.0
      %2411 = vmatpush.msra.mxu0 0.0
      %2412 = vmatpush.msra.mxu0 0.0
      %2413 = vmatpush.msra.mxu0 %v2310
      %2414 = vmatmul.f32.gmra.mxu0 %v2300
      %v2415 = vpop.f32.mrf.mxu0
      %v2416 = vadd.f32 0.0, %v2415
      %2417 = vdwg.mxu0
      %2418 = vmatpush.msra.mxu0 0.0
      %2419 = vmatpush.msra.mxu0 0.0
      %2420 = vmatpush.msra.mxu0 0.0
      %2421 = vmatpush.msra.mxu0 0.0
      %2422 = vmatpush.msra.mxu0 0.0
      %2423 = vmatpush.msra.mxu0 0.0
      %2424 = vmatpush.msra.mxu0 0.0
      %2425 = vmatpush.msra.mxu0 0.0
      %2426 = vmatpush.msra.mxu0 0.0
      %2427 = vmatpush.msra.mxu0 0.0
      %2428 = vmatpush.msra.mxu0 0.0
      %2429 = vmatpush.msra.mxu0 0.0
      %2430 = vmatpush.msra.mxu0 0.0
      %2431 = vmatpush.msra.mxu0 0.0
      %2432 = vmatpush.msra.mxu0 0.0
      %2433 = vmatpush.msra.mxu0 %v2312
      %2434 = vmatmul.f32.gmra.mxu0 %v2300
      %v2435 = vpop.f32.mrf.mxu0
      %v2436 = vadd.f32 0.0, %v2435
      %2437 = vdwg.mxu0
      %2438 = vmatpush.msra.mxu0 0.0
      %2439 = vmatpush.msra.mxu0 0.0
      %2440 = vmatpush.msra.mxu0 0.0
      %2441 = vmatpush.msra.mxu0 0.0
      %2442 = vmatpush.msra.mxu0 0.0
      %2443 = vmatpush.msra.mxu0 0.0
      %2444 = vmatpush.msra.mxu0 0.0
      %2445 = vmatpush.msra.mxu0 0.0
      %2446 = vmatpush.msra.mxu0 0.0
      %2447 = vmatpush.msra.mxu0 0.0
      %2448 = vmatpush.msra.mxu0 0.0
      %2449 = vmatpush.msra.mxu0 0.0
      %2450 = vmatpush.msra.mxu0 0.0
      %2451 = vmatpush.msra.mxu0 0.0
      %2452 = vmatpush.msra.mxu0 0.0
      %2453 = vmatpush.msra.mxu0 %v2314
      %2454 = vmatmul.f32.gmra.mxu0 %v2300
      %v2455 = vpop.f32.mrf.mxu0
      %v2456 = vadd.f32 0.0, %v2455
      %2457 = vdwg.mxu0
      %2458 = vmatpush.msra.mxu0 0.0
      %2459 = vmatpush.msra.mxu0 0.0
      %2460 = vmatpush.msra.mxu0 0.0
      %2461 = vmatpush.msra.mxu0 0.0
      %2462 = vmatpush.msra.mxu0 0.0
      %2463 = vmatpush.msra.mxu0 0.0
      %2464 = vmatpush.msra.mxu0 0.0
      %2465 = vmatpush.msra.mxu0 0.0
      %2466 = vmatpush.msra.mxu0 0.0
      %2467 = vmatpush.msra.mxu0 0.0
      %2468 = vmatpush.msra.mxu0 0.0
      %2469 = vmatpush.msra.mxu0 0.0
      %2470 = vmatpush.msra.mxu0 0.0
      %2471 = vmatpush.msra.mxu0 0.0
      %2472 = vmatpush.msra.mxu0 0.0
      %2473 = vmatpush.msra.mxu0 %v2316
      %2474 = vmatmul.f32.gmra.mxu0 %v2300
      %v2475 = vpop.f32.mrf.mxu0
      %v2476 = vadd.f32 0.0, %v2475
      %2477 = vdwg.mxu0
      %v2478 = vadd.f32 %v2246, %v2336
      %v2479 = vadd.f32 %v2247, %v2356
      %v2480 = vadd.f32 %v2248, %v2376
      %v2481 = vadd.f32 %v2249, %v2396
      %v2482 = vadd.f32 %v2250, %v2416
      %v2483 = vadd.f32 %v2251, %v2436
      %v2484 = vadd.f32 %v2252, %v2456
      %v2485 = vadd.f32 %v2253, %v2476
      %2486 = vrot.lane.b32.xlu0 %v1132, 104
      %v2487 = vpop.permute.xlu0 %2486
      %2488 = vst [vmem:[#allocation1] ss:$2 sm:$0xff] %v1127
      %s2489 = scalar_lea.vmem [#allocation1], 16
      %2490 = vst [vmem:[%s2489] ss:$2 sm:$0xff] %v1128
      %s2491 = scalar_lea.vmem [#allocation1], 32
      %2492 = vst [vmem:[%s2491] ss:$2 sm:$0xff] %v1129
      %s2493 = scalar_lea.vmem [#allocation1], 48
      %2494 = vst [vmem:[%s2493] ss:$2 sm:$0xff] %v1130
      %v2495 = vld.sshfl [vmem:[#allocation1] sm:$0xff pattern:$0x75316420]
      %v2496 = vld.sshfl [vmem:[#allocation1 + $0x8] sm:$0xff pattern:$0x75316420]
      %v2497 = vld.sshfl [vmem:[#allocation1 + $0x10] sm:$0xff pattern:$0x75316420]
      %v2498 = vld.sshfl [vmem:[#allocation1 + $0x18] sm:$0xff pattern:$0x75316420]
      %v2499 = vld.sshfl [vmem:[#allocation1 + $0x20] sm:$0xff pattern:$0x75316420]
      %v2500 = vld.sshfl [vmem:[#allocation1 + $0x28] sm:$0xff pattern:$0x75316420]
      %v2501 = vld.sshfl [vmem:[#allocation1 + $0x30] sm:$0xff pattern:$0x75316420]
      %v2502 = vld.sshfl [vmem:[#allocation1 + $0x38] sm:$0xff pattern:$0x75316420]
      %2503 = vst [vmem:[#allocation1] ss:$2 sm:$0xff] %v1131
      %v2504 = vld.sshfl [vmem:[#allocation1] sm:$0xff pattern:$0x75316420]
      %2505 = vrot.lane.b32.xlu0 %v2495, 122
      %v2506 = vpop.permute.xlu0 %2505
      %2507 = vrot.lane.b32.xlu0 %v2496, 122
      %v2508 = vpop.permute.xlu0 %2507
      %2509 = vrot.lane.b32.xlu0 %v2497, 122
      %v2510 = vpop.permute.xlu0 %2509
      %2511 = vrot.lane.b32.xlu0 %v2498, 122
      %v2512 = vpop.permute.xlu0 %2511
      %2513 = vrot.lane.b32.xlu0 %v2499, 122
      %v2514 = vpop.permute.xlu0 %2513
      %2515 = vrot.lane.b32.xlu0 %v2500, 122
      %v2516 = vpop.permute.xlu0 %2515
      %2517 = vrot.lane.b32.xlu0 %v2501, 122
      %v2518 = vpop.permute.xlu0 %2517
      %2519 = vrot.lane.b32.xlu0 %v2502, 122
      %v2520 = vpop.permute.xlu0 %2519
      %2521 = vrot.lane.b32.xlu0 %v2504, 122
      %v2522 = vpop.permute.xlu0 %2521
      %vm2523 = vcmask 998400
      %v2524 = vsel %vm2523, %v2506, %v2508
      %v2525 = vsel %vm2523, %v2508, %v2510
      %v2526 = vsel %vm2523, %v2510, %v2512
      %v2527 = vsel %vm2523, %v2512, %v2514
      %v2528 = vsel %vm2523, %v2514, %v2516
      %v2529 = vsel %vm2523, %v2516, %v2518
      %v2530 = vsel %vm2523, %v2518, %v2520
      %v2531 = vsel %vm2523, %v2520, %v2522
      %v2532 = vsel %vm1185, %v2487, 0
      %v2534 = vsel %vm1188, %v2524, 0
      %v2536 = vsel %vm1188, %v2525, 0
      %v2538 = vsel %vm1188, %v2526, 0
      %v2540 = vsel %vm1188, %v2527, 0
      %v2542 = vsel %vm1188, %v2528, 0
      %v2544 = vsel %vm1188, %v2529, 0
      %v2546 = vsel %vm1188, %v2530, 0
      %v2548 = vsel %vm1188, %v2531, 0
      %2550 = vmatpush.msra.mxu0 0.0
      %2551 = vmatpush.msra.mxu0 0.0
      %2552 = vmatpush.msra.mxu0 0.0
      %2553 = vmatpush.msra.mxu0 0.0
      %2554 = vmatpush.msra.mxu0 0.0
      %2555 = vmatpush.msra.mxu0 0.0
      %2556 = vmatpush.msra.mxu0 0.0
      %2557 = vmatpush.msra.mxu0 0.0
      %2558 = vmatpush.msra.mxu0 0.0
      %2559 = vmatpush.msra.mxu0 0.0
      %2560 = vmatpush.msra.mxu0 0.0
      %2561 = vmatpush.msra.mxu0 0.0
      %2562 = vmatpush.msra.mxu0 0.0
      %2563 = vmatpush.msra.mxu0 0.0
      %2564 = vmatpush.msra.mxu0 0.0
      %2565 = vmatpush.msra.mxu0 %v2534
      %2566 = vmatmul.f32.gmra.mxu0 %v2532
      %v2567 = vpop.f32.mrf.mxu0
      %v2568 = vadd.f32 0.0, %v2567
      %2569 = vdwg.mxu0
      %2570 = vmatpush.msra.mxu0 0.0
      %2571 = vmatpush.msra.mxu0 0.0
      %2572 = vmatpush.msra.mxu0 0.0
      %2573 = vmatpush.msra.mxu0 0.0
      %2574 = vmatpush.msra.mxu0 0.0
      %2575 = vmatpush.msra.mxu0 0.0
      %2576 = vmatpush.msra.mxu0 0.0
      %2577 = vmatpush.msra.mxu0 0.0
      %2578 = vmatpush.msra.mxu0 0.0
      %2579 = vmatpush.msra.mxu0 0.0
      %2580 = vmatpush.msra.mxu0 0.0
      %2581 = vmatpush.msra.mxu0 0.0
      %2582 = vmatpush.msra.mxu0 0.0
      %2583 = vmatpush.msra.mxu0 0.0
      %2584 = vmatpush.msra.mxu0 0.0
      %2585 = vmatpush.msra.mxu0 %v2536
      %2586 = vmatmul.f32.gmra.mxu0 %v2532
      %v2587 = vpop.f32.mrf.mxu0
      %v2588 = vadd.f32 0.0, %v2587
      %2589 = vdwg.mxu0
      %2590 = vmatpush.msra.mxu0 0.0
      %2591 = vmatpush.msra.mxu0 0.0
      %2592 = vmatpush.msra.mxu0 0.0
      %2593 = vmatpush.msra.mxu0 0.0
      %2594 = vmatpush.msra.mxu0 0.0
      %2595 = vmatpush.msra.mxu0 0.0
      %2596 = vmatpush.msra.mxu0 0.0
      %2597 = vmatpush.msra.mxu0 0.0
      %2598 = vmatpush.msra.mxu0 0.0
      %2599 = vmatpush.msra.mxu0 0.0
      %2600 = vmatpush.msra.mxu0 0.0
      %2601 = vmatpush.msra.mxu0 0.0
      %2602 = vmatpush.msra.mxu0 0.0
      %2603 = vmatpush.msra.mxu0 0.0
      %2604 = vmatpush.msra.mxu0 0.0
      %2605 = vmatpush.msra.mxu0 %v2538
      %2606 = vmatmul.f32.gmra.mxu0 %v2532
      %v2607 = vpop.f32.mrf.mxu0
      %v2608 = vadd.f32 0.0, %v2607
      %2609 = vdwg.mxu0
      %2610 = vmatpush.msra.mxu0 0.0
      %2611 = vmatpush.msra.mxu0 0.0
      %2612 = vmatpush.msra.mxu0 0.0
      %2613 = vmatpush.msra.mxu0 0.0
      %2614 = vmatpush.msra.mxu0 0.0
      %2615 = vmatpush.msra.mxu0 0.0
      %2616 = vmatpush.msra.mxu0 0.0
      %2617 = vmatpush.msra.mxu0 0.0
      %2618 = vmatpush.msra.mxu0 0.0
      %2619 = vmatpush.msra.mxu0 0.0
      %2620 = vmatpush.msra.mxu0 0.0
      %2621 = vmatpush.msra.mxu0 0.0
      %2622 = vmatpush.msra.mxu0 0.0
      %2623 = vmatpush.msra.mxu0 0.0
      %2624 = vmatpush.msra.mxu0 0.0
      %2625 = vmatpush.msra.mxu0 %v2540
      %2626 = vmatmul.f32.gmra.mxu0 %v2532
      %v2627 = vpop.f32.mrf.mxu0
      %v2628 = vadd.f32 0.0, %v2627
      %2629 = vdwg.mxu0
      %2630 = vmatpush.msra.mxu0 0.0
      %2631 = vmatpush.msra.mxu0 0.0
      %2632 = vmatpush.msra.mxu0 0.0
      %2633 = vmatpush.msra.mxu0 0.0
      %2634 = vmatpush.msra.mxu0 0.0
      %2635 = vmatpush.msra.mxu0 0.0
      %2636 = vmatpush.msra.mxu0 0.0
      %2637 = vmatpush.msra.mxu0 0.0
      %2638 = vmatpush.msra.mxu0 0.0
      %2639 = vmatpush.msra.mxu0 0.0
      %2640 = vmatpush.msra.mxu0 0.0
      %2641 = vmatpush.msra.mxu0 0.0
      %2642 = vmatpush.msra.mxu0 0.0
      %2643 = vmatpush.msra.mxu0 0.0
      %2644 = vmatpush.msra.mxu0 0.0
      %2645 = vmatpush.msra.mxu0 %v2542
      %2646 = vmatmul.f32.gmra.mxu0 %v2532
      %v2647 = vpop.f32.mrf.mxu0
      %v2648 = vadd.f32 0.0, %v2647
      %2649 = vdwg.mxu0
      %2650 = vmatpush.msra.mxu0 0.0
      %2651 = vmatpush.msra.mxu0 0.0
      %2652 = vmatpush.msra.mxu0 0.0
      %2653 = vmatpush.msra.mxu0 0.0
      %2654 = vmatpush.msra.mxu0 0.0
      %2655 = vmatpush.msra.mxu0 0.0
      %2656 = vmatpush.msra.mxu0 0.0
      %2657 = vmatpush.msra.mxu0 0.0
      %2658 = vmatpush.msra.mxu0 0.0
      %2659 = vmatpush.msra.mxu0 0.0
      %2660 = vmatpush.msra.mxu0 0.0
      %2661 = vmatpush.msra.mxu0 0.0
      %2662 = vmatpush.msra.mxu0 0.0
      %2663 = vmatpush.msra.mxu0 0.0
      %2664 = vmatpush.msra.mxu0 0.0
      %2665 = vmatpush.msra.mxu0 %v2544
      %2666 = vmatmul.f32.gmra.mxu0 %v2532
      %v2667 = vpop.f32.mrf.mxu0
      %v2668 = vadd.f32 0.0, %v2667
      %2669 = vdwg.mxu0
      %2670 = vmatpush.msra.mxu0 0.0
      %2671 = vmatpush.msra.mxu0 0.0
      %2672 = vmatpush.msra.mxu0 0.0
      %2673 = vmatpush.msra.mxu0 0.0
      %2674 = vmatpush.msra.mxu0 0.0
      %2675 = vmatpush.msra.mxu0 0.0
      %2676 = vmatpush.msra.mxu0 0.0
      %2677 = vmatpush.msra.mxu0 0.0
      %2678 = vmatpush.msra.mxu0 0.0
      %2679 = vmatpush.msra.mxu0 0.0
      %2680 = vmatpush.msra.mxu0 0.0
      %2681 = vmatpush.msra.mxu0 0.0
      %2682 = vmatpush.msra.mxu0 0.0
      %2683 = vmatpush.msra.mxu0 0.0
      %2684 = vmatpush.msra.mxu0 0.0
      %2685 = vmatpush.msra.mxu0 %v2546
      %2686 = vmatmul.f32.gmra.mxu0 %v2532
      %v2687 = vpop.f32.mrf.mxu0
      %v2688 = vadd.f32 0.0, %v2687
      %2689 = vdwg.mxu0
      %2690 = vmatpush.msra.mxu0 0.0
      %2691 = vmatpush.msra.mxu0 0.0
      %2692 = vmatpush.msra.mxu0 0.0
      %2693 = vmatpush.msra.mxu0 0.0
      %2694 = vmatpush.msra.mxu0 0.0
      %2695 = vmatpush.msra.mxu0 0.0
      %2696 = vmatpush.msra.mxu0 0.0
      %2697 = vmatpush.msra.mxu0 0.0
      %2698 = vmatpush.msra.mxu0 0.0
      %2699 = vmatpush.msra.mxu0 0.0
      %2700 = vmatpush.msra.mxu0 0.0
      %2701 = vmatpush.msra.mxu0 0.0
      %2702 = vmatpush.msra.mxu0 0.0
      %2703 = vmatpush.msra.mxu0 0.0
      %2704 = vmatpush.msra.mxu0 0.0
      %2705 = vmatpush.msra.mxu0 %v2548
      %2706 = vmatmul.f32.gmra.mxu0 %v2532
      %v2707 = vpop.f32.mrf.mxu0
      %v2708 = vadd.f32 0.0, %v2707
      %2709 = vdwg.mxu0
      %v2710 = vadd.f32 %v2478, %v2568
      %v2711 = vadd.f32 %v2479, %v2588
      %v2712 = vadd.f32 %v2480, %v2608
      %v2713 = vadd.f32 %v2481, %v2628
      %v2714 = vadd.f32 %v2482, %v2648
      %v2715 = vadd.f32 %v2483, %v2668
      %v2716 = vadd.f32 %v2484, %v2688
      %v2717 = vadd.f32 %v2485, %v2708
      %2718 = vrot.lane.b32.xlu0 %v1132, 100
      %v2719 = vpop.permute.xlu0 %2718
      %2720 = vst [vmem:[#allocation1] ss:$2 sm:$0xff] %v1127
      %s2721 = scalar_lea.vmem [#allocation1], 16
      %2722 = vst [vmem:[%s2721] ss:$2 sm:$0xff] %v1128
      %s2723 = scalar_lea.vmem [#allocation1], 32
      %2724 = vst [vmem:[%s2723] ss:$2 sm:$0xff] %v1129
      %s2725 = scalar_lea.vmem [#allocation1], 48
      %2726 = vst [vmem:[%s2725] ss:$2 sm:$0xff] %v1130
      %v2727 = vld.sshfl [vmem:[#allocation1] sm:$0xff pattern:$0x75316420]
      %v2728 = vld.sshfl [vmem:[#allocation1 + $0x8] sm:$0xff pattern:$0x75316420]
      %v2729 = vld.sshfl [vmem:[#allocation1 + $0x10] sm:$0xff pattern:$0x75316420]
      %v2730 = vld.sshfl [vmem:[#allocation1 + $0x18] sm:$0xff pattern:$0x75316420]
      %v2731 = vld.sshfl [vmem:[#allocation1 + $0x20] sm:$0xff pattern:$0x75316420]
      %v2732 = vld.sshfl [vmem:[#allocation1 + $0x28] sm:$0xff pattern:$0x75316420]
      %v2733 = vld.sshfl [vmem:[#allocation1 + $0x30] sm:$0xff pattern:$0x75316420]
      %v2734 = vld.sshfl [vmem:[#allocation1 + $0x38] sm:$0xff pattern:$0x75316420]
      %2735 = vst [vmem:[#allocation1] ss:$2 sm:$0xff] %v1131
      %v2736 = vld.sshfl [vmem:[#allocation1] sm:$0xff pattern:$0x75316420]
      %2737 = vrot.lane.b32.xlu0 %v2727, 121
      %v2738 = vpop.permute.xlu0 %2737
      %2739 = vrot.lane.b32.xlu0 %v2728, 121
      %v2740 = vpop.permute.xlu0 %2739
      %2741 = vrot.lane.b32.xlu0 %v2729, 121
      %v2742 = vpop.permute.xlu0 %2741
      %2743 = vrot.lane.b32.xlu0 %v2730, 121
      %v2744 = vpop.permute.xlu0 %2743
      %2745 = vrot.lane.b32.xlu0 %v2731, 121
      %v2746 = vpop.permute.xlu0 %2745
      %2747 = vrot.lane.b32.xlu0 %v2732, 121
      %v2748 = vpop.permute.xlu0 %2747
      %2749 = vrot.lane.b32.xlu0 %v2733, 121
      %v2750 = vpop.permute.xlu0 %2749
      %2751 = vrot.lane.b32.xlu0 %v2734, 121
      %v2752 = vpop.permute.xlu0 %2751
      %2753 = vrot.lane.b32.xlu0 %v2736, 121
      %v2754 = vpop.permute.xlu0 %2753
      %vm2755 = vcmask 990208
      %v2756 = vsel %vm2755, %v2738, %v2740
      %v2757 = vsel %vm2755, %v2740, %v2742
      %v2758 = vsel %vm2755, %v2742, %v2744
      %v2759 = vsel %vm2755, %v2744, %v2746
      %v2760 = vsel %vm2755, %v2746, %v2748
      %v2761 = vsel %vm2755, %v2748, %v2750
      %v2762 = vsel %vm2755, %v2750, %v2752
      %v2763 = vsel %vm2755, %v2752, %v2754
      %v2764 = vsel %vm1185, %v2719, 0
      %v2766 = vsel %vm1188, %v2756, 0
      %v2768 = vsel %vm1188, %v2757, 0
      %v2770 = vsel %vm1188, %v2758, 0
      %v2772 = vsel %vm1188, %v2759, 0
      %v2774 = vsel %vm1188, %v2760, 0
      %v2776 = vsel %vm1188, %v2761, 0
      %v2778 = vsel %vm1188, %v2762, 0
      %v2780 = vsel %vm1188, %v2763, 0
      %2782 = vmatpush.msra.mxu0 0.0
      %2783 = vmatpush.msra.mxu0 0.0
      %2784 = vmatpush.msra.mxu0 0.0
      %2785 = vmatpush.msra.mxu0 0.0
      %2786 = vmatpush.msra.mxu0 0.0
      %2787 = vmatpush.msra.mxu0 0.0
      %2788 = vmatpush.msra.mxu0 0.0
      %2789 = vmatpush.msra.mxu0 0.0
      %2790 = vmatpush.msra.mxu0 0.0
      %2791 = vmatpush.msra.mxu0 0.0
      %2792 = vmatpush.msra.mxu0 0.0
      %2793 = vmatpush.msra.mxu0 0.0
      %2794 = vmatpush.msra.mxu0 0.0
      %2795 = vmatpush.msra.mxu0 0.0
      %2796 = vmatpush.msra.mxu0 0.0
      %2797 = vmatpush.msra.mxu0 %v2766
      %2798 = vmatmul.f32.gmra.mxu0 %v2764
      %v2799 = vpop.f32.mrf.mxu0
      %v2800 = vadd.f32 0.0, %v2799
      %2801 = vdwg.mxu0
      %2802 = vmatpush.msra.mxu0 0.0
      %2803 = vmatpush.msra.mxu0 0.0
      %2804 = vmatpush.msra.mxu0 0.0
      %2805 = vmatpush.msra.mxu0 0.0
      %2806 = vmatpush.msra.mxu0 0.0
      %2807 = vmatpush.msra.mxu0 0.0
      %2808 = vmatpush.msra.mxu0 0.0
      %2809 = vmatpush.msra.mxu0 0.0
      %2810 = vmatpush.msra.mxu0 0.0
      %2811 = vmatpush.msra.mxu0 0.0
      %2812 = vmatpush.msra.mxu0 0.0
      %2813 = vmatpush.msra.mxu0 0.0
      %2814 = vmatpush.msra.mxu0 0.0
      %2815 = vmatpush.msra.mxu0 0.0
      %2816 = vmatpush.msra.mxu0 0.0
      %2817 = vmatpush.msra.mxu0 %v2768
      %2818 = vmatmul.f32.gmra.mxu0 %v2764
      %v2819 = vpop.f32.mrf.mxu0
      %v2820 = vadd.f32 0.0, %v2819
      %2821 = vdwg.mxu0
      %2822 = vmatpush.msra.mxu0 0.0
      %2823 = vmatpush.msra.mxu0 0.0
      %2824 = vmatpush.msra.mxu0 0.0
      %2825 = vmatpush.msra.mxu0 0.0
      %2826 = vmatpush.msra.mxu0 0.0
      %2827 = vmatpush.msra.mxu0 0.0
      %2828 = vmatpush.msra.mxu0 0.0
      %2829 = vmatpush.msra.mxu0 0.0
      %2830 = vmatpush.msra.mxu0 0.0
      %2831 = vmatpush.msra.mxu0 0.0
      %2832 = vmatpush.msra.mxu0 0.0
      %2833 = vmatpush.msra.mxu0 0.0
      %2834 = vmatpush.msra.mxu0 0.0
      %2835 = vmatpush.msra.mxu0 0.0
      %2836 = vmatpush.msra.mxu0 0.0
      %2837 = vmatpush.msra.mxu0 %v2770
      %2838 = vmatmul.f32.gmra.mxu0 %v2764
      %v2839 = vpop.f32.mrf.mxu0
      %v2840 = vadd.f32 0.0, %v2839
      %2841 = vdwg.mxu0
      %2842 = vmatpush.msra.mxu0 0.0
      %2843 = vmatpush.msra.mxu0 0.0
      %2844 = vmatpush.msra.mxu0 0.0
      %2845 = vmatpush.msra.mxu0 0.0
      %2846 = vmatpush.msra.mxu0 0.0
      %2847 = vmatpush.msra.mxu0 0.0
      %2848 = vmatpush.msra.mxu0 0.0
      %2849 = vmatpush.msra.mxu0 0.0
      %2850 = vmatpush.msra.mxu0 0.0
      %2851 = vmatpush.msra.mxu0 0.0
      %2852 = vmatpush.msra.mxu0 0.0
      %2853 = vmatpush.msra.mxu0 0.0
      %2854 = vmatpush.msra.mxu0 0.0
      %2855 = vmatpush.msra.mxu0 0.0
      %2856 = vmatpush.msra.mxu0 0.0
      %2857 = vmatpush.msra.mxu0 %v2772
      %2858 = vmatmul.f32.gmra.mxu0 %v2764
      %v2859 = vpop.f32.mrf.mxu0
      %v2860 = vadd.f32 0.0, %v2859
      %2861 = vdwg.mxu0
      %2862 = vmatpush.msra.mxu0 0.0
      %2863 = vmatpush.msra.mxu0 0.0
      %2864 = vmatpush.msra.mxu0 0.0
      %2865 = vmatpush.msra.mxu0 0.0
      %2866 = vmatpush.msra.mxu0 0.0
      %2867 = vmatpush.msra.mxu0 0.0
      %2868 = vmatpush.msra.mxu0 0.0
      %2869 = vmatpush.msra.mxu0 0.0
      %2870 = vmatpush.msra.mxu0 0.0
      %2871 = vmatpush.msra.mxu0 0.0
      %2872 = vmatpush.msra.mxu0 0.0
      %2873 = vmatpush.msra.mxu0 0.0
      %2874 = vmatpush.msra.mxu0 0.0
      %2875 = vmatpush.msra.mxu0 0.0
      %2876 = vmatpush.msra.mxu0 0.0
      %2877 = vmatpush.msra.mxu0 %v2774
      %2878 = vmatmul.f32.gmra.mxu0 %v2764
      %v2879 = vpop.f32.mrf.mxu0
      %v2880 = vadd.f32 0.0, %v2879
      %2881 = vdwg.mxu0
      %2882 = vmatpush.msra.mxu0 0.0
      %2883 = vmatpush.msra.mxu0 0.0
      %2884 = vmatpush.msra.mxu0 0.0
      %2885 = vmatpush.msra.mxu0 0.0
      %2886 = vmatpush.msra.mxu0 0.0
      %2887 = vmatpush.msra.mxu0 0.0
      %2888 = vmatpush.msra.mxu0 0.0
      %2889 = vmatpush.msra.mxu0 0.0
      %2890 = vmatpush.msra.mxu0 0.0
      %2891 = vmatpush.msra.mxu0 0.0
      %2892 = vmatpush.msra.mxu0 0.0
      %2893 = vmatpush.msra.mxu0 0.0
      %2894 = vmatpush.msra.mxu0 0.0
      %2895 = vmatpush.msra.mxu0 0.0
      %2896 = vmatpush.msra.mxu0 0.0
      %2897 = vmatpush.msra.mxu0 %v2776
      %2898 = vmatmul.f32.gmra.mxu0 %v2764
      %v2899 = vpop.f32.mrf.mxu0
      %v2900 = vadd.f32 0.0, %v2899
      %2901 = vdwg.mxu0
      %2902 = vmatpush.msra.mxu0 0.0
      %2903 = vmatpush.msra.mxu0 0.0
      %2904 = vmatpush.msra.mxu0 0.0
      %2905 = vmatpush.msra.mxu0 0.0
      %2906 = vmatpush.msra.mxu0 0.0
      %2907 = vmatpush.msra.mxu0 0.0
      %2908 = vmatpush.msra.mxu0 0.0
      %2909 = vmatpush.msra.mxu0 0.0
      %2910 = vmatpush.msra.mxu0 0.0
      %2911 = vmatpush.msra.mxu0 0.0
      %2912 = vmatpush.msra.mxu0 0.0
      %2913 = vmatpush.msra.mxu0 0.0
      %2914 = vmatpush.msra.mxu0 0.0
      %2915 = vmatpush.msra.mxu0 0.0
      %2916 = vmatpush.msra.mxu0 0.0
      %2917 = vmatpush.msra.mxu0 %v2778
      %2918 = vmatmul.f32.gmra.mxu0 %v2764
      %v2919 = vpop.f32.mrf.mxu0
      %v2920 = vadd.f32 0.0, %v2919
      %2921 = vdwg.mxu0
      %2922 = vmatpush.msra.mxu0 0.0
      %2923 = vmatpush.msra.mxu0 0.0
      %2924 = vmatpush.msra.mxu0 0.0
      %2925 = vmatpush.msra.mxu0 0.0
      %2926 = vmatpush.msra.mxu0 0.0
      %2927 = vmatpush.msra.mxu0 0.0
      %2928 = vmatpush.msra.mxu0 0.0
      %2929 = vmatpush.msra.mxu0 0.0
      %2930 = vmatpush.msra.mxu0 0.0
      %2931 = vmatpush.msra.mxu0 0.0
      %2932 = vmatpush.msra.mxu0 0.0
      %2933 = vmatpush.msra.mxu0 0.0
      %2934 = vmatpush.msra.mxu0 0.0
      %2935 = vmatpush.msra.mxu0 0.0
      %2936 = vmatpush.msra.mxu0 0.0
      %2937 = vmatpush.msra.mxu0 %v2780
      %2938 = vmatmul.f32.gmra.mxu0 %v2764
      %v2939 = vpop.f32.mrf.mxu0
      %v2940 = vadd.f32 0.0, %v2939
      %2941 = vdwg.mxu0
      %v2942 = vadd.f32 %v2710, %v2800
      %v2943 = vadd.f32 %v2711, %v2820
      %v2944 = vadd.f32 %v2712, %v2840
      %v2945 = vadd.f32 %v2713, %v2860
      %v2946 = vadd.f32 %v2714, %v2880
      %v2947 = vadd.f32 %v2715, %v2900
      %v2948 = vadd.f32 %v2716, %v2920
      %v2949 = vadd.f32 %v2717, %v2940
      %2950 = vrot.lane.b32.xlu0 %v1132, 96
      %v2951 = vpop.permute.xlu0 %2950
      %2952 = vst [vmem:[#allocation1] ss:$2 sm:$0xff] %v1127
      %s2953 = scalar_lea.vmem [#allocation1], 16
      %2954 = vst [vmem:[%s2953] ss:$2 sm:$0xff] %v1128
      %s2955 = scalar_lea.vmem [#allocation1], 32
      %2956 = vst [vmem:[%s2955] ss:$2 sm:$0xff] %v1129
      %s2957 = scalar_lea.vmem [#allocation1], 48
      %2958 = vst [vmem:[%s2957] ss:$2 sm:$0xff] %v1130
      %v2959 = vld.sshfl [vmem:[#allocation1] sm:$0xff pattern:$0x75316420]
      %v2960 = vld.sshfl [vmem:[#allocation1 + $0x8] sm:$0xff pattern:$0x75316420]
      %v2961 = vld.sshfl [vmem:[#allocation1 + $0x10] sm:$0xff pattern:$0x75316420]
      %v2962 = vld.sshfl [vmem:[#allocation1 + $0x18] sm:$0xff pattern:$0x75316420]
      %v2963 = vld.sshfl [vmem:[#allocation1 + $0x20] sm:$0xff pattern:$0x75316420]
      %v2964 = vld.sshfl [vmem:[#allocation1 + $0x28] sm:$0xff pattern:$0x75316420]
      %v2965 = vld.sshfl [vmem:[#allocation1 + $0x30] sm:$0xff pattern:$0x75316420]
      %v2966 = vld.sshfl [vmem:[#allocation1 + $0x38] sm:$0xff pattern:$0x75316420]
      %2967 = vst [vmem:[#allocation1] ss:$2 sm:$0xff] %v1131
      %v2968 = vld.sshfl [vmem:[#allocation1] sm:$0xff pattern:$0x75316420]
      %2969 = vrot.lane.b32.xlu0 %v2959, 120
      %v2970 = vpop.permute.xlu0 %2969
      %2971 = vrot.lane.b32.xlu0 %v2960, 120
      %v2972 = vpop.permute.xlu0 %2971
      %2973 = vrot.lane.b32.xlu0 %v2961, 120
      %v2974 = vpop.permute.xlu0 %2973
      %2975 = vrot.lane.b32.xlu0 %v2962, 120
      %v2976 = vpop.permute.xlu0 %2975
      %2977 = vrot.lane.b32.xlu0 %v2963, 120
      %v2978 = vpop.permute.xlu0 %2977
      %2979 = vrot.lane.b32.xlu0 %v2964, 120
      %v2980 = vpop.permute.xlu0 %2979
      %2981 = vrot.lane.b32.xlu0 %v2965, 120
      %v2982 = vpop.permute.xlu0 %2981
      %2983 = vrot.lane.b32.xlu0 %v2966, 120
      %v2984 = vpop.permute.xlu0 %2983
      %2985 = vrot.lane.b32.xlu0 %v2968, 120
      %v2986 = vpop.permute.xlu0 %2985
      %vm2987 = vcmask 982016
      %v2988 = vsel %vm2987, %v2970, %v2972
      %v2989 = vsel %vm2987, %v2972, %v2974
      %v2990 = vsel %vm2987, %v2974, %v2976
      %v2991 = vsel %vm2987, %v2976, %v2978
      %v2992 = vsel %vm2987, %v2978, %v2980
      %v2993 = vsel %vm2987, %v2980, %v2982
      %v2994 = vsel %vm2987, %v2982, %v2984
      %v2995 = vsel %vm2987, %v2984, %v2986
      %v2996 = vsel %vm1185, %v2951, 0
      %v2998 = vsel %vm1188, %v2988, 0
      %v3000 = vsel %vm1188, %v2989, 0
      %v3002 = vsel %vm1188, %v2990, 0
      %v3004 = vsel %vm1188, %v2991, 0
      %v3006 = vsel %vm1188, %v2992, 0
      %v3008 = vsel %vm1188, %v2993, 0
      %v3010 = vsel %vm1188, %v2994, 0
      %v3012 = vsel %vm1188, %v2995, 0
      %3014 = vmatpush.msra.mxu0 0.0
      %3015 = vmatpush.msra.mxu0 0.0
      %3016 = vmatpush.msra.mxu0 0.0
      %3017 = vmatpush.msra.mxu0 0.0
      %3018 = vmatpush.msra.mxu0 0.0
      %3019 = vmatpush.msra.mxu0 0.0
      %3020 = vmatpush.msra.mxu0 0.0
      %3021 = vmatpush.msra.mxu0 0.0
      %3022 = vmatpush.msra.mxu0 0.0
      %3023 = vmatpush.msra.mxu0 0.0
      %3024 = vmatpush.msra.mxu0 0.0
      %3025 = vmatpush.msra.mxu0 0.0
      %3026 = vmatpush.msra.mxu0 0.0
      %3027 = vmatpush.msra.mxu0 0.0
      %3028 = vmatpush.msra.mxu0 0.0
      %3029 = vmatpush.msra.mxu0 %v2998
      %3030 = vmatmul.f32.gmra.mxu0 %v2996
      %v3031 = vpop.f32.mrf.mxu0
      %v3032 = vadd.f32 0.0, %v3031
      %3033 = vdwg.mxu0
      %3034 = vmatpush.msra.mxu0 0.0
      %3035 = vmatpush.msra.mxu0 0.0
      %3036 = vmatpush.msra.mxu0 0.0
      %3037 = vmatpush.msra.mxu0 0.0
      %3038 = vmatpush.msra.mxu0 0.0
      %3039 = vmatpush.msra.mxu0 0.0
      %3040 = vmatpush.msra.mxu0 0.0
      %3041 = vmatpush.msra.mxu0 0.0
      %3042 = vmatpush.msra.mxu0 0.0
      %3043 = vmatpush.msra.mxu0 0.0
      %3044 = vmatpush.msra.mxu0 0.0
      %3045 = vmatpush.msra.mxu0 0.0
      %3046 = vmatpush.msra.mxu0 0.0
      %3047 = vmatpush.msra.mxu0 0.0
      %3048 = vmatpush.msra.mxu0 0.0
      %3049 = vmatpush.msra.mxu0 %v3000
      %3050 = vmatmul.f32.gmra.mxu0 %v2996
      %v3051 = vpop.f32.mrf.mxu0
      %v3052 = vadd.f32 0.0, %v3051
      %3053 = vdwg.mxu0
      %3054 = vmatpush.msra.mxu0 0.0
      %3055 = vmatpush.msra.mxu0 0.0
      %3056 = vmatpush.msra.mxu0 0.0
      %3057 = vmatpush.msra.mxu0 0.0
      %3058 = vmatpush.msra.mxu0 0.0
      %3059 = vmatpush.msra.mxu0 0.0
      %3060 = vmatpush.msra.mxu0 0.0
      %3061 = vmatpush.msra.mxu0 0.0
      %3062 = vmatpush.msra.mxu0 0.0
      %3063 = vmatpush.msra.mxu0 0.0
      %3064 = vmatpush.msra.mxu0 0.0
      %3065 = vmatpush.msra.mxu0 0.0
      %3066 = vmatpush.msra.mxu0 0.0
      %3067 = vmatpush.msra.mxu0 0.0
      %3068 = vmatpush.msra.mxu0 0.0
      %3069 = vmatpush.msra.mxu0 %v3002
      %3070 = vmatmul.f32.gmra.mxu0 %v2996
      %v3071 = vpop.f32.mrf.mxu0
      %v3072 = vadd.f32 0.0, %v3071
      %3073 = vdwg.mxu0
      %3074 = vmatpush.msra.mxu0 0.0
      %3075 = vmatpush.msra.mxu0 0.0
      %3076 = vmatpush.msra.mxu0 0.0
      %3077 = vmatpush.msra.mxu0 0.0
      %3078 = vmatpush.msra.mxu0 0.0
      %3079 = vmatpush.msra.mxu0 0.0
      %3080 = vmatpush.msra.mxu0 0.0
      %3081 = vmatpush.msra.mxu0 0.0
      %3082 = vmatpush.msra.mxu0 0.0
      %3083 = vmatpush.msra.mxu0 0.0
      %3084 = vmatpush.msra.mxu0 0.0
      %3085 = vmatpush.msra.mxu0 0.0
      %3086 = vmatpush.msra.mxu0 0.0
      %3087 = vmatpush.msra.mxu0 0.0
      %3088 = vmatpush.msra.mxu0 0.0
      %3089 = vmatpush.msra.mxu0 %v3004
      %3090 = vmatmul.f32.gmra.mxu0 %v2996
      %v3091 = vpop.f32.mrf.mxu0
      %v3092 = vadd.f32 0.0, %v3091
      %3093 = vdwg.mxu0
      %3094 = vmatpush.msra.mxu0 0.0
      %3095 = vmatpush.msra.mxu0 0.0
      %3096 = vmatpush.msra.mxu0 0.0
      %3097 = vmatpush.msra.mxu0 0.0
      %3098 = vmatpush.msra.mxu0 0.0
      %3099 = vmatpush.msra.mxu0 0.0
      %3100 = vmatpush.msra.mxu0 0.0
      %3101 = vmatpush.msra.mxu0 0.0
      %3102 = vmatpush.msra.mxu0 0.0
      %3103 = vmatpush.msra.mxu0 0.0
      %3104 = vmatpush.msra.mxu0 0.0
      %3105 = vmatpush.msra.mxu0 0.0
      %3106 = vmatpush.msra.mxu0 0.0
      %3107 = vmatpush.msra.mxu0 0.0
      %3108 = vmatpush.msra.mxu0 0.0
      %3109 = vmatpush.msra.mxu0 %v3006
      %3110 = vmatmul.f32.gmra.mxu0 %v2996
      %v3111 = vpop.f32.mrf.mxu0
      %v3112 = vadd.f32 0.0, %v3111
      %3113 = vdwg.mxu0
      %3114 = vmatpush.msra.mxu0 0.0
      %3115 = vmatpush.msra.mxu0 0.0
      %3116 = vmatpush.msra.mxu0 0.0
      %3117 = vmatpush.msra.mxu0 0.0
      %3118 = vmatpush.msra.mxu0 0.0
      %3119 = vmatpush.msra.mxu0 0.0
      %3120 = vmatpush.msra.mxu0 0.0
      %3121 = vmatpush.msra.mxu0 0.0
      %3122 = vmatpush.msra.mxu0 0.0
      %3123 = vmatpush.msra.mxu0 0.0
      %3124 = vmatpush.msra.mxu0 0.0
      %3125 = vmatpush.msra.mxu0 0.0
      %3126 = vmatpush.msra.mxu0 0.0
      %3127 = vmatpush.msra.mxu0 0.0
      %3128 = vmatpush.msra.mxu0 0.0
      %3129 = vmatpush.msra.mxu0 %v3008
      %3130 = vmatmul.f32.gmra.mxu0 %v2996
      %v3131 = vpop.f32.mrf.mxu0
      %v3132 = vadd.f32 0.0, %v3131
      %3133 = vdwg.mxu0
      %3134 = vmatpush.msra.mxu0 0.0
      %3135 = vmatpush.msra.mxu0 0.0
      %3136 = vmatpush.msra.mxu0 0.0
      %3137 = vmatpush.msra.mxu0 0.0
      %3138 = vmatpush.msra.mxu0 0.0
      %3139 = vmatpush.msra.mxu0 0.0
      %3140 = vmatpush.msra.mxu0 0.0
      %3141 = vmatpush.msra.mxu0 0.0
      %3142 = vmatpush.msra.mxu0 0.0
      %3143 = vmatpush.msra.mxu0 0.0
      %3144 = vmatpush.msra.mxu0 0.0
      %3145 = vmatpush.msra.mxu0 0.0
      %3146 = vmatpush.msra.mxu0 0.0
      %3147 = vmatpush.msra.mxu0 0.0
      %3148 = vmatpush.msra.mxu0 0.0
      %3149 = vmatpush.msra.mxu0 %v3010
      %3150 = vmatmul.f32.gmra.mxu0 %v2996
      %v3151 = vpop.f32.mrf.mxu0
      %v3152 = vadd.f32 0.0, %v3151
      %3153 = vdwg.mxu0
      %3154 = vmatpush.msra.mxu0 0.0
      %3155 = vmatpush.msra.mxu0 0.0
      %3156 = vmatpush.msra.mxu0 0.0
      %3157 = vmatpush.msra.mxu0 0.0
      %3158 = vmatpush.msra.mxu0 0.0
      %3159 = vmatpush.msra.mxu0 0.0
      %3160 = vmatpush.msra.mxu0 0.0
      %3161 = vmatpush.msra.mxu0 0.0
      %3162 = vmatpush.msra.mxu0 0.0
      %3163 = vmatpush.msra.mxu0 0.0
      %3164 = vmatpush.msra.mxu0 0.0
      %3165 = vmatpush.msra.mxu0 0.0
      %3166 = vmatpush.msra.mxu0 0.0
      %3167 = vmatpush.msra.mxu0 0.0
      %3168 = vmatpush.msra.mxu0 0.0
      %3169 = vmatpush.msra.mxu0 %v3012
      %3170 = vmatmul.f32.gmra.mxu0 %v2996
      %v3171 = vpop.f32.mrf.mxu0
      %v3172 = vadd.f32 0.0, %v3171
      %3173 = vdwg.mxu0
      %v3174 = vadd.f32 %v2942, %v3032
      %v3175 = vadd.f32 %v2943, %v3052
      %v3176 = vadd.f32 %v2944, %v3072
      %v3177 = vadd.f32 %v2945, %v3092
      %v3178 = vadd.f32 %v2946, %v3112
      %v3179 = vadd.f32 %v2947, %v3132
      %v3180 = vadd.f32 %v2948, %v3152
      %v3181 = vadd.f32 %v2949, %v3172
      %3182 = vrot.lane.b32.xlu0 %v1132, 92
      %v3183 = vpop.permute.xlu0 %3182
      %3184 = vst [vmem:[#allocation1] ss:$2 sm:$0xff] %v1127
      %s3185 = scalar_lea.vmem [#allocation1], 16
      %3186 = vst [vmem:[%s3185] ss:$2 sm:$0xff] %v1128
      %s3187 = scalar_lea.vmem [#allocation1], 32
      %3188 = vst [vmem:[%s3187] ss:$2 sm:$0xff] %v1129
      %s3189 = scalar_lea.vmem [#allocation1], 48
      %3190 = vst [vmem:[%s3189] ss:$2 sm:$0xff] %v1130
      %v3191 = vld.sshfl [vmem:[#allocation1] sm:$0xff pattern:$0x75316420]
      %v3192 = vld.sshfl [vmem:[#allocation1 + $0x8] sm:$0xff pattern:$0x75316420]
      %v3193 = vld.sshfl [vmem:[#allocation1 + $0x10] sm:$0xff pattern:$0x75316420]
      %v3194 = vld.sshfl [vmem:[#allocation1 + $0x18] sm:$0xff pattern:$0x75316420]
      %v3195 = vld.sshfl [vmem:[#allocation1 + $0x20] sm:$0xff pattern:$0x75316420]
      %v3196 = vld.sshfl [vmem:[#allocation1 + $0x28] sm:$0xff pattern:$0x75316420]
      %v3197 = vld.sshfl [vmem:[#allocation1 + $0x30] sm:$0xff pattern:$0x75316420]
      %v3198 = vld.sshfl [vmem:[#allocation1 + $0x38] sm:$0xff pattern:$0x75316420]
      %3199 = vst [vmem:[#allocation1] ss:$2 sm:$0xff] %v1131
      %v3200 = vld.sshfl [vmem:[#allocation1] sm:$0xff pattern:$0x75316420]
      %3201 = vrot.lane.b32.xlu0 %v3191, 119
      %v3202 = vpop.permute.xlu0 %3201
      %3203 = vrot.lane.b32.xlu0 %v3192, 119
      %v3204 = vpop.permute.xlu0 %3203
      %3205 = vrot.lane.b32.xlu0 %v3193, 119
      %v3206 = vpop.permute.xlu0 %3205
      %3207 = vrot.lane.b32.xlu0 %v3194, 119
      %v3208 = vpop.permute.xlu0 %3207
      %3209 = vrot.lane.b32.xlu0 %v3195, 119
      %v3210 = vpop.permute.xlu0 %3209
      %3211 = vrot.lane.b32.xlu0 %v3196, 119
      %v3212 = vpop.permute.xlu0 %3211
      %3213 = vrot.lane.b32.xlu0 %v3197, 119
      %v3214 = vpop.permute.xlu0 %3213
      %3215 = vrot.lane.b32.xlu0 %v3198, 119
      %v3216 = vpop.permute.xlu0 %3215
      %3217 = vrot.lane.b32.xlu0 %v3200, 119
      %v3218 = vpop.permute.xlu0 %3217
      %vm3219 = vcmask 973824
      %v3220 = vsel %vm3219, %v3202, %v3204
      %v3221 = vsel %vm3219, %v3204, %v3206
      %v3222 = vsel %vm3219, %v3206, %v3208
      %v3223 = vsel %vm3219, %v3208, %v3210
      %v3224 = vsel %vm3219, %v3210, %v3212
      %v3225 = vsel %vm3219, %v3212, %v3214
      %v3226 = vsel %vm3219, %v3214, %v3216
      %v3227 = vsel %vm3219, %v3216, %v3218
      %v3228 = vsel %vm1185, %v3183, 0
      %v3230 = vsel %vm1188, %v3220, 0
      %v3232 = vsel %vm1188, %v3221, 0
      %v3234 = vsel %vm1188, %v3222, 0
      %v3236 = vsel %vm1188, %v3223, 0
      %v3238 = vsel %vm1188, %v3224, 0
      %v3240 = vsel %vm1188, %v3225, 0
      %v3242 = vsel %vm1188, %v3226, 0
      %v3244 = vsel %vm1188, %v3227, 0
      %3246 = vmatpush.msra.mxu0 0.0
      %3247 = vmatpush.msra.mxu0 0.0
      %3248 = vmatpush.msra.mxu0 0.0
      %3249 = vmatpush.msra.mxu0 0.0
      %3250 = vmatpush.msra.mxu0 0.0
      %3251 = vmatpush.msra.mxu0 0.0
      %3252 = vmatpush.msra.mxu0 0.0
      %3253 = vmatpush.msra.mxu0 0.0
      %3254 = vmatpush.msra.mxu0 0.0
      %3255 = vmatpush.msra.mxu0 0.0
      %3256 = vmatpush.msra.mxu0 0.0
      %3257 = vmatpush.msra.mxu0 0.0
      %3258 = vmatpush.msra.mxu0 0.0
      %3259 = vmatpush.msra.mxu0 0.0
      %3260 = vmatpush.msra.mxu0 0.0
      %3261 = vmatpush.msra.mxu0 %v3230
      %3262 = vmatmul.f32.gmra.mxu0 %v3228
      %v3263 = vpop.f32.mrf.mxu0
      %v3264 = vadd.f32 0.0, %v3263
      %3265 = vdwg.mxu0
      %3266 = vmatpush.msra.mxu0 0.0
      %3267 = vmatpush.msra.mxu0 0.0
      %3268 = vmatpush.msra.mxu0 0.0
      %3269 = vmatpush.msra.mxu0 0.0
      %3270 = vmatpush.msra.mxu0 0.0
      %3271 = vmatpush.msra.mxu0 0.0
      %3272 = vmatpush.msra.mxu0 0.0
      %3273 = vmatpush.msra.mxu0 0.0
      %3274 = vmatpush.msra.mxu0 0.0
      %3275 = vmatpush.msra.mxu0 0.0
      %3276 = vmatpush.msra.mxu0 0.0
      %3277 = vmatpush.msra.mxu0 0.0
      %3278 = vmatpush.msra.mxu0 0.0
      %3279 = vmatpush.msra.mxu0 0.0
      %3280 = vmatpush.msra.mxu0 0.0
      %3281 = vmatpush.msra.mxu0 %v3232
      %3282 = vmatmul.f32.gmra.mxu0 %v3228
      %v3283 = vpop.f32.mrf.mxu0
      %v3284 = vadd.f32 0.0, %v3283
      %3285 = vdwg.mxu0
      %3286 = vmatpush.msra.mxu0 0.0
      %3287 = vmatpush.msra.mxu0 0.0
      %3288 = vmatpush.msra.mxu0 0.0
      %3289 = vmatpush.msra.mxu0 0.0
      %3290 = vmatpush.msra.mxu0 0.0
      %3291 = vmatpush.msra.mxu0 0.0
      %3292 = vmatpush.msra.mxu0 0.0
      %3293 = vmatpush.msra.mxu0 0.0
      %3294 = vmatpush.msra.mxu0 0.0
      %3295 = vmatpush.msra.mxu0 0.0
      %3296 = vmatpush.msra.mxu0 0.0
      %3297 = vmatpush.msra.mxu0 0.0
      %3298 = vmatpush.msra.mxu0 0.0
      %3299 = vmatpush.msra.mxu0 0.0
      %3300 = vmatpush.msra.mxu0 0.0
      %3301 = vmatpush.msra.mxu0 %v3234
      %3302 = vmatmul.f32.gmra.mxu0 %v3228
      %v3303 = vpop.f32.mrf.mxu0
      %v3304 = vadd.f32 0.0, %v3303
      %3305 = vdwg.mxu0
      %3306 = vmatpush.msra.mxu0 0.0
      %3307 = vmatpush.msra.mxu0 0.0
      %3308 = vmatpush.msra.mxu0 0.0
      %3309 = vmatpush.msra.mxu0 0.0
      %3310 = vmatpush.msra.mxu0 0.0
      %3311 = vmatpush.msra.mxu0 0.0
      %3312 = vmatpush.msra.mxu0 0.0
      %3313 = vmatpush.msra.mxu0 0.0
      %3314 = vmatpush.msra.mxu0 0.0
      %3315 = vmatpush.msra.mxu0 0.0
      %3316 = vmatpush.msra.mxu0 0.0
      %3317 = vmatpush.msra.mxu0 0.0
      %3318 = vmatpush.msra.mxu0 0.0
      %3319 = vmatpush.msra.mxu0 0.0
      %3320 = vmatpush.msra.mxu0 0.0
      %3321 = vmatpush.msra.mxu0 %v3236
      %3322 = vmatmul.f32.gmra.mxu0 %v3228
      %v3323 = vpop.f32.mrf.mxu0
      %v3324 = vadd.f32 0.0, %v3323
      %3325 = vdwg.mxu0
      %3326 = vmatpush.msra.mxu0 0.0
      %3327 = vmatpush.msra.mxu0 0.0
      %3328 = vmatpush.msra.mxu0 0.0
      %3329 = vmatpush.msra.mxu0 0.0
      %3330 = vmatpush.msra.mxu0 0.0
      %3331 = vmatpush.msra.mxu0 0.0
      %3332 = vmatpush.msra.mxu0 0.0
      %3333 = vmatpush.msra.mxu0 0.0
      %3334 = vmatpush.msra.mxu0 0.0
      %3335 = vmatpush.msra.mxu0 0.0
      %3336 = vmatpush.msra.mxu0 0.0
      %3337 = vmatpush.msra.mxu0 0.0
      %3338 = vmatpush.msra.mxu0 0.0
      %3339 = vmatpush.msra.mxu0 0.0
      %3340 = vmatpush.msra.mxu0 0.0
      %3341 = vmatpush.msra.mxu0 %v3238
      %3342 = vmatmul.f32.gmra.mxu0 %v3228
      %v3343 = vpop.f32.mrf.mxu0
      %v3344 = vadd.f32 0.0, %v3343
      %3345 = vdwg.mxu0
      %3346 = vmatpush.msra.mxu0 0.0
      %3347 = vmatpush.msra.mxu0 0.0
      %3348 = vmatpush.msra.mxu0 0.0
      %3349 = vmatpush.msra.mxu0 0.0
      %3350 = vmatpush.msra.mxu0 0.0
      %3351 = vmatpush.msra.mxu0 0.0
      %3352 = vmatpush.msra.mxu0 0.0
      %3353 = vmatpush.msra.mxu0 0.0
      %3354 = vmatpush.msra.mxu0 0.0
      %3355 = vmatpush.msra.mxu0 0.0
      %3356 = vmatpush.msra.mxu0 0.0
      %3357 = vmatpush.msra.mxu0 0.0
      %3358 = vmatpush.msra.mxu0 0.0
      %3359 = vmatpush.msra.mxu0 0.0
      %3360 = vmatpush.msra.mxu0 0.0
      %3361 = vmatpush.msra.mxu0 %v3240
      %3362 = vmatmul.f32.gmra.mxu0 %v3228
      %v3363 = vpop.f32.mrf.mxu0
      %v3364 = vadd.f32 0.0, %v3363
      %3365 = vdwg.mxu0
      %3366 = vmatpush.msra.mxu0 0.0
      %3367 = vmatpush.msra.mxu0 0.0
      %3368 = vmatpush.msra.mxu0 0.0
      %3369 = vmatpush.msra.mxu0 0.0
      %3370 = vmatpush.msra.mxu0 0.0
      %3371 = vmatpush.msra.mxu0 0.0
      %3372 = vmatpush.msra.mxu0 0.0
      %3373 = vmatpush.msra.mxu0 0.0
      %3374 = vmatpush.msra.mxu0 0.0
      %3375 = vmatpush.msra.mxu0 0.0
      %3376 = vmatpush.msra.mxu0 0.0
      %3377 = vmatpush.msra.mxu0 0.0
      %3378 = vmatpush.msra.mxu0 0.0
      %3379 = vmatpush.msra.mxu0 0.0
      %3380 = vmatpush.msra.mxu0 0.0
      %3381 = vmatpush.msra.mxu0 %v3242
      %3382 = vmatmul.f32.gmra.mxu0 %v3228
      %v3383 = vpop.f32.mrf.mxu0
      %v3384 = vadd.f32 0.0, %v3383
      %3385 = vdwg.mxu0
      %3386 = vmatpush.msra.mxu0 0.0
      %3387 = vmatpush.msra.mxu0 0.0
      %3388 = vmatpush.msra.mxu0 0.0
      %3389 = vmatpush.msra.mxu0 0.0
      %3390 = vmatpush.msra.mxu0 0.0
      %3391 = vmatpush.msra.mxu0 0.0
      %3392 = vmatpush.msra.mxu0 0.0
      %3393 = vmatpush.msra.mxu0 0.0
      %3394 = vmatpush.msra.mxu0 0.0
      %3395 = vmatpush.msra.mxu0 0.0
      %3396 = vmatpush.msra.mxu0 0.0
      %3397 = vmatpush.msra.mxu0 0.0
      %3398 = vmatpush.msra.mxu0 0.0
      %3399 = vmatpush.msra.mxu0 0.0
      %3400 = vmatpush.msra.mxu0 0.0
      %3401 = vmatpush.msra.mxu0 %v3244
      %3402 = vmatmul.f32.gmra.mxu0 %v3228
      %v3403 = vpop.f32.mrf.mxu0
      %v3404 = vadd.f32 0.0, %v3403
      %3405 = vdwg.mxu0
      %v3406 = vadd.f32 %v3174, %v3264
      %v3407 = vadd.f32 %v3175, %v3284
      %v3408 = vadd.f32 %v3176, %v3304
      %v3409 = vadd.f32 %v3177, %v3324
      %v3410 = vadd.f32 %v3178, %v3344
      %v3411 = vadd.f32 %v3179, %v3364
      %v3412 = vadd.f32 %v3180, %v3384
      %v3413 = vadd.f32 %v3181, %v3404
      %3414 = vrot.lane.b32.xlu0 %v1132, 88
      %v3415 = vpop.permute.xlu0 %3414
      %3416 = vst [vmem:[#allocation1] ss:$2 sm:$0xff] %v1127
      %s3417 = scalar_lea.vmem [#allocation1], 16
      %3418 = vst [vmem:[%s3417] ss:$2 sm:$0xff] %v1128
      %s3419 = scalar_lea.vmem [#allocation1], 32
      %3420 = vst [vmem:[%s3419] ss:$2 sm:$0xff] %v1129
      %s3421 = scalar_lea.vmem [#allocation1], 48
      %3422 = vst [vmem:[%s3421] ss:$2 sm:$0xff] %v1130
      %v3423 = vld.sshfl [vmem:[#allocation1] sm:$0xff pattern:$0x75316420]
      %v3424 = vld.sshfl [vmem:[#allocation1 + $0x8] sm:$0xff pattern:$0x75316420]
      %v3425 = vld.sshfl [vmem:[#allocation1 + $0x10] sm:$0xff pattern:$0x75316420]
      %v3426 = vld.sshfl [vmem:[#allocation1 + $0x18] sm:$0xff pattern:$0x75316420]
      %v3427 = vld.sshfl [vmem:[#allocation1 + $0x20] sm:$0xff pattern:$0x75316420]
      %v3428 = vld.sshfl [vmem:[#allocation1 + $0x28] sm:$0xff pattern:$0x75316420]
      %v3429 = vld.sshfl [vmem:[#allocation1 + $0x30] sm:$0xff pattern:$0x75316420]
      %v3430 = vld.sshfl [vmem:[#allocation1 + $0x38] sm:$0xff pattern:$0x75316420]
      %3431 = vst [vmem:[#allocation1] ss:$2 sm:$0xff] %v1131
      %v3432 = vld.sshfl [vmem:[#allocation1] sm:$0xff pattern:$0x75316420]
      %3433 = vrot.lane.b32.xlu0 %v3423, 118
      %v3434 = vpop.permute.xlu0 %3433
      %3435 = vrot.lane.b32.xlu0 %v3424, 118
      %v3436 = vpop.permute.xlu0 %3435
      %3437 = vrot.lane.b32.xlu0 %v3425, 118
      %v3438 = vpop.permute.xlu0 %3437
      %3439 = vrot.lane.b32.xlu0 %v3426, 118
      %v3440 = vpop.permute.xlu0 %3439
      %3441 = vrot.lane.b32.xlu0 %v3427, 118
      %v3442 = vpop.permute.xlu0 %3441
      %3443 = vrot.lane.b32.xlu0 %v3428, 118
      %v3444 = vpop.permute.xlu0 %3443
      %3445 = vrot.lane.b32.xlu0 %v3429, 118
      %v3446 = vpop.permute.xlu0 %3445
      %3447 = vrot.lane.b32.xlu0 %v3430, 118
      %v3448 = vpop.permute.xlu0 %3447
      %3449 = vrot.lane.b32.xlu0 %v3432, 118
      %v3450 = vpop.permute.xlu0 %3449
      %vm3451 = vcmask 965632
      %v3452 = vsel %vm3451, %v3434, %v3436
      %v3453 = vsel %vm3451, %v3436, %v3438
      %v3454 = vsel %vm3451, %v3438, %v3440
      %v3455 = vsel %vm3451, %v3440, %v3442
      %v3456 = vsel %vm3451, %v3442, %v3444
      %v3457 = vsel %vm3451, %v3444, %v3446
      %v3458 = vsel %vm3451, %v3446, %v3448
      %v3459 = vsel %vm3451, %v3448, %v3450
      %v3460 = vsel %vm1185, %v3415, 0
      %v3462 = vsel %vm1188, %v3452, 0
      %v3464 = vsel %vm1188, %v3453, 0
      %v3466 = vsel %vm1188, %v3454, 0
      %v3468 = vsel %vm1188, %v3455, 0
      %v3470 = vsel %vm1188, %v3456, 0
      %v3472 = vsel %vm1188, %v3457, 0
      %v3474 = vsel %vm1188, %v3458, 0
      %v3476 = vsel %vm1188, %v3459, 0
      %3478 = vmatpush.msra.mxu0 0.0
      %3479 = vmatpush.msra.mxu0 0.0
      %3480 = vmatpush.msra.mxu0 0.0
      %3481 = vmatpush.msra.mxu0 0.0
      %3482 = vmatpush.msra.mxu0 0.0
      %3483 = vmatpush.msra.mxu0 0.0
      %3484 = vmatpush.msra.mxu0 0.0
      %3485 = vmatpush.msra.mxu0 0.0
      %3486 = vmatpush.msra.mxu0 0.0
      %3487 = vmatpush.msra.mxu0 0.0
      %3488 = vmatpush.msra.mxu0 0.0
      %3489 = vmatpush.msra.mxu0 0.0
      %3490 = vmatpush.msra.mxu0 0.0
      %3491 = vmatpush.msra.mxu0 0.0
      %3492 = vmatpush.msra.mxu0 0.0
      %3493 = vmatpush.msra.mxu0 %v3462
      %3494 = vmatmul.f32.gmra.mxu0 %v3460
      %v3495 = vpop.f32.mrf.mxu0
      %v3496 = vadd.f32 0.0, %v3495
      %3497 = vdwg.mxu0
      %3498 = vmatpush.msra.mxu0 0.0
      %3499 = vmatpush.msra.mxu0 0.0
      %3500 = vmatpush.msra.mxu0 0.0
      %3501 = vmatpush.msra.mxu0 0.0
      %3502 = vmatpush.msra.mxu0 0.0
      %3503 = vmatpush.msra.mxu0 0.0
      %3504 = vmatpush.msra.mxu0 0.0
      %3505 = vmatpush.msra.mxu0 0.0
      %3506 = vmatpush.msra.mxu0 0.0
      %3507 = vmatpush.msra.mxu0 0.0
      %3508 = vmatpush.msra.mxu0 0.0
      %3509 = vmatpush.msra.mxu0 0.0
      %3510 = vmatpush.msra.mxu0 0.0
      %3511 = vmatpush.msra.mxu0 0.0
      %3512 = vmatpush.msra.mxu0 0.0
      %3513 = vmatpush.msra.mxu0 %v3464
      %3514 = vmatmul.f32.gmra.mxu0 %v3460
      %v3515 = vpop.f32.mrf.mxu0
      %v3516 = vadd.f32 0.0, %v3515
      %3517 = vdwg.mxu0
      %3518 = vmatpush.msra.mxu0 0.0
      %3519 = vmatpush.msra.mxu0 0.0
      %3520 = vmatpush.msra.mxu0 0.0
      %3521 = vmatpush.msra.mxu0 0.0
      %3522 = vmatpush.msra.mxu0 0.0
      %3523 = vmatpush.msra.mxu0 0.0
      %3524 = vmatpush.msra.mxu0 0.0
      %3525 = vmatpush.msra.mxu0 0.0
      %3526 = vmatpush.msra.mxu0 0.0
      %3527 = vmatpush.msra.mxu0 0.0
      %3528 = vmatpush.msra.mxu0 0.0
      %3529 = vmatpush.msra.mxu0 0.0
      %3530 = vmatpush.msra.mxu0 0.0
      %3531 = vmatpush.msra.mxu0 0.0
      %3532 = vmatpush.msra.mxu0 0.0
      %3533 = vmatpush.msra.mxu0 %v3466
      %3534 = vmatmul.f32.gmra.mxu0 %v3460
      %v3535 = vpop.f32.mrf.mxu0
      %v3536 = vadd.f32 0.0, %v3535
      %3537 = vdwg.mxu0
      %3538 = vmatpush.msra.mxu0 0.0
      %3539 = vmatpush.msra.mxu0 0.0
      %3540 = vmatpush.msra.mxu0 0.0
      %3541 = vmatpush.msra.mxu0 0.0
      %3542 = vmatpush.msra.mxu0 0.0
      %3543 = vmatpush.msra.mxu0 0.0
      %3544 = vmatpush.msra.mxu0 0.0
      %3545 = vmatpush.msra.mxu0 0.0
      %3546 = vmatpush.msra.mxu0 0.0
      %3547 = vmatpush.msra.mxu0 0.0
      %3548 = vmatpush.msra.mxu0 0.0
      %3549 = vmatpush.msra.mxu0 0.0
      %3550 = vmatpush.msra.mxu0 0.0
      %3551 = vmatpush.msra.mxu0 0.0
      %3552 = vmatpush.msra.mxu0 0.0
      %3553 = vmatpush.msra.mxu0 %v3468
      %3554 = vmatmul.f32.gmra.mxu0 %v3460
      %v3555 = vpop.f32.mrf.mxu0
      %v3556 = vadd.f32 0.0, %v3555
      %3557 = vdwg.mxu0
      %3558 = vmatpush.msra.mxu0 0.0
      %3559 = vmatpush.msra.mxu0 0.0
      %3560 = vmatpush.msra.mxu0 0.0
      %3561 = vmatpush.msra.mxu0 0.0
      %3562 = vmatpush.msra.mxu0 0.0
      %3563 = vmatpush.msra.mxu0 0.0
      %3564 = vmatpush.msra.mxu0 0.0
      %3565 = vmatpush.msra.mxu0 0.0
      %3566 = vmatpush.msra.mxu0 0.0
      %3567 = vmatpush.msra.mxu0 0.0
      %3568 = vmatpush.msra.mxu0 0.0
      %3569 = vmatpush.msra.mxu0 0.0
      %3570 = vmatpush.msra.mxu0 0.0
      %3571 = vmatpush.msra.mxu0 0.0
      %3572 = vmatpush.msra.mxu0 0.0
      %3573 = vmatpush.msra.mxu0 %v3470
      %3574 = vmatmul.f32.gmra.mxu0 %v3460
      %v3575 = vpop.f32.mrf.mxu0
      %v3576 = vadd.f32 0.0, %v3575
      %3577 = vdwg.mxu0
      %3578 = vmatpush.msra.mxu0 0.0
      %3579 = vmatpush.msra.mxu0 0.0
      %3580 = vmatpush.msra.mxu0 0.0
      %3581 = vmatpush.msra.mxu0 0.0
      %3582 = vmatpush.msra.mxu0 0.0
      %3583 = vmatpush.msra.mxu0 0.0
      %3584 = vmatpush.msra.mxu0 0.0
      %3585 = vmatpush.msra.mxu0 0.0
      %3586 = vmatpush.msra.mxu0 0.0
      %3587 = vmatpush.msra.mxu0 0.0
      %3588 = vmatpush.msra.mxu0 0.0
      %3589 = vmatpush.msra.mxu0 0.0
      %3590 = vmatpush.msra.mxu0 0.0
      %3591 = vmatpush.msra.mxu0 0.0
      %3592 = vmatpush.msra.mxu0 0.0
      %3593 = vmatpush.msra.mxu0 %v3472
      %3594 = vmatmul.f32.gmra.mxu0 %v3460
      %v3595 = vpop.f32.mrf.mxu0
      %v3596 = vadd.f32 0.0, %v3595
      %3597 = vdwg.mxu0
      %3598 = vmatpush.msra.mxu0 0.0
      %3599 = vmatpush.msra.mxu0 0.0
      %3600 = vmatpush.msra.mxu0 0.0
      %3601 = vmatpush.msra.mxu0 0.0
      %3602 = vmatpush.msra.mxu0 0.0
      %3603 = vmatpush.msra.mxu0 0.0
      %3604 = vmatpush.msra.mxu0 0.0
      %3605 = vmatpush.msra.mxu0 0.0
      %3606 = vmatpush.msra.mxu0 0.0
      %3607 = vmatpush.msra.mxu0 0.0
      %3608 = vmatpush.msra.mxu0 0.0
      %3609 = vmatpush.msra.mxu0 0.0
      %3610 = vmatpush.msra.mxu0 0.0
      %3611 = vmatpush.msra.mxu0 0.0
      %3612 = vmatpush.msra.mxu0 0.0
      %3613 = vmatpush.msra.mxu0 %v3474
      %3614 = vmatmul.f32.gmra.mxu0 %v3460
      %v3615 = vpop.f32.mrf.mxu0
      %v3616 = vadd.f32 0.0, %v3615
      %3617 = vdwg.mxu0
      %3618 = vmatpush.msra.mxu0 0.0
      %3619 = vmatpush.msra.mxu0 0.0
      %3620 = vmatpush.msra.mxu0 0.0
      %3621 = vmatpush.msra.mxu0 0.0
      %3622 = vmatpush.msra.mxu0 0.0
      %3623 = vmatpush.msra.mxu0 0.0
      %3624 = vmatpush.msra.mxu0 0.0
      %3625 = vmatpush.msra.mxu0 0.0
      %3626 = vmatpush.msra.mxu0 0.0
      %3627 = vmatpush.msra.mxu0 0.0
      %3628 = vmatpush.msra.mxu0 0.0
      %3629 = vmatpush.msra.mxu0 0.0
      %3630 = vmatpush.msra.mxu0 0.0
      %3631 = vmatpush.msra.mxu0 0.0
      %3632 = vmatpush.msra.mxu0 0.0
      %3633 = vmatpush.msra.mxu0 %v3476
      %3634 = vmatmul.f32.gmra.mxu0 %v3460
      %v3635 = vpop.f32.mrf.mxu0
      %v3636 = vadd.f32 0.0, %v3635
      %3637 = vdwg.mxu0
      %v3638 = vadd.f32 %v3406, %v3496
      %v3639 = vadd.f32 %v3407, %v3516
      %v3640 = vadd.f32 %v3408, %v3536
      %v3641 = vadd.f32 %v3409, %v3556
      %v3642 = vadd.f32 %v3410, %v3576
      %v3643 = vadd.f32 %v3411, %v3596
      %v3644 = vadd.f32 %v3412, %v3616
      %v3645 = vadd.f32 %v3413, %v3636
      %3646 = vrot.lane.b32.xlu0 %v1132, 84
      %v3647 = vpop.permute.xlu0 %3646
      %3648 = vst [vmem:[#allocation1] ss:$2 sm:$0xff] %v1127
      %s3649 = scalar_lea.vmem [#allocation1], 16
      %3650 = vst [vmem:[%s3649] ss:$2 sm:$0xff] %v1128
      %s3651 = scalar_lea.vmem [#allocation1], 32
      %3652 = vst [vmem:[%s3651] ss:$2 sm:$0xff] %v1129
      %s3653 = scalar_lea.vmem [#allocation1], 48
      %3654 = vst [vmem:[%s3653] ss:$2 sm:$0xff] %v1130
      %v3655 = vld.sshfl [vmem:[#allocation1] sm:$0xff pattern:$0x75316420]
      %v3656 = vld.sshfl [vmem:[#allocation1 + $0x8] sm:$0xff pattern:$0x75316420]
      %v3657 = vld.sshfl [vmem:[#allocation1 + $0x10] sm:$0xff pattern:$0x75316420]
      %v3658 = vld.sshfl [vmem:[#allocation1 + $0x18] sm:$0xff pattern:$0x75316420]
      %v3659 = vld.sshfl [vmem:[#allocation1 + $0x20] sm:$0xff pattern:$0x75316420]
      %v3660 = vld.sshfl [vmem:[#allocation1 + $0x28] sm:$0xff pattern:$0x75316420]
      %v3661 = vld.sshfl [vmem:[#allocation1 + $0x30] sm:$0xff pattern:$0x75316420]
      %v3662 = vld.sshfl [vmem:[#allocation1 + $0x38] sm:$0xff pattern:$0x75316420]
      %3663 = vst [vmem:[#allocation1] ss:$2 sm:$0xff] %v1131
      %v3664 = vld.sshfl [vmem:[#allocation1] sm:$0xff pattern:$0x75316420]
      %3665 = vrot.lane.b32.xlu0 %v3655, 117
      %v3666 = vpop.permute.xlu0 %3665
      %3667 = vrot.lane.b32.xlu0 %v3656, 117
      %v3668 = vpop.permute.xlu0 %3667
      %3669 = vrot.lane.b32.xlu0 %v3657, 117
      %v3670 = vpop.permute.xlu0 %3669
      %3671 = vrot.lane.b32.xlu0 %v3658, 117
      %v3672 = vpop.permute.xlu0 %3671
      %3673 = vrot.lane.b32.xlu0 %v3659, 117
      %v3674 = vpop.permute.xlu0 %3673
      %3675 = vrot.lane.b32.xlu0 %v3660, 117
      %v3676 = vpop.permute.xlu0 %3675
      %3677 = vrot.lane.b32.xlu0 %v3661, 117
      %v3678 = vpop.permute.xlu0 %3677
      %3679 = vrot.lane.b32.xlu0 %v3662, 117
      %v3680 = vpop.permute.xlu0 %3679
      %3681 = vrot.lane.b32.xlu0 %v3664, 117
      %v3682 = vpop.permute.xlu0 %3681
      %vm3683 = vcmask 957440
      %v3684 = vsel %vm3683, %v3666, %v3668
      %v3685 = vsel %vm3683, %v3668, %v3670
      %v3686 = vsel %vm3683, %v3670, %v3672
      %v3687 = vsel %vm3683, %v3672, %v3674
      %v3688 = vsel %vm3683, %v3674, %v3676
      %v3689 = vsel %vm3683, %v3676, %v3678
      %v3690 = vsel %vm3683, %v3678, %v3680
      %v3691 = vsel %vm3683, %v3680, %v3682
      %v3692 = vsel %vm1185, %v3647, 0
      %v3694 = vsel %vm1188, %v3684, 0
      %v3696 = vsel %vm1188, %v3685, 0
      %v3698 = vsel %vm1188, %v3686, 0
      %v3700 = vsel %vm1188, %v3687, 0
      %v3702 = vsel %vm1188, %v3688, 0
      %v3704 = vsel %vm1188, %v3689, 0
      %v3706 = vsel %vm1188, %v3690, 0
      %v3708 = vsel %vm1188, %v3691, 0
      %3710 = vmatpush.msra.mxu0 0.0
      %3711 = vmatpush.msra.mxu0 0.0
      %3712 = vmatpush.msra.mxu0 0.0
      %3713 = vmatpush.msra.mxu0 0.0
      %3714 = vmatpush.msra.mxu0 0.0
      %3715 = vmatpush.msra.mxu0 0.0
      %3716 = vmatpush.msra.mxu0 0.0
      %3717 = vmatpush.msra.mxu0 0.0
      %3718 = vmatpush.msra.mxu0 0.0
      %3719 = vmatpush.msra.mxu0 0.0
      %3720 = vmatpush.msra.mxu0 0.0
      %3721 = vmatpush.msra.mxu0 0.0
      %3722 = vmatpush.msra.mxu0 0.0
      %3723 = vmatpush.msra.mxu0 0.0
      %3724 = vmatpush.msra.mxu0 0.0
      %3725 = vmatpush.msra.mxu0 %v3694
      %3726 = vmatmul.f32.gmra.mxu0 %v3692
      %v3727 = vpop.f32.mrf.mxu0
      %v3728 = vadd.f32 0.0, %v3727
      %3729 = vdwg.mxu0
      %3730 = vmatpush.msra.mxu0 0.0
      %3731 = vmatpush.msra.mxu0 0.0
      %3732 = vmatpush.msra.mxu0 0.0
      %3733 = vmatpush.msra.mxu0 0.0
      %3734 = vmatpush.msra.mxu0 0.0
      %3735 = vmatpush.msra.mxu0 0.0
      %3736 = vmatpush.msra.mxu0 0.0
      %3737 = vmatpush.msra.mxu0 0.0
      %3738 = vmatpush.msra.mxu0 0.0
      %3739 = vmatpush.msra.mxu0 0.0
      %3740 = vmatpush.msra.mxu0 0.0
      %3741 = vmatpush.msra.mxu0 0.0
      %3742 = vmatpush.msra.mxu0 0.0
      %3743 = vmatpush.msra.mxu0 0.0
      %3744 = vmatpush.msra.mxu0 0.0
      %3745 = vmatpush.msra.mxu0 %v3696
      %3746 = vmatmul.f32.gmra.mxu0 %v3692
      %v3747 = vpop.f32.mrf.mxu0
      %v3748 = vadd.f32 0.0, %v3747
      %3749 = vdwg.mxu0
      %3750 = vmatpush.msra.mxu0 0.0
      %3751 = vmatpush.msra.mxu0 0.0
      %3752 = vmatpush.msra.mxu0 0.0
      %3753 = vmatpush.msra.mxu0 0.0
      %3754 = vmatpush.msra.mxu0 0.0
      %3755 = vmatpush.msra.mxu0 0.0
      %3756 = vmatpush.msra.mxu0 0.0
      %3757 = vmatpush.msra.mxu0 0.0
      %3758 = vmatpush.msra.mxu0 0.0
      %3759 = vmatpush.msra.mxu0 0.0
      %3760 = vmatpush.msra.mxu0 0.0
      %3761 = vmatpush.msra.mxu0 0.0
      %3762 = vmatpush.msra.mxu0 0.0
      %3763 = vmatpush.msra.mxu0 0.0
      %3764 = vmatpush.msra.mxu0 0.0
      %3765 = vmatpush.msra.mxu0 %v3698
      %3766 = vmatmul.f32.gmra.mxu0 %v3692
      %v3767 = vpop.f32.mrf.mxu0
      %v3768 = vadd.f32 0.0, %v3767
      %3769 = vdwg.mxu0
      %3770 = vmatpush.msra.mxu0 0.0
      %3771 = vmatpush.msra.mxu0 0.0
      %3772 = vmatpush.msra.mxu0 0.0
      %3773 = vmatpush.msra.mxu0 0.0
      %3774 = vmatpush.msra.mxu0 0.0
      %3775 = vmatpush.msra.mxu0 0.0
      %3776 = vmatpush.msra.mxu0 0.0
      %3777 = vmatpush.msra.mxu0 0.0
      %3778 = vmatpush.msra.mxu0 0.0
      %3779 = vmatpush.msra.mxu0 0.0
      %3780 = vmatpush.msra.mxu0 0.0
      %3781 = vmatpush.msra.mxu0 0.0
      %3782 = vmatpush.msra.mxu0 0.0
      %3783 = vmatpush.msra.mxu0 0.0
      %3784 = vmatpush.msra.mxu0 0.0
      %3785 = vmatpush.msra.mxu0 %v3700
      %3786 = vmatmul.f32.gmra.mxu0 %v3692
      %v3787 = vpop.f32.mrf.mxu0
      %v3788 = vadd.f32 0.0, %v3787
      %3789 = vdwg.mxu0
      %3790 = vmatpush.msra.mxu0 0.0
      %3791 = vmatpush.msra.mxu0 0.0
      %3792 = vmatpush.msra.mxu0 0.0
      %3793 = vmatpush.msra.mxu0 0.0
      %3794 = vmatpush.msra.mxu0 0.0
      %3795 = vmatpush.msra.mxu0 0.0
      %3796 = vmatpush.msra.mxu0 0.0
      %3797 = vmatpush.msra.mxu0 0.0
      %3798 = vmatpush.msra.mxu0 0.0
      %3799 = vmatpush.msra.mxu0 0.0
      %3800 = vmatpush.msra.mxu0 0.0
      %3801 = vmatpush.msra.mxu0 0.0
      %3802 = vmatpush.msra.mxu0 0.0
      %3803 = vmatpush.msra.mxu0 0.0
      %3804 = vmatpush.msra.mxu0 0.0
      %3805 = vmatpush.msra.mxu0 %v3702
      %3806 = vmatmul.f32.gmra.mxu0 %v3692
      %v3807 = vpop.f32.mrf.mxu0
      %v3808 = vadd.f32 0.0, %v3807
      %3809 = vdwg.mxu0
      %3810 = vmatpush.msra.mxu0 0.0
      %3811 = vmatpush.msra.mxu0 0.0
      %3812 = vmatpush.msra.mxu0 0.0
      %3813 = vmatpush.msra.mxu0 0.0
      %3814 = vmatpush.msra.mxu0 0.0
      %3815 = vmatpush.msra.mxu0 0.0
      %3816 = vmatpush.msra.mxu0 0.0
      %3817 = vmatpush.msra.mxu0 0.0
      %3818 = vmatpush.msra.mxu0 0.0
      %3819 = vmatpush.msra.mxu0 0.0
      %3820 = vmatpush.msra.mxu0 0.0
      %3821 = vmatpush.msra.mxu0 0.0
      %3822 = vmatpush.msra.mxu0 0.0
      %3823 = vmatpush.msra.mxu0 0.0
      %3824 = vmatpush.msra.mxu0 0.0
      %3825 = vmatpush.msra.mxu0 %v3704
      %3826 = vmatmul.f32.gmra.mxu0 %v3692
      %v3827 = vpop.f32.mrf.mxu0
      %v3828 = vadd.f32 0.0, %v3827
      %3829 = vdwg.mxu0
      %3830 = vmatpush.msra.mxu0 0.0
      %3831 = vmatpush.msra.mxu0 0.0
      %3832 = vmatpush.msra.mxu0 0.0
      %3833 = vmatpush.msra.mxu0 0.0
      %3834 = vmatpush.msra.mxu0 0.0
      %3835 = vmatpush.msra.mxu0 0.0
      %3836 = vmatpush.msra.mxu0 0.0
      %3837 = vmatpush.msra.mxu0 0.0
      %3838 = vmatpush.msra.mxu0 0.0
      %3839 = vmatpush.msra.mxu0 0.0
      %3840 = vmatpush.msra.mxu0 0.0
      %3841 = vmatpush.msra.mxu0 0.0
      %3842 = vmatpush.msra.mxu0 0.0
      %3843 = vmatpush.msra.mxu0 0.0
      %3844 = vmatpush.msra.mxu0 0.0
      %3845 = vmatpush.msra.mxu0 %v3706
      %3846 = vmatmul.f32.gmra.mxu0 %v3692
      %v3847 = vpop.f32.mrf.mxu0
      %v3848 = vadd.f32 0.0, %v3847
      %3849 = vdwg.mxu0
      %3850 = vmatpush.msra.mxu0 0.0
      %3851 = vmatpush.msra.mxu0 0.0
      %3852 = vmatpush.msra.mxu0 0.0
      %3853 = vmatpush.msra.mxu0 0.0
      %3854 = vmatpush.msra.mxu0 0.0
      %3855 = vmatpush.msra.mxu0 0.0
      %3856 = vmatpush.msra.mxu0 0.0
      %3857 = vmatpush.msra.mxu0 0.0
      %3858 = vmatpush.msra.mxu0 0.0
      %3859 = vmatpush.msra.mxu0 0.0
      %3860 = vmatpush.msra.mxu0 0.0
      %3861 = vmatpush.msra.mxu0 0.0
      %3862 = vmatpush.msra.mxu0 0.0
      %3863 = vmatpush.msra.mxu0 0.0
      %3864 = vmatpush.msra.mxu0 0.0
      %3865 = vmatpush.msra.mxu0 %v3708
      %3866 = vmatmul.f32.gmra.mxu0 %v3692
      %v3867 = vpop.f32.mrf.mxu0
      %v3868 = vadd.f32 0.0, %v3867
      %3869 = vdwg.mxu0
      %v3870 = vadd.f32 %v3638, %v3728
      %v3871 = vadd.f32 %v3639, %v3748
      %v3872 = vadd.f32 %v3640, %v3768
      %v3873 = vadd.f32 %v3641, %v3788
      %v3874 = vadd.f32 %v3642, %v3808
      %v3875 = vadd.f32 %v3643, %v3828
      %v3876 = vadd.f32 %v3644, %v3848
      %v3877 = vadd.f32 %v3645, %v3868
      %3878 = vrot.lane.b32.xlu0 %v1132, 80
      %v3879 = vpop.permute.xlu0 %3878
      %3880 = vst [vmem:[#allocation1] ss:$2 sm:$0xff] %v1127
      %s3881 = scalar_lea.vmem [#allocation1], 16
      %3882 = vst [vmem:[%s3881] ss:$2 sm:$0xff] %v1128
      %s3883 = scalar_lea.vmem [#allocation1], 32
      %3884 = vst [vmem:[%s3883] ss:$2 sm:$0xff] %v1129
      %s3885 = scalar_lea.vmem [#allocation1], 48
      %3886 = vst [vmem:[%s3885] ss:$2 sm:$0xff] %v1130
      %v3887 = vld.sshfl [vmem:[#allocation1] sm:$0xff pattern:$0x75316420]
      %v3888 = vld.sshfl [vmem:[#allocation1 + $0x8] sm:$0xff pattern:$0x75316420]
      %v3889 = vld.sshfl [vmem:[#allocation1 + $0x10] sm:$0xff pattern:$0x75316420]
      %v3890 = vld.sshfl [vmem:[#allocation1 + $0x18] sm:$0xff pattern:$0x75316420]
      %v3891 = vld.sshfl [vmem:[#allocation1 + $0x20] sm:$0xff pattern:$0x75316420]
      %v3892 = vld.sshfl [vmem:[#allocation1 + $0x28] sm:$0xff pattern:$0x75316420]
      %v3893 = vld.sshfl [vmem:[#allocation1 + $0x30] sm:$0xff pattern:$0x75316420]
      %v3894 = vld.sshfl [vmem:[#allocation1 + $0x38] sm:$0xff pattern:$0x75316420]
      %3895 = vst [vmem:[#allocation1] ss:$2 sm:$0xff] %v1131
      %v3896 = vld.sshfl [vmem:[#allocation1] sm:$0xff pattern:$0x75316420]
      %3897 = vrot.lane.b32.xlu0 %v3887, 116
      %v3898 = vpop.permute.xlu0 %3897
      %3899 = vrot.lane.b32.xlu0 %v3888, 116
      %v3900 = vpop.permute.xlu0 %3899
      %3901 = vrot.lane.b32.xlu0 %v3889, 116
      %v3902 = vpop.permute.xlu0 %3901
      %3903 = vrot.lane.b32.xlu0 %v3890, 116
      %v3904 = vpop.permute.xlu0 %3903
      %3905 = vrot.lane.b32.xlu0 %v3891, 116
      %v3906 = vpop.permute.xlu0 %3905
      %3907 = vrot.lane.b32.xlu0 %v3892, 116
      %v3908 = vpop.permute.xlu0 %3907
      %3909 = vrot.lane.b32.xlu0 %v3893, 116
      %v3910 = vpop.permute.xlu0 %3909
      %3911 = vrot.lane.b32.xlu0 %v3894, 116
      %v3912 = vpop.permute.xlu0 %3911
      %3913 = vrot.lane.b32.xlu0 %v3896, 116
      %v3914 = vpop.permute.xlu0 %3913
      %vm3915 = vcmask 949248
      %v3916 = vsel %vm3915, %v3898, %v3900
      %v3917 = vsel %vm3915, %v3900, %v3902
      %v3918 = vsel %vm3915, %v3902, %v3904
      %v3919 = vsel %vm3915, %v3904, %v3906
      %v3920 = vsel %vm3915, %v3906, %v3908
      %v3921 = vsel %vm3915, %v3908, %v3910
      %v3922 = vsel %vm3915, %v3910, %v3912
      %v3923 = vsel %vm3915, %v3912, %v3914
      %v3924 = vsel %vm1185, %v3879, 0
      %v3926 = vsel %vm1188, %v3916, 0
      %v3928 = vsel %vm1188, %v3917, 0
      %v3930 = vsel %vm1188, %v3918, 0
      %v3932 = vsel %vm1188, %v3919, 0
      %v3934 = vsel %vm1188, %v3920, 0
      %v3936 = vsel %vm1188, %v3921, 0
      %v3938 = vsel %vm1188, %v3922, 0
      %v3940 = vsel %vm1188, %v3923, 0
      %3942 = vmatpush.msra.mxu0 0.0
      %3943 = vmatpush.msra.mxu0 0.0
      %3944 = vmatpush.msra.mxu0 0.0
      %3945 = vmatpush.msra.mxu0 0.0
      %3946 = vmatpush.msra.mxu0 0.0
      %3947 = vmatpush.msra.mxu0 0.0
      %3948 = vmatpush.msra.mxu0 0.0
      %3949 = vmatpush.msra.mxu0 0.0
      %3950 = vmatpush.msra.mxu0 0.0
      %3951 = vmatpush.msra.mxu0 0.0
      %3952 = vmatpush.msra.mxu0 0.0
      %3953 = vmatpush.msra.mxu0 0.0
      %3954 = vmatpush.msra.mxu0 0.0
      %3955 = vmatpush.msra.mxu0 0.0
      %3956 = vmatpush.msra.mxu0 0.0
      %3957 = vmatpush.msra.mxu0 %v3926
      %3958 = vmatmul.f32.gmra.mxu0 %v3924
      %v3959 = vpop.f32.mrf.mxu0
      %v3960 = vadd.f32 0.0, %v3959
      %3961 = vdwg.mxu0
      %3962 = vmatpush.msra.mxu0 0.0
      %3963 = vmatpush.msra.mxu0 0.0
      %3964 = vmatpush.msra.mxu0 0.0
      %3965 = vmatpush.msra.mxu0 0.0
      %3966 = vmatpush.msra.mxu0 0.0
      %3967 = vmatpush.msra.mxu0 0.0
      %3968 = vmatpush.msra.mxu0 0.0
      %3969 = vmatpush.msra.mxu0 0.0
      %3970 = vmatpush.msra.mxu0 0.0
      %3971 = vmatpush.msra.mxu0 0.0
      %3972 = vmatpush.msra.mxu0 0.0
      %3973 = vmatpush.msra.mxu0 0.0
      %3974 = vmatpush.msra.mxu0 0.0
      %3975 = vmatpush.msra.mxu0 0.0
      %3976 = vmatpush.msra.mxu0 0.0
      %3977 = vmatpush.msra.mxu0 %v3928
      %3978 = vmatmul.f32.gmra.mxu0 %v3924
      %v3979 = vpop.f32.mrf.mxu0
      %v3980 = vadd.f32 0.0, %v3979
      %3981 = vdwg.mxu0
      %3982 = vmatpush.msra.mxu0 0.0
      %3983 = vmatpush.msra.mxu0 0.0
      %3984 = vmatpush.msra.mxu0 0.0
      %3985 = vmatpush.msra.mxu0 0.0
      %3986 = vmatpush.msra.mxu0 0.0
      %3987 = vmatpush.msra.mxu0 0.0
      %3988 = vmatpush.msra.mxu0 0.0
      %3989 = vmatpush.msra.mxu0 0.0
      %3990 = vmatpush.msra.mxu0 0.0
      %3991 = vmatpush.msra.mxu0 0.0
      %3992 = vmatpush.msra.mxu0 0.0
      %3993 = vmatpush.msra.mxu0 0.0
      %3994 = vmatpush.msra.mxu0 0.0
      %3995 = vmatpush.msra.mxu0 0.0
      %3996 = vmatpush.msra.mxu0 0.0
      %3997 = vmatpush.msra.mxu0 %v3930
      %3998 = vmatmul.f32.gmra.mxu0 %v3924
      %v3999 = vpop.f32.mrf.mxu0
      %v4000 = vadd.f32 0.0, %v3999
      %4001 = vdwg.mxu0
      %4002 = vmatpush.msra.mxu0 0.0
      %4003 = vmatpush.msra.mxu0 0.0
      %4004 = vmatpush.msra.mxu0 0.0
      %4005 = vmatpush.msra.mxu0 0.0
      %4006 = vmatpush.msra.mxu0 0.0
      %4007 = vmatpush.msra.mxu0 0.0
      %4008 = vmatpush.msra.mxu0 0.0
      %4009 = vmatpush.msra.mxu0 0.0
      %4010 = vmatpush.msra.mxu0 0.0
      %4011 = vmatpush.msra.mxu0 0.0
      %4012 = vmatpush.msra.mxu0 0.0
      %4013 = vmatpush.msra.mxu0 0.0
      %4014 = vmatpush.msra.mxu0 0.0
      %4015 = vmatpush.msra.mxu0 0.0
      %4016 = vmatpush.msra.mxu0 0.0
      %4017 = vmatpush.msra.mxu0 %v3932
      %4018 = vmatmul.f32.gmra.mxu0 %v3924
      %v4019 = vpop.f32.mrf.mxu0
      %v4020 = vadd.f32 0.0, %v4019
      %4021 = vdwg.mxu0
      %4022 = vmatpush.msra.mxu0 0.0
      %4023 = vmatpush.msra.mxu0 0.0
      %4024 = vmatpush.msra.mxu0 0.0
      %4025 = vmatpush.msra.mxu0 0.0
      %4026 = vmatpush.msra.mxu0 0.0
      %4027 = vmatpush.msra.mxu0 0.0
      %4028 = vmatpush.msra.mxu0 0.0
      %4029 = vmatpush.msra.mxu0 0.0
      %4030 = vmatpush.msra.mxu0 0.0
      %4031 = vmatpush.msra.mxu0 0.0
      %4032 = vmatpush.msra.mxu0 0.0
      %4033 = vmatpush.msra.mxu0 0.0
      %4034 = vmatpush.msra.mxu0 0.0
      %4035 = vmatpush.msra.mxu0 0.0
      %4036 = vmatpush.msra.mxu0 0.0
      %4037 = vmatpush.msra.mxu0 %v3934
      %4038 = vmatmul.f32.gmra.mxu0 %v3924
      %v4039 = vpop.f32.mrf.mxu0
      %v4040 = vadd.f32 0.0, %v4039
      %4041 = vdwg.mxu0
      %4042 = vmatpush.msra.mxu0 0.0
      %4043 = vmatpush.msra.mxu0 0.0
      %4044 = vmatpush.msra.mxu0 0.0
      %4045 = vmatpush.msra.mxu0 0.0
      %4046 = vmatpush.msra.mxu0 0.0
      %4047 = vmatpush.msra.mxu0 0.0
      %4048 = vmatpush.msra.mxu0 0.0
      %4049 = vmatpush.msra.mxu0 0.0
      %4050 = vmatpush.msra.mxu0 0.0
      %4051 = vmatpush.msra.mxu0 0.0
      %4052 = vmatpush.msra.mxu0 0.0
      %4053 = vmatpush.msra.mxu0 0.0
      %4054 = vmatpush.msra.mxu0 0.0
      %4055 = vmatpush.msra.mxu0 0.0
      %4056 = vmatpush.msra.mxu0 0.0
      %4057 = vmatpush.msra.mxu0 %v3936
      %4058 = vmatmul.f32.gmra.mxu0 %v3924
      %v4059 = vpop.f32.mrf.mxu0
      %v4060 = vadd.f32 0.0, %v4059
      %4061 = vdwg.mxu0
      %4062 = vmatpush.msra.mxu0 0.0
      %4063 = vmatpush.msra.mxu0 0.0
      %4064 = vmatpush.msra.mxu0 0.0
      %4065 = vmatpush.msra.mxu0 0.0
      %4066 = vmatpush.msra.mxu0 0.0
      %4067 = vmatpush.msra.mxu0 0.0
      %4068 = vmatpush.msra.mxu0 0.0
      %4069 = vmatpush.msra.mxu0 0.0
      %4070 = vmatpush.msra.mxu0 0.0
      %4071 = vmatpush.msra.mxu0 0.0
      %4072 = vmatpush.msra.mxu0 0.0
      %4073 = vmatpush.msra.mxu0 0.0
      %4074 = vmatpush.msra.mxu0 0.0
      %4075 = vmatpush.msra.mxu0 0.0
      %4076 = vmatpush.msra.mxu0 0.0
      %4077 = vmatpush.msra.mxu0 %v3938
      %4078 = vmatmul.f32.gmra.mxu0 %v3924
      %v4079 = vpop.f32.mrf.mxu0
      %v4080 = vadd.f32 0.0, %v4079
      %4081 = vdwg.mxu0
      %4082 = vmatpush.msra.mxu0 0.0
      %4083 = vmatpush.msra.mxu0 0.0
      %4084 = vmatpush.msra.mxu0 0.0
      %4085 = vmatpush.msra.mxu0 0.0
      %4086 = vmatpush.msra.mxu0 0.0
      %4087 = vmatpush.msra.mxu0 0.0
      %4088 = vmatpush.msra.mxu0 0.0
      %4089 = vmatpush.msra.mxu0 0.0
      %4090 = vmatpush.msra.mxu0 0.0
      %4091 = vmatpush.msra.mxu0 0.0
      %4092 = vmatpush.msra.mxu0 0.0
      %4093 = vmatpush.msra.mxu0 0.0
      %4094 = vmatpush.msra.mxu0 0.0
      %4095 = vmatpush.msra.mxu0 0.0
      %4096 = vmatpush.msra.mxu0 0.0
      %4097 = vmatpush.msra.mxu0 %v3940
      %4098 = vmatmul.f32.gmra.mxu0 %v3924
      %v4099 = vpop.f32.mrf.mxu0
      %v4100 = vadd.f32 0.0, %v4099
      %4101 = vdwg.mxu0
      %v4102 = vadd.f32 %v3870, %v3960
      %v4103 = vadd.f32 %v3871, %v3980
      %v4104 = vadd.f32 %v3872, %v4000
      %v4105 = vadd.f32 %v3873, %v4020
      %v4106 = vadd.f32 %v3874, %v4040
      %v4107 = vadd.f32 %v3875, %v4060
      %v4108 = vadd.f32 %v3876, %v4080
      %v4109 = vadd.f32 %v3877, %v4100
      %4110 = vrot.lane.b32.xlu0 %v1132, 76
      %v4111 = vpop.permute.xlu0 %4110
      %4112 = vst [vmem:[#allocation1] ss:$2 sm:$0xff] %v1127
      %s4113 = scalar_lea.vmem [#allocation1], 16
      %4114 = vst [vmem:[%s4113] ss:$2 sm:$0xff] %v1128
      %s4115 = scalar_lea.vmem [#allocation1], 32
      %4116 = vst [vmem:[%s4115] ss:$2 sm:$0xff] %v1129
      %s4117 = scalar_lea.vmem [#allocation1], 48
      %4118 = vst [vmem:[%s4117] ss:$2 sm:$0xff] %v1130
      %v4119 = vld.sshfl [vmem:[#allocation1] sm:$0xff pattern:$0x75316420]
      %v4120 = vld.sshfl [vmem:[#allocation1 + $0x8] sm:$0xff pattern:$0x75316420]
      %v4121 = vld.sshfl [vmem:[#allocation1 + $0x10] sm:$0xff pattern:$0x75316420]
      %v4122 = vld.sshfl [vmem:[#allocation1 + $0x18] sm:$0xff pattern:$0x75316420]
      %v4123 = vld.sshfl [vmem:[#allocation1 + $0x20] sm:$0xff pattern:$0x75316420]
      %v4124 = vld.sshfl [vmem:[#allocation1 + $0x28] sm:$0xff pattern:$0x75316420]
      %v4125 = vld.sshfl [vmem:[#allocation1 + $0x30] sm:$0xff pattern:$0x75316420]
      %v4126 = vld.sshfl [vmem:[#allocation1 + $0x38] sm:$0xff pattern:$0x75316420]
      %4127 = vst [vmem:[#allocation1] ss:$2 sm:$0xff] %v1131
      %v4128 = vld.sshfl [vmem:[#allocation1] sm:$0xff pattern:$0x75316420]
      %4129 = vrot.lane.b32.xlu0 %v4119, 115
      %v4130 = vpop.permute.xlu0 %4129
      %4131 = vrot.lane.b32.xlu0 %v4120, 115
      %v4132 = vpop.permute.xlu0 %4131
      %4133 = vrot.lane.b32.xlu0 %v4121, 115
      %v4134 = vpop.permute.xlu0 %4133
      %4135 = vrot.lane.b32.xlu0 %v4122, 115
      %v4136 = vpop.permute.xlu0 %4135
      %4137 = vrot.lane.b32.xlu0 %v4123, 115
      %v4138 = vpop.permute.xlu0 %4137
      %4139 = vrot.lane.b32.xlu0 %v4124, 115
      %v4140 = vpop.permute.xlu0 %4139
      %4141 = vrot.lane.b32.xlu0 %v4125, 115
      %v4142 = vpop.permute.xlu0 %4141
      %4143 = vrot.lane.b32.xlu0 %v4126, 115
      %v4144 = vpop.permute.xlu0 %4143
      %4145 = vrot.lane.b32.xlu0 %v4128, 115
      %v4146 = vpop.permute.xlu0 %4145
      %vm4147 = vcmask 941056
      %v4148 = vsel %vm4147, %v4130, %v4132
      %v4149 = vsel %vm4147, %v4132, %v4134
      %v4150 = vsel %vm4147, %v4134, %v4136
      %v4151 = vsel %vm4147, %v4136, %v4138
      %v4152 = vsel %vm4147, %v4138, %v4140
      %v4153 = vsel %vm4147, %v4140, %v4142
      %v4154 = vsel %vm4147, %v4142, %v4144
      %v4155 = vsel %vm4147, %v4144, %v4146
      %v4156 = vsel %vm1185, %v4111, 0
      %v4158 = vsel %vm1188, %v4148, 0
      %v4160 = vsel %vm1188, %v4149, 0
      %v4162 = vsel %vm1188, %v4150, 0
      %v4164 = vsel %vm1188, %v4151, 0
      %v4166 = vsel %vm1188, %v4152, 0
      %v4168 = vsel %vm1188, %v4153, 0
      %v4170 = vsel %vm1188, %v4154, 0
      %v4172 = vsel %vm1188, %v4155, 0
      %4174 = vmatpush.msra.mxu0 0.0
      %4175 = vmatpush.msra.mxu0 0.0
      %4176 = vmatpush.msra.mxu0 0.0
      %4177 = vmatpush.msra.mxu0 0.0
      %4178 = vmatpush.msra.mxu0 0.0
      %4179 = vmatpush.msra.mxu0 0.0
      %4180 = vmatpush.msra.mxu0 0.0
      %4181 = vmatpush.msra.mxu0 0.0
      %4182 = vmatpush.msra.mxu0 0.0
      %4183 = vmatpush.msra.mxu0 0.0
      %4184 = vmatpush.msra.mxu0 0.0
      %4185 = vmatpush.msra.mxu0 0.0
      %4186 = vmatpush.msra.mxu0 0.0
      %4187 = vmatpush.msra.mxu0 0.0
      %4188 = vmatpush.msra.mxu0 0.0
      %4189 = vmatpush.msra.mxu0 %v4158
      %4190 = vmatmul.f32.gmra.mxu0 %v4156
      %v4191 = vpop.f32.mrf.mxu0
      %v4192 = vadd.f32 0.0, %v4191
      %4193 = vdwg.mxu0
      %4194 = vmatpush.msra.mxu0 0.0
      %4195 = vmatpush.msra.mxu0 0.0
      %4196 = vmatpush.msra.mxu0 0.0
      %4197 = vmatpush.msra.mxu0 0.0
      %4198 = vmatpush.msra.mxu0 0.0
      %4199 = vmatpush.msra.mxu0 0.0
      %4200 = vmatpush.msra.mxu0 0.0
      %4201 = vmatpush.msra.mxu0 0.0
      %4202 = vmatpush.msra.mxu0 0.0
      %4203 = vmatpush.msra.mxu0 0.0
      %4204 = vmatpush.msra.mxu0 0.0
      %4205 = vmatpush.msra.mxu0 0.0
      %4206 = vmatpush.msra.mxu0 0.0
      %4207 = vmatpush.msra.mxu0 0.0
      %4208 = vmatpush.msra.mxu0 0.0
      %4209 = vmatpush.msra.mxu0 %v4160
      %4210 = vmatmul.f32.gmra.mxu0 %v4156
      %v4211 = vpop.f32.mrf.mxu0
      %v4212 = vadd.f32 0.0, %v4211
      %4213 = vdwg.mxu0
      %4214 = vmatpush.msra.mxu0 0.0
      %4215 = vmatpush.msra.mxu0 0.0
      %4216 = vmatpush.msra.mxu0 0.0
      %4217 = vmatpush.msra.mxu0 0.0
      %4218 = vmatpush.msra.mxu0 0.0
      %4219 = vmatpush.msra.mxu0 0.0
      %4220 = vmatpush.msra.mxu0 0.0
      %4221 = vmatpush.msra.mxu0 0.0
      %4222 = vmatpush.msra.mxu0 0.0
      %4223 = vmatpush.msra.mxu0 0.0
      %4224 = vmatpush.msra.mxu0 0.0
      %4225 = vmatpush.msra.mxu0 0.0
      %4226 = vmatpush.msra.mxu0 0.0
      %4227 = vmatpush.msra.mxu0 0.0
      %4228 = vmatpush.msra.mxu0 0.0
      %4229 = vmatpush.msra.mxu0 %v4162
      %4230 = vmatmul.f32.gmra.mxu0 %v4156
      %v4231 = vpop.f32.mrf.mxu0
      %v4232 = vadd.f32 0.0, %v4231
      %4233 = vdwg.mxu0
      %4234 = vmatpush.msra.mxu0 0.0
      %4235 = vmatpush.msra.mxu0 0.0
      %4236 = vmatpush.msra.mxu0 0.0
      %4237 = vmatpush.msra.mxu0 0.0
      %4238 = vmatpush.msra.mxu0 0.0
      %4239 = vmatpush.msra.mxu0 0.0
      %4240 = vmatpush.msra.mxu0 0.0
      %4241 = vmatpush.msra.mxu0 0.0
      %4242 = vmatpush.msra.mxu0 0.0
      %4243 = vmatpush.msra.mxu0 0.0
      %4244 = vmatpush.msra.mxu0 0.0
      %4245 = vmatpush.msra.mxu0 0.0
      %4246 = vmatpush.msra.mxu0 0.0
      %4247 = vmatpush.msra.mxu0 0.0
      %4248 = vmatpush.msra.mxu0 0.0
      %4249 = vmatpush.msra.mxu0 %v4164
      %4250 = vmatmul.f32.gmra.mxu0 %v4156
      %v4251 = vpop.f32.mrf.mxu0
      %v4252 = vadd.f32 0.0, %v4251
      %4253 = vdwg.mxu0
      %4254 = vmatpush.msra.mxu0 0.0
      %4255 = vmatpush.msra.mxu0 0.0
      %4256 = vmatpush.msra.mxu0 0.0
      %4257 = vmatpush.msra.mxu0 0.0
      %4258 = vmatpush.msra.mxu0 0.0
      %4259 = vmatpush.msra.mxu0 0.0
      %4260 = vmatpush.msra.mxu0 0.0
      %4261 = vmatpush.msra.mxu0 0.0
      %4262 = vmatpush.msra.mxu0 0.0
      %4263 = vmatpush.msra.mxu0 0.0
      %4264 = vmatpush.msra.mxu0 0.0
      %4265 = vmatpush.msra.mxu0 0.0
      %4266 = vmatpush.msra.mxu0 0.0
      %4267 = vmatpush.msra.mxu0 0.0
      %4268 = vmatpush.msra.mxu0 0.0
      %4269 = vmatpush.msra.mxu0 %v4166
      %4270 = vmatmul.f32.gmra.mxu0 %v4156
      %v4271 = vpop.f32.mrf.mxu0
      %v4272 = vadd.f32 0.0, %v4271
      %4273 = vdwg.mxu0
      %4274 = vmatpush.msra.mxu0 0.0
      %4275 = vmatpush.msra.mxu0 0.0
      %4276 = vmatpush.msra.mxu0 0.0
      %4277 = vmatpush.msra.mxu0 0.0
      %4278 = vmatpush.msra.mxu0 0.0
      %4279 = vmatpush.msra.mxu0 0.0
      %4280 = vmatpush.msra.mxu0 0.0
      %4281 = vmatpush.msra.mxu0 0.0
      %4282 = vmatpush.msra.mxu0 0.0
      %4283 = vmatpush.msra.mxu0 0.0
      %4284 = vmatpush.msra.mxu0 0.0
      %4285 = vmatpush.msra.mxu0 0.0
      %4286 = vmatpush.msra.mxu0 0.0
      %4287 = vmatpush.msra.mxu0 0.0
      %4288 = vmatpush.msra.mxu0 0.0
      %4289 = vmatpush.msra.mxu0 %v4168
      %4290 = vmatmul.f32.gmra.mxu0 %v4156
      %v4291 = vpop.f32.mrf.mxu0
      %v4292 = vadd.f32 0.0, %v4291
      %4293 = vdwg.mxu0
      %4294 = vmatpush.msra.mxu0 0.0
      %4295 = vmatpush.msra.mxu0 0.0
      %4296 = vmatpush.msra.mxu0 0.0
      %4297 = vmatpush.msra.mxu0 0.0
      %4298 = vmatpush.msra.mxu0 0.0
      %4299 = vmatpush.msra.mxu0 0.0
      %4300 = vmatpush.msra.mxu0 0.0
      %4301 = vmatpush.msra.mxu0 0.0
      %4302 = vmatpush.msra.mxu0 0.0
      %4303 = vmatpush.msra.mxu0 0.0
      %4304 = vmatpush.msra.mxu0 0.0
      %4305 = vmatpush.msra.mxu0 0.0
      %4306 = vmatpush.msra.mxu0 0.0
      %4307 = vmatpush.msra.mxu0 0.0
      %4308 = vmatpush.msra.mxu0 0.0
      %4309 = vmatpush.msra.mxu0 %v4170
      %4310 = vmatmul.f32.gmra.mxu0 %v4156
      %v4311 = vpop.f32.mrf.mxu0
      %v4312 = vadd.f32 0.0, %v4311
      %4313 = vdwg.mxu0
      %4314 = vmatpush.msra.mxu0 0.0
      %4315 = vmatpush.msra.mxu0 0.0
      %4316 = vmatpush.msra.mxu0 0.0
      %4317 = vmatpush.msra.mxu0 0.0
      %4318 = vmatpush.msra.mxu0 0.0
      %4319 = vmatpush.msra.mxu0 0.0
      %4320 = vmatpush.msra.mxu0 0.0
      %4321 = vmatpush.msra.mxu0 0.0
      %4322 = vmatpush.msra.mxu0 0.0
      %4323 = vmatpush.msra.mxu0 0.0
      %4324 = vmatpush.msra.mxu0 0.0
      %4325 = vmatpush.msra.mxu0 0.0
      %4326 = vmatpush.msra.mxu0 0.0
      %4327 = vmatpush.msra.mxu0 0.0
      %4328 = vmatpush.msra.mxu0 0.0
      %4329 = vmatpush.msra.mxu0 %v4172
      %4330 = vmatmul.f32.gmra.mxu0 %v4156
      %v4331 = vpop.f32.mrf.mxu0
      %v4332 = vadd.f32 0.0, %v4331
      %4333 = vdwg.mxu0
      %v4334 = vadd.f32 %v4102, %v4192
      %v4335 = vadd.f32 %v4103, %v4212
      %v4336 = vadd.f32 %v4104, %v4232
      %v4337 = vadd.f32 %v4105, %v4252
      %v4338 = vadd.f32 %v4106, %v4272
      %v4339 = vadd.f32 %v4107, %v4292
      %v4340 = vadd.f32 %v4108, %v4312
      %v4341 = vadd.f32 %v4109, %v4332
      %4342 = vrot.lane.b32.xlu0 %v1132, 72
      %v4343 = vpop.permute.xlu0 %4342
      %4344 = vst [vmem:[#allocation1] ss:$2 sm:$0xff] %v1127
      %s4345 = scalar_lea.vmem [#allocation1], 16
      %4346 = vst [vmem:[%s4345] ss:$2 sm:$0xff] %v1128
      %s4347 = scalar_lea.vmem [#allocation1], 32
      %4348 = vst [vmem:[%s4347] ss:$2 sm:$0xff] %v1129
      %s4349 = scalar_lea.vmem [#allocation1], 48
      %4350 = vst [vmem:[%s4349] ss:$2 sm:$0xff] %v1130
      %v4351 = vld.sshfl [vmem:[#allocation1] sm:$0xff pattern:$0x75316420]
      %v4352 = vld.sshfl [vmem:[#allocation1 + $0x8] sm:$0xff pattern:$0x75316420]
      %v4353 = vld.sshfl [vmem:[#allocation1 + $0x10] sm:$0xff pattern:$0x75316420]
      %v4354 = vld.sshfl [vmem:[#allocation1 + $0x18] sm:$0xff pattern:$0x75316420]
      %v4355 = vld.sshfl [vmem:[#allocation1 + $0x20] sm:$0xff pattern:$0x75316420]
      %v4356 = vld.sshfl [vmem:[#allocation1 + $0x28] sm:$0xff pattern:$0x75316420]
      %v4357 = vld.sshfl [vmem:[#allocation1 + $0x30] sm:$0xff pattern:$0x75316420]
      %v4358 = vld.sshfl [vmem:[#allocation1 + $0x38] sm:$0xff pattern:$0x75316420]
      %4359 = vst [vmem:[#allocation1] ss:$2 sm:$0xff] %v1131
      %v4360 = vld.sshfl [vmem:[#allocation1] sm:$0xff pattern:$0x75316420]
      %4361 = vrot.lane.b32.xlu0 %v4351, 114
      %v4362 = vpop.permute.xlu0 %4361
      %4363 = vrot.lane.b32.xlu0 %v4352, 114
      %v4364 = vpop.permute.xlu0 %4363
      %4365 = vrot.lane.b32.xlu0 %v4353, 114
      %v4366 = vpop.permute.xlu0 %4365
      %4367 = vrot.lane.b32.xlu0 %v4354, 114
      %v4368 = vpop.permute.xlu0 %4367
      %4369 = vrot.lane.b32.xlu0 %v4355, 114
      %v4370 = vpop.permute.xlu0 %4369
      %4371 = vrot.lane.b32.xlu0 %v4356, 114
      %v4372 = vpop.permute.xlu0 %4371
      %4373 = vrot.lane.b32.xlu0 %v4357, 114
      %v4374 = vpop.permute.xlu0 %4373
      %4375 = vrot.lane.b32.xlu0 %v4358, 114
      %v4376 = vpop.permute.xlu0 %4375
      %4377 = vrot.lane.b32.xlu0 %v4360, 114
      %v4378 = vpop.permute.xlu0 %4377
      %vm4379 = vcmask 932864
      %v4380 = vsel %vm4379, %v4362, %v4364
      %v4381 = vsel %vm4379, %v4364, %v4366
      %v4382 = vsel %vm4379, %v4366, %v4368
      %v4383 = vsel %vm4379, %v4368, %v4370
      %v4384 = vsel %vm4379, %v4370, %v4372
      %v4385 = vsel %vm4379, %v4372, %v4374
      %v4386 = vsel %vm4379, %v4374, %v4376
      %v4387 = vsel %vm4379, %v4376, %v4378
      %v4388 = vsel %vm1185, %v4343, 0
      %v4390 = vsel %vm1188, %v4380, 0
      %v4392 = vsel %vm1188, %v4381, 0
      %v4394 = vsel %vm1188, %v4382, 0
      %v4396 = vsel %vm1188, %v4383, 0
      %v4398 = vsel %vm1188, %v4384, 0
      %v4400 = vsel %vm1188, %v4385, 0
      %v4402 = vsel %vm1188, %v4386, 0
      %v4404 = vsel %vm1188, %v4387, 0
      %4406 = vmatpush.msra.mxu0 0.0
      %4407 = vmatpush.msra.mxu0 0.0
      %4408 = vmatpush.msra.mxu0 0.0
      %4409 = vmatpush.msra.mxu0 0.0
      %4410 = vmatpush.msra.mxu0 0.0
      %4411 = vmatpush.msra.mxu0 0.0
      %4412 = vmatpush.msra.mxu0 0.0
      %4413 = vmatpush.msra.mxu0 0.0
      %4414 = vmatpush.msra.mxu0 0.0
      %4415 = vmatpush.msra.mxu0 0.0
      %4416 = vmatpush.msra.mxu0 0.0
      %4417 = vmatpush.msra.mxu0 0.0
      %4418 = vmatpush.msra.mxu0 0.0
      %4419 = vmatpush.msra.mxu0 0.0
      %4420 = vmatpush.msra.mxu0 0.0
      %4421 = vmatpush.msra.mxu0 %v4390
      %4422 = vmatmul.f32.gmra.mxu0 %v4388
      %v4423 = vpop.f32.mrf.mxu0
      %v4424 = vadd.f32 0.0, %v4423
      %4425 = vdwg.mxu0
      %4426 = vmatpush.msra.mxu0 0.0
      %4427 = vmatpush.msra.mxu0 0.0
      %4428 = vmatpush.msra.mxu0 0.0
      %4429 = vmatpush.msra.mxu0 0.0
      %4430 = vmatpush.msra.mxu0 0.0
      %4431 = vmatpush.msra.mxu0 0.0
      %4432 = vmatpush.msra.mxu0 0.0
      %4433 = vmatpush.msra.mxu0 0.0
      %4434 = vmatpush.msra.mxu0 0.0
      %4435 = vmatpush.msra.mxu0 0.0
      %4436 = vmatpush.msra.mxu0 0.0
      %4437 = vmatpush.msra.mxu0 0.0
      %4438 = vmatpush.msra.mxu0 0.0
      %4439 = vmatpush.msra.mxu0 0.0
      %4440 = vmatpush.msra.mxu0 0.0
      %4441 = vmatpush.msra.mxu0 %v4392
      %4442 = vmatmul.f32.gmra.mxu0 %v4388
      %v4443 = vpop.f32.mrf.mxu0
      %v4444 = vadd.f32 0.0, %v4443
      %4445 = vdwg.mxu0
      %4446 = vmatpush.msra.mxu0 0.0
      %4447 = vmatpush.msra.mxu0 0.0
      %4448 = vmatpush.msra.mxu0 0.0
      %4449 = vmatpush.msra.mxu0 0.0
      %4450 = vmatpush.msra.mxu0 0.0
      %4451 = vmatpush.msra.mxu0 0.0
      %4452 = vmatpush.msra.mxu0 0.0
      %4453 = vmatpush.msra.mxu0 0.0
      %4454 = vmatpush.msra.mxu0 0.0
      %4455 = vmatpush.msra.mxu0 0.0
      %4456 = vmatpush.msra.mxu0 0.0
      %4457 = vmatpush.msra.mxu0 0.0
      %4458 = vmatpush.msra.mxu0 0.0
      %4459 = vmatpush.msra.mxu0 0.0
      %4460 = vmatpush.msra.mxu0 0.0
      %4461 = vmatpush.msra.mxu0 %v4394
      %4462 = vmatmul.f32.gmra.mxu0 %v4388
      %v4463 = vpop.f32.mrf.mxu0
      %v4464 = vadd.f32 0.0, %v4463
      %4465 = vdwg.mxu0
      %4466 = vmatpush.msra.mxu0 0.0
      %4467 = vmatpush.msra.mxu0 0.0
      %4468 = vmatpush.msra.mxu0 0.0
      %4469 = vmatpush.msra.mxu0 0.0
      %4470 = vmatpush.msra.mxu0 0.0
      %4471 = vmatpush.msra.mxu0 0.0
      %4472 = vmatpush.msra.mxu0 0.0
      %4473 = vmatpush.msra.mxu0 0.0
      %4474 = vmatpush.msra.mxu0 0.0
      %4475 = vmatpush.msra.mxu0 0.0
      %4476 = vmatpush.msra.mxu0 0.0
      %4477 = vmatpush.msra.mxu0 0.0
      %4478 = vmatpush.msra.mxu0 0.0
      %4479 = vmatpush.msra.mxu0 0.0
      %4480 = vmatpush.msra.mxu0 0.0
      %4481 = vmatpush.msra.mxu0 %v4396
      %4482 = vmatmul.f32.gmra.mxu0 %v4388
      %v4483 = vpop.f32.mrf.mxu0
      %v4484 = vadd.f32 0.0, %v4483
      %4485 = vdwg.mxu0
      %4486 = vmatpush.msra.mxu0 0.0
      %4487 = vmatpush.msra.mxu0 0.0
      %4488 = vmatpush.msra.mxu0 0.0
      %4489 = vmatpush.msra.mxu0 0.0
      %4490 = vmatpush.msra.mxu0 0.0
      %4491 = vmatpush.msra.mxu0 0.0
      %4492 = vmatpush.msra.mxu0 0.0
      %4493 = vmatpush.msra.mxu0 0.0
      %4494 = vmatpush.msra.mxu0 0.0
      %4495 = vmatpush.msra.mxu0 0.0
      %4496 = vmatpush.msra.mxu0 0.0
      %4497 = vmatpush.msra.mxu0 0.0
      %4498 = vmatpush.msra.mxu0 0.0
      %4499 = vmatpush.msra.mxu0 0.0
      %4500 = vmatpush.msra.mxu0 0.0
      %4501 = vmatpush.msra.mxu0 %v4398
      %4502 = vmatmul.f32.gmra.mxu0 %v4388
      %v4503 = vpop.f32.mrf.mxu0
      %v4504 = vadd.f32 0.0, %v4503
      %4505 = vdwg.mxu0
      %4506 = vmatpush.msra.mxu0 0.0
      %4507 = vmatpush.msra.mxu0 0.0
      %4508 = vmatpush.msra.mxu0 0.0
      %4509 = vmatpush.msra.mxu0 0.0
      %4510 = vmatpush.msra.mxu0 0.0
      %4511 = vmatpush.msra.mxu0 0.0
      %4512 = vmatpush.msra.mxu0 0.0
      %4513 = vmatpush.msra.mxu0 0.0
      %4514 = vmatpush.msra.mxu0 0.0
      %4515 = vmatpush.msra.mxu0 0.0
      %4516 = vmatpush.msra.mxu0 0.0
      %4517 = vmatpush.msra.mxu0 0.0
      %4518 = vmatpush.msra.mxu0 0.0
      %4519 = vmatpush.msra.mxu0 0.0
      %4520 = vmatpush.msra.mxu0 0.0
      %4521 = vmatpush.msra.mxu0 %v4400
      %4522 = vmatmul.f32.gmra.mxu0 %v4388
      %v4523 = vpop.f32.mrf.mxu0
      %v4524 = vadd.f32 0.0, %v4523
      %4525 = vdwg.mxu0
      %4526 = vmatpush.msra.mxu0 0.0
      %4527 = vmatpush.msra.mxu0 0.0
      %4528 = vmatpush.msra.mxu0 0.0
      %4529 = vmatpush.msra.mxu0 0.0
      %4530 = vmatpush.msra.mxu0 0.0
      %4531 = vmatpush.msra.mxu0 0.0
      %4532 = vmatpush.msra.mxu0 0.0
      %4533 = vmatpush.msra.mxu0 0.0
      %4534 = vmatpush.msra.mxu0 0.0
      %4535 = vmatpush.msra.mxu0 0.0
      %4536 = vmatpush.msra.mxu0 0.0
      %4537 = vmatpush.msra.mxu0 0.0
      %4538 = vmatpush.msra.mxu0 0.0
      %4539 = vmatpush.msra.mxu0 0.0
      %4540 = vmatpush.msra.mxu0 0.0
      %4541 = vmatpush.msra.mxu0 %v4402
      %4542 = vmatmul.f32.gmra.mxu0 %v4388
      %v4543 = vpop.f32.mrf.mxu0
      %v4544 = vadd.f32 0.0, %v4543
      %4545 = vdwg.mxu0
      %4546 = vmatpush.msra.mxu0 0.0
      %4547 = vmatpush.msra.mxu0 0.0
      %4548 = vmatpush.msra.mxu0 0.0
      %4549 = vmatpush.msra.mxu0 0.0
      %4550 = vmatpush.msra.mxu0 0.0
      %4551 = vmatpush.msra.mxu0 0.0
      %4552 = vmatpush.msra.mxu0 0.0
      %4553 = vmatpush.msra.mxu0 0.0
      %4554 = vmatpush.msra.mxu0 0.0
      %4555 = vmatpush.msra.mxu0 0.0
      %4556 = vmatpush.msra.mxu0 0.0
      %4557 = vmatpush.msra.mxu0 0.0
      %4558 = vmatpush.msra.mxu0 0.0
      %4559 = vmatpush.msra.mxu0 0.0
      %4560 = vmatpush.msra.mxu0 0.0
      %4561 = vmatpush.msra.mxu0 %v4404
      %4562 = vmatmul.f32.gmra.mxu0 %v4388
      %v4563 = vpop.f32.mrf.mxu0
      %v4564 = vadd.f32 0.0, %v4563
      %4565 = vdwg.mxu0
      %v4566 = vadd.f32 %v4334, %v4424
      %v4567 = vadd.f32 %v4335, %v4444
      %v4568 = vadd.f32 %v4336, %v4464
      %v4569 = vadd.f32 %v4337, %v4484
      %v4570 = vadd.f32 %v4338, %v4504
      %v4571 = vadd.f32 %v4339, %v4524
      %v4572 = vadd.f32 %v4340, %v4544
      %v4573 = vadd.f32 %v4341, %v4564
      %4574 = vrot.lane.b32.xlu0 %v1132, 68
      %v4575 = vpop.permute.xlu0 %4574
      %4576 = vst [vmem:[#allocation1] ss:$2 sm:$0xff] %v1127
      %s4577 = scalar_lea.vmem [#allocation1], 16
      %4578 = vst [vmem:[%s4577] ss:$2 sm:$0xff] %v1128
      %s4579 = scalar_lea.vmem [#allocation1], 32
      %4580 = vst [vmem:[%s4579] ss:$2 sm:$0xff] %v1129
      %s4581 = scalar_lea.vmem [#allocation1], 48
      %4582 = vst [vmem:[%s4581] ss:$2 sm:$0xff] %v1130
      %v4583 = vld.sshfl [vmem:[#allocation1] sm:$0xff pattern:$0x75316420]
      %v4584 = vld.sshfl [vmem:[#allocation1 + $0x8] sm:$0xff pattern:$0x75316420]
      %v4585 = vld.sshfl [vmem:[#allocation1 + $0x10] sm:$0xff pattern:$0x75316420]
      %v4586 = vld.sshfl [vmem:[#allocation1 + $0x18] sm:$0xff pattern:$0x75316420]
      %v4587 = vld.sshfl [vmem:[#allocation1 + $0x20] sm:$0xff pattern:$0x75316420]
      %v4588 = vld.sshfl [vmem:[#allocation1 + $0x28] sm:$0xff pattern:$0x75316420]
      %v4589 = vld.sshfl [vmem:[#allocation1 + $0x30] sm:$0xff pattern:$0x75316420]
      %v4590 = vld.sshfl [vmem:[#allocation1 + $0x38] sm:$0xff pattern:$0x75316420]
      %4591 = vst [vmem:[#allocation1] ss:$2 sm:$0xff] %v1131
      %v4592 = vld.sshfl [vmem:[#allocation1] sm:$0xff pattern:$0x75316420]
      %4593 = vrot.lane.b32.xlu0 %v4583, 113
      %v4594 = vpop.permute.xlu0 %4593
      %4595 = vrot.lane.b32.xlu0 %v4584, 113
      %v4596 = vpop.permute.xlu0 %4595
      %4597 = vrot.lane.b32.xlu0 %v4585, 113
      %v4598 = vpop.permute.xlu0 %4597
      %4599 = vrot.lane.b32.xlu0 %v4586, 113
      %v4600 = vpop.permute.xlu0 %4599
      %4601 = vrot.lane.b32.xlu0 %v4587, 113
      %v4602 = vpop.permute.xlu0 %4601
      %4603 = vrot.lane.b32.xlu0 %v4588, 113
      %v4604 = vpop.permute.xlu0 %4603
      %4605 = vrot.lane.b32.xlu0 %v4589, 113
      %v4606 = vpop.permute.xlu0 %4605
      %4607 = vrot.lane.b32.xlu0 %v4590, 113
      %v4608 = vpop.permute.xlu0 %4607
      %4609 = vrot.lane.b32.xlu0 %v4592, 113
      %v4610 = vpop.permute.xlu0 %4609
      %vm4611 = vcmask 924672
      %v4612 = vsel %vm4611, %v4594, %v4596
      %v4613 = vsel %vm4611, %v4596, %v4598
      %v4614 = vsel %vm4611, %v4598, %v4600
      %v4615 = vsel %vm4611, %v4600, %v4602
      %v4616 = vsel %vm4611, %v4602, %v4604
      %v4617 = vsel %vm4611, %v4604, %v4606
      %v4618 = vsel %vm4611, %v4606, %v4608
      %v4619 = vsel %vm4611, %v4608, %v4610
      %v4620 = vsel %vm1185, %v4575, 0
      %v4622 = vsel %vm1188, %v4612, 0
      %v4624 = vsel %vm1188, %v4613, 0
      %v4626 = vsel %vm1188, %v4614, 0
      %v4628 = vsel %vm1188, %v4615, 0
      %v4630 = vsel %vm1188, %v4616, 0
      %v4632 = vsel %vm1188, %v4617, 0
      %v4634 = vsel %vm1188, %v4618, 0
      %v4636 = vsel %vm1188, %v4619, 0
      %4638 = vmatpush.msra.mxu0 0.0
      %4639 = vmatpush.msra.mxu0 0.0
      %4640 = vmatpush.msra.mxu0 0.0
      %4641 = vmatpush.msra.mxu0 0.0
      %4642 = vmatpush.msra.mxu0 0.0
      %4643 = vmatpush.msra.mxu0 0.0
      %4644 = vmatpush.msra.mxu0 0.0
      %4645 = vmatpush.msra.mxu0 0.0
      %4646 = vmatpush.msra.mxu0 0.0
      %4647 = vmatpush.msra.mxu0 0.0
      %4648 = vmatpush.msra.mxu0 0.0
      %4649 = vmatpush.msra.mxu0 0.0
      %4650 = vmatpush.msra.mxu0 0.0
      %4651 = vmatpush.msra.mxu0 0.0
      %4652 = vmatpush.msra.mxu0 0.0
      %4653 = vmatpush.msra.mxu0 %v4622
      %4654 = vmatmul.f32.gmra.mxu0 %v4620
      %v4655 = vpop.f32.mrf.mxu0
      %v4656 = vadd.f32 0.0, %v4655
      %4657 = vdwg.mxu0
      %4658 = vmatpush.msra.mxu0 0.0
      %4659 = vmatpush.msra.mxu0 0.0
      %4660 = vmatpush.msra.mxu0 0.0
      %4661 = vmatpush.msra.mxu0 0.0
      %4662 = vmatpush.msra.mxu0 0.0
      %4663 = vmatpush.msra.mxu0 0.0
      %4664 = vmatpush.msra.mxu0 0.0
      %4665 = vmatpush.msra.mxu0 0.0
      %4666 = vmatpush.msra.mxu0 0.0
      %4667 = vmatpush.msra.mxu0 0.0
      %4668 = vmatpush.msra.mxu0 0.0
      %4669 = vmatpush.msra.mxu0 0.0
      %4670 = vmatpush.msra.mxu0 0.0
      %4671 = vmatpush.msra.mxu0 0.0
      %4672 = vmatpush.msra.mxu0 0.0
      %4673 = vmatpush.msra.mxu0 %v4624
      %4674 = vmatmul.f32.gmra.mxu0 %v4620
      %v4675 = vpop.f32.mrf.mxu0
      %v4676 = vadd.f32 0.0, %v4675
      %4677 = vdwg.mxu0
      %4678 = vmatpush.msra.mxu0 0.0
      %4679 = vmatpush.msra.mxu0 0.0
      %4680 = vmatpush.msra.mxu0 0.0
      %4681 = vmatpush.msra.mxu0 0.0
      %4682 = vmatpush.msra.mxu0 0.0
      %4683 = vmatpush.msra.mxu0 0.0
      %4684 = vmatpush.msra.mxu0 0.0
      %4685 = vmatpush.msra.mxu0 0.0
      %4686 = vmatpush.msra.mxu0 0.0
      %4687 = vmatpush.msra.mxu0 0.0
      %4688 = vmatpush.msra.mxu0 0.0
      %4689 = vmatpush.msra.mxu0 0.0
      %4690 = vmatpush.msra.mxu0 0.0
      %4691 = vmatpush.msra.mxu0 0.0
      %4692 = vmatpush.msra.mxu0 0.0
      %4693 = vmatpush.msra.mxu0 %v4626
      %4694 = vmatmul.f32.gmra.mxu0 %v4620
      %v4695 = vpop.f32.mrf.mxu0
      %v4696 = vadd.f32 0.0, %v4695
      %4697 = vdwg.mxu0
      %4698 = vmatpush.msra.mxu0 0.0
      %4699 = vmatpush.msra.mxu0 0.0
      %4700 = vmatpush.msra.mxu0 0.0
      %4701 = vmatpush.msra.mxu0 0.0
      %4702 = vmatpush.msra.mxu0 0.0
      %4703 = vmatpush.msra.mxu0 0.0
      %4704 = vmatpush.msra.mxu0 0.0
      %4705 = vmatpush.msra.mxu0 0.0
      %4706 = vmatpush.msra.mxu0 0.0
      %4707 = vmatpush.msra.mxu0 0.0
      %4708 = vmatpush.msra.mxu0 0.0
      %4709 = vmatpush.msra.mxu0 0.0
      %4710 = vmatpush.msra.mxu0 0.0
      %4711 = vmatpush.msra.mxu0 0.0
      %4712 = vmatpush.msra.mxu0 0.0
      %4713 = vmatpush.msra.mxu0 %v4628
      %4714 = vmatmul.f32.gmra.mxu0 %v4620
      %v4715 = vpop.f32.mrf.mxu0
      %v4716 = vadd.f32 0.0, %v4715
      %4717 = vdwg.mxu0
      %4718 = vmatpush.msra.mxu0 0.0
      %4719 = vmatpush.msra.mxu0 0.0
      %4720 = vmatpush.msra.mxu0 0.0
      %4721 = vmatpush.msra.mxu0 0.0
      %4722 = vmatpush.msra.mxu0 0.0
      %4723 = vmatpush.msra.mxu0 0.0
      %4724 = vmatpush.msra.mxu0 0.0
      %4725 = vmatpush.msra.mxu0 0.0
      %4726 = vmatpush.msra.mxu0 0.0
      %4727 = vmatpush.msra.mxu0 0.0
      %4728 = vmatpush.msra.mxu0 0.0
      %4729 = vmatpush.msra.mxu0 0.0
      %4730 = vmatpush.msra.mxu0 0.0
      %4731 = vmatpush.msra.mxu0 0.0
      %4732 = vmatpush.msra.mxu0 0.0
      %4733 = vmatpush.msra.mxu0 %v4630
      %4734 = vmatmul.f32.gmra.mxu0 %v4620
      %v4735 = vpop.f32.mrf.mxu0
      %v4736 = vadd.f32 0.0, %v4735
      %4737 = vdwg.mxu0
      %4738 = vmatpush.msra.mxu0 0.0
      %4739 = vmatpush.msra.mxu0 0.0
      %4740 = vmatpush.msra.mxu0 0.0
      %4741 = vmatpush.msra.mxu0 0.0
      %4742 = vmatpush.msra.mxu0 0.0
      %4743 = vmatpush.msra.mxu0 0.0
      %4744 = vmatpush.msra.mxu0 0.0
      %4745 = vmatpush.msra.mxu0 0.0
      %4746 = vmatpush.msra.mxu0 0.0
      %4747 = vmatpush.msra.mxu0 0.0
      %4748 = vmatpush.msra.mxu0 0.0
      %4749 = vmatpush.msra.mxu0 0.0
      %4750 = vmatpush.msra.mxu0 0.0
      %4751 = vmatpush.msra.mxu0 0.0
      %4752 = vmatpush.msra.mxu0 0.0
      %4753 = vmatpush.msra.mxu0 %v4632
      %4754 = vmatmul.f32.gmra.mxu0 %v4620
      %v4755 = vpop.f32.mrf.mxu0
      %v4756 = vadd.f32 0.0, %v4755
      %4757 = vdwg.mxu0
      %4758 = vmatpush.msra.mxu0 0.0
      %4759 = vmatpush.msra.mxu0 0.0
      %4760 = vmatpush.msra.mxu0 0.0
      %4761 = vmatpush.msra.mxu0 0.0
      %4762 = vmatpush.msra.mxu0 0.0
      %4763 = vmatpush.msra.mxu0 0.0
      %4764 = vmatpush.msra.mxu0 0.0
      %4765 = vmatpush.msra.mxu0 0.0
      %4766 = vmatpush.msra.mxu0 0.0
      %4767 = vmatpush.msra.mxu0 0.0
      %4768 = vmatpush.msra.mxu0 0.0
      %4769 = vmatpush.msra.mxu0 0.0
      %4770 = vmatpush.msra.mxu0 0.0
      %4771 = vmatpush.msra.mxu0 0.0
      %4772 = vmatpush.msra.mxu0 0.0
      %4773 = vmatpush.msra.mxu0 %v4634
      %4774 = vmatmul.f32.gmra.mxu0 %v4620
      %v4775 = vpop.f32.mrf.mxu0
      %v4776 = vadd.f32 0.0, %v4775
      %4777 = vdwg.mxu0
      %4778 = vmatpush.msra.mxu0 0.0
      %4779 = vmatpush.msra.mxu0 0.0
      %4780 = vmatpush.msra.mxu0 0.0
      %4781 = vmatpush.msra.mxu0 0.0
      %4782 = vmatpush.msra.mxu0 0.0
      %4783 = vmatpush.msra.mxu0 0.0
      %4784 = vmatpush.msra.mxu0 0.0
      %4785 = vmatpush.msra.mxu0 0.0
      %4786 = vmatpush.msra.mxu0 0.0
      %4787 = vmatpush.msra.mxu0 0.0
      %4788 = vmatpush.msra.mxu0 0.0
      %4789 = vmatpush.msra.mxu0 0.0
      %4790 = vmatpush.msra.mxu0 0.0
      %4791 = vmatpush.msra.mxu0 0.0
      %4792 = vmatpush.msra.mxu0 0.0
      %4793 = vmatpush.msra.mxu0 %v4636
      %4794 = vmatmul.f32.gmra.mxu0 %v4620
      %v4795 = vpop.f32.mrf.mxu0
      %v4796 = vadd.f32 0.0, %v4795
      %4797 = vdwg.mxu0
      %v4798 = vadd.f32 %v4566, %v4656
      %v4799 = vadd.f32 %v4567, %v4676
      %v4800 = vadd.f32 %v4568, %v4696
      %v4801 = vadd.f32 %v4569, %v4716
      %v4802 = vadd.f32 %v4570, %v4736
      %v4803 = vadd.f32 %v4571, %v4756
      %v4804 = vadd.f32 %v4572, %v4776
      %v4805 = vadd.f32 %v4573, %v4796
      %4806 = vrot.lane.b32.xlu0 %v1132, 64
      %v4807 = vpop.permute.xlu0 %4806
      %4808 = vst [vmem:[#allocation1] ss:$2 sm:$0xff] %v1127
      %s4809 = scalar_lea.vmem [#allocation1], 16
      %4810 = vst [vmem:[%s4809] ss:$2 sm:$0xff] %v1128
      %s4811 = scalar_lea.vmem [#allocation1], 32
      %4812 = vst [vmem:[%s4811] ss:$2 sm:$0xff] %v1129
      %s4813 = scalar_lea.vmem [#allocation1], 48
      %4814 = vst [vmem:[%s4813] ss:$2 sm:$0xff] %v1130
      %v4815 = vld.sshfl [vmem:[#allocation1] sm:$0xff pattern:$0x75316420]
      %v4816 = vld.sshfl [vmem:[#allocation1 + $0x8] sm:$0xff pattern:$0x75316420]
      %v4817 = vld.sshfl [vmem:[#allocation1 + $0x10] sm:$0xff pattern:$0x75316420]
      %v4818 = vld.sshfl [vmem:[#allocation1 + $0x18] sm:$0xff pattern:$0x75316420]
      %v4819 = vld.sshfl [vmem:[#allocation1 + $0x20] sm:$0xff pattern:$0x75316420]
      %v4820 = vld.sshfl [vmem:[#allocation1 + $0x28] sm:$0xff pattern:$0x75316420]
      %v4821 = vld.sshfl [vmem:[#allocation1 + $0x30] sm:$0xff pattern:$0x75316420]
      %v4822 = vld.sshfl [vmem:[#allocation1 + $0x38] sm:$0xff pattern:$0x75316420]
      %4823 = vst [vmem:[#allocation1] ss:$2 sm:$0xff] %v1131
      %v4824 = vld.sshfl [vmem:[#allocation1] sm:$0xff pattern:$0x75316420]
      %4825 = vrot.lane.b32.xlu0 %v4815, 112
      %v4826 = vpop.permute.xlu0 %4825
      %4827 = vrot.lane.b32.xlu0 %v4816, 112
      %v4828 = vpop.permute.xlu0 %4827
      %4829 = vrot.lane.b32.xlu0 %v4817, 112
      %v4830 = vpop.permute.xlu0 %4829
      %4831 = vrot.lane.b32.xlu0 %v4818, 112
      %v4832 = vpop.permute.xlu0 %4831
      %4833 = vrot.lane.b32.xlu0 %v4819, 112
      %v4834 = vpop.permute.xlu0 %4833
      %4835 = vrot.lane.b32.xlu0 %v4820, 112
      %v4836 = vpop.permute.xlu0 %4835
      %4837 = vrot.lane.b32.xlu0 %v4821, 112
      %v4838 = vpop.permute.xlu0 %4837
      %4839 = vrot.lane.b32.xlu0 %v4822, 112
      %v4840 = vpop.permute.xlu0 %4839
      %4841 = vrot.lane.b32.xlu0 %v4824, 112
      %v4842 = vpop.permute.xlu0 %4841
      %vm4843 = vcmask 916480
      %v4844 = vsel %vm4843, %v4826, %v4828
      %v4845 = vsel %vm4843, %v4828, %v4830
      %v4846 = vsel %vm4843, %v4830, %v4832
      %v4847 = vsel %vm4843, %v4832, %v4834
      %v4848 = vsel %vm4843, %v4834, %v4836
      %v4849 = vsel %vm4843, %v4836, %v4838
      %v4850 = vsel %vm4843, %v4838, %v4840
      %v4851 = vsel %vm4843, %v4840, %v4842
      %v4852 = vsel %vm1185, %v4807, 0
      %v4854 = vsel %vm1188, %v4844, 0
      %v4856 = vsel %vm1188, %v4845, 0
      %v4858 = vsel %vm1188, %v4846, 0
      %v4860 = vsel %vm1188, %v4847, 0
      %v4862 = vsel %vm1188, %v4848, 0
      %v4864 = vsel %vm1188, %v4849, 0
      %v4866 = vsel %vm1188, %v4850, 0
      %v4868 = vsel %vm1188, %v4851, 0
      %4870 = vmatpush.msra.mxu0 0.0
      %4871 = vmatpush.msra.mxu0 0.0
      %4872 = vmatpush.msra.mxu0 0.0
      %4873 = vmatpush.msra.mxu0 0.0
      %4874 = vmatpush.msra.mxu0 0.0
      %4875 = vmatpush.msra.mxu0 0.0
      %4876 = vmatpush.msra.mxu0 0.0
      %4877 = vmatpush.msra.mxu0 0.0
      %4878 = vmatpush.msra.mxu0 0.0
      %4879 = vmatpush.msra.mxu0 0.0
      %4880 = vmatpush.msra.mxu0 0.0
      %4881 = vmatpush.msra.mxu0 0.0
      %4882 = vmatpush.msra.mxu0 0.0
      %4883 = vmatpush.msra.mxu0 0.0
      %4884 = vmatpush.msra.mxu0 0.0
      %4885 = vmatpush.msra.mxu0 %v4854
      %4886 = vmatmul.f32.gmra.mxu0 %v4852
      %v4887 = vpop.f32.mrf.mxu0
      %v4888 = vadd.f32 0.0, %v4887
      %4889 = vdwg.mxu0
      %4890 = vmatpush.msra.mxu0 0.0
      %4891 = vmatpush.msra.mxu0 0.0
      %4892 = vmatpush.msra.mxu0 0.0
      %4893 = vmatpush.msra.mxu0 0.0
      %4894 = vmatpush.msra.mxu0 0.0
      %4895 = vmatpush.msra.mxu0 0.0
      %4896 = vmatpush.msra.mxu0 0.0
      %4897 = vmatpush.msra.mxu0 0.0
      %4898 = vmatpush.msra.mxu0 0.0
      %4899 = vmatpush.msra.mxu0 0.0
      %4900 = vmatpush.msra.mxu0 0.0
      %4901 = vmatpush.msra.mxu0 0.0
      %4902 = vmatpush.msra.mxu0 0.0
      %4903 = vmatpush.msra.mxu0 0.0
      %4904 = vmatpush.msra.mxu0 0.0
      %4905 = vmatpush.msra.mxu0 %v4856
      %4906 = vmatmul.f32.gmra.mxu0 %v4852
      %v4907 = vpop.f32.mrf.mxu0
      %v4908 = vadd.f32 0.0, %v4907
      %4909 = vdwg.mxu0
      %4910 = vmatpush.msra.mxu0 0.0
      %4911 = vmatpush.msra.mxu0 0.0
      %4912 = vmatpush.msra.mxu0 0.0
      %4913 = vmatpush.msra.mxu0 0.0
      %4914 = vmatpush.msra.mxu0 0.0
      %4915 = vmatpush.msra.mxu0 0.0
      %4916 = vmatpush.msra.mxu0 0.0
      %4917 = vmatpush.msra.mxu0 0.0
      %4918 = vmatpush.msra.mxu0 0.0
      %4919 = vmatpush.msra.mxu0 0.0
      %4920 = vmatpush.msra.mxu0 0.0
      %4921 = vmatpush.msra.mxu0 0.0
      %4922 = vmatpush.msra.mxu0 0.0
      %4923 = vmatpush.msra.mxu0 0.0
      %4924 = vmatpush.msra.mxu0 0.0
      %4925 = vmatpush.msra.mxu0 %v4858
      %4926 = vmatmul.f32.gmra.mxu0 %v4852
      %v4927 = vpop.f32.mrf.mxu0
      %v4928 = vadd.f32 0.0, %v4927
      %4929 = vdwg.mxu0
      %4930 = vmatpush.msra.mxu0 0.0
      %4931 = vmatpush.msra.mxu0 0.0
      %4932 = vmatpush.msra.mxu0 0.0
      %4933 = vmatpush.msra.mxu0 0.0
      %4934 = vmatpush.msra.mxu0 0.0
      %4935 = vmatpush.msra.mxu0 0.0
      %4936 = vmatpush.msra.mxu0 0.0
      %4937 = vmatpush.msra.mxu0 0.0
      %4938 = vmatpush.msra.mxu0 0.0
      %4939 = vmatpush.msra.mxu0 0.0
      %4940 = vmatpush.msra.mxu0 0.0
      %4941 = vmatpush.msra.mxu0 0.0
      %4942 = vmatpush.msra.mxu0 0.0
      %4943 = vmatpush.msra.mxu0 0.0
      %4944 = vmatpush.msra.mxu0 0.0
      %4945 = vmatpush.msra.mxu0 %v4860
      %4946 = vmatmul.f32.gmra.mxu0 %v4852
      %v4947 = vpop.f32.mrf.mxu0
      %v4948 = vadd.f32 0.0, %v4947
      %4949 = vdwg.mxu0
      %4950 = vmatpush.msra.mxu0 0.0
      %4951 = vmatpush.msra.mxu0 0.0
      %4952 = vmatpush.msra.mxu0 0.0
      %4953 = vmatpush.msra.mxu0 0.0
      %4954 = vmatpush.msra.mxu0 0.0
      %4955 = vmatpush.msra.mxu0 0.0
      %4956 = vmatpush.msra.mxu0 0.0
      %4957 = vmatpush.msra.mxu0 0.0
      %4958 = vmatpush.msra.mxu0 0.0
      %4959 = vmatpush.msra.mxu0 0.0
      %4960 = vmatpush.msra.mxu0 0.0
      %4961 = vmatpush.msra.mxu0 0.0
      %4962 = vmatpush.msra.mxu0 0.0
      %4963 = vmatpush.msra.mxu0 0.0
      %4964 = vmatpush.msra.mxu0 0.0
      %4965 = vmatpush.msra.mxu0 %v4862
      %4966 = vmatmul.f32.gmra.mxu0 %v4852
      %v4967 = vpop.f32.mrf.mxu0
      %v4968 = vadd.f32 0.0, %v4967
      %4969 = vdwg.mxu0
      %4970 = vmatpush.msra.mxu0 0.0
      %4971 = vmatpush.msra.mxu0 0.0
      %4972 = vmatpush.msra.mxu0 0.0
      %4973 = vmatpush.msra.mxu0 0.0
      %4974 = vmatpush.msra.mxu0 0.0
      %4975 = vmatpush.msra.mxu0 0.0
      %4976 = vmatpush.msra.mxu0 0.0
      %4977 = vmatpush.msra.mxu0 0.0
      %4978 = vmatpush.msra.mxu0 0.0
      %4979 = vmatpush.msra.mxu0 0.0
      %4980 = vmatpush.msra.mxu0 0.0
      %4981 = vmatpush.msra.mxu0 0.0
      %4982 = vmatpush.msra.mxu0 0.0
      %4983 = vmatpush.msra.mxu0 0.0
      %4984 = vmatpush.msra.mxu0 0.0
      %4985 = vmatpush.msra.mxu0 %v4864
      %4986 = vmatmul.f32.gmra.mxu0 %v4852
      %v4987 = vpop.f32.mrf.mxu0
      %v4988 = vadd.f32 0.0, %v4987
      %4989 = vdwg.mxu0
      %4990 = vmatpush.msra.mxu0 0.0
      %4991 = vmatpush.msra.mxu0 0.0
      %4992 = vmatpush.msra.mxu0 0.0
      %4993 = vmatpush.msra.mxu0 0.0
      %4994 = vmatpush.msra.mxu0 0.0
      %4995 = vmatpush.msra.mxu0 0.0
      %4996 = vmatpush.msra.mxu0 0.0
      %4997 = vmatpush.msra.mxu0 0.0
      %4998 = vmatpush.msra.mxu0 0.0
      %4999 = vmatpush.msra.mxu0 0.0
      %5000 = vmatpush.msra.mxu0 0.0
      %5001 = vmatpush.msra.mxu0 0.0
      %5002 = vmatpush.msra.mxu0 0.0
      %5003 = vmatpush.msra.mxu0 0.0
      %5004 = vmatpush.msra.mxu0 0.0
      %5005 = vmatpush.msra.mxu0 %v4866
      %5006 = vmatmul.f32.gmra.mxu0 %v4852
      %v5007 = vpop.f32.mrf.mxu0
      %v5008 = vadd.f32 0.0, %v5007
      %5009 = vdwg.mxu0
      %5010 = vmatpush.msra.mxu0 0.0
      %5011 = vmatpush.msra.mxu0 0.0
      %5012 = vmatpush.msra.mxu0 0.0
      %5013 = vmatpush.msra.mxu0 0.0
      %5014 = vmatpush.msra.mxu0 0.0
      %5015 = vmatpush.msra.mxu0 0.0
      %5016 = vmatpush.msra.mxu0 0.0
      %5017 = vmatpush.msra.mxu0 0.0
      %5018 = vmatpush.msra.mxu0 0.0
      %5019 = vmatpush.msra.mxu0 0.0
      %5020 = vmatpush.msra.mxu0 0.0
      %5021 = vmatpush.msra.mxu0 0.0
      %5022 = vmatpush.msra.mxu0 0.0
      %5023 = vmatpush.msra.mxu0 0.0
      %5024 = vmatpush.msra.mxu0 0.0
      %5025 = vmatpush.msra.mxu0 %v4868
      %5026 = vmatmul.f32.gmra.mxu0 %v4852
      %v5027 = vpop.f32.mrf.mxu0
      %v5028 = vadd.f32 0.0, %v5027
      %5029 = vdwg.mxu0
      %v5030 = vadd.f32 %v4798, %v4888
      %v5031 = vadd.f32 %v4799, %v4908
      %v5032 = vadd.f32 %v4800, %v4928
      %v5033 = vadd.f32 %v4801, %v4948
      %v5034 = vadd.f32 %v4802, %v4968
      %v5035 = vadd.f32 %v4803, %v4988
      %v5036 = vadd.f32 %v4804, %v5008
      %v5037 = vadd.f32 %v4805, %v5028
      %5038 = vrot.lane.b32.xlu0 %v1132, 60
      %v5039 = vpop.permute.xlu0 %5038
      %5040 = vst [vmem:[#allocation1] ss:$2 sm:$0xff] %v1127
      %s5041 = scalar_lea.vmem [#allocation1], 16
      %5042 = vst [vmem:[%s5041] ss:$2 sm:$0xff] %v1128
      %s5043 = scalar_lea.vmem [#allocation1], 32
      %5044 = vst [vmem:[%s5043] ss:$2 sm:$0xff] %v1129
      %s5045 = scalar_lea.vmem [#allocation1], 48
      %5046 = vst [vmem:[%s5045] ss:$2 sm:$0xff] %v1130
      %v5047 = vld.sshfl [vmem:[#allocation1] sm:$0xff pattern:$0x75316420]
      %v5048 = vld.sshfl [vmem:[#allocation1 + $0x8] sm:$0xff pattern:$0x75316420]
      %v5049 = vld.sshfl [vmem:[#allocation1 + $0x10] sm:$0xff pattern:$0x75316420]
      %v5050 = vld.sshfl [vmem:[#allocation1 + $0x18] sm:$0xff pattern:$0x75316420]
      %v5051 = vld.sshfl [vmem:[#allocation1 + $0x20] sm:$0xff pattern:$0x75316420]
      %v5052 = vld.sshfl [vmem:[#allocation1 + $0x28] sm:$0xff pattern:$0x75316420]
      %v5053 = vld.sshfl [vmem:[#allocation1 + $0x30] sm:$0xff pattern:$0x75316420]
      %v5054 = vld.sshfl [vmem:[#allocation1 + $0x38] sm:$0xff pattern:$0x75316420]
      %5055 = vst [vmem:[#allocation1] ss:$2 sm:$0xff] %v1131
      %v5056 = vld.sshfl [vmem:[#allocation1] sm:$0xff pattern:$0x75316420]
      %5057 = vrot.lane.b32.xlu0 %v5047, 111
      %v5058 = vpop.permute.xlu0 %5057
      %5059 = vrot.lane.b32.xlu0 %v5048, 111
      %v5060 = vpop.permute.xlu0 %5059
      %5061 = vrot.lane.b32.xlu0 %v5049, 111
      %v5062 = vpop.permute.xlu0 %5061
      %5063 = vrot.lane.b32.xlu0 %v5050, 111
      %v5064 = vpop.permute.xlu0 %5063
      %5065 = vrot.lane.b32.xlu0 %v5051, 111
      %v5066 = vpop.permute.xlu0 %5065
      %5067 = vrot.lane.b32.xlu0 %v5052, 111
      %v5068 = vpop.permute.xlu0 %5067
      %5069 = vrot.lane.b32.xlu0 %v5053, 111
      %v5070 = vpop.permute.xlu0 %5069
      %5071 = vrot.lane.b32.xlu0 %v5054, 111
      %v5072 = vpop.permute.xlu0 %5071
      %5073 = vrot.lane.b32.xlu0 %v5056, 111
      %v5074 = vpop.permute.xlu0 %5073
      %vm5075 = vcmask 908288
      %v5076 = vsel %vm5075, %v5058, %v5060
      %v5077 = vsel %vm5075, %v5060, %v5062
      %v5078 = vsel %vm5075, %v5062, %v5064
      %v5079 = vsel %vm5075, %v5064, %v5066
      %v5080 = vsel %vm5075, %v5066, %v5068
      %v5081 = vsel %vm5075, %v5068, %v5070
      %v5082 = vsel %vm5075, %v5070, %v5072
      %v5083 = vsel %vm5075, %v5072, %v5074
      %v5084 = vsel %vm1185, %v5039, 0
      %v5086 = vsel %vm1188, %v5076, 0
      %v5088 = vsel %vm1188, %v5077, 0
      %v5090 = vsel %vm1188, %v5078, 0
      %v5092 = vsel %vm1188, %v5079, 0
      %v5094 = vsel %vm1188, %v5080, 0
      %v5096 = vsel %vm1188, %v5081, 0
      %v5098 = vsel %vm1188, %v5082, 0
      %v5100 = vsel %vm1188, %v5083, 0
      %5102 = vmatpush.msra.mxu0 0.0
      %5103 = vmatpush.msra.mxu0 0.0
      %5104 = vmatpush.msra.mxu0 0.0
      %5105 = vmatpush.msra.mxu0 0.0
      %5106 = vmatpush.msra.mxu0 0.0
      %5107 = vmatpush.msra.mxu0 0.0
      %5108 = vmatpush.msra.mxu0 0.0
      %5109 = vmatpush.msra.mxu0 0.0
      %5110 = vmatpush.msra.mxu0 0.0
      %5111 = vmatpush.msra.mxu0 0.0
      %5112 = vmatpush.msra.mxu0 0.0
      %5113 = vmatpush.msra.mxu0 0.0
      %5114 = vmatpush.msra.mxu0 0.0
      %5115 = vmatpush.msra.mxu0 0.0
      %5116 = vmatpush.msra.mxu0 0.0
      %5117 = vmatpush.msra.mxu0 %v5086
      %5118 = vmatmul.f32.gmra.mxu0 %v5084
      %v5119 = vpop.f32.mrf.mxu0
      %v5120 = vadd.f32 0.0, %v5119
      %5121 = vdwg.mxu0
      %5122 = vmatpush.msra.mxu0 0.0
      %5123 = vmatpush.msra.mxu0 0.0
      %5124 = vmatpush.msra.mxu0 0.0
      %5125 = vmatpush.msra.mxu0 0.0
      %5126 = vmatpush.msra.mxu0 0.0
      %5127 = vmatpush.msra.mxu0 0.0
      %5128 = vmatpush.msra.mxu0 0.0
      %5129 = vmatpush.msra.mxu0 0.0
      %5130 = vmatpush.msra.mxu0 0.0
      %5131 = vmatpush.msra.mxu0 0.0
      %5132 = vmatpush.msra.mxu0 0.0
      %5133 = vmatpush.msra.mxu0 0.0
      %5134 = vmatpush.msra.mxu0 0.0
      %5135 = vmatpush.msra.mxu0 0.0
      %5136 = vmatpush.msra.mxu0 0.0
      %5137 = vmatpush.msra.mxu0 %v5088
      %5138 = vmatmul.f32.gmra.mxu0 %v5084
      %v5139 = vpop.f32.mrf.mxu0
      %v5140 = vadd.f32 0.0, %v5139
      %5141 = vdwg.mxu0
      %5142 = vmatpush.msra.mxu0 0.0
      %5143 = vmatpush.msra.mxu0 0.0
      %5144 = vmatpush.msra.mxu0 0.0
      %5145 = vmatpush.msra.mxu0 0.0
      %5146 = vmatpush.msra.mxu0 0.0
      %5147 = vmatpush.msra.mxu0 0.0
      %5148 = vmatpush.msra.mxu0 0.0
      %5149 = vmatpush.msra.mxu0 0.0
      %5150 = vmatpush.msra.mxu0 0.0
      %5151 = vmatpush.msra.mxu0 0.0
      %5152 = vmatpush.msra.mxu0 0.0
      %5153 = vmatpush.msra.mxu0 0.0
      %5154 = vmatpush.msra.mxu0 0.0
      %5155 = vmatpush.msra.mxu0 0.0
      %5156 = vmatpush.msra.mxu0 0.0
      %5157 = vmatpush.msra.mxu0 %v5090
      %5158 = vmatmul.f32.gmra.mxu0 %v5084
      %v5159 = vpop.f32.mrf.mxu0
      %v5160 = vadd.f32 0.0, %v5159
      %5161 = vdwg.mxu0
      %5162 = vmatpush.msra.mxu0 0.0
      %5163 = vmatpush.msra.mxu0 0.0
      %5164 = vmatpush.msra.mxu0 0.0
      %5165 = vmatpush.msra.mxu0 0.0
      %5166 = vmatpush.msra.mxu0 0.0
      %5167 = vmatpush.msra.mxu0 0.0
      %5168 = vmatpush.msra.mxu0 0.0
      %5169 = vmatpush.msra.mxu0 0.0
      %5170 = vmatpush.msra.mxu0 0.0
      %5171 = vmatpush.msra.mxu0 0.0
      %5172 = vmatpush.msra.mxu0 0.0
      %5173 = vmatpush.msra.mxu0 0.0
      %5174 = vmatpush.msra.mxu0 0.0
      %5175 = vmatpush.msra.mxu0 0.0
      %5176 = vmatpush.msra.mxu0 0.0
      %5177 = vmatpush.msra.mxu0 %v5092
      %5178 = vmatmul.f32.gmra.mxu0 %v5084
      %v5179 = vpop.f32.mrf.mxu0
      %v5180 = vadd.f32 0.0, %v5179
      %5181 = vdwg.mxu0
      %5182 = vmatpush.msra.mxu0 0.0
      %5183 = vmatpush.msra.mxu0 0.0
      %5184 = vmatpush.msra.mxu0 0.0
      %5185 = vmatpush.msra.mxu0 0.0
      %5186 = vmatpush.msra.mxu0 0.0
      %5187 = vmatpush.msra.mxu0 0.0
      %5188 = vmatpush.msra.mxu0 0.0
      %5189 = vmatpush.msra.mxu0 0.0
      %5190 = vmatpush.msra.mxu0 0.0
      %5191 = vmatpush.msra.mxu0 0.0
      %5192 = vmatpush.msra.mxu0 0.0
      %5193 = vmatpush.msra.mxu0 0.0
      %5194 = vmatpush.msra.mxu0 0.0
      %5195 = vmatpush.msra.mxu0 0.0
      %5196 = vmatpush.msra.mxu0 0.0
      %5197 = vmatpush.msra.mxu0 %v5094
      %5198 = vmatmul.f32.gmra.mxu0 %v5084
      %v5199 = vpop.f32.mrf.mxu0
      %v5200 = vadd.f32 0.0, %v5199
      %5201 = vdwg.mxu0
      %5202 = vmatpush.msra.mxu0 0.0
      %5203 = vmatpush.msra.mxu0 0.0
      %5204 = vmatpush.msra.mxu0 0.0
      %5205 = vmatpush.msra.mxu0 0.0
      %5206 = vmatpush.msra.mxu0 0.0
      %5207 = vmatpush.msra.mxu0 0.0
      %5208 = vmatpush.msra.mxu0 0.0
      %5209 = vmatpush.msra.mxu0 0.0
      %5210 = vmatpush.msra.mxu0 0.0
      %5211 = vmatpush.msra.mxu0 0.0
      %5212 = vmatpush.msra.mxu0 0.0
      %5213 = vmatpush.msra.mxu0 0.0
      %5214 = vmatpush.msra.mxu0 0.0
      %5215 = vmatpush.msra.mxu0 0.0
      %5216 = vmatpush.msra.mxu0 0.0
      %5217 = vmatpush.msra.mxu0 %v5096
      %5218 = vmatmul.f32.gmra.mxu0 %v5084
      %v5219 = vpop.f32.mrf.mxu0
      %v5220 = vadd.f32 0.0, %v5219
      %5221 = vdwg.mxu0
      %5222 = vmatpush.msra.mxu0 0.0
      %5223 = vmatpush.msra.mxu0 0.0
      %5224 = vmatpush.msra.mxu0 0.0
      %5225 = vmatpush.msra.mxu0 0.0
      %5226 = vmatpush.msra.mxu0 0.0
      %5227 = vmatpush.msra.mxu0 0.0
      %5228 = vmatpush.msra.mxu0 0.0
      %5229 = vmatpush.msra.mxu0 0.0
      %5230 = vmatpush.msra.mxu0 0.0
      %5231 = vmatpush.msra.mxu0 0.0
      %5232 = vmatpush.msra.mxu0 0.0
      %5233 = vmatpush.msra.mxu0 0.0
      %5234 = vmatpush.msra.mxu0 0.0
      %5235 = vmatpush.msra.mxu0 0.0
      %5236 = vmatpush.msra.mxu0 0.0
      %5237 = vmatpush.msra.mxu0 %v5098
      %5238 = vmatmul.f32.gmra.mxu0 %v5084
      %v5239 = vpop.f32.mrf.mxu0
      %v5240 = vadd.f32 0.0, %v5239
      %5241 = vdwg.mxu0
      %5242 = vmatpush.msra.mxu0 0.0
      %5243 = vmatpush.msra.mxu0 0.0
      %5244 = vmatpush.msra.mxu0 0.0
      %5245 = vmatpush.msra.mxu0 0.0
      %5246 = vmatpush.msra.mxu0 0.0
      %5247 = vmatpush.msra.mxu0 0.0
      %5248 = vmatpush.msra.mxu0 0.0
      %5249 = vmatpush.msra.mxu0 0.0
      %5250 = vmatpush.msra.mxu0 0.0
      %5251 = vmatpush.msra.mxu0 0.0
      %5252 = vmatpush.msra.mxu0 0.0
      %5253 = vmatpush.msra.mxu0 0.0
      %5254 = vmatpush.msra.mxu0 0.0
      %5255 = vmatpush.msra.mxu0 0.0
      %5256 = vmatpush.msra.mxu0 0.0
      %5257 = vmatpush.msra.mxu0 %v5100
      %5258 = vmatmul.f32.gmra.mxu0 %v5084
      %v5259 = vpop.f32.mrf.mxu0
      %v5260 = vadd.f32 0.0, %v5259
      %5261 = vdwg.mxu0
      %v5262 = vadd.f32 %v5030, %v5120
      %v5263 = vadd.f32 %v5031, %v5140
      %v5264 = vadd.f32 %v5032, %v5160
      %v5265 = vadd.f32 %v5033, %v5180
      %v5266 = vadd.f32 %v5034, %v5200
      %v5267 = vadd.f32 %v5035, %v5220
      %v5268 = vadd.f32 %v5036, %v5240
      %v5269 = vadd.f32 %v5037, %v5260
      %5270 = vrot.lane.b32.xlu0 %v1132, 56
      %v5271 = vpop.permute.xlu0 %5270
      %5272 = vst [vmem:[#allocation1] ss:$2 sm:$0xff] %v1127
      %s5273 = scalar_lea.vmem [#allocation1], 16
      %5274 = vst [vmem:[%s5273] ss:$2 sm:$0xff] %v1128
      %s5275 = scalar_lea.vmem [#allocation1], 32
      %5276 = vst [vmem:[%s5275] ss:$2 sm:$0xff] %v1129
      %s5277 = scalar_lea.vmem [#allocation1], 48
      %5278 = vst [vmem:[%s5277] ss:$2 sm:$0xff] %v1130
      %v5279 = vld.sshfl [vmem:[#allocation1] sm:$0xff pattern:$0x75316420]
      %v5280 = vld.sshfl [vmem:[#allocation1 + $0x8] sm:$0xff pattern:$0x75316420]
      %v5281 = vld.sshfl [vmem:[#allocation1 + $0x10] sm:$0xff pattern:$0x75316420]
      %v5282 = vld.sshfl [vmem:[#allocation1 + $0x18] sm:$0xff pattern:$0x75316420]
      %v5283 = vld.sshfl [vmem:[#allocation1 + $0x20] sm:$0xff pattern:$0x75316420]
      %v5284 = vld.sshfl [vmem:[#allocation1 + $0x28] sm:$0xff pattern:$0x75316420]
      %v5285 = vld.sshfl [vmem:[#allocation1 + $0x30] sm:$0xff pattern:$0x75316420]
      %v5286 = vld.sshfl [vmem:[#allocation1 + $0x38] sm:$0xff pattern:$0x75316420]
      %5287 = vst [vmem:[#allocation1] ss:$2 sm:$0xff] %v1131
      %v5288 = vld.sshfl [vmem:[#allocation1] sm:$0xff pattern:$0x75316420]
      %5289 = vrot.lane.b32.xlu0 %v5279, 110
      %v5290 = vpop.permute.xlu0 %5289
      %5291 = vrot.lane.b32.xlu0 %v5280, 110
      %v5292 = vpop.permute.xlu0 %5291
      %5293 = vrot.lane.b32.xlu0 %v5281, 110
      %v5294 = vpop.permute.xlu0 %5293
      %5295 = vrot.lane.b32.xlu0 %v5282, 110
      %v5296 = vpop.permute.xlu0 %5295
      %5297 = vrot.lane.b32.xlu0 %v5283, 110
      %v5298 = vpop.permute.xlu0 %5297
      %5299 = vrot.lane.b32.xlu0 %v5284, 110
      %v5300 = vpop.permute.xlu0 %5299
      %5301 = vrot.lane.b32.xlu0 %v5285, 110
      %v5302 = vpop.permute.xlu0 %5301
      %5303 = vrot.lane.b32.xlu0 %v5286, 110
      %v5304 = vpop.permute.xlu0 %5303
      %5305 = vrot.lane.b32.xlu0 %v5288, 110
      %v5306 = vpop.permute.xlu0 %5305
      %vm5307 = vcmask 900096
      %v5308 = vsel %vm5307, %v5290, %v5292
      %v5309 = vsel %vm5307, %v5292, %v5294
      %v5310 = vsel %vm5307, %v5294, %v5296
      %v5311 = vsel %vm5307, %v5296, %v5298
      %v5312 = vsel %vm5307, %v5298, %v5300
      %v5313 = vsel %vm5307, %v5300, %v5302
      %v5314 = vsel %vm5307, %v5302, %v5304
      %v5315 = vsel %vm5307, %v5304, %v5306
      %v5316 = vsel %vm1185, %v5271, 0
      %v5318 = vsel %vm1188, %v5308, 0
      %v5320 = vsel %vm1188, %v5309, 0
      %v5322 = vsel %vm1188, %v5310, 0
      %v5324 = vsel %vm1188, %v5311, 0
      %v5326 = vsel %vm1188, %v5312, 0
      %v5328 = vsel %vm1188, %v5313, 0
      %v5330 = vsel %vm1188, %v5314, 0
      %v5332 = vsel %vm1188, %v5315, 0
      %5334 = vmatpush.msra.mxu0 0.0
      %5335 = vmatpush.msra.mxu0 0.0
      %5336 = vmatpush.msra.mxu0 0.0
      %5337 = vmatpush.msra.mxu0 0.0
      %5338 = vmatpush.msra.mxu0 0.0
      %5339 = vmatpush.msra.mxu0 0.0
      %5340 = vmatpush.msra.mxu0 0.0
      %5341 = vmatpush.msra.mxu0 0.0
      %5342 = vmatpush.msra.mxu0 0.0
      %5343 = vmatpush.msra.mxu0 0.0
      %5344 = vmatpush.msra.mxu0 0.0
      %5345 = vmatpush.msra.mxu0 0.0
      %5346 = vmatpush.msra.mxu0 0.0
      %5347 = vmatpush.msra.mxu0 0.0
      %5348 = vmatpush.msra.mxu0 0.0
      %5349 = vmatpush.msra.mxu0 %v5318
      %5350 = vmatmul.f32.gmra.mxu0 %v5316
      %v5351 = vpop.f32.mrf.mxu0
      %v5352 = vadd.f32 0.0, %v5351
      %5353 = vdwg.mxu0
      %5354 = vmatpush.msra.mxu0 0.0
      %5355 = vmatpush.msra.mxu0 0.0
      %5356 = vmatpush.msra.mxu0 0.0
      %5357 = vmatpush.msra.mxu0 0.0
      %5358 = vmatpush.msra.mxu0 0.0
      %5359 = vmatpush.msra.mxu0 0.0
      %5360 = vmatpush.msra.mxu0 0.0
      %5361 = vmatpush.msra.mxu0 0.0
      %5362 = vmatpush.msra.mxu0 0.0
      %5363 = vmatpush.msra.mxu0 0.0
      %5364 = vmatpush.msra.mxu0 0.0
      %5365 = vmatpush.msra.mxu0 0.0
      %5366 = vmatpush.msra.mxu0 0.0
      %5367 = vmatpush.msra.mxu0 0.0
      %5368 = vmatpush.msra.mxu0 0.0
      %5369 = vmatpush.msra.mxu0 %v5320
      %5370 = vmatmul.f32.gmra.mxu0 %v5316
      %v5371 = vpop.f32.mrf.mxu0
      %v5372 = vadd.f32 0.0, %v5371
      %5373 = vdwg.mxu0
      %5374 = vmatpush.msra.mxu0 0.0
      %5375 = vmatpush.msra.mxu0 0.0
      %5376 = vmatpush.msra.mxu0 0.0
      %5377 = vmatpush.msra.mxu0 0.0
      %5378 = vmatpush.msra.mxu0 0.0
      %5379 = vmatpush.msra.mxu0 0.0
      %5380 = vmatpush.msra.mxu0 0.0
      %5381 = vmatpush.msra.mxu0 0.0
      %5382 = vmatpush.msra.mxu0 0.0
      %5383 = vmatpush.msra.mxu0 0.0
      %5384 = vmatpush.msra.mxu0 0.0
      %5385 = vmatpush.msra.mxu0 0.0
      %5386 = vmatpush.msra.mxu0 0.0
      %5387 = vmatpush.msra.mxu0 0.0
      %5388 = vmatpush.msra.mxu0 0.0
      %5389 = vmatpush.msra.mxu0 %v5322
      %5390 = vmatmul.f32.gmra.mxu0 %v5316
      %v5391 = vpop.f32.mrf.mxu0
      %v5392 = vadd.f32 0.0, %v5391
      %5393 = vdwg.mxu0
      %5394 = vmatpush.msra.mxu0 0.0
      %5395 = vmatpush.msra.mxu0 0.0
      %5396 = vmatpush.msra.mxu0 0.0
      %5397 = vmatpush.msra.mxu0 0.0
      %5398 = vmatpush.msra.mxu0 0.0
      %5399 = vmatpush.msra.mxu0 0.0
      %5400 = vmatpush.msra.mxu0 0.0
      %5401 = vmatpush.msra.mxu0 0.0
      %5402 = vmatpush.msra.mxu0 0.0
      %5403 = vmatpush.msra.mxu0 0.0
      %5404 = vmatpush.msra.mxu0 0.0
      %5405 = vmatpush.msra.mxu0 0.0
      %5406 = vmatpush.msra.mxu0 0.0
      %5407 = vmatpush.msra.mxu0 0.0
      %5408 = vmatpush.msra.mxu0 0.0
      %5409 = vmatpush.msra.mxu0 %v5324
      %5410 = vmatmul.f32.gmra.mxu0 %v5316
      %v5411 = vpop.f32.mrf.mxu0
      %v5412 = vadd.f32 0.0, %v5411
      %5413 = vdwg.mxu0
      %5414 = vmatpush.msra.mxu0 0.0
      %5415 = vmatpush.msra.mxu0 0.0
      %5416 = vmatpush.msra.mxu0 0.0
      %5417 = vmatpush.msra.mxu0 0.0
      %5418 = vmatpush.msra.mxu0 0.0
      %5419 = vmatpush.msra.mxu0 0.0
      %5420 = vmatpush.msra.mxu0 0.0
      %5421 = vmatpush.msra.mxu0 0.0
      %5422 = vmatpush.msra.mxu0 0.0
      %5423 = vmatpush.msra.mxu0 0.0
      %5424 = vmatpush.msra.mxu0 0.0
      %5425 = vmatpush.msra.mxu0 0.0
      %5426 = vmatpush.msra.mxu0 0.0
      %5427 = vmatpush.msra.mxu0 0.0
      %5428 = vmatpush.msra.mxu0 0.0
      %5429 = vmatpush.msra.mxu0 %v5326
      %5430 = vmatmul.f32.gmra.mxu0 %v5316
      %v5431 = vpop.f32.mrf.mxu0
      %v5432 = vadd.f32 0.0, %v5431
      %5433 = vdwg.mxu0
      %5434 = vmatpush.msra.mxu0 0.0
      %5435 = vmatpush.msra.mxu0 0.0
      %5436 = vmatpush.msra.mxu0 0.0
      %5437 = vmatpush.msra.mxu0 0.0
      %5438 = vmatpush.msra.mxu0 0.0
      %5439 = vmatpush.msra.mxu0 0.0
      %5440 = vmatpush.msra.mxu0 0.0
      %5441 = vmatpush.msra.mxu0 0.0
      %5442 = vmatpush.msra.mxu0 0.0
      %5443 = vmatpush.msra.mxu0 0.0
      %5444 = vmatpush.msra.mxu0 0.0
      %5445 = vmatpush.msra.mxu0 0.0
      %5446 = vmatpush.msra.mxu0 0.0
      %5447 = vmatpush.msra.mxu0 0.0
      %5448 = vmatpush.msra.mxu0 0.0
      %5449 = vmatpush.msra.mxu0 %v5328
      %5450 = vmatmul.f32.gmra.mxu0 %v5316
      %v5451 = vpop.f32.mrf.mxu0
      %v5452 = vadd.f32 0.0, %v5451
      %5453 = vdwg.mxu0
      %5454 = vmatpush.msra.mxu0 0.0
      %5455 = vmatpush.msra.mxu0 0.0
      %5456 = vmatpush.msra.mxu0 0.0
      %5457 = vmatpush.msra.mxu0 0.0
      %5458 = vmatpush.msra.mxu0 0.0
      %5459 = vmatpush.msra.mxu0 0.0
      %5460 = vmatpush.msra.mxu0 0.0
      %5461 = vmatpush.msra.mxu0 0.0
      %5462 = vmatpush.msra.mxu0 0.0
      %5463 = vmatpush.msra.mxu0 0.0
      %5464 = vmatpush.msra.mxu0 0.0
      %5465 = vmatpush.msra.mxu0 0.0
      %5466 = vmatpush.msra.mxu0 0.0
      %5467 = vmatpush.msra.mxu0 0.0
      %5468 = vmatpush.msra.mxu0 0.0
      %5469 = vmatpush.msra.mxu0 %v5330
      %5470 = vmatmul.f32.gmra.mxu0 %v5316
      %v5471 = vpop.f32.mrf.mxu0
      %v5472 = vadd.f32 0.0, %v5471
      %5473 = vdwg.mxu0
      %5474 = vmatpush.msra.mxu0 0.0
      %5475 = vmatpush.msra.mxu0 0.0
      %5476 = vmatpush.msra.mxu0 0.0
      %5477 = vmatpush.msra.mxu0 0.0
      %5478 = vmatpush.msra.mxu0 0.0
      %5479 = vmatpush.msra.mxu0 0.0
      %5480 = vmatpush.msra.mxu0 0.0
      %5481 = vmatpush.msra.mxu0 0.0
      %5482 = vmatpush.msra.mxu0 0.0
      %5483 = vmatpush.msra.mxu0 0.0
      %5484 = vmatpush.msra.mxu0 0.0
      %5485 = vmatpush.msra.mxu0 0.0
      %5486 = vmatpush.msra.mxu0 0.0
      %5487 = vmatpush.msra.mxu0 0.0
      %5488 = vmatpush.msra.mxu0 0.0
      %5489 = vmatpush.msra.mxu0 %v5332
      %5490 = vmatmul.f32.gmra.mxu0 %v5316
      %v5491 = vpop.f32.mrf.mxu0
      %v5492 = vadd.f32 0.0, %v5491
      %5493 = vdwg.mxu0
      %v5494 = vadd.f32 %v5262, %v5352
      %v5495 = vadd.f32 %v5263, %v5372
      %v5496 = vadd.f32 %v5264, %v5392
      %v5497 = vadd.f32 %v5265, %v5412
      %v5498 = vadd.f32 %v5266, %v5432
      %v5499 = vadd.f32 %v5267, %v5452
      %v5500 = vadd.f32 %v5268, %v5472
      %v5501 = vadd.f32 %v5269, %v5492
      %5502 = vrot.lane.b32.xlu0 %v1132, 52
      %v5503 = vpop.permute.xlu0 %5502
      %5504 = vst [vmem:[#allocation1] ss:$2 sm:$0xff] %v1127
      %s5505 = scalar_lea.vmem [#allocation1], 16
      %5506 = vst [vmem:[%s5505] ss:$2 sm:$0xff] %v1128
      %s5507 = scalar_lea.vmem [#allocation1], 32
      %5508 = vst [vmem:[%s5507] ss:$2 sm:$0xff] %v1129
      %s5509 = scalar_lea.vmem [#allocation1], 48
      %5510 = vst [vmem:[%s5509] ss:$2 sm:$0xff] %v1130
      %v5511 = vld.sshfl [vmem:[#allocation1] sm:$0xff pattern:$0x75316420]
      %v5512 = vld.sshfl [vmem:[#allocation1 + $0x8] sm:$0xff pattern:$0x75316420]
      %v5513 = vld.sshfl [vmem:[#allocation1 + $0x10] sm:$0xff pattern:$0x75316420]
      %v5514 = vld.sshfl [vmem:[#allocation1 + $0x18] sm:$0xff pattern:$0x75316420]
      %v5515 = vld.sshfl [vmem:[#allocation1 + $0x20] sm:$0xff pattern:$0x75316420]
      %v5516 = vld.sshfl [vmem:[#allocation1 + $0x28] sm:$0xff pattern:$0x75316420]
      %v5517 = vld.sshfl [vmem:[#allocation1 + $0x30] sm:$0xff pattern:$0x75316420]
      %v5518 = vld.sshfl [vmem:[#allocation1 + $0x38] sm:$0xff pattern:$0x75316420]
      %5519 = vst [vmem:[#allocation1] ss:$2 sm:$0xff] %v1131
      %v5520 = vld.sshfl [vmem:[#allocation1] sm:$0xff pattern:$0x75316420]
      %5521 = vrot.lane.b32.xlu0 %v5511, 109
      %v5522 = vpop.permute.xlu0 %5521
      %5523 = vrot.lane.b32.xlu0 %v5512, 109
      %v5524 = vpop.permute.xlu0 %5523
      %5525 = vrot.lane.b32.xlu0 %v5513, 109
      %v5526 = vpop.permute.xlu0 %5525
      %5527 = vrot.lane.b32.xlu0 %v5514, 109
      %v5528 = vpop.permute.xlu0 %5527
      %5529 = vrot.lane.b32.xlu0 %v5515, 109
      %v5530 = vpop.permute.xlu0 %5529
      %5531 = vrot.lane.b32.xlu0 %v5516, 109
      %v5532 = vpop.permute.xlu0 %5531
      %5533 = vrot.lane.b32.xlu0 %v5517, 109
      %v5534 = vpop.permute.xlu0 %5533
      %5535 = vrot.lane.b32.xlu0 %v5518, 109
      %v5536 = vpop.permute.xlu0 %5535
      %5537 = vrot.lane.b32.xlu0 %v5520, 109
      %v5538 = vpop.permute.xlu0 %5537
      %vm5539 = vcmask 891904
      %v5540 = vsel %vm5539, %v5522, %v5524
      %v5541 = vsel %vm5539, %v5524, %v5526
      %v5542 = vsel %vm5539, %v5526, %v5528
      %v5543 = vsel %vm5539, %v5528, %v5530
      %v5544 = vsel %vm5539, %v5530, %v5532
      %v5545 = vsel %vm5539, %v5532, %v5534
      %v5546 = vsel %vm5539, %v5534, %v5536
      %v5547 = vsel %vm5539, %v5536, %v5538
      %v5548 = vsel %vm1185, %v5503, 0
      %v5550 = vsel %vm1188, %v5540, 0
      %v5552 = vsel %vm1188, %v5541, 0
      %v5554 = vsel %vm1188, %v5542, 0
      %v5556 = vsel %vm1188, %v5543, 0
      %v5558 = vsel %vm1188, %v5544, 0
      %v5560 = vsel %vm1188, %v5545, 0
      %v5562 = vsel %vm1188, %v5546, 0
      %v5564 = vsel %vm1188, %v5547, 0
      %5566 = vmatpush.msra.mxu0 0.0
      %5567 = vmatpush.msra.mxu0 0.0
      %5568 = vmatpush.msra.mxu0 0.0
      %5569 = vmatpush.msra.mxu0 0.0
      %5570 = vmatpush.msra.mxu0 0.0
      %5571 = vmatpush.msra.mxu0 0.0
      %5572 = vmatpush.msra.mxu0 0.0
      %5573 = vmatpush.msra.mxu0 0.0
      %5574 = vmatpush.msra.mxu0 0.0
      %5575 = vmatpush.msra.mxu0 0.0
      %5576 = vmatpush.msra.mxu0 0.0
      %5577 = vmatpush.msra.mxu0 0.0
      %5578 = vmatpush.msra.mxu0 0.0
      %5579 = vmatpush.msra.mxu0 0.0
      %5580 = vmatpush.msra.mxu0 0.0
      %5581 = vmatpush.msra.mxu0 %v5550
      %5582 = vmatmul.f32.gmra.mxu0 %v5548
      %v5583 = vpop.f32.mrf.mxu0
      %v5584 = vadd.f32 0.0, %v5583
      %5585 = vdwg.mxu0
      %5586 = vmatpush.msra.mxu0 0.0
      %5587 = vmatpush.msra.mxu0 0.0
      %5588 = vmatpush.msra.mxu0 0.0
      %5589 = vmatpush.msra.mxu0 0.0
      %5590 = vmatpush.msra.mxu0 0.0
      %5591 = vmatpush.msra.mxu0 0.0
      %5592 = vmatpush.msra.mxu0 0.0
      %5593 = vmatpush.msra.mxu0 0.0
      %5594 = vmatpush.msra.mxu0 0.0
      %5595 = vmatpush.msra.mxu0 0.0
      %5596 = vmatpush.msra.mxu0 0.0
      %5597 = vmatpush.msra.mxu0 0.0
      %5598 = vmatpush.msra.mxu0 0.0
      %5599 = vmatpush.msra.mxu0 0.0
      %5600 = vmatpush.msra.mxu0 0.0
      %5601 = vmatpush.msra.mxu0 %v5552
      %5602 = vmatmul.f32.gmra.mxu0 %v5548
      %v5603 = vpop.f32.mrf.mxu0
      %v5604 = vadd.f32 0.0, %v5603
      %5605 = vdwg.mxu0
      %5606 = vmatpush.msra.mxu0 0.0
      %5607 = vmatpush.msra.mxu0 0.0
      %5608 = vmatpush.msra.mxu0 0.0
      %5609 = vmatpush.msra.mxu0 0.0
      %5610 = vmatpush.msra.mxu0 0.0
      %5611 = vmatpush.msra.mxu0 0.0
      %5612 = vmatpush.msra.mxu0 0.0
      %5613 = vmatpush.msra.mxu0 0.0
      %5614 = vmatpush.msra.mxu0 0.0
      %5615 = vmatpush.msra.mxu0 0.0
      %5616 = vmatpush.msra.mxu0 0.0
      %5617 = vmatpush.msra.mxu0 0.0
      %5618 = vmatpush.msra.mxu0 0.0
      %5619 = vmatpush.msra.mxu0 0.0
      %5620 = vmatpush.msra.mxu0 0.0
      %5621 = vmatpush.msra.mxu0 %v5554
      %5622 = vmatmul.f32.gmra.mxu0 %v5548
      %v5623 = vpop.f32.mrf.mxu0
      %v5624 = vadd.f32 0.0, %v5623
      %5625 = vdwg.mxu0
      %5626 = vmatpush.msra.mxu0 0.0
      %5627 = vmatpush.msra.mxu0 0.0
      %5628 = vmatpush.msra.mxu0 0.0
      %5629 = vmatpush.msra.mxu0 0.0
      %5630 = vmatpush.msra.mxu0 0.0
      %5631 = vmatpush.msra.mxu0 0.0
      %5632 = vmatpush.msra.mxu0 0.0
      %5633 = vmatpush.msra.mxu0 0.0
      %5634 = vmatpush.msra.mxu0 0.0
      %5635 = vmatpush.msra.mxu0 0.0
      %5636 = vmatpush.msra.mxu0 0.0
      %5637 = vmatpush.msra.mxu0 0.0
      %5638 = vmatpush.msra.mxu0 0.0
      %5639 = vmatpush.msra.mxu0 0.0
      %5640 = vmatpush.msra.mxu0 0.0
      %5641 = vmatpush.msra.mxu0 %v5556
      %5642 = vmatmul.f32.gmra.mxu0 %v5548
      %v5643 = vpop.f32.mrf.mxu0
      %v5644 = vadd.f32 0.0, %v5643
      %5645 = vdwg.mxu0
      %5646 = vmatpush.msra.mxu0 0.0
      %5647 = vmatpush.msra.mxu0 0.0
      %5648 = vmatpush.msra.mxu0 0.0
      %5649 = vmatpush.msra.mxu0 0.0
      %5650 = vmatpush.msra.mxu0 0.0
      %5651 = vmatpush.msra.mxu0 0.0
      %5652 = vmatpush.msra.mxu0 0.0
      %5653 = vmatpush.msra.mxu0 0.0
      %5654 = vmatpush.msra.mxu0 0.0
      %5655 = vmatpush.msra.mxu0 0.0
      %5656 = vmatpush.msra.mxu0 0.0
      %5657 = vmatpush.msra.mxu0 0.0
      %5658 = vmatpush.msra.mxu0 0.0
      %5659 = vmatpush.msra.mxu0 0.0
      %5660 = vmatpush.msra.mxu0 0.0
      %5661 = vmatpush.msra.mxu0 %v5558
      %5662 = vmatmul.f32.gmra.mxu0 %v5548
      %v5663 = vpop.f32.mrf.mxu0
      %v5664 = vadd.f32 0.0, %v5663
      %5665 = vdwg.mxu0
      %5666 = vmatpush.msra.mxu0 0.0
      %5667 = vmatpush.msra.mxu0 0.0
      %5668 = vmatpush.msra.mxu0 0.0
      %5669 = vmatpush.msra.mxu0 0.0
      %5670 = vmatpush.msra.mxu0 0.0
      %5671 = vmatpush.msra.mxu0 0.0
      %5672 = vmatpush.msra.mxu0 0.0
      %5673 = vmatpush.msra.mxu0 0.0
      %5674 = vmatpush.msra.mxu0 0.0
      %5675 = vmatpush.msra.mxu0 0.0
      %5676 = vmatpush.msra.mxu0 0.0
      %5677 = vmatpush.msra.mxu0 0.0
      %5678 = vmatpush.msra.mxu0 0.0
      %5679 = vmatpush.msra.mxu0 0.0
      %5680 = vmatpush.msra.mxu0 0.0
      %5681 = vmatpush.msra.mxu0 %v5560
      %5682 = vmatmul.f32.gmra.mxu0 %v5548
      %v5683 = vpop.f32.mrf.mxu0
      %v5684 = vadd.f32 0.0, %v5683
      %5685 = vdwg.mxu0
      %5686 = vmatpush.msra.mxu0 0.0
      %5687 = vmatpush.msra.mxu0 0.0
      %5688 = vmatpush.msra.mxu0 0.0
      %5689 = vmatpush.msra.mxu0 0.0
      %5690 = vmatpush.msra.mxu0 0.0
      %5691 = vmatpush.msra.mxu0 0.0
      %5692 = vmatpush.msra.mxu0 0.0
      %5693 = vmatpush.msra.mxu0 0.0
      %5694 = vmatpush.msra.mxu0 0.0
      %5695 = vmatpush.msra.mxu0 0.0
      %5696 = vmatpush.msra.mxu0 0.0
      %5697 = vmatpush.msra.mxu0 0.0
      %5698 = vmatpush.msra.mxu0 0.0
      %5699 = vmatpush.msra.mxu0 0.0
      %5700 = vmatpush.msra.mxu0 0.0
      %5701 = vmatpush.msra.mxu0 %v5562
      %5702 = vmatmul.f32.gmra.mxu0 %v5548
      %v5703 = vpop.f32.mrf.mxu0
      %v5704 = vadd.f32 0.0, %v5703
      %5705 = vdwg.mxu0
      %5706 = vmatpush.msra.mxu0 0.0
      %5707 = vmatpush.msra.mxu0 0.0
      %5708 = vmatpush.msra.mxu0 0.0
      %5709 = vmatpush.msra.mxu0 0.0
      %5710 = vmatpush.msra.mxu0 0.0
      %5711 = vmatpush.msra.mxu0 0.0
      %5712 = vmatpush.msra.mxu0 0.0
      %5713 = vmatpush.msra.mxu0 0.0
      %5714 = vmatpush.msra.mxu0 0.0
      %5715 = vmatpush.msra.mxu0 0.0
      %5716 = vmatpush.msra.mxu0 0.0
      %5717 = vmatpush.msra.mxu0 0.0
      %5718 = vmatpush.msra.mxu0 0.0
      %5719 = vmatpush.msra.mxu0 0.0
      %5720 = vmatpush.msra.mxu0 0.0
      %5721 = vmatpush.msra.mxu0 %v5564
      %5722 = vmatmul.f32.gmra.mxu0 %v5548
      %v5723 = vpop.f32.mrf.mxu0
      %v5724 = vadd.f32 0.0, %v5723
      %5725 = vdwg.mxu0
      %v5726 = vadd.f32 %v5494, %v5584
      %v5727 = vadd.f32 %v5495, %v5604
      %v5728 = vadd.f32 %v5496, %v5624
      %v5729 = vadd.f32 %v5497, %v5644
      %v5730 = vadd.f32 %v5498, %v5664
      %v5731 = vadd.f32 %v5499, %v5684
      %v5732 = vadd.f32 %v5500, %v5704
      %v5733 = vadd.f32 %v5501, %v5724
      %v5734 = vld [vmem:[%s5] sm:$0xff]
      %5736 = vset.pattern.permute.xlu0 0
      %5737 = vperm.xlu0 %5736, %v5734
      %v5738 = vpop.permute.xlu0 %5737
      %v5740 = vadd.f32 %v5726, %v5738
      %v5741 = vadd.f32 %v5727, %v5738
      %v5742 = vadd.f32 %v5728, %v5738
      %v5743 = vadd.f32 %v5729, %v5738
      %v5744 = vadd.f32 %v5730, %v5738
      %v5745 = vadd.f32 %v5731, %v5738
      %v5746 = vadd.f32 %v5732, %v5738
      %v5747 = vadd.f32 %v5733, %v5738
      %v5748 = vmax.f32 %v5740, 0.0
      %v5749 = vmax.f32 %v5741, 0.0
      %v5750 = vmax.f32 %v5742, 0.0
      %v5751 = vmax.f32 %v5743, 0.0
      %v5752 = vmax.f32 %v5744, 0.0
      %v5753 = vmax.f32 %v5745, 0.0
      %v5754 = vmax.f32 %v5746, 0.0
      %v5755 = vmax.f32 %v5747, 0.0
      %5764 = vrot.lane.b32.xlu0 %v5748, 127
      %v5765 = vpop.permute.xlu0 %5764
      %5766 = vrot.lane.b32.xlu0 %v5749, 127
      %v5767 = vpop.permute.xlu0 %5766
      %5768 = vrot.lane.b32.xlu0 %v5750, 127
      %v5769 = vpop.permute.xlu0 %5768
      %5770 = vrot.lane.b32.xlu0 %v5751, 127
      %v5771 = vpop.permute.xlu0 %5770
      %5772 = vrot.lane.b32.xlu0 %v5752, 127
      %v5773 = vpop.permute.xlu0 %5772
      %5774 = vrot.lane.b32.xlu0 %v5753, 127
      %v5775 = vpop.permute.xlu0 %5774
      %5776 = vrot.lane.b32.xlu0 %v5754, 127
      %v5777 = vpop.permute.xlu0 %5776
      %5778 = vrot.lane.b32.xlu0 %v5755, 127
      %v5779 = vpop.permute.xlu0 %5778
      %v5780 = vsel %vm1176, %v5765, %v5767
      %v5781 = vsel %vm1176, %v5767, %v5769
      %v5782 = vsel %vm1176, %v5769, %v5771
      %v5783 = vsel %vm1176, %v5771, %v5773
      %v5784 = vsel %vm1176, %v5773, %v5775
      %v5785 = vsel %vm1176, %v5775, %v5777
      %v5786 = vsel %vm1176, %v5777, %v5779
      %v5795 = vsel %vm1176, %v5779, 0.0
      %v5796 = vmax.f32 %v5748, %v5780
      %v5797 = vmax.f32 %v5749, %v5781
      %v5798 = vmax.f32 %v5750, %v5782
      %v5799 = vmax.f32 %v5751, %v5783
      %v5800 = vmax.f32 %v5752, %v5784
      %v5801 = vmax.f32 %v5753, %v5785
      %v5802 = vmax.f32 %v5754, %v5786
      %v5803 = vmax.f32 %v5755, %v5795
      %5804 = vrot.lane.b32.xlu0 %v5748, 126
      %v5805 = vpop.permute.xlu0 %5804
      %5806 = vrot.lane.b32.xlu0 %v5749, 126
      %v5807 = vpop.permute.xlu0 %5806
      %5808 = vrot.lane.b32.xlu0 %v5750, 126
      %v5809 = vpop.permute.xlu0 %5808
      %5810 = vrot.lane.b32.xlu0 %v5751, 126
      %v5811 = vpop.permute.xlu0 %5810
      %5812 = vrot.lane.b32.xlu0 %v5752, 126
      %v5813 = vpop.permute.xlu0 %5812
      %5814 = vrot.lane.b32.xlu0 %v5753, 126
      %v5815 = vpop.permute.xlu0 %5814
      %5816 = vrot.lane.b32.xlu0 %v5754, 126
      %v5817 = vpop.permute.xlu0 %5816
      %5818 = vrot.lane.b32.xlu0 %v5755, 126
      %v5819 = vpop.permute.xlu0 %5818
      %v5820 = vsel %vm1595, %v5805, %v5807
      %v5821 = vsel %vm1595, %v5807, %v5809
      %v5822 = vsel %vm1595, %v5809, %v5811
      %v5823 = vsel %vm1595, %v5811, %v5813
      %v5824 = vsel %vm1595, %v5813, %v5815
      %v5825 = vsel %vm1595, %v5815, %v5817
      %v5826 = vsel %vm1595, %v5817, %v5819
      %v5835 = vsel %vm1595, %v5819, 0.0
      %5836 = vrot.lane.b32.xlu0 %v5748, 125
      %v5837 = vpop.permute.xlu0 %5836
      %5838 = vrot.lane.b32.xlu0 %v5749, 125
      %v5839 = vpop.permute.xlu0 %5838
      %5840 = vrot.lane.b32.xlu0 %v5750, 125
      %v5841 = vpop.permute.xlu0 %5840
      %5842 = vrot.lane.b32.xlu0 %v5751, 125
      %v5843 = vpop.permute.xlu0 %5842
      %5844 = vrot.lane.b32.xlu0 %v5752, 125
      %v5845 = vpop.permute.xlu0 %5844
      %5846 = vrot.lane.b32.xlu0 %v5753, 125
      %v5847 = vpop.permute.xlu0 %5846
      %5848 = vrot.lane.b32.xlu0 %v5754, 125
      %v5849 = vpop.permute.xlu0 %5848
      %5850 = vrot.lane.b32.xlu0 %v5755, 125
      %v5851 = vpop.permute.xlu0 %5850
      %v5852 = vsel %vm1827, %v5837, %v5839
      %v5853 = vsel %vm1827, %v5839, %v5841
      %v5854 = vsel %vm1827, %v5841, %v5843
      %v5855 = vsel %vm1827, %v5843, %v5845
      %v5856 = vsel %vm1827, %v5845, %v5847
      %v5857 = vsel %vm1827, %v5847, %v5849
      %v5858 = vsel %vm1827, %v5849, %v5851
      %v5867 = vsel %vm1827, %v5851, 0.0
      %v5868 = vmax.f32 %v5820, %v5852
      %v5869 = vmax.f32 %v5821, %v5853
      %v5870 = vmax.f32 %v5822, %v5854
      %v5871 = vmax.f32 %v5823, %v5855
      %v5872 = vmax.f32 %v5824, %v5856
      %v5873 = vmax.f32 %v5825, %v5857
      %v5874 = vmax.f32 %v5826, %v5858
      %v5875 = vmax.f32 %v5835, %v5867
      %v5876 = vmax.f32 %v5796, %v5868
      %v5877 = vmax.f32 %v5797, %v5869
      %v5878 = vmax.f32 %v5798, %v5870
      %v5879 = vmax.f32 %v5799, %v5871
      %v5880 = vmax.f32 %v5800, %v5872
      %v5881 = vmax.f32 %v5801, %v5873
      %v5882 = vmax.f32 %v5802, %v5874
      %v5883 = vmax.f32 %v5803, %v5875
      %v5884 = vlaneseq
      %v5885 = vshrl.u32 %v5884, 7
      %v5886 = vadd.s32 %v5885, 8
      %v5887 = vadd.s32 %v5885, 16
      %v5888 = vadd.s32 %v5885, 24
      %v5889 = vadd.s32 %v5885, 32
      %v5890 = vadd.s32 %v5885, 40
      %v5891 = vadd.s32 %v5885, 48
      %v5892 = vadd.s32 %v5885, 56
      %v5893 = vadd.s32 %v5885, 64
      %v5894 = vadd.s32 %v5885, 72
      %v5895 = vadd.s32 %v5885, 80
      %v5896 = vadd.s32 %v5885, 88
      %v5897 = vadd.s32 %v5885, 96
      %v5898 = vadd.s32 %v5885, 104
      %v5899 = vadd.s32 %v5885, 112
      %v5900 = vadd.s32 %v5885, 120
      %v5901 = vadd.s32 %v5885, 128
      %v5902 = vadd.s32 %v5885, 136
      %v5903 = vadd.s32 %v5885, 144
      %v5904 = vadd.s32 %v5885, 152
      %v5905 = vadd.s32 %v5885, 160
      %v5906 = vadd.s32 %v5885, 168
      %v5907 = vadd.s32 %v5885, 176
      %v5908 = vadd.s32 %v5885, 184
      %v5909 = vadd.s32 %v5885, 192
      %v5910 = vadd.s32 %v5885, 200
      %v5911 = vadd.s32 %v5885, 208
      %v5912 = vadd.s32 %v5885, 216
      %v5913 = vadd.s32 %v5885, 224
      %v5914 = vadd.s32 %v5885, 232
      %v5915 = vadd.s32 %v5885, 240
      %v5916 = vadd.s32 %v5885, 248
      %v5917 = vadd.s32 %v5885, 256
      %v5918 = vadd.s32 %v5885, 264
      %v5919 = vadd.s32 %v5885, 272
      %v5920 = vadd.s32 %v5885, 280
      %v5921 = vadd.s32 %v5885, 288
      %v5922 = vadd.s32 %v5885, 296
      %v5923 = vadd.s32 %v5885, 304
      %v5924 = vadd.s32 %v5885, 312
      %v5925 = vadd.s32 %v5885, 320
      %v5926 = vadd.s32 %v5885, 328
      %v5927 = vadd.s32 %v5885, 336
      %v5928 = vadd.s32 %v5885, 344
      %v5929 = vadd.s32 %v5885, 352
      %v5930 = vadd.s32 %v5885, 360
      %v5931 = vadd.s32 %v5885, 368
      %v5932 = vadd.s32 %v5885, 376
      %v5933 = vadd.s32 %v5885, 384
      %v5934 = vadd.s32 %v5885, 392
      %v5935 = vadd.s32 %v5885, 400
      %v5936 = vadd.s32 %v5885, 408
      %v5937 = vadd.s32 %v5885, 416
      %v5938 = vadd.s32 %v5885, 424
      %v5939 = vadd.s32 %v5885, 432
      %v5940 = vadd.s32 %v5885, 440
      %v5941 = vadd.s32 %v5885, 448
      %v5942 = vadd.s32 %v5885, 456
      %v5943 = vadd.s32 %v5885, 464
      %v5944 = vadd.s32 %v5885, 472
      %v5945 = vadd.s32 %v5885, 480
      %v5946 = vadd.s32 %v5885, 488
      %v5947 = vadd.s32 %v5885, 496
      %v5948 = vadd.s32 %v5885, 504
      %v5949 = vadd.s32 %v5885, 512
      %v5950 = vadd.s32 %v5885, 520
      %v5951 = vadd.s32 %v5885, 528
      %v5952 = vadd.s32 %v5885, 536
      %v5953 = vadd.s32 %v5885, 544
      %v5954 = vadd.s32 %v5885, 552
      %v5955 = vadd.s32 %v5885, 560
      %v5956 = vadd.s32 %v5885, 568
      %v5957 = vadd.s32 %v5885, 576
      %v5958 = vadd.s32 %v5885, 584
      %v5959 = vadd.s32 %v5885, 592
      %v5960 = vadd.s32 %v5885, 600
      %v5961 = vadd.s32 %v5885, 608
      %v5962 = vadd.s32 %v5885, 616
      %v5963 = vadd.s32 %v5885, 624
      %v5964 = vadd.s32 %v5885, 632
      %v5965 = vadd.s32 %v5885, 640
      %v5966 = vadd.s32 %v5885, 648
      %v5967 = vadd.s32 %v5885, 656
      %v5968 = vadd.s32 %v5885, 664
      %v5969 = vadd.s32 %v5885, 672
      %v5970 = vadd.s32 %v5885, 680
      %v5971 = vadd.s32 %v5885, 688
      %v5972 = vadd.s32 %v5885, 696
      %v5973 = vadd.s32 %v5885, 704
      %v5974 = vadd.s32 %v5885, 712
      %v5975 = vadd.s32 %v5885, 720
      %v5976 = vadd.s32 %v5885, 728
      %v5977 = vadd.s32 %v5885, 736
      %v5978 = vadd.s32 %v5885, 744
      %v5979 = vadd.s32 %v5885, 752
      %v5980 = vadd.s32 %v5885, 760
      %v5981 = vadd.s32 %v5885, 768
      %v5982 = vadd.s32 %v5885, 776
      %v5983 = vadd.s32 %v5885, 784
      %v5984 = vadd.s32 %v5885, 792
      %v5985 = vadd.s32 %v5885, 800
      %v5986 = vadd.s32 %v5885, 808
      %v5987 = vadd.s32 %v5885, 816
      %v5988 = vadd.s32 %v5885, 824
      %v5989 = vadd.s32 %v5885, 832
      %v5990 = vadd.s32 %v5885, 840
      %v5991 = vadd.s32 %v5885, 848
      %v5992 = vadd.s32 %v5885, 856
      %v5993 = vadd.s32 %v5885, 864
      %v5994 = vadd.s32 %v5885, 872
      %v5995 = vadd.s32 %v5885, 880
      %v5996 = vadd.s32 %v5885, 888
      %v5997 = vadd.s32 %v5885, 896
      %v5998 = vadd.s32 %v5885, 904
      %v5999 = vadd.s32 %v5885, 912
      %v6000 = vadd.s32 %v5885, 920
      %v6001 = vadd.s32 %v5885, 928
      %v6002 = vadd.s32 %v5885, 936
      %v6003 = vadd.s32 %v5885, 944
      %v6004 = vadd.s32 %v5885, 952
      %v6005 = vadd.s32 %v5885, 960
      %v6006 = vadd.s32 %v5885, 968
      %v6007 = vadd.s32 %v5885, 976
      %v6008 = vadd.s32 %v5885, 984
      %v6009 = vadd.s32 %v5885, 992
      %v6010 = vadd.s32 %v5885, 1000
      %v6011 = vadd.s32 %v5885, 1008
      %v6012 = vadd.s32 %v5885, 1016
      %v6013 = vlaneseq
      %v6014 = vand.u32 %v6013, 127
      %v6015 = vadd.s32 %v6014, 128
      %v6016 = vmul.u32 %v6014, 4
      %v6017 = vmul.u32 %v6015, 4
      %vm6018 = vcmp.eq.s32.totalorder %v5885, %v6016
      %vm6019 = vcmp.eq.s32.totalorder %v5885, %v6017
      %vm6020 = vcmp.eq.s32.totalorder %v5886, %v6016
      %vm6021 = vcmp.eq.s32.totalorder %v5886, %v6017
      %vm6022 = vcmp.eq.s32.totalorder %v5887, %v6016
      %vm6023 = vcmp.eq.s32.totalorder %v5887, %v6017
      %vm6024 = vcmp.eq.s32.totalorder %v5888, %v6016
      %vm6025 = vcmp.eq.s32.totalorder %v5888, %v6017
      %vm6026 = vcmp.eq.s32.totalorder %v5889, %v6016
      %vm6027 = vcmp.eq.s32.totalorder %v5889, %v6017
      %vm6028 = vcmp.eq.s32.totalorder %v5890, %v6016
      %vm6029 = vcmp.eq.s32.totalorder %v5890, %v6017
      %vm6030 = vcmp.eq.s32.totalorder %v5891, %v6016
      %vm6031 = vcmp.eq.s32.totalorder %v5891, %v6017
      %vm6032 = vcmp.eq.s32.totalorder %v5892, %v6016
      %vm6033 = vcmp.eq.s32.totalorder %v5892, %v6017
      %vm6034 = vcmp.eq.s32.totalorder %v5893, %v6016
      %vm6035 = vcmp.eq.s32.totalorder %v5893, %v6017
      %vm6036 = vcmp.eq.s32.totalorder %v5894, %v6016
      %vm6037 = vcmp.eq.s32.totalorder %v5894, %v6017
      %vm6038 = vcmp.eq.s32.totalorder %v5895, %v6016
      %vm6039 = vcmp.eq.s32.totalorder %v5895, %v6017
      %vm6040 = vcmp.eq.s32.totalorder %v5896, %v6016
      %vm6041 = vcmp.eq.s32.totalorder %v5896, %v6017
      %vm6042 = vcmp.eq.s32.totalorder %v5897, %v6016
      %vm6043 = vcmp.eq.s32.totalorder %v5897, %v6017
      %vm6044 = vcmp.eq.s32.totalorder %v5898, %v6016
      %vm6045 = vcmp.eq.s32.totalorder %v5898, %v6017
      %vm6046 = vcmp.eq.s32.totalorder %v5899, %v6016
      %vm6047 = vcmp.eq.s32.totalorder %v5899, %v6017
      %vm6048 = vcmp.eq.s32.totalorder %v5900, %v6016
      %vm6049 = vcmp.eq.s32.totalorder %v5900, %v6017
      %vm6050 = vcmp.eq.s32.totalorder %v5901, %v6016
      %vm6051 = vcmp.eq.s32.totalorder %v5901, %v6017
      %vm6052 = vcmp.eq.s32.totalorder %v5902, %v6016
      %vm6053 = vcmp.eq.s32.totalorder %v5902, %v6017
      %vm6054 = vcmp.eq.s32.totalorder %v5903, %v6016
      %vm6055 = vcmp.eq.s32.totalorder %v5903, %v6017
      %vm6056 = vcmp.eq.s32.totalorder %v5904, %v6016
      %vm6057 = vcmp.eq.s32.totalorder %v5904, %v6017
      %vm6058 = vcmp.eq.s32.totalorder %v5905, %v6016
      %vm6059 = vcmp.eq.s32.totalorder %v5905, %v6017
      %vm6060 = vcmp.eq.s32.totalorder %v5906, %v6016
      %vm6061 = vcmp.eq.s32.totalorder %v5906, %v6017
      %vm6062 = vcmp.eq.s32.totalorder %v5907, %v6016
      %vm6063 = vcmp.eq.s32.totalorder %v5907, %v6017
      %vm6064 = vcmp.eq.s32.totalorder %v5908, %v6016
      %vm6065 = vcmp.eq.s32.totalorder %v5908, %v6017
      %vm6066 = vcmp.eq.s32.totalorder %v5909, %v6016
      %vm6067 = vcmp.eq.s32.totalorder %v5909, %v6017
      %vm6068 = vcmp.eq.s32.totalorder %v5910, %v6016
      %vm6069 = vcmp.eq.s32.totalorder %v5910, %v6017
      %vm6070 = vcmp.eq.s32.totalorder %v5911, %v6016
      %vm6071 = vcmp.eq.s32.totalorder %v5911, %v6017
      %vm6072 = vcmp.eq.s32.totalorder %v5912, %v6016
      %vm6073 = vcmp.eq.s32.totalorder %v5912, %v6017
      %vm6074 = vcmp.eq.s32.totalorder %v5913, %v6016
      %vm6075 = vcmp.eq.s32.totalorder %v5913, %v6017
      %vm6076 = vcmp.eq.s32.totalorder %v5914, %v6016
      %vm6077 = vcmp.eq.s32.totalorder %v5914, %v6017
      %vm6078 = vcmp.eq.s32.totalorder %v5915, %v6016
      %vm6079 = vcmp.eq.s32.totalorder %v5915, %v6017
      %vm6080 = vcmp.eq.s32.totalorder %v5916, %v6016
      %vm6081 = vcmp.eq.s32.totalorder %v5916, %v6017
      %vm6082 = vcmp.eq.s32.totalorder %v5917, %v6016
      %vm6083 = vcmp.eq.s32.totalorder %v5917, %v6017
      %vm6084 = vcmp.eq.s32.totalorder %v5918, %v6016
      %vm6085 = vcmp.eq.s32.totalorder %v5918, %v6017
      %vm6086 = vcmp.eq.s32.totalorder %v5919, %v6016
      %vm6087 = vcmp.eq.s32.totalorder %v5919, %v6017
      %vm6088 = vcmp.eq.s32.totalorder %v5920, %v6016
      %vm6089 = vcmp.eq.s32.totalorder %v5920, %v6017
      %vm6090 = vcmp.eq.s32.totalorder %v5921, %v6016
      %vm6091 = vcmp.eq.s32.totalorder %v5921, %v6017
      %vm6092 = vcmp.eq.s32.totalorder %v5922, %v6016
      %vm6093 = vcmp.eq.s32.totalorder %v5922, %v6017
      %vm6094 = vcmp.eq.s32.totalorder %v5923, %v6016
      %vm6095 = vcmp.eq.s32.totalorder %v5923, %v6017
      %vm6096 = vcmp.eq.s32.totalorder %v5924, %v6016
      %vm6097 = vcmp.eq.s32.totalorder %v5924, %v6017
      %vm6098 = vcmp.eq.s32.totalorder %v5925, %v6016
      %vm6099 = vcmp.eq.s32.totalorder %v5925, %v6017
      %vm6100 = vcmp.eq.s32.totalorder %v5926, %v6016
      %vm6101 = vcmp.eq.s32.totalorder %v5926, %v6017
      %vm6102 = vcmp.eq.s32.totalorder %v5927, %v6016
      %vm6103 = vcmp.eq.s32.totalorder %v5927, %v6017
      %vm6104 = vcmp.eq.s32.totalorder %v5928, %v6016
      %vm6105 = vcmp.eq.s32.totalorder %v5928, %v6017
      %vm6106 = vcmp.eq.s32.totalorder %v5929, %v6016
      %vm6107 = vcmp.eq.s32.totalorder %v5929, %v6017
      %vm6108 = vcmp.eq.s32.totalorder %v5930, %v6016
      %vm6109 = vcmp.eq.s32.totalorder %v5930, %v6017
      %vm6110 = vcmp.eq.s32.totalorder %v5931, %v6016
      %vm6111 = vcmp.eq.s32.totalorder %v5931, %v6017
      %vm6112 = vcmp.eq.s32.totalorder %v5932, %v6016
      %vm6113 = vcmp.eq.s32.totalorder %v5932, %v6017
      %vm6114 = vcmp.eq.s32.totalorder %v5933, %v6016
      %vm6115 = vcmp.eq.s32.totalorder %v5933, %v6017
      %vm6116 = vcmp.eq.s32.totalorder %v5934, %v6016
      %vm6117 = vcmp.eq.s32.totalorder %v5934, %v6017
      %vm6118 = vcmp.eq.s32.totalorder %v5935, %v6016
      %vm6119 = vcmp.eq.s32.totalorder %v5935, %v6017
      %vm6120 = vcmp.eq.s32.totalorder %v5936, %v6016
      %vm6121 = vcmp.eq.s32.totalorder %v5936, %v6017
      %vm6122 = vcmp.eq.s32.totalorder %v5937, %v6016
      %vm6123 = vcmp.eq.s32.totalorder %v5937, %v6017
      %vm6124 = vcmp.eq.s32.totalorder %v5938, %v6016
      %vm6125 = vcmp.eq.s32.totalorder %v5938, %v6017
      %vm6126 = vcmp.eq.s32.totalorder %v5939, %v6016
      %vm6127 = vcmp.eq.s32.totalorder %v5939, %v6017
      %vm6128 = vcmp.eq.s32.totalorder %v5940, %v6016
      %vm6129 = vcmp.eq.s32.totalorder %v5940, %v6017
      %vm6130 = vcmp.eq.s32.totalorder %v5941, %v6016
      %vm6131 = vcmp.eq.s32.totalorder %v5941, %v6017
      %vm6132 = vcmp.eq.s32.totalorder %v5942, %v6016
      %vm6133 = vcmp.eq.s32.totalorder %v5942, %v6017
      %vm6134 = vcmp.eq.s32.totalorder %v5943, %v6016
      %vm6135 = vcmp.eq.s32.totalorder %v5943, %v6017
      %vm6136 = vcmp.eq.s32.totalorder %v5944, %v6016
      %vm6137 = vcmp.eq.s32.totalorder %v5944, %v6017
      %vm6138 = vcmp.eq.s32.totalorder %v5945, %v6016
      %vm6139 = vcmp.eq.s32.totalorder %v5945, %v6017
      %vm6140 = vcmp.eq.s32.totalorder %v5946, %v6016
      %vm6141 = vcmp.eq.s32.totalorder %v5946, %v6017
      %vm6142 = vcmp.eq.s32.totalorder %v5947, %v6016
      %vm6143 = vcmp.eq.s32.totalorder %v5947, %v6017
      %vm6144 = vcmp.eq.s32.totalorder %v5948, %v6016
      %vm6145 = vcmp.eq.s32.totalorder %v5948, %v6017
      %vm6146 = vcmp.eq.s32.totalorder %v5949, %v6016
      %vm6147 = vcmp.eq.s32.totalorder %v5949, %v6017
      %vm6148 = vcmp.eq.s32.totalorder %v5950, %v6016
      %vm6149 = vcmp.eq.s32.totalorder %v5950, %v6017
      %vm6150 = vcmp.eq.s32.totalorder %v5951, %v6016
      %vm6151 = vcmp.eq.s32.totalorder %v5951, %v6017
      %vm6152 = vcmp.eq.s32.totalorder %v5952, %v6016
      %vm6153 = vcmp.eq.s32.totalorder %v5952, %v6017
      %vm6154 = vcmp.eq.s32.totalorder %v5953, %v6016
      %vm6155 = vcmp.eq.s32.totalorder %v5953, %v6017
      %vm6156 = vcmp.eq.s32.totalorder %v5954, %v6016
      %vm6157 = vcmp.eq.s32.totalorder %v5954, %v6017
      %vm6158 = vcmp.eq.s32.totalorder %v5955, %v6016
      %vm6159 = vcmp.eq.s32.totalorder %v5955, %v6017
      %vm6160 = vcmp.eq.s32.totalorder %v5956, %v6016
      %vm6161 = vcmp.eq.s32.totalorder %v5956, %v6017
      %vm6162 = vcmp.eq.s32.totalorder %v5957, %v6016
      %vm6163 = vcmp.eq.s32.totalorder %v5957, %v6017
      %vm6164 = vcmp.eq.s32.totalorder %v5958, %v6016
      %vm6165 = vcmp.eq.s32.totalorder %v5958, %v6017
      %vm6166 = vcmp.eq.s32.totalorder %v5959, %v6016
      %vm6167 = vcmp.eq.s32.totalorder %v5959, %v6017
      %vm6168 = vcmp.eq.s32.totalorder %v5960, %v6016
      %vm6169 = vcmp.eq.s32.totalorder %v5960, %v6017
      %vm6170 = vcmp.eq.s32.totalorder %v5961, %v6016
      %vm6171 = vcmp.eq.s32.totalorder %v5961, %v6017
      %vm6172 = vcmp.eq.s32.totalorder %v5962, %v6016
      %vm6173 = vcmp.eq.s32.totalorder %v5962, %v6017
      %vm6174 = vcmp.eq.s32.totalorder %v5963, %v6016
      %vm6175 = vcmp.eq.s32.totalorder %v5963, %v6017
      %vm6176 = vcmp.eq.s32.totalorder %v5964, %v6016
      %vm6177 = vcmp.eq.s32.totalorder %v5964, %v6017
      %vm6178 = vcmp.eq.s32.totalorder %v5965, %v6016
      %vm6179 = vcmp.eq.s32.totalorder %v5965, %v6017
      %vm6180 = vcmp.eq.s32.totalorder %v5966, %v6016
      %vm6181 = vcmp.eq.s32.totalorder %v5966, %v6017
      %vm6182 = vcmp.eq.s32.totalorder %v5967, %v6016
      %vm6183 = vcmp.eq.s32.totalorder %v5967, %v6017
      %vm6184 = vcmp.eq.s32.totalorder %v5968, %v6016
      %vm6185 = vcmp.eq.s32.totalorder %v5968, %v6017
      %vm6186 = vcmp.eq.s32.totalorder %v5969, %v6016
      %vm6187 = vcmp.eq.s32.totalorder %v5969, %v6017
      %vm6188 = vcmp.eq.s32.totalorder %v5970, %v6016
      %vm6189 = vcmp.eq.s32.totalorder %v5970, %v6017
      %vm6190 = vcmp.eq.s32.totalorder %v5971, %v6016
      %vm6191 = vcmp.eq.s32.totalorder %v5971, %v6017
      %vm6192 = vcmp.eq.s32.totalorder %v5972, %v6016
      %vm6193 = vcmp.eq.s32.totalorder %v5972, %v6017
      %vm6194 = vcmp.eq.s32.totalorder %v5973, %v6016
      %vm6195 = vcmp.eq.s32.totalorder %v5973, %v6017
      %vm6196 = vcmp.eq.s32.totalorder %v5974, %v6016
      %vm6197 = vcmp.eq.s32.totalorder %v5974, %v6017
      %vm6198 = vcmp.eq.s32.totalorder %v5975, %v6016
      %vm6199 = vcmp.eq.s32.totalorder %v5975, %v6017
      %vm6200 = vcmp.eq.s32.totalorder %v5976, %v6016
      %vm6201 = vcmp.eq.s32.totalorder %v5976, %v6017
      %vm6202 = vcmp.eq.s32.totalorder %v5977, %v6016
      %vm6203 = vcmp.eq.s32.totalorder %v5977, %v6017
      %vm6204 = vcmp.eq.s32.totalorder %v5978, %v6016
      %vm6205 = vcmp.eq.s32.totalorder %v5978, %v6017
      %vm6206 = vcmp.eq.s32.totalorder %v5979, %v6016
      %vm6207 = vcmp.eq.s32.totalorder %v5979, %v6017
      %vm6208 = vcmp.eq.s32.totalorder %v5980, %v6016
      %vm6209 = vcmp.eq.s32.totalorder %v5980, %v6017
      %vm6210 = vcmp.eq.s32.totalorder %v5981, %v6016
      %vm6211 = vcmp.eq.s32.totalorder %v5981, %v6017
      %vm6212 = vcmp.eq.s32.totalorder %v5982, %v6016
      %vm6213 = vcmp.eq.s32.totalorder %v5982, %v6017
      %vm6214 = vcmp.eq.s32.totalorder %v5983, %v6016
      %vm6215 = vcmp.eq.s32.totalorder %v5983, %v6017
      %vm6216 = vcmp.eq.s32.totalorder %v5984, %v6016
      %vm6217 = vcmp.eq.s32.totalorder %v5984, %v6017
      %vm6218 = vcmp.eq.s32.totalorder %v5985, %v6016
      %vm6219 = vcmp.eq.s32.totalorder %v5985, %v6017
      %vm6220 = vcmp.eq.s32.totalorder %v5986, %v6016
      %vm6221 = vcmp.eq.s32.totalorder %v5986, %v6017
      %vm6222 = vcmp.eq.s32.totalorder %v5987, %v6016
      %vm6223 = vcmp.eq.s32.totalorder %v5987, %v6017
      %vm6224 = vcmp.eq.s32.totalorder %v5988, %v6016
      %vm6225 = vcmp.eq.s32.totalorder %v5988, %v6017
      %vm6226 = vcmp.eq.s32.totalorder %v5989, %v6016
      %vm6227 = vcmp.eq.s32.totalorder %v5989, %v6017
      %vm6228 = vcmp.eq.s32.totalorder %v5990, %v6016
      %vm6229 = vcmp.eq.s32.totalorder %v5990, %v6017
      %vm6230 = vcmp.eq.s32.totalorder %v5991, %v6016
      %vm6231 = vcmp.eq.s32.totalorder %v5991, %v6017
      %vm6232 = vcmp.eq.s32.totalorder %v5992, %v6016
      %vm6233 = vcmp.eq.s32.totalorder %v5992, %v6017
      %vm6234 = vcmp.eq.s32.totalorder %v5993, %v6016
      %vm6235 = vcmp.eq.s32.totalorder %v5993, %v6017
      %vm6236 = vcmp.eq.s32.totalorder %v5994, %v6016
      %vm6237 = vcmp.eq.s32.totalorder %v5994, %v6017
      %vm6238 = vcmp.eq.s32.totalorder %v5995, %v6016
      %vm6239 = vcmp.eq.s32.totalorder %v5995, %v6017
      %vm6240 = vcmp.eq.s32.totalorder %v5996, %v6016
      %vm6241 = vcmp.eq.s32.totalorder %v5996, %v6017
      %vm6242 = vcmp.eq.s32.totalorder %v5997, %v6016
      %vm6243 = vcmp.eq.s32.totalorder %v5997, %v6017
      %vm6244 = vcmp.eq.s32.totalorder %v5998, %v6016
      %vm6245 = vcmp.eq.s32.totalorder %v5998, %v6017
      %vm6246 = vcmp.eq.s32.totalorder %v5999, %v6016
      %vm6247 = vcmp.eq.s32.totalorder %v5999, %v6017
      %vm6248 = vcmp.eq.s32.totalorder %v6000, %v6016
      %vm6249 = vcmp.eq.s32.totalorder %v6000, %v6017
      %vm6250 = vcmp.eq.s32.totalorder %v6001, %v6016
      %vm6251 = vcmp.eq.s32.totalorder %v6001, %v6017
      %vm6252 = vcmp.eq.s32.totalorder %v6002, %v6016
      %vm6253 = vcmp.eq.s32.totalorder %v6002, %v6017
      %vm6254 = vcmp.eq.s32.totalorder %v6003, %v6016
      %vm6255 = vcmp.eq.s32.totalorder %v6003, %v6017
      %vm6256 = vcmp.eq.s32.totalorder %v6004, %v6016
      %vm6257 = vcmp.eq.s32.totalorder %v6004, %v6017
      %vm6258 = vcmp.eq.s32.totalorder %v6005, %v6016
      %vm6259 = vcmp.eq.s32.totalorder %v6005, %v6017
      %vm6260 = vcmp.eq.s32.totalorder %v6006, %v6016
      %vm6261 = vcmp.eq.s32.totalorder %v6006, %v6017
      %vm6262 = vcmp.eq.s32.totalorder %v6007, %v6016
      %vm6263 = vcmp.eq.s32.totalorder %v6007, %v6017
      %vm6264 = vcmp.eq.s32.totalorder %v6008, %v6016
      %vm6265 = vcmp.eq.s32.totalorder %v6008, %v6017
      %vm6266 = vcmp.eq.s32.totalorder %v6009, %v6016
      %vm6267 = vcmp.eq.s32.totalorder %v6009, %v6017
      %vm6268 = vcmp.eq.s32.totalorder %v6010, %v6016
      %vm6269 = vcmp.eq.s32.totalorder %v6010, %v6017
      %vm6270 = vcmp.eq.s32.totalorder %v6011, %v6016
      %vm6271 = vcmp.eq.s32.totalorder %v6011, %v6017
      %vm6272 = vcmp.eq.s32.totalorder %v6012, %v6016
      %vm6273 = vcmp.eq.s32.totalorder %v6012, %v6017
      %v6274 = vsel %vm6018, 1, 0
      %v6275 = vsel %vm6019, 1, 0
      %v6276 = vsel %vm6020, 1, 0
      %v6277 = vsel %vm6021, 1, 0
      %v6278 = vsel %vm6022, 1, 0
      %v6279 = vsel %vm6023, 1, 0
      %v6280 = vsel %vm6024, 1, 0
      %v6281 = vsel %vm6025, 1, 0
      %v6282 = vsel %vm6026, 1, 0
      %v6283 = vsel %vm6027, 1, 0
      %v6284 = vsel %vm6028, 1, 0
      %v6285 = vsel %vm6029, 1, 0
      %v6286 = vsel %vm6030, 1, 0
      %v6287 = vsel %vm6031, 1, 0
      %v6288 = vsel %vm6032, 1, 0
      %v6289 = vsel %vm6033, 1, 0
      %v6290 = vsel %vm6034, 1, 0
      %v6291 = vsel %vm6035, 1, 0
      %v6292 = vsel %vm6036, 1, 0
      %v6293 = vsel %vm6037, 1, 0
      %v6294 = vsel %vm6038, 1, 0
      %v6295 = vsel %vm6039, 1, 0
      %v6296 = vsel %vm6040, 1, 0
      %v6297 = vsel %vm6041, 1, 0
      %v6298 = vsel %vm6042, 1, 0
      %v6299 = vsel %vm6043, 1, 0
      %v6300 = vsel %vm6044, 1, 0
      %v6301 = vsel %vm6045, 1, 0
      %v6302 = vsel %vm6046, 1, 0
      %v6303 = vsel %vm6047, 1, 0
      %v6304 = vsel %vm6048, 1, 0
      %v6305 = vsel %vm6049, 1, 0
      %v6306 = vsel %vm6050, 1, 0
      %v6307 = vsel %vm6051, 1, 0
      %v6308 = vsel %vm6052, 1, 0
      %v6309 = vsel %vm6053, 1, 0
      %v6310 = vsel %vm6054, 1, 0
      %v6311 = vsel %vm6055, 1, 0
      %v6312 = vsel %vm6056, 1, 0
      %v6313 = vsel %vm6057, 1, 0
      %v6314 = vsel %vm6058, 1, 0
      %v6315 = vsel %vm6059, 1, 0
      %v6316 = vsel %vm6060, 1, 0
      %v6317 = vsel %vm6061, 1, 0
      %v6318 = vsel %vm6062, 1, 0
      %v6319 = vsel %vm6063, 1, 0
      %v6320 = vsel %vm6064, 1, 0
      %v6321 = vsel %vm6065, 1, 0
      %v6322 = vsel %vm6066, 1, 0
      %v6323 = vsel %vm6067, 1, 0
      %v6324 = vsel %vm6068, 1, 0
      %v6325 = vsel %vm6069, 1, 0
      %v6326 = vsel %vm6070, 1, 0
      %v6327 = vsel %vm6071, 1, 0
      %v6328 = vsel %vm6072, 1, 0
      %v6329 = vsel %vm6073, 1, 0
      %v6330 = vsel %vm6074, 1, 0
      %v6331 = vsel %vm6075, 1, 0
      %v6332 = vsel %vm6076, 1, 0
      %v6333 = vsel %vm6077, 1, 0
      %v6334 = vsel %vm6078, 1, 0
      %v6335 = vsel %vm6079, 1, 0
      %v6336 = vsel %vm6080, 1, 0
      %v6337 = vsel %vm6081, 1, 0
      %v6338 = vsel %vm6082, 1, 0
      %v6339 = vsel %vm6083, 1, 0
      %v6340 = vsel %vm6084, 1, 0
      %v6341 = vsel %vm6085, 1, 0
      %v6342 = vsel %vm6086, 1, 0
      %v6343 = vsel %vm6087, 1, 0
      %v6344 = vsel %vm6088, 1, 0
      %v6345 = vsel %vm6089, 1, 0
      %v6346 = vsel %vm6090, 1, 0
      %v6347 = vsel %vm6091, 1, 0
      %v6348 = vsel %vm6092, 1, 0
      %v6349 = vsel %vm6093, 1, 0
      %v6350 = vsel %vm6094, 1, 0
      %v6351 = vsel %vm6095, 1, 0
      %v6352 = vsel %vm6096, 1, 0
      %v6353 = vsel %vm6097, 1, 0
      %v6354 = vsel %vm6098, 1, 0
      %v6355 = vsel %vm6099, 1, 0
      %v6356 = vsel %vm6100, 1, 0
      %v6357 = vsel %vm6101, 1, 0
      %v6358 = vsel %vm6102, 1, 0
      %v6359 = vsel %vm6103, 1, 0
      %v6360 = vsel %vm6104, 1, 0
      %v6361 = vsel %vm6105, 1, 0
      %v6362 = vsel %vm6106, 1, 0
      %v6363 = vsel %vm6107, 1, 0
      %v6364 = vsel %vm6108, 1, 0
      %v6365 = vsel %vm6109, 1, 0
      %v6366 = vsel %vm6110, 1, 0
      %v6367 = vsel %vm6111, 1, 0
      %v6368 = vsel %vm6112, 1, 0
      %v6369 = vsel %vm6113, 1, 0
      %v6370 = vsel %vm6114, 1, 0
      %v6371 = vsel %vm6115, 1, 0
      %v6372 = vsel %vm6116, 1, 0
      %v6373 = vsel %vm6117, 1, 0
      %v6374 = vsel %vm6118, 1, 0
      %v6375 = vsel %vm6119, 1, 0
      %v6376 = vsel %vm6120, 1, 0
      %v6377 = vsel %vm6121, 1, 0
      %v6378 = vsel %vm6122, 1, 0
      %v6379 = vsel %vm6123, 1, 0
      %v6380 = vsel %vm6124, 1, 0
      %v6381 = vsel %vm6125, 1, 0
      %v6382 = vsel %vm6126, 1, 0
      %v6383 = vsel %vm6127, 1, 0
      %v6384 = vsel %vm6128, 1, 0
      %v6385 = vsel %vm6129, 1, 0
      %v6386 = vsel %vm6130, 1, 0
      %v6387 = vsel %vm6131, 1, 0
      %v6388 = vsel %vm6132, 1, 0
      %v6389 = vsel %vm6133, 1, 0
      %v6390 = vsel %vm6134, 1, 0
      %v6391 = vsel %vm6135, 1, 0
      %v6392 = vsel %vm6136, 1, 0
      %v6393 = vsel %vm6137, 1, 0
      %v6394 = vsel %vm6138, 1, 0
      %v6395 = vsel %vm6139, 1, 0
      %v6396 = vsel %vm6140, 1, 0
      %v6397 = vsel %vm6141, 1, 0
      %v6398 = vsel %vm6142, 1, 0
      %v6399 = vsel %vm6143, 1, 0
      %v6400 = vsel %vm6144, 1, 0
      %v6401 = vsel %vm6145, 1, 0
      %v6402 = vsel %vm6146, 1, 0
      %v6403 = vsel %vm6147, 1, 0
      %v6404 = vsel %vm6148, 1, 0
      %v6405 = vsel %vm6149, 1, 0
      %v6406 = vsel %vm6150, 1, 0
      %v6407 = vsel %vm6151, 1, 0
      %v6408 = vsel %vm6152, 1, 0
      %v6409 = vsel %vm6153, 1, 0
      %v6410 = vsel %vm6154, 1, 0
      %v6411 = vsel %vm6155, 1, 0
      %v6412 = vsel %vm6156, 1, 0
      %v6413 = vsel %vm6157, 1, 0
      %v6414 = vsel %vm6158, 1, 0
      %v6415 = vsel %vm6159, 1, 0
      %v6416 = vsel %vm6160, 1, 0
      %v6417 = vsel %vm6161, 1, 0
      %v6418 = vsel %vm6162, 1, 0
      %v6419 = vsel %vm6163, 1, 0
      %v6420 = vsel %vm6164, 1, 0
      %v6421 = vsel %vm6165, 1, 0
      %v6422 = vsel %vm6166, 1, 0
      %v6423 = vsel %vm6167, 1, 0
      %v6424 = vsel %vm6168, 1, 0
      %v6425 = vsel %vm6169, 1, 0
      %v6426 = vsel %vm6170, 1, 0
      %v6427 = vsel %vm6171, 1, 0
      %v6428 = vsel %vm6172, 1, 0
      %v6429 = vsel %vm6173, 1, 0
      %v6430 = vsel %vm6174, 1, 0
      %v6431 = vsel %vm6175, 1, 0
      %v6432 = vsel %vm6176, 1, 0
      %v6433 = vsel %vm6177, 1, 0
      %v6434 = vsel %vm6178, 1, 0
      %v6435 = vsel %vm6179, 1, 0
      %v6436 = vsel %vm6180, 1, 0
      %v6437 = vsel %vm6181, 1, 0
      %v6438 = vsel %vm6182, 1, 0
      %v6439 = vsel %vm6183, 1, 0
      %v6440 = vsel %vm6184, 1, 0
      %v6441 = vsel %vm6185, 1, 0
      %v6442 = vsel %vm6186, 1, 0
      %v6443 = vsel %vm6187, 1, 0
      %v6444 = vsel %vm6188, 1, 0
      %v6445 = vsel %vm6189, 1, 0
      %v6446 = vsel %vm6190, 1, 0
      %v6447 = vsel %vm6191, 1, 0
      %v6448 = vsel %vm6192, 1, 0
      %v6449 = vsel %vm6193, 1, 0
      %v6450 = vsel %vm6194, 1, 0
      %v6451 = vsel %vm6195, 1, 0
      %v6452 = vsel %vm6196, 1, 0
      %v6453 = vsel %vm6197, 1, 0
      %v6454 = vsel %vm6198, 1, 0
      %v6455 = vsel %vm6199, 1, 0
      %v6456 = vsel %vm6200, 1, 0
      %v6457 = vsel %vm6201, 1, 0
      %v6458 = vsel %vm6202, 1, 0
      %v6459 = vsel %vm6203, 1, 0
      %v6460 = vsel %vm6204, 1, 0
      %v6461 = vsel %vm6205, 1, 0
      %v6462 = vsel %vm6206, 1, 0
      %v6463 = vsel %vm6207, 1, 0
      %v6464 = vsel %vm6208, 1, 0
      %v6465 = vsel %vm6209, 1, 0
      %v6466 = vsel %vm6210, 1, 0
      %v6467 = vsel %vm6211, 1, 0
      %v6468 = vsel %vm6212, 1, 0
      %v6469 = vsel %vm6213, 1, 0
      %v6470 = vsel %vm6214, 1, 0
      %v6471 = vsel %vm6215, 1, 0
      %v6472 = vsel %vm6216, 1, 0
      %v6473 = vsel %vm6217, 1, 0
      %v6474 = vsel %vm6218, 1, 0
      %v6475 = vsel %vm6219, 1, 0
      %v6476 = vsel %vm6220, 1, 0
      %v6477 = vsel %vm6221, 1, 0
      %v6478 = vsel %vm6222, 1, 0
      %v6479 = vsel %vm6223, 1, 0
      %v6480 = vsel %vm6224, 1, 0
      %v6481 = vsel %vm6225, 1, 0
      %v6482 = vsel %vm6226, 1, 0
      %v6483 = vsel %vm6227, 1, 0
      %v6484 = vsel %vm6228, 1, 0
      %v6485 = vsel %vm6229, 1, 0
      %v6486 = vsel %vm6230, 1, 0
      %v6487 = vsel %vm6231, 1, 0
      %v6488 = vsel %vm6232, 1, 0
      %v6489 = vsel %vm6233, 1, 0
      %v6490 = vsel %vm6234, 1, 0
      %v6491 = vsel %vm6235, 1, 0
      %v6492 = vsel %vm6236, 1, 0
      %v6493 = vsel %vm6237, 1, 0
      %v6494 = vsel %vm6238, 1, 0
      %v6495 = vsel %vm6239, 1, 0
      %v6496 = vsel %vm6240, 1, 0
      %v6497 = vsel %vm6241, 1, 0
      %v6498 = vsel %vm6242, 1, 0
      %v6499 = vsel %vm6243, 1, 0
      %v6500 = vsel %vm6244, 1, 0
      %v6501 = vsel %vm6245, 1, 0
      %v6502 = vsel %vm6246, 1, 0
      %v6503 = vsel %vm6247, 1, 0
      %v6504 = vsel %vm6248, 1, 0
      %v6505 = vsel %vm6249, 1, 0
      %v6506 = vsel %vm6250, 1, 0
      %v6507 = vsel %vm6251, 1, 0
      %v6508 = vsel %vm6252, 1, 0
      %v6509 = vsel %vm6253, 1, 0
      %v6510 = vsel %vm6254, 1, 0
      %v6511 = vsel %vm6255, 1, 0
      %v6512 = vsel %vm6256, 1, 0
      %v6513 = vsel %vm6257, 1, 0
      %v6514 = vsel %vm6258, 1, 0
      %v6515 = vsel %vm6259, 1, 0
      %v6516 = vsel %vm6260, 1, 0
      %v6517 = vsel %vm6261, 1, 0
      %v6518 = vsel %vm6262, 1, 0
      %v6519 = vsel %vm6263, 1, 0
      %v6520 = vsel %vm6264, 1, 0
      %v6521 = vsel %vm6265, 1, 0
      %v6522 = vsel %vm6266, 1, 0
      %v6523 = vsel %vm6267, 1, 0
      %v6524 = vsel %vm6268, 1, 0
      %v6525 = vsel %vm6269, 1, 0
      %v6526 = vsel %vm6270, 1, 0
      %v6527 = vsel %vm6271, 1, 0
      %v6528 = vsel %vm6272, 1, 0
      %v6529 = vsel %vm6273, 1, 0
      %v6530 = vcvt.s32.f32 %v6274
      %v6531 = vcvt.s32.f32 %v6275
      %v6532 = vcvt.s32.f32 %v6276
      %v6533 = vcvt.s32.f32 %v6277
      %v6534 = vcvt.s32.f32 %v6278
      %v6535 = vcvt.s32.f32 %v6279
      %v6536 = vcvt.s32.f32 %v6280
      %v6537 = vcvt.s32.f32 %v6281
      %v6538 = vcvt.s32.f32 %v6282
      %v6539 = vcvt.s32.f32 %v6283
      %v6540 = vcvt.s32.f32 %v6284
      %v6541 = vcvt.s32.f32 %v6285
      %v6542 = vcvt.s32.f32 %v6286
      %v6543 = vcvt.s32.f32 %v6287
      %v6544 = vcvt.s32.f32 %v6288
      %v6545 = vcvt.s32.f32 %v6289
      %v6546 = vcvt.s32.f32 %v6290
      %v6547 = vcvt.s32.f32 %v6291
      %v6548 = vcvt.s32.f32 %v6292
      %v6549 = vcvt.s32.f32 %v6293
      %v6550 = vcvt.s32.f32 %v6294
      %v6551 = vcvt.s32.f32 %v6295
      %v6552 = vcvt.s32.f32 %v6296
      %v6553 = vcvt.s32.f32 %v6297
      %v6554 = vcvt.s32.f32 %v6298
      %v6555 = vcvt.s32.f32 %v6299
      %v6556 = vcvt.s32.f32 %v6300
      %v6557 = vcvt.s32.f32 %v6301
      %v6558 = vcvt.s32.f32 %v6302
      %v6559 = vcvt.s32.f32 %v6303
      %v6560 = vcvt.s32.f32 %v6304
      %v6561 = vcvt.s32.f32 %v6305
      %v6562 = vcvt.s32.f32 %v6306
      %v6563 = vcvt.s32.f32 %v6307
      %v6564 = vcvt.s32.f32 %v6308
      %v6565 = vcvt.s32.f32 %v6309
      %v6566 = vcvt.s32.f32 %v6310
      %v6567 = vcvt.s32.f32 %v6311
      %v6568 = vcvt.s32.f32 %v6312
      %v6569 = vcvt.s32.f32 %v6313
      %v6570 = vcvt.s32.f32 %v6314
      %v6571 = vcvt.s32.f32 %v6315
      %v6572 = vcvt.s32.f32 %v6316
      %v6573 = vcvt.s32.f32 %v6317
      %v6574 = vcvt.s32.f32 %v6318
      %v6575 = vcvt.s32.f32 %v6319
      %v6576 = vcvt.s32.f32 %v6320
      %v6577 = vcvt.s32.f32 %v6321
      %v6578 = vcvt.s32.f32 %v6322
      %v6579 = vcvt.s32.f32 %v6323
      %v6580 = vcvt.s32.f32 %v6324
      %v6581 = vcvt.s32.f32 %v6325
      %v6582 = vcvt.s32.f32 %v6326
      %v6583 = vcvt.s32.f32 %v6327
      %v6584 = vcvt.s32.f32 %v6328
      %v6585 = vcvt.s32.f32 %v6329
      %v6586 = vcvt.s32.f32 %v6330
      %v6587 = vcvt.s32.f32 %v6331
      %v6588 = vcvt.s32.f32 %v6332
      %v6589 = vcvt.s32.f32 %v6333
      %v6590 = vcvt.s32.f32 %v6334
      %v6591 = vcvt.s32.f32 %v6335
      %v6592 = vcvt.s32.f32 %v6336
      %v6593 = vcvt.s32.f32 %v6337
      %v6594 = vcvt.s32.f32 %v6338
      %v6595 = vcvt.s32.f32 %v6339
      %v6596 = vcvt.s32.f32 %v6340
      %v6597 = vcvt.s32.f32 %v6341
      %v6598 = vcvt.s32.f32 %v6342
      %v6599 = vcvt.s32.f32 %v6343
      %v6600 = vcvt.s32.f32 %v6344
      %v6601 = vcvt.s32.f32 %v6345
      %v6602 = vcvt.s32.f32 %v6346
      %v6603 = vcvt.s32.f32 %v6347
      %v6604 = vcvt.s32.f32 %v6348
      %v6605 = vcvt.s32.f32 %v6349
      %v6606 = vcvt.s32.f32 %v6350
      %v6607 = vcvt.s32.f32 %v6351
      %v6608 = vcvt.s32.f32 %v6352
      %v6609 = vcvt.s32.f32 %v6353
      %v6610 = vcvt.s32.f32 %v6354
      %v6611 = vcvt.s32.f32 %v6355
      %v6612 = vcvt.s32.f32 %v6356
      %v6613 = vcvt.s32.f32 %v6357
      %v6614 = vcvt.s32.f32 %v6358
      %v6615 = vcvt.s32.f32 %v6359
      %v6616 = vcvt.s32.f32 %v6360
      %v6617 = vcvt.s32.f32 %v6361
      %v6618 = vcvt.s32.f32 %v6362
      %v6619 = vcvt.s32.f32 %v6363
      %v6620 = vcvt.s32.f32 %v6364
      %v6621 = vcvt.s32.f32 %v6365
      %v6622 = vcvt.s32.f32 %v6366
      %v6623 = vcvt.s32.f32 %v6367
      %v6624 = vcvt.s32.f32 %v6368
      %v6625 = vcvt.s32.f32 %v6369
      %v6626 = vcvt.s32.f32 %v6370
      %v6627 = vcvt.s32.f32 %v6371
      %v6628 = vcvt.s32.f32 %v6372
      %v6629 = vcvt.s32.f32 %v6373
      %v6630 = vcvt.s32.f32 %v6374
      %v6631 = vcvt.s32.f32 %v6375
      %v6632 = vcvt.s32.f32 %v6376
      %v6633 = vcvt.s32.f32 %v6377
      %v6634 = vcvt.s32.f32 %v6378
      %v6635 = vcvt.s32.f32 %v6379
      %v6636 = vcvt.s32.f32 %v6380
      %v6637 = vcvt.s32.f32 %v6381
      %v6638 = vcvt.s32.f32 %v6382
      %v6639 = vcvt.s32.f32 %v6383
      %v6640 = vcvt.s32.f32 %v6384
      %v6641 = vcvt.s32.f32 %v6385
      %v6642 = vcvt.s32.f32 %v6386
      %v6643 = vcvt.s32.f32 %v6387
      %v6644 = vcvt.s32.f32 %v6388
      %v6645 = vcvt.s32.f32 %v6389
      %v6646 = vcvt.s32.f32 %v6390
      %v6647 = vcvt.s32.f32 %v6391
      %v6648 = vcvt.s32.f32 %v6392
      %v6649 = vcvt.s32.f32 %v6393
      %v6650 = vcvt.s32.f32 %v6394
      %v6651 = vcvt.s32.f32 %v6395
      %v6652 = vcvt.s32.f32 %v6396
      %v6653 = vcvt.s32.f32 %v6397
      %v6654 = vcvt.s32.f32 %v6398
      %v6655 = vcvt.s32.f32 %v6399
      %v6656 = vcvt.s32.f32 %v6400
      %v6657 = vcvt.s32.f32 %v6401
      %v6658 = vcvt.s32.f32 %v6402
      %v6659 = vcvt.s32.f32 %v6403
      %v6660 = vcvt.s32.f32 %v6404
      %v6661 = vcvt.s32.f32 %v6405
      %v6662 = vcvt.s32.f32 %v6406
      %v6663 = vcvt.s32.f32 %v6407
      %v6664 = vcvt.s32.f32 %v6408
      %v6665 = vcvt.s32.f32 %v6409
      %v6666 = vcvt.s32.f32 %v6410
      %v6667 = vcvt.s32.f32 %v6411
      %v6668 = vcvt.s32.f32 %v6412
      %v6669 = vcvt.s32.f32 %v6413
      %v6670 = vcvt.s32.f32 %v6414
      %v6671 = vcvt.s32.f32 %v6415
      %v6672 = vcvt.s32.f32 %v6416
      %v6673 = vcvt.s32.f32 %v6417
      %v6674 = vcvt.s32.f32 %v6418
      %v6675 = vcvt.s32.f32 %v6419
      %v6676 = vcvt.s32.f32 %v6420
      %v6677 = vcvt.s32.f32 %v6421
      %v6678 = vcvt.s32.f32 %v6422
      %v6679 = vcvt.s32.f32 %v6423
      %v6680 = vcvt.s32.f32 %v6424
      %v6681 = vcvt.s32.f32 %v6425
      %v6682 = vcvt.s32.f32 %v6426
      %v6683 = vcvt.s32.f32 %v6427
      %v6684 = vcvt.s32.f32 %v6428
      %v6685 = vcvt.s32.f32 %v6429
      %v6686 = vcvt.s32.f32 %v6430
      %v6687 = vcvt.s32.f32 %v6431
      %v6688 = vcvt.s32.f32 %v6432
      %v6689 = vcvt.s32.f32 %v6433
      %v6690 = vcvt.s32.f32 %v6434
      %v6691 = vcvt.s32.f32 %v6435
      %v6692 = vcvt.s32.f32 %v6436
      %v6693 = vcvt.s32.f32 %v6437
      %v6694 = vcvt.s32.f32 %v6438
      %v6695 = vcvt.s32.f32 %v6439
      %v6696 = vcvt.s32.f32 %v6440
      %v6697 = vcvt.s32.f32 %v6441
      %v6698 = vcvt.s32.f32 %v6442
      %v6699 = vcvt.s32.f32 %v6443
      %v6700 = vcvt.s32.f32 %v6444
      %v6701 = vcvt.s32.f32 %v6445
      %v6702 = vcvt.s32.f32 %v6446
      %v6703 = vcvt.s32.f32 %v6447
      %v6704 = vcvt.s32.f32 %v6448
      %v6705 = vcvt.s32.f32 %v6449
      %v6706 = vcvt.s32.f32 %v6450
      %v6707 = vcvt.s32.f32 %v6451
      %v6708 = vcvt.s32.f32 %v6452
      %v6709 = vcvt.s32.f32 %v6453
      %v6710 = vcvt.s32.f32 %v6454
      %v6711 = vcvt.s32.f32 %v6455
      %v6712 = vcvt.s32.f32 %v6456
      %v6713 = vcvt.s32.f32 %v6457
      %v6714 = vcvt.s32.f32 %v6458
      %v6715 = vcvt.s32.f32 %v6459
      %v6716 = vcvt.s32.f32 %v6460
      %v6717 = vcvt.s32.f32 %v6461
      %v6718 = vcvt.s32.f32 %v6462
      %v6719 = vcvt.s32.f32 %v6463
      %v6720 = vcvt.s32.f32 %v6464
      %v6721 = vcvt.s32.f32 %v6465
      %v6722 = vcvt.s32.f32 %v6466
      %v6723 = vcvt.s32.f32 %v6467
      %v6724 = vcvt.s32.f32 %v6468
      %v6725 = vcvt.s32.f32 %v6469
      %v6726 = vcvt.s32.f32 %v6470
      %v6727 = vcvt.s32.f32 %v6471
      %v6728 = vcvt.s32.f32 %v6472
      %v6729 = vcvt.s32.f32 %v6473
      %v6730 = vcvt.s32.f32 %v6474
      %v6731 = vcvt.s32.f32 %v6475
      %v6732 = vcvt.s32.f32 %v6476
      %v6733 = vcvt.s32.f32 %v6477
      %v6734 = vcvt.s32.f32 %v6478
      %v6735 = vcvt.s32.f32 %v6479
      %v6736 = vcvt.s32.f32 %v6480
      %v6737 = vcvt.s32.f32 %v6481
      %v6738 = vcvt.s32.f32 %v6482
      %v6739 = vcvt.s32.f32 %v6483
      %v6740 = vcvt.s32.f32 %v6484
      %v6741 = vcvt.s32.f32 %v6485
      %v6742 = vcvt.s32.f32 %v6486
      %v6743 = vcvt.s32.f32 %v6487
      %v6744 = vcvt.s32.f32 %v6488
      %v6745 = vcvt.s32.f32 %v6489
      %v6746 = vcvt.s32.f32 %v6490
      %v6747 = vcvt.s32.f32 %v6491
      %v6748 = vcvt.s32.f32 %v6492
      %v6749 = vcvt.s32.f32 %v6493
      %v6750 = vcvt.s32.f32 %v6494
      %v6751 = vcvt.s32.f32 %v6495
      %v6752 = vcvt.s32.f32 %v6496
      %v6753 = vcvt.s32.f32 %v6497
      %v6754 = vcvt.s32.f32 %v6498
      %v6755 = vcvt.s32.f32 %v6499
      %v6756 = vcvt.s32.f32 %v6500
      %v6757 = vcvt.s32.f32 %v6501
      %v6758 = vcvt.s32.f32 %v6502
      %v6759 = vcvt.s32.f32 %v6503
      %v6760 = vcvt.s32.f32 %v6504
      %v6761 = vcvt.s32.f32 %v6505
      %v6762 = vcvt.s32.f32 %v6506
      %v6763 = vcvt.s32.f32 %v6507
      %v6764 = vcvt.s32.f32 %v6508
      %v6765 = vcvt.s32.f32 %v6509
      %v6766 = vcvt.s32.f32 %v6510
      %v6767 = vcvt.s32.f32 %v6511
      %v6768 = vcvt.s32.f32 %v6512
      %v6769 = vcvt.s32.f32 %v6513
      %v6770 = vcvt.s32.f32 %v6514
      %v6771 = vcvt.s32.f32 %v6515
      %v6772 = vcvt.s32.f32 %v6516
      %v6773 = vcvt.s32.f32 %v6517
      %v6774 = vcvt.s32.f32 %v6518
      %v6775 = vcvt.s32.f32 %v6519
      %v6776 = vcvt.s32.f32 %v6520
      %v6777 = vcvt.s32.f32 %v6521
      %v6778 = vcvt.s32.f32 %v6522
      %v6779 = vcvt.s32.f32 %v6523
      %v6780 = vcvt.s32.f32 %v6524
      %v6781 = vcvt.s32.f32 %v6525
      %v6782 = vcvt.s32.f32 %v6526
      %v6783 = vcvt.s32.f32 %v6527
      %v6784 = vcvt.s32.f32 %v6528
      %v6785 = vcvt.s32.f32 %v6529
      %6786 = vmatpush.msra.mxu0 %v6560
      %6787 = vmatpush.msra.mxu0 %v6558
      %6788 = vmatpush.msra.mxu0 %v6556
      %6789 = vmatpush.msra.mxu0 %v6554
      %6790 = vmatpush.msra.mxu0 %v6552
      %6791 = vmatpush.msra.mxu0 %v6550
      %6792 = vmatpush.msra.mxu0 %v6548
      %6793 = vmatpush.msra.mxu0 %v6546
      %6794 = vmatpush.msra.mxu0 %v6544
      %6795 = vmatpush.msra.mxu0 %v6542
      %6796 = vmatpush.msra.mxu0 %v6540
      %6797 = vmatpush.msra.mxu0 %v6538
      %6798 = vmatpush.msra.mxu0 %v6536
      %6799 = vmatpush.msra.mxu0 %v6534
      %6800 = vmatpush.msra.mxu0 %v6532
      %6801 = vmatpush.msra.mxu0 %v6530
      %6802 = vmatmul.f32.gmra.mxu0 %v5876
      %v6803 = vpop.f32.mrf.mxu0
      %v6804 = vadd.f32 0.0, %v6803
      %6805 = vdwg.mxu0
      %6806 = vmatpush.msra.mxu0 %v6592
      %6807 = vmatpush.msra.mxu0 %v6590
      %6808 = vmatpush.msra.mxu0 %v6588
      %6809 = vmatpush.msra.mxu0 %v6586
      %6810 = vmatpush.msra.mxu0 %v6584
      %6811 = vmatpush.msra.mxu0 %v6582
      %6812 = vmatpush.msra.mxu0 %v6580
      %6813 = vmatpush.msra.mxu0 %v6578
      %6814 = vmatpush.msra.mxu0 %v6576
      %6815 = vmatpush.msra.mxu0 %v6574
      %6816 = vmatpush.msra.mxu0 %v6572
      %6817 = vmatpush.msra.mxu0 %v6570
      %6818 = vmatpush.msra.mxu0 %v6568
      %6819 = vmatpush.msra.mxu0 %v6566
      %6820 = vmatpush.msra.mxu0 %v6564
      %6821 = vmatpush.msra.mxu0 %v6562
      %6822 = vmatmul.f32.gmra.mxu0 %v5877
      %v6823 = vpop.f32.mrf.mxu0
      %v6824 = vadd.f32 %v6804, %v6823
      %6825 = vdwg.mxu0
      %6826 = vmatpush.msra.mxu0 %v6624
      %6827 = vmatpush.msra.mxu0 %v6622
      %6828 = vmatpush.msra.mxu0 %v6620
      %6829 = vmatpush.msra.mxu0 %v6618
      %6830 = vmatpush.msra.mxu0 %v6616
      %6831 = vmatpush.msra.mxu0 %v6614
      %6832 = vmatpush.msra.mxu0 %v6612
      %6833 = vmatpush.msra.mxu0 %v6610
      %6834 = vmatpush.msra.mxu0 %v6608
      %6835 = vmatpush.msra.mxu0 %v6606
      %6836 = vmatpush.msra.mxu0 %v6604
      %6837 = vmatpush.msra.mxu0 %v6602
      %6838 = vmatpush.msra.mxu0 %v6600
      %6839 = vmatpush.msra.mxu0 %v6598
      %6840 = vmatpush.msra.mxu0 %v6596
      %6841 = vmatpush.msra.mxu0 %v6594
      %6842 = vmatmul.f32.gmra.mxu0 %v5878
      %v6843 = vpop.f32.mrf.mxu0
      %v6844 = vadd.f32 %v6824, %v6843
      %6845 = vdwg.mxu0
      %6846 = vmatpush.msra.mxu0 %v6656
      %6847 = vmatpush.msra.mxu0 %v6654
      %6848 = vmatpush.msra.mxu0 %v6652
      %6849 = vmatpush.msra.mxu0 %v6650
      %6850 = vmatpush.msra.mxu0 %v6648
      %6851 = vmatpush.msra.mxu0 %v6646
      %6852 = vmatpush.msra.mxu0 %v6644
      %6853 = vmatpush.msra.mxu0 %v6642
      %6854 = vmatpush.msra.mxu0 %v6640
      %6855 = vmatpush.msra.mxu0 %v6638
      %6856 = vmatpush.msra.mxu0 %v6636
      %6857 = vmatpush.msra.mxu0 %v6634
      %6858 = vmatpush.msra.mxu0 %v6632
      %6859 = vmatpush.msra.mxu0 %v6630
      %6860 = vmatpush.msra.mxu0 %v6628
      %6861 = vmatpush.msra.mxu0 %v6626
      %6862 = vmatmul.f32.gmra.mxu0 %v5879
      %v6863 = vpop.f32.mrf.mxu0
      %v6864 = vadd.f32 %v6844, %v6863
      %6865 = vdwg.mxu0
      %6866 = vmatpush.msra.mxu0 %v6688
      %6867 = vmatpush.msra.mxu0 %v6686
      %6868 = vmatpush.msra.mxu0 %v6684
      %6869 = vmatpush.msra.mxu0 %v6682
      %6870 = vmatpush.msra.mxu0 %v6680
      %6871 = vmatpush.msra.mxu0 %v6678
      %6872 = vmatpush.msra.mxu0 %v6676
      %6873 = vmatpush.msra.mxu0 %v6674
      %6874 = vmatpush.msra.mxu0 %v6672
      %6875 = vmatpush.msra.mxu0 %v6670
      %6876 = vmatpush.msra.mxu0 %v6668
      %6877 = vmatpush.msra.mxu0 %v6666
      %6878 = vmatpush.msra.mxu0 %v6664
      %6879 = vmatpush.msra.mxu0 %v6662
      %6880 = vmatpush.msra.mxu0 %v6660
      %6881 = vmatpush.msra.mxu0 %v6658
      %6882 = vmatmul.f32.gmra.mxu0 %v5880
      %v6883 = vpop.f32.mrf.mxu0
      %v6884 = vadd.f32 %v6864, %v6883
      %6885 = vdwg.mxu0
      %6886 = vmatpush.msra.mxu0 %v6720
      %6887 = vmatpush.msra.mxu0 %v6718
      %6888 = vmatpush.msra.mxu0 %v6716
      %6889 = vmatpush.msra.mxu0 %v6714
      %6890 = vmatpush.msra.mxu0 %v6712
      %6891 = vmatpush.msra.mxu0 %v6710
      %6892 = vmatpush.msra.mxu0 %v6708
      %6893 = vmatpush.msra.mxu0 %v6706
      %6894 = vmatpush.msra.mxu0 %v6704
      %6895 = vmatpush.msra.mxu0 %v6702
      %6896 = vmatpush.msra.mxu0 %v6700
      %6897 = vmatpush.msra.mxu0 %v6698
      %6898 = vmatpush.msra.mxu0 %v6696
      %6899 = vmatpush.msra.mxu0 %v6694
      %6900 = vmatpush.msra.mxu0 %v6692
      %6901 = vmatpush.msra.mxu0 %v6690
      %6902 = vmatmul.f32.gmra.mxu0 %v5881
      %v6903 = vpop.f32.mrf.mxu0
      %v6904 = vadd.f32 %v6884, %v6903
      %6905 = vdwg.mxu0
      %6906 = vmatpush.msra.mxu0 %v6752
      %6907 = vmatpush.msra.mxu0 %v6750
      %6908 = vmatpush.msra.mxu0 %v6748
      %6909 = vmatpush.msra.mxu0 %v6746
      %6910 = vmatpush.msra.mxu0 %v6744
      %6911 = vmatpush.msra.mxu0 %v6742
      %6912 = vmatpush.msra.mxu0 %v6740
      %6913 = vmatpush.msra.mxu0 %v6738
      %6914 = vmatpush.msra.mxu0 %v6736
      %6915 = vmatpush.msra.mxu0 %v6734
      %6916 = vmatpush.msra.mxu0 %v6732
      %6917 = vmatpush.msra.mxu0 %v6730
      %6918 = vmatpush.msra.mxu0 %v6728
      %6919 = vmatpush.msra.mxu0 %v6726
      %6920 = vmatpush.msra.mxu0 %v6724
      %6921 = vmatpush.msra.mxu0 %v6722
      %6922 = vmatmul.f32.gmra.mxu0 %v5882
      %v6923 = vpop.f32.mrf.mxu0
      %v6924 = vadd.f32 %v6904, %v6923
      %6925 = vdwg.mxu0
      %6926 = vmatpush.msra.mxu0 %v6784
      %6927 = vmatpush.msra.mxu0 %v6782
      %6928 = vmatpush.msra.mxu0 %v6780
      %6929 = vmatpush.msra.mxu0 %v6778
      %6930 = vmatpush.msra.mxu0 %v6776
      %6931 = vmatpush.msra.mxu0 %v6774
      %6932 = vmatpush.msra.mxu0 %v6772
      %6933 = vmatpush.msra.mxu0 %v6770
      %6934 = vmatpush.msra.mxu0 %v6768
      %6935 = vmatpush.msra.mxu0 %v6766
      %6936 = vmatpush.msra.mxu0 %v6764
      %6937 = vmatpush.msra.mxu0 %v6762
      %6938 = vmatpush.msra.mxu0 %v6760
      %6939 = vmatpush.msra.mxu0 %v6758
      %6940 = vmatpush.msra.mxu0 %v6756
      %6941 = vmatpush.msra.mxu0 %v6754
      %6942 = vmatmul.f32.gmra.mxu0 %v5883
      %v6943 = vpop.f32.mrf.mxu0
      %v6944 = vadd.f32 %v6924, %v6943
      %6945 = vdwg.mxu0
      %6946 = vmatpush.msra.mxu0 %v6561
      %6947 = vmatpush.msra.mxu0 %v6559
      %6948 = vmatpush.msra.mxu0 %v6557
      %6949 = vmatpush.msra.mxu0 %v6555
      %6950 = vmatpush.msra.mxu0 %v6553
      %6951 = vmatpush.msra.mxu0 %v6551
      %6952 = vmatpush.msra.mxu0 %v6549
      %6953 = vmatpush.msra.mxu0 %v6547
      %6954 = vmatpush.msra.mxu0 %v6545
      %6955 = vmatpush.msra.mxu0 %v6543
      %6956 = vmatpush.msra.mxu0 %v6541
      %6957 = vmatpush.msra.mxu0 %v6539
      %6958 = vmatpush.msra.mxu0 %v6537
      %6959 = vmatpush.msra.mxu0 %v6535
      %6960 = vmatpush.msra.mxu0 %v6533
      %6961 = vmatpush.msra.mxu0 %v6531
      %6962 = vmatmul.f32.gmra.mxu0 %v5876
      %v6963 = vpop.f32.mrf.mxu0
      %v6964 = vadd.f32 0.0, %v6963
      %6965 = vdwg.mxu0
      %6966 = vmatpush.msra.mxu0 %v6593
      %6967 = vmatpush.msra.mxu0 %v6591
      %6968 = vmatpush.msra.mxu0 %v6589
      %6969 = vmatpush.msra.mxu0 %v6587
      %6970 = vmatpush.msra.mxu0 %v6585
      %6971 = vmatpush.msra.mxu0 %v6583
      %6972 = vmatpush.msra.mxu0 %v6581
      %6973 = vmatpush.msra.mxu0 %v6579
      %6974 = vmatpush.msra.mxu0 %v6577
      %6975 = vmatpush.msra.mxu0 %v6575
      %6976 = vmatpush.msra.mxu0 %v6573
      %6977 = vmatpush.msra.mxu0 %v6571
      %6978 = vmatpush.msra.mxu0 %v6569
      %6979 = vmatpush.msra.mxu0 %v6567
      %6980 = vmatpush.msra.mxu0 %v6565
      %6981 = vmatpush.msra.mxu0 %v6563
      %6982 = vmatmul.f32.gmra.mxu0 %v5877
      %v6983 = vpop.f32.mrf.mxu0
      %v6984 = vadd.f32 %v6964, %v6983
      %6985 = vdwg.mxu0
      %6986 = vmatpush.msra.mxu0 %v6625
      %6987 = vmatpush.msra.mxu0 %v6623
      %6988 = vmatpush.msra.mxu0 %v6621
      %6989 = vmatpush.msra.mxu0 %v6619
      %6990 = vmatpush.msra.mxu0 %v6617
      %6991 = vmatpush.msra.mxu0 %v6615
      %6992 = vmatpush.msra.mxu0 %v6613
      %6993 = vmatpush.msra.mxu0 %v6611
      %6994 = vmatpush.msra.mxu0 %v6609
      %6995 = vmatpush.msra.mxu0 %v6607
      %6996 = vmatpush.msra.mxu0 %v6605
      %6997 = vmatpush.msra.mxu0 %v6603
      %6998 = vmatpush.msra.mxu0 %v6601
      %6999 = vmatpush.msra.mxu0 %v6599
      %7000 = vmatpush.msra.mxu0 %v6597
      %7001 = vmatpush.msra.mxu0 %v6595
      %7002 = vmatmul.f32.gmra.mxu0 %v5878
      %v7003 = vpop.f32.mrf.mxu0
      %v7004 = vadd.f32 %v6984, %v7003
      %7005 = vdwg.mxu0
      %7006 = vmatpush.msra.mxu0 %v6657
      %7007 = vmatpush.msra.mxu0 %v6655
      %7008 = vmatpush.msra.mxu0 %v6653
      %7009 = vmatpush.msra.mxu0 %v6651
      %7010 = vmatpush.msra.mxu0 %v6649
      %7011 = vmatpush.msra.mxu0 %v6647
      %7012 = vmatpush.msra.mxu0 %v6645
      %7013 = vmatpush.msra.mxu0 %v6643
      %7014 = vmatpush.msra.mxu0 %v6641
      %7015 = vmatpush.msra.mxu0 %v6639
      %7016 = vmatpush.msra.mxu0 %v6637
      %7017 = vmatpush.msra.mxu0 %v6635
      %7018 = vmatpush.msra.mxu0 %v6633
      %7019 = vmatpush.msra.mxu0 %v6631
      %7020 = vmatpush.msra.mxu0 %v6629
      %7021 = vmatpush.msra.mxu0 %v6627
      %7022 = vmatmul.f32.gmra.mxu0 %v5879
      %v7023 = vpop.f32.mrf.mxu0
      %v7024 = vadd.f32 %v7004, %v7023
      %7025 = vdwg.mxu0
      %7026 = vmatpush.msra.mxu0 %v6689
      %7027 = vmatpush.msra.mxu0 %v6687
      %7028 = vmatpush.msra.mxu0 %v6685
      %7029 = vmatpush.msra.mxu0 %v6683
      %7030 = vmatpush.msra.mxu0 %v6681
      %7031 = vmatpush.msra.mxu0 %v6679
      %7032 = vmatpush.msra.mxu0 %v6677
      %7033 = vmatpush.msra.mxu0 %v6675
      %7034 = vmatpush.msra.mxu0 %v6673
      %7035 = vmatpush.msra.mxu0 %v6671
      %7036 = vmatpush.msra.mxu0 %v6669
      %7037 = vmatpush.msra.mxu0 %v6667
      %7038 = vmatpush.msra.mxu0 %v6665
      %7039 = vmatpush.msra.mxu0 %v6663
      %7040 = vmatpush.msra.mxu0 %v6661
      %7041 = vmatpush.msra.mxu0 %v6659
      %7042 = vmatmul.f32.gmra.mxu0 %v5880
      %v7043 = vpop.f32.mrf.mxu0
      %v7044 = vadd.f32 %v7024, %v7043
      %7045 = vdwg.mxu0
      %7046 = vmatpush.msra.mxu0 %v6721
      %7047 = vmatpush.msra.mxu0 %v6719
      %7048 = vmatpush.msra.mxu0 %v6717
      %7049 = vmatpush.msra.mxu0 %v6715
      %7050 = vmatpush.msra.mxu0 %v6713
      %7051 = vmatpush.msra.mxu0 %v6711
      %7052 = vmatpush.msra.mxu0 %v6709
      %7053 = vmatpush.msra.mxu0 %v6707
      %7054 = vmatpush.msra.mxu0 %v6705
      %7055 = vmatpush.msra.mxu0 %v6703
      %7056 = vmatpush.msra.mxu0 %v6701
      %7057 = vmatpush.msra.mxu0 %v6699
      %7058 = vmatpush.msra.mxu0 %v6697
      %7059 = vmatpush.msra.mxu0 %v6695
      %7060 = vmatpush.msra.mxu0 %v6693
      %7061 = vmatpush.msra.mxu0 %v6691
      %7062 = vmatmul.f32.gmra.mxu0 %v5881
      %v7063 = vpop.f32.mrf.mxu0
      %v7064 = vadd.f32 %v7044, %v7063
      %7065 = vdwg.mxu0
      %7066 = vmatpush.msra.mxu0 %v6753
      %7067 = vmatpush.msra.mxu0 %v6751
      %7068 = vmatpush.msra.mxu0 %v6749
      %7069 = vmatpush.msra.mxu0 %v6747
      %7070 = vmatpush.msra.mxu0 %v6745
      %7071 = vmatpush.msra.mxu0 %v6743
      %7072 = vmatpush.msra.mxu0 %v6741
      %7073 = vmatpush.msra.mxu0 %v6739
      %7074 = vmatpush.msra.mxu0 %v6737
      %7075 = vmatpush.msra.mxu0 %v6735
      %7076 = vmatpush.msra.mxu0 %v6733
      %7077 = vmatpush.msra.mxu0 %v6731
      %7078 = vmatpush.msra.mxu0 %v6729
      %7079 = vmatpush.msra.mxu0 %v6727
      %7080 = vmatpush.msra.mxu0 %v6725
      %7081 = vmatpush.msra.mxu0 %v6723
      %7082 = vmatmul.f32.gmra.mxu0 %v5882
      %v7083 = vpop.f32.mrf.mxu0
      %v7084 = vadd.f32 %v7064, %v7083
      %7085 = vdwg.mxu0
      %7086 = vmatpush.msra.mxu0 %v6785
      %7087 = vmatpush.msra.mxu0 %v6783
      %7088 = vmatpush.msra.mxu0 %v6781
      %7089 = vmatpush.msra.mxu0 %v6779
      %7090 = vmatpush.msra.mxu0 %v6777
      %7091 = vmatpush.msra.mxu0 %v6775
      %7092 = vmatpush.msra.mxu0 %v6773
      %7093 = vmatpush.msra.mxu0 %v6771
      %7094 = vmatpush.msra.mxu0 %v6769
      %7095 = vmatpush.msra.mxu0 %v6767
      %7096 = vmatpush.msra.mxu0 %v6765
      %7097 = vmatpush.msra.mxu0 %v6763
      %7098 = vmatpush.msra.mxu0 %v6761
      %7099 = vmatpush.msra.mxu0 %v6759
      %7100 = vmatpush.msra.mxu0 %v6757
      %7101 = vmatpush.msra.mxu0 %v6755
      %7102 = vmatmul.f32.gmra.mxu0 %v5883
      %v7103 = vpop.f32.mrf.mxu0
      %v7104 = vadd.f32 %v7084, %v7103
      %7105 = vdwg.mxu0
      %v7106 = vld [vmem:[%s7] sm:$0xff]
      %v7107 = vld [vmem:[%s9] sm:$0xff]
      %7110 = vrot.lane.b32.xlu0 %v6944, 1
      %v7111 = vpop.permute.xlu0 %7110
      %7112 = vrot.lane.b32.xlu0 %v7104, 1
      %v7113 = vpop.permute.xlu0 %7112
      %vm7114 = vcmask 7168
      %v7115 = vsel %vm7114, %v7111, %v7113
      %v7118 = vsel %vm7114, 0.0, %v7111
      %7119 = vrot.lane.b32.xlu0 %v6944, 127
      %v7120 = vpop.permute.xlu0 %7119
      %7121 = vrot.lane.b32.xlu0 %v7104, 127
      %v7122 = vpop.permute.xlu0 %7121
      %v7123 = vsel %vm1176, %v7120, %v7122
      %v7126 = vsel %vm1176, %v7122, 0.0
      %7128 = vset.pattern.permute.xlu0 0
      %7129 = vperm.xlu0 %7128, %v7107
      %v7130 = vpop.permute.xlu0 %7129
      %vm7132 = vcmask 195584
      %v7134 = vsel %vm7132, %v7106, 0
      %7136 = vmatpush.msra.mxu0 0.0
      %7137 = vmatpush.msra.mxu0 0.0
      %7138 = vmatpush.msra.mxu0 0.0
      %7139 = vmatpush.msra.mxu0 0.0
      %7140 = vmatpush.msra.mxu0 0.0
      %7141 = vmatpush.msra.mxu0 0.0
      %7142 = vmatpush.msra.mxu0 0.0
      %7143 = vmatpush.msra.mxu0 0.0
      %7144 = vmatpush.msra.mxu0 0.0
      %7145 = vmatpush.msra.mxu0 0.0
      %7146 = vmatpush.msra.mxu0 0.0
      %7147 = vmatpush.msra.mxu0 0.0
      %7148 = vmatpush.msra.mxu0 0.0
      %7149 = vmatpush.msra.mxu0 %v7123
      %7150 = vmatpush.msra.mxu0 %v6944
      %7151 = vmatpush.msra.mxu0 %v7118
      %7152 = vmatmul.f32.gmra.mxu0 %v7134
      %v7153 = vpop.f32.mrf.mxu0
      %v7154 = vadd.f32 %v7130, %v7153
      %7155 = vdwg.mxu0
      %7156 = vmatpush.msra.mxu0 0.0
      %7157 = vmatpush.msra.mxu0 0.0
      %7158 = vmatpush.msra.mxu0 0.0
      %7159 = vmatpush.msra.mxu0 0.0
      %7160 = vmatpush.msra.mxu0 0.0
      %7161 = vmatpush.msra.mxu0 0.0
      %7162 = vmatpush.msra.mxu0 0.0
      %7163 = vmatpush.msra.mxu0 0.0
      %7164 = vmatpush.msra.mxu0 0.0
      %7165 = vmatpush.msra.mxu0 0.0
      %7166 = vmatpush.msra.mxu0 0.0
      %7167 = vmatpush.msra.mxu0 0.0
      %7168 = vmatpush.msra.mxu0 0.0
      %7169 = vmatpush.msra.mxu0 %v7126
      %7170 = vmatpush.msra.mxu0 %v7104
      %7171 = vmatpush.msra.mxu0 %v7115
      %7172 = vmatmul.f32.gmra.mxu0 %v7134
      %v7173 = vpop.f32.mrf.mxu0
      %v7174 = vadd.f32 %v7130, %v7173
      %7175 = vdwg.mxu0
      %v7176 = vmax.f32 %v7154, 0.0
      %v7177 = vmax.f32 %v7174, 0.0
      %v7178 = vld [vmem:[%s11] sm:$0xff]
      %v7179 = vld [vmem:[%s13] sm:$0xff]
      %7182 = vrot.lane.b32.xlu0 %v7176, 1
      %v7183 = vpop.permute.xlu0 %7182
      %7184 = vrot.lane.b32.xlu0 %v7177, 1
      %v7185 = vpop.permute.xlu0 %7184
      %v7186 = vsel %vm7114, %v7183, %v7185
      %v7189 = vsel %vm7114, 0.0, %v7183
      %7190 = vrot.lane.b32.xlu0 %v7176, 127
      %v7191 = vpop.permute.xlu0 %7190
      %7192 = vrot.lane.b32.xlu0 %v7177, 127
      %v7193 = vpop.permute.xlu0 %7192
      %v7194 = vsel %vm1176, %v7191, %v7193
      %v7197 = vsel %vm1176, %v7193, 0.0
      %7199 = vset.pattern.permute.xlu0 0
      %7200 = vperm.xlu0 %7199, %v7179
      %v7201 = vpop.permute.xlu0 %7200
      %v7204 = vsel %vm7132, %v7178, 0
      %7206 = vmatpush.msra.mxu0 0.0
      %7207 = vmatpush.msra.mxu0 0.0
      %7208 = vmatpush.msra.mxu0 0.0
      %7209 = vmatpush.msra.mxu0 0.0
      %7210 = vmatpush.msra.mxu0 0.0
      %7211 = vmatpush.msra.mxu0 0.0
      %7212 = vmatpush.msra.mxu0 0.0
      %7213 = vmatpush.msra.mxu0 0.0
      %7214 = vmatpush.msra.mxu0 0.0
      %7215 = vmatpush.msra.mxu0 0.0
      %7216 = vmatpush.msra.mxu0 0.0
      %7217 = vmatpush.msra.mxu0 0.0
      %7218 = vmatpush.msra.mxu0 0.0
      %7219 = vmatpush.msra.mxu0 %v7194
      %7220 = vmatpush.msra.mxu0 %v7176
      %7221 = vmatpush.msra.mxu0 %v7189
      %7222 = vmatmul.f32.gmra.mxu0 %v7204
      %v7223 = vpop.f32.mrf.mxu0
      %v7224 = vadd.f32 %v7201, %v7223
      %7225 = vdwg.mxu0
      %7226 = vmatpush.msra.mxu0 0.0
      %7227 = vmatpush.msra.mxu0 0.0
      %7228 = vmatpush.msra.mxu0 0.0
      %7229 = vmatpush.msra.mxu0 0.0
      %7230 = vmatpush.msra.mxu0 0.0
      %7231 = vmatpush.msra.mxu0 0.0
      %7232 = vmatpush.msra.mxu0 0.0
      %7233 = vmatpush.msra.mxu0 0.0
      %7234 = vmatpush.msra.mxu0 0.0
      %7235 = vmatpush.msra.mxu0 0.0
      %7236 = vmatpush.msra.mxu0 0.0
      %7237 = vmatpush.msra.mxu0 0.0
      %7238 = vmatpush.msra.mxu0 0.0
      %7239 = vmatpush.msra.mxu0 %v7197
      %7240 = vmatpush.msra.mxu0 %v7177
      %7241 = vmatpush.msra.mxu0 %v7186
      %7242 = vmatmul.f32.gmra.mxu0 %v7204
      %v7243 = vpop.f32.mrf.mxu0
      %v7244 = vadd.f32 %v7201, %v7243
      %7245 = vdwg.mxu0
      %v7246 = vmax.f32 %v7224, 0.0
      %v7247 = vmax.f32 %v7244, 0.0
      %v7248 = vld [vmem:[%s15] sm:$0xff]
      %v7249 = vld [vmem:[%s17] sm:$0xff]
      %7252 = vrot.lane.b32.xlu0 %v7246, 1
      %v7253 = vpop.permute.xlu0 %7252
      %7254 = vrot.lane.b32.xlu0 %v7247, 1
      %v7255 = vpop.permute.xlu0 %7254
      %v7256 = vsel %vm7114, %v7253, %v7255
      %v7259 = vsel %vm7114, 0.0, %v7253
      %7260 = vrot.lane.b32.xlu0 %v7246, 127
      %v7261 = vpop.permute.xlu0 %7260
      %7262 = vrot.lane.b32.xlu0 %v7247, 127
      %v7263 = vpop.permute.xlu0 %7262
      %v7264 = vsel %vm1176, %v7261, %v7263
      %v7267 = vsel %vm1176, %v7263, 0.0
      %7269 = vset.pattern.permute.xlu0 0
      %7270 = vperm.xlu0 %7269, %v7249
      %v7271 = vpop.permute.xlu0 %7270
      %v7274 = vsel %vm7132, %v7248, 0
      %7276 = vmatpush.msra.mxu0 0.0
      %7277 = vmatpush.msra.mxu0 0.0
      %7278 = vmatpush.msra.mxu0 0.0
      %7279 = vmatpush.msra.mxu0 0.0
      %7280 = vmatpush.msra.mxu0 0.0
      %7281 = vmatpush.msra.mxu0 0.0
      %7282 = vmatpush.msra.mxu0 0.0
      %7283 = vmatpush.msra.mxu0 0.0
      %7284 = vmatpush.msra.mxu0 0.0
      %7285 = vmatpush.msra.mxu0 0.0
      %7286 = vmatpush.msra.mxu0 0.0
      %7287 = vmatpush.msra.mxu0 0.0
      %7288 = vmatpush.msra.mxu0 0.0
      %7289 = vmatpush.msra.mxu0 %v7264
      %7290 = vmatpush.msra.mxu0 %v7246
      %7291 = vmatpush.msra.mxu0 %v7259
      %7292 = vmatmul.f32.gmra.mxu0 %v7274
      %v7293 = vpop.f32.mrf.mxu0
      %v7294 = vadd.f32 %v7271, %v7293
      %7295 = vdwg.mxu0
      %7296 = vmatpush.msra.mxu0 0.0
      %7297 = vmatpush.msra.mxu0 0.0
      %7298 = vmatpush.msra.mxu0 0.0
      %7299 = vmatpush.msra.mxu0 0.0
      %7300 = vmatpush.msra.mxu0 0.0
      %7301 = vmatpush.msra.mxu0 0.0
      %7302 = vmatpush.msra.mxu0 0.0
      %7303 = vmatpush.msra.mxu0 0.0
      %7304 = vmatpush.msra.mxu0 0.0
      %7305 = vmatpush.msra.mxu0 0.0
      %7306 = vmatpush.msra.mxu0 0.0
      %7307 = vmatpush.msra.mxu0 0.0
      %7308 = vmatpush.msra.mxu0 0.0
      %7309 = vmatpush.msra.mxu0 %v7267
      %7310 = vmatpush.msra.mxu0 %v7247
      %7311 = vmatpush.msra.mxu0 %v7256
      %7312 = vmatmul.f32.gmra.mxu0 %v7274
      %v7313 = vpop.f32.mrf.mxu0
      %v7314 = vadd.f32 %v7271, %v7313
      %7315 = vdwg.mxu0
      %v7316 = vmax.f32 %v7294, 0.0
      %v7317 = vmax.f32 %v7314, 0.0
      %v7318 = vld [vmem:[%s19] sm:$0xff]
      %v7319 = vld [vmem:[%s21] sm:$0xff]
      %7322 = vrot.lane.b32.xlu0 %v7316, 1
      %v7323 = vpop.permute.xlu0 %7322
      %7324 = vrot.lane.b32.xlu0 %v7317, 1
      %v7325 = vpop.permute.xlu0 %7324
      %v7326 = vsel %vm7114, %v7323, %v7325
      %v7329 = vsel %vm7114, 0.0, %v7323
      %7330 = vrot.lane.b32.xlu0 %v7316, 127
      %v7331 = vpop.permute.xlu0 %7330
      %7332 = vrot.lane.b32.xlu0 %v7317, 127
      %v7333 = vpop.permute.xlu0 %7332
      %v7334 = vsel %vm1176, %v7331, %v7333
      %v7337 = vsel %vm1176, %v7333, 0.0
      %7339 = vset.pattern.permute.xlu0 0
      %7340 = vperm.xlu0 %7339, %v7319
      %v7341 = vpop.permute.xlu0 %7340
      %v7344 = vsel %vm7132, %v7318, 0
      %7346 = vmatpush.msra.mxu0 0.0
      %7347 = vmatpush.msra.mxu0 0.0
      %7348 = vmatpush.msra.mxu0 0.0
      %7349 = vmatpush.msra.mxu0 0.0
      %7350 = vmatpush.msra.mxu0 0.0
      %7351 = vmatpush.msra.mxu0 0.0
      %7352 = vmatpush.msra.mxu0 0.0
      %7353 = vmatpush.msra.mxu0 0.0
      %7354 = vmatpush.msra.mxu0 0.0
      %7355 = vmatpush.msra.mxu0 0.0
      %7356 = vmatpush.msra.mxu0 0.0
      %7357 = vmatpush.msra.mxu0 0.0
      %7358 = vmatpush.msra.mxu0 0.0
      %7359 = vmatpush.msra.mxu0 %v7334
      %7360 = vmatpush.msra.mxu0 %v7316
      %7361 = vmatpush.msra.mxu0 %v7329
      %7362 = vmatmul.f32.gmra.mxu0 %v7344
      %v7363 = vpop.f32.mrf.mxu0
      %v7364 = vadd.f32 %v7341, %v7363
      %7365 = vdwg.mxu0
      %7366 = vmatpush.msra.mxu0 0.0
      %7367 = vmatpush.msra.mxu0 0.0
      %7368 = vmatpush.msra.mxu0 0.0
      %7369 = vmatpush.msra.mxu0 0.0
      %7370 = vmatpush.msra.mxu0 0.0
      %7371 = vmatpush.msra.mxu0 0.0
      %7372 = vmatpush.msra.mxu0 0.0
      %7373 = vmatpush.msra.mxu0 0.0
      %7374 = vmatpush.msra.mxu0 0.0
      %7375 = vmatpush.msra.mxu0 0.0
      %7376 = vmatpush.msra.mxu0 0.0
      %7377 = vmatpush.msra.mxu0 0.0
      %7378 = vmatpush.msra.mxu0 0.0
      %7379 = vmatpush.msra.mxu0 %v7337
      %7380 = vmatpush.msra.mxu0 %v7317
      %7381 = vmatpush.msra.mxu0 %v7326
      %7382 = vmatmul.f32.gmra.mxu0 %v7344
      %v7383 = vpop.f32.mrf.mxu0
      %v7384 = vadd.f32 %v7341, %v7383
      %7385 = vdwg.mxu0
      %v7386 = vmax.f32 %v7364, 0.0
      %v7387 = vmax.f32 %v7384, 0.0
      %7390 = vrot.lane.b32.xlu0 %v7386, 127
      %v7391 = vpop.permute.xlu0 %7390
      %7392 = vrot.lane.b32.xlu0 %v7387, 127
      %v7393 = vpop.permute.xlu0 %7392
      %v7394 = vsel %vm1176, %v7391, %v7393
      %v7397 = vsel %vm1176, %v7393, 0.0
      %v7398 = vmax.f32 %v7386, %v7394
      %v7399 = vmax.f32 %v7387, %v7397
      %7400 = vrot.lane.b32.xlu0 %v7386, 126
      %v7401 = vpop.permute.xlu0 %7400
      %7402 = vrot.lane.b32.xlu0 %v7387, 126
      %v7403 = vpop.permute.xlu0 %7402
      %v7404 = vsel %vm1595, %v7401, %v7403
      %v7407 = vsel %vm1595, %v7403, 0.0
      %7408 = vrot.lane.b32.xlu0 %v7386, 125
      %v7409 = vpop.permute.xlu0 %7408
      %7410 = vrot.lane.b32.xlu0 %v7387, 125
      %v7411 = vpop.permute.xlu0 %7410
      %v7412 = vsel %vm1827, %v7409, %v7411
      %v7415 = vsel %vm1827, %v7411, 0.0
      %v7416 = vmax.f32 %v7404, %v7412
      %v7417 = vmax.f32 %v7407, %v7415
      %v7418 = vmax.f32 %v7398, %v7416
      %v7419 = vmax.f32 %v7399, %v7417
      %7420 = vmatpush.msra.mxu0 %v6560
      %7421 = vmatpush.msra.mxu0 %v6558
      %7422 = vmatpush.msra.mxu0 %v6556
      %7423 = vmatpush.msra.mxu0 %v6554
      %7424 = vmatpush.msra.mxu0 %v6552
      %7425 = vmatpush.msra.mxu0 %v6550
      %7426 = vmatpush.msra.mxu0 %v6548
      %7427 = vmatpush.msra.mxu0 %v6546
      %7428 = vmatpush.msra.mxu0 %v6544
      %7429 = vmatpush.msra.mxu0 %v6542
      %7430 = vmatpush.msra.mxu0 %v6540
      %7431 = vmatpush.msra.mxu0 %v6538
      %7432 = vmatpush.msra.mxu0 %v6536
      %7433 = vmatpush.msra.mxu0 %v6534
      %7434 = vmatpush.msra.mxu0 %v6532
      %7435 = vmatpush.msra.mxu0 %v6530
      %7436 = vmatmul.f32.gmra.mxu0 %v7418
      %v7437 = vpop.f32.mrf.mxu0
      %v7438 = vadd.f32 0.0, %v7437
      %7439 = vdwg.mxu0
      %7440 = vmatpush.msra.mxu0 %v6592
      %7441 = vmatpush.msra.mxu0 %v6590
      %7442 = vmatpush.msra.mxu0 %v6588
      %7443 = vmatpush.msra.mxu0 %v6586
      %7444 = vmatpush.msra.mxu0 %v6584
      %7445 = vmatpush.msra.mxu0 %v6582
      %7446 = vmatpush.msra.mxu0 %v6580
      %7447 = vmatpush.msra.mxu0 %v6578
      %7448 = vmatpush.msra.mxu0 %v6576
      %7449 = vmatpush.msra.mxu0 %v6574
      %7450 = vmatpush.msra.mxu0 %v6572
      %7451 = vmatpush.msra.mxu0 %v6570
      %7452 = vmatpush.msra.mxu0 %v6568
      %7453 = vmatpush.msra.mxu0 %v6566
      %7454 = vmatpush.msra.mxu0 %v6564
      %7455 = vmatpush.msra.mxu0 %v6562
      %7456 = vmatmul.f32.gmra.mxu0 %v7419
      %v7457 = vpop.f32.mrf.mxu0
      %v7458 = vadd.f32 %v7438, %v7457
      %7459 = vdwg.mxu0
      %v7460 = vld [vmem:[%s23] sm:$0xff]
      %v7461 = vld [vmem:[%s23 + $0x8] sm:$0xff]
      %v7462 = vld [vmem:[%s25] sm:$0xff]
      %v7463 = vld [vmem:[%s25 + $0x8] sm:$0xff]
      %7465 = vrot.lane.b32.xlu0 %v7458, 1
      %v7466 = vpop.permute.xlu0 %7465
      %v7468 = vsel %vm7114, 0.0, %v7466
      %7469 = vrot.lane.b32.xlu0 %v7458, 127
      %v7470 = vpop.permute.xlu0 %7469
      %vm7472 = vcmask 515072
      %v7473 = vsel %vm7472, %v7470, 0.0
      %7475 = vset.pattern.permute.xlu0 0
      %7476 = vperm.xlu0 %7475, %v7462
      %v7477 = vpop.permute.xlu0 %7476
      %7480 = vset.pattern.permute.xlu0 0
      %7481 = vperm.xlu0 %7480, %v7463
      %v7482 = vpop.permute.xlu0 %7481
      %v7485 = vsel %vm7132, %v7460, 0
      %v7488 = vsel %vm7132, %v7461, 0
      %7490 = vmatpush.msra.mxu0 0.0
      %7491 = vmatpush.msra.mxu0 0.0
      %7492 = vmatpush.msra.mxu0 0.0
      %7493 = vmatpush.msra.mxu0 0.0
      %7494 = vmatpush.msra.mxu0 0.0
      %7495 = vmatpush.msra.mxu0 0.0
      %7496 = vmatpush.msra.mxu0 0.0
      %7497 = vmatpush.msra.mxu0 0.0
      %7498 = vmatpush.msra.mxu0 0.0
      %7499 = vmatpush.msra.mxu0 0.0
      %7500 = vmatpush.msra.mxu0 0.0
      %7501 = vmatpush.msra.mxu0 0.0
      %7502 = vmatpush.msra.mxu0 0.0
      %7503 = vmatpush.msra.mxu0 %v7473
      %7504 = vmatpush.msra.mxu0 %v7458
      %7505 = vmatpush.msra.mxu0 %v7468
      %7506 = vmatmul.f32.gmra.mxu0 %v7485
      %v7507 = vpop.f32.mrf.mxu0
      %v7508 = vadd.f32 %v7477, %v7507
      %7509 = vmatmul.f32.gmra.mxu0 %v7488
      %v7510 = vpop.f32.mrf.mxu0
      %v7511 = vadd.f32 %v7482, %v7510
      %7512 = vdwg.mxu0
      %v7513 = vmax.f32 %v7508, 0.0
      %v7514 = vmax.f32 %v7511, 0.0
      %v7515 = vld [vmem:[%s27] sm:$0xff]
      %v7516 = vld [vmem:[%s27 + $0x8] sm:$0xff]
      %v7517 = vld [vmem:[%s29] sm:$0xff]
      %v7518 = vld [vmem:[%s29 + $0x8] sm:$0xff]
      %7521 = vrot.lane.b32.xlu0 %v7513, 1
      %v7522 = vpop.permute.xlu0 %7521
      %7523 = vrot.lane.b32.xlu0 %v7514, 1
      %v7524 = vpop.permute.xlu0 %7523
      %v7527 = vsel %vm7114, 0.0, %v7522
      %v7528 = vsel %vm7114, 0.0, %v7524
      %7529 = vrot.lane.b32.xlu0 %v7513, 127
      %v7530 = vpop.permute.xlu0 %7529
      %7531 = vrot.lane.b32.xlu0 %v7514, 127
      %v7532 = vpop.permute.xlu0 %7531
      %v7535 = vsel %vm7472, %v7530, 0.0
      %v7536 = vsel %vm7472, %v7532, 0.0
      %7538 = vset.pattern.permute.xlu0 0
      %7539 = vperm.xlu0 %7538, %v7517
      %v7540 = vpop.permute.xlu0 %7539
      %7543 = vset.pattern.permute.xlu0 0
      %7544 = vperm.xlu0 %7543, %v7518
      %v7545 = vpop.permute.xlu0 %7544
      %vm7547 = vcmask 392192
      %v7549 = vsel %vm7547, %v7515, 0
      %v7552 = vsel %vm7547, %v7516, 0
      %7554 = vmatpush.msra.mxu0 0.0
      %7555 = vmatpush.msra.mxu0 0.0
      %7556 = vmatpush.msra.mxu0 0.0
      %7557 = vmatpush.msra.mxu0 0.0
      %7558 = vmatpush.msra.mxu0 0.0
      %7559 = vmatpush.msra.mxu0 0.0
      %7560 = vmatpush.msra.mxu0 0.0
      %7561 = vmatpush.msra.mxu0 0.0
      %7562 = vmatpush.msra.mxu0 0.0
      %7563 = vmatpush.msra.mxu0 0.0
      %7564 = vmatpush.msra.mxu0 %v7536
      %7565 = vmatpush.msra.mxu0 %v7535
      %7566 = vmatpush.msra.mxu0 %v7514
      %7567 = vmatpush.msra.mxu0 %v7513
      %7568 = vmatpush.msra.mxu0 %v7528
      %7569 = vmatpush.msra.mxu0 %v7527
      %7570 = vmatmul.f32.gmra.mxu0 %v7549
      %v7571 = vpop.f32.mrf.mxu0
      %v7572 = vadd.f32 %v7540, %v7571
      %7573 = vmatmul.f32.gmra.mxu0 %v7552
      %v7574 = vpop.f32.mrf.mxu0
      %v7575 = vadd.f32 %v7545, %v7574
      %7576 = vdwg.mxu0
      %v7577 = vmax.f32 %v7572, 0.0
      %v7578 = vmax.f32 %v7575, 0.0
      %v7579 = vld [vmem:[%s31] sm:$0xff]
      %v7580 = vld [vmem:[%s31 + $0x8] sm:$0xff]
      %v7581 = vld [vmem:[%s33] sm:$0xff]
      %v7582 = vld [vmem:[%s33 + $0x8] sm:$0xff]
      %7585 = vrot.lane.b32.xlu0 %v7577, 1
      %v7586 = vpop.permute.xlu0 %7585
      %7587 = vrot.lane.b32.xlu0 %v7578, 1
      %v7588 = vpop.permute.xlu0 %7587
      %v7591 = vsel %vm7114, 0.0, %v7586
      %v7592 = vsel %vm7114, 0.0, %v7588
      %7593 = vrot.lane.b32.xlu0 %v7577, 127
      %v7594 = vpop.permute.xlu0 %7593
      %7595 = vrot.lane.b32.xlu0 %v7578, 127
      %v7596 = vpop.permute.xlu0 %7595
      %v7599 = vsel %vm7472, %v7594, 0.0
      %v7600 = vsel %vm7472, %v7596, 0.0
      %7602 = vset.pattern.permute.xlu0 0
      %7603 = vperm.xlu0 %7602, %v7581
      %v7604 = vpop.permute.xlu0 %7603
      %7607 = vset.pattern.permute.xlu0 0
      %7608 = vperm.xlu0 %7607, %v7582
      %v7609 = vpop.permute.xlu0 %7608
      %v7612 = vsel %vm7547, %v7579, 0
      %v7615 = vsel %vm7547, %v7580, 0
      %7617 = vmatpush.msra.mxu0 0.0
      %7618 = vmatpush.msra.mxu0 0.0
      %7619 = vmatpush.msra.mxu0 0.0
      %7620 = vmatpush.msra.mxu0 0.0
      %7621 = vmatpush.msra.mxu0 0.0
      %7622 = vmatpush.msra.mxu0 0.0
      %7623 = vmatpush.msra.mxu0 0.0
      %7624 = vmatpush.msra.mxu0 0.0
      %7625 = vmatpush.msra.mxu0 0.0
      %7626 = vmatpush.msra.mxu0 0.0
      %7627 = vmatpush.msra.mxu0 %v7600
      %7628 = vmatpush.msra.mxu0 %v7599
      %7629 = vmatpush.msra.mxu0 %v7578
      %7630 = vmatpush.msra.mxu0 %v7577
      %7631 = vmatpush.msra.mxu0 %v7592
      %7632 = vmatpush.msra.mxu0 %v7591
      %7633 = vmatmul.f32.gmra.mxu0 %v7612
      %v7634 = vpop.f32.mrf.mxu0
      %v7635 = vadd.f32 %v7604, %v7634
      %7636 = vmatmul.f32.gmra.mxu0 %v7615
      %v7637 = vpop.f32.mrf.mxu0
      %v7638 = vadd.f32 %v7609, %v7637
      %7639 = vdwg.mxu0
      %v7640 = vmax.f32 %v7635, 0.0
      %v7641 = vmax.f32 %v7638, 0.0
      %v7642 = vld [vmem:[%s35] sm:$0xff]
      %v7643 = vld [vmem:[%s35 + $0x8] sm:$0xff]
      %v7644 = vld [vmem:[%s37] sm:$0xff]
      %v7645 = vld [vmem:[%s37 + $0x8] sm:$0xff]
      %7648 = vrot.lane.b32.xlu0 %v7640, 1
      %v7649 = vpop.permute.xlu0 %7648
      %7650 = vrot.lane.b32.xlu0 %v7641, 1
      %v7651 = vpop.permute.xlu0 %7650
      %v7654 = vsel %vm7114, 0.0, %v7649
      %v7655 = vsel %vm7114, 0.0, %v7651
      %7656 = vrot.lane.b32.xlu0 %v7640, 127
      %v7657 = vpop.permute.xlu0 %7656
      %7658 = vrot.lane.b32.xlu0 %v7641, 127
      %v7659 = vpop.permute.xlu0 %7658
      %v7662 = vsel %vm7472, %v7657, 0.0
      %v7663 = vsel %vm7472, %v7659, 0.0
      %7665 = vset.pattern.permute.xlu0 0
      %7666 = vperm.xlu0 %7665, %v7644
      %v7667 = vpop.permute.xlu0 %7666
      %7670 = vset.pattern.permute.xlu0 0
      %7671 = vperm.xlu0 %7670, %v7645
      %v7672 = vpop.permute.xlu0 %7671
      %v7675 = vsel %vm7547, %v7642, 0
      %v7678 = vsel %vm7547, %v7643, 0
      %7680 = vmatpush.msra.mxu0 0.0
      %7681 = vmatpush.msra.mxu0 0.0
      %7682 = vmatpush.msra.mxu0 0.0
      %7683 = vmatpush.msra.mxu0 0.0
      %7684 = vmatpush.msra.mxu0 0.0
      %7685 = vmatpush.msra.mxu0 0.0
      %7686 = vmatpush.msra.mxu0 0.0
      %7687 = vmatpush.msra.mxu0 0.0
      %7688 = vmatpush.msra.mxu0 0.0
      %7689 = vmatpush.msra.mxu0 0.0
      %7690 = vmatpush.msra.mxu0 %v7663
      %7691 = vmatpush.msra.mxu0 %v7662
      %7692 = vmatpush.msra.mxu0 %v7641
      %7693 = vmatpush.msra.mxu0 %v7640
      %7694 = vmatpush.msra.mxu0 %v7655
      %7695 = vmatpush.msra.mxu0 %v7654
      %7696 = vmatmul.f32.gmra.mxu0 %v7675
      %v7697 = vpop.f32.mrf.mxu0
      %v7698 = vadd.f32 %v7667, %v7697
      %7699 = vmatmul.f32.gmra.mxu0 %v7678
      %v7700 = vpop.f32.mrf.mxu0
      %v7701 = vadd.f32 %v7672, %v7700
      %7702 = vdwg.mxu0
      %v7703 = vmax.f32 %v7698, 0.0
      %v7704 = vmax.f32 %v7701, 0.0
      %7707 = vrot.lane.b32.xlu0 %v7703, 127
      %v7708 = vpop.permute.xlu0 %7707
      %7709 = vrot.lane.b32.xlu0 %v7704, 127
      %v7710 = vpop.permute.xlu0 %7709
      %v7713 = vsel %vm7472, %v7708, 0.0
      %v7714 = vsel %vm7472, %v7710, 0.0
      %v7715 = vmax.f32 %v7703, %v7713
      %v7716 = vmax.f32 %v7704, %v7714
      %7717 = vrot.lane.b32.xlu0 %v7703, 126
      %v7718 = vpop.permute.xlu0 %7717
      %7719 = vrot.lane.b32.xlu0 %v7704, 126
      %v7720 = vpop.permute.xlu0 %7719
      %vm7723 = vcmask 506880
      %v7724 = vsel %vm7723, %v7718, 0.0
      %v7725 = vsel %vm7723, %v7720, 0.0
      %7726 = vrot.lane.b32.xlu0 %v7703, 125
      %v7727 = vpop.permute.xlu0 %7726
      %7728 = vrot.lane.b32.xlu0 %v7704, 125
      %v7729 = vpop.permute.xlu0 %7728
      %vm7732 = vcmask 498688
      %v7733 = vsel %vm7732, %v7727, 0.0
      %v7734 = vsel %vm7732, %v7729, 0.0
      %v7735 = vmax.f32 %v7724, %v7733
      %v7736 = vmax.f32 %v7725, %v7734
      %v7737 = vmax.f32 %v7715, %v7735
      %v7738 = vmax.f32 %v7716, %v7736
      %vm7739 = vcmask 523264
      %v7741 = vsel %vm7739, %v7737, 0
      %v7744 = vsel %vm7739, %v7738, 0
      %7746 = vmatpush.msra.mxu0 0.0
      %7747 = vmatpush.msra.mxu0 0.0
      %7748 = vmatpush.msra.mxu0 0.0
      %7749 = vmatpush.msra.mxu0 0.0
      %7750 = vmatpush.msra.mxu0 0.0
      %7751 = vmatpush.msra.mxu0 0.0
      %7752 = vmatpush.msra.mxu0 0.0
      %7753 = vmatpush.msra.mxu0 0.0
      %7754 = vmatpush.msra.mxu0 %v6544
      %7755 = vmatpush.msra.mxu0 %v6542
      %7756 = vmatpush.msra.mxu0 %v6540
      %7757 = vmatpush.msra.mxu0 %v6538
      %7758 = vmatpush.msra.mxu0 %v6536
      %7759 = vmatpush.msra.mxu0 %v6534
      %7760 = vmatpush.msra.mxu0 %v6532
      %7761 = vmatpush.msra.mxu0 %v6530
      %7762 = vmatmul.f32.gmra.mxu0 %v7741
      %v7763 = vpop.f32.mrf.mxu0
      %v7764 = vadd.f32 0.0, %v7763
      %7765 = vmatmul.f32.gmra.mxu0 %v7744
      %v7766 = vpop.f32.mrf.mxu0
      %v7767 = vadd.f32 0.0, %v7766
      %7768 = vdwg.mxu0
      %v7769 = vld [vmem:[%s39] sm:$0xff]
      %v7770 = vld [vmem:[%s39 + $0x8] sm:$0xff]
      %v7771 = vld [vmem:[%s39 + $0x10] sm:$0xff]
      %v7772 = vld [vmem:[%s39 + $0x18] sm:$0xff]
      %v7773 = vld [vmem:[%s41] sm:$0xff]
      %v7774 = vld [vmem:[%s41 + $0x8] sm:$0xff]
      %v7775 = vld [vmem:[%s41 + $0x10] sm:$0xff]
      %v7776 = vld [vmem:[%s41 + $0x18] sm:$0xff]
      %7779 = vrot.lane.b32.xlu0 %v7764, 1
      %v7780 = vpop.permute.xlu0 %7779
      %7781 = vrot.lane.b32.xlu0 %v7767, 1
      %v7782 = vpop.permute.xlu0 %7781
      %v7785 = vsel %vm7114, 0.0, %v7780
      %v7786 = vsel %vm7114, 0.0, %v7782
      %7787 = vrot.lane.b32.xlu0 %v7764, 127
      %v7788 = vpop.permute.xlu0 %7787
      %7789 = vrot.lane.b32.xlu0 %v7767, 127
      %v7790 = vpop.permute.xlu0 %7789
      %vm7793 = vcmask 121856
      %v7794 = vsel %vm7793, %v7788, 0.0
      %v7795 = vsel %vm7793, %v7790, 0.0
      %7797 = vset.pattern.permute.xlu0 0
      %7798 = vperm.xlu0 %7797, %v7773
      %v7799 = vpop.permute.xlu0 %7798
      %7802 = vset.pattern.permute.xlu0 0
      %7803 = vperm.xlu0 %7802, %v7774
      %v7804 = vpop.permute.xlu0 %7803
      %7807 = vset.pattern.permute.xlu0 0
      %7808 = vperm.xlu0 %7807, %v7775
      %v7809 = vpop.permute.xlu0 %7808
      %7812 = vset.pattern.permute.xlu0 0
      %7813 = vperm.xlu0 %7812, %v7776
      %v7814 = vpop.permute.xlu0 %7813
      %v7817 = vsel %vm7547, %v7769, 0
      %v7820 = vsel %vm7547, %v7770, 0
      %v7823 = vsel %vm7547, %v7771, 0
      %v7826 = vsel %vm7547, %v7772, 0
      %7828 = vmatpush.msra.mxu0 0.0
      %7829 = vmatpush.msra.mxu0 0.0
      %7830 = vmatpush.msra.mxu0 0.0
      %7831 = vmatpush.msra.mxu0 0.0
      %7832 = vmatpush.msra.mxu0 0.0
      %7833 = vmatpush.msra.mxu0 0.0
      %7834 = vmatpush.msra.mxu0 0.0
      %7835 = vmatpush.msra.mxu0 0.0
      %7836 = vmatpush.msra.mxu0 0.0
      %7837 = vmatpush.msra.mxu0 0.0
      %7838 = vmatpush.msra.mxu0 %v7795
      %7839 = vmatpush.msra.mxu0 %v7794
      %7840 = vmatpush.msra.mxu0 %v7767
      %7841 = vmatpush.msra.mxu0 %v7764
      %7842 = vmatpush.msra.mxu0 %v7786
      %7843 = vmatpush.msra.mxu0 %v7785
      %7844 = vmatmul.f32.gmra.mxu0 %v7817
      %v7845 = vpop.f32.mrf.mxu0
      %v7846 = vadd.f32 %v7799, %v7845
      %7847 = vmatmul.f32.gmra.mxu0 %v7820
      %v7848 = vpop.f32.mrf.mxu0
      %v7849 = vadd.f32 %v7804, %v7848
      %7850 = vmatmul.f32.gmra.mxu0 %v7823
      %v7851 = vpop.f32.mrf.mxu0
      %v7852 = vadd.f32 %v7809, %v7851
      %7853 = vmatmul.f32.gmra.mxu0 %v7826
      %v7854 = vpop.f32.mrf.mxu0
      %v7855 = vadd.f32 %v7814, %v7854
      %7856 = vdwg.mxu0
      %v7857 = vmax.f32 %v7846, 0.0
      %v7858 = vmax.f32 %v7849, 0.0
      %v7859 = vmax.f32 %v7852, 0.0
      %v7860 = vmax.f32 %v7855, 0.0
      %v7861 = vld [vmem:[%s43] sm:$0xff]
      %v7862 = vld [vmem:[%s43 + $0x8] sm:$0xff]
      %v7863 = vld [vmem:[%s43 + $0x10] sm:$0xff]
      %v7864 = vld [vmem:[%s43 + $0x18] sm:$0xff]
      %v7865 = vld [vmem:[%s45] sm:$0xff]
      %v7866 = vld [vmem:[%s45 + $0x8] sm:$0xff]
      %v7867 = vld [vmem:[%s45 + $0x10] sm:$0xff]
      %v7868 = vld [vmem:[%s45 + $0x18] sm:$0xff]
      %7873 = vrot.lane.b32.xlu0 %v7857, 1
      %v7874 = vpop.permute.xlu0 %7873
      %7875 = vrot.lane.b32.xlu0 %v7858, 1
      %v7876 = vpop.permute.xlu0 %7875
      %7877 = vrot.lane.b32.xlu0 %v7859, 1
      %v7878 = vpop.permute.xlu0 %7877
      %7879 = vrot.lane.b32.xlu0 %v7860, 1
      %v7880 = vpop.permute.xlu0 %7879
      %v7885 = vsel %vm7114, 0.0, %v7874
      %v7886 = vsel %vm7114, 0.0, %v7876
      %v7887 = vsel %vm7114, 0.0, %v7878
      %v7888 = vsel %vm7114, 0.0, %v7880
      %7889 = vrot.lane.b32.xlu0 %v7857, 127
      %v7890 = vpop.permute.xlu0 %7889
      %7891 = vrot.lane.b32.xlu0 %v7858, 127
      %v7892 = vpop.permute.xlu0 %7891
      %7893 = vrot.lane.b32.xlu0 %v7859, 127
      %v7894 = vpop.permute.xlu0 %7893
      %7895 = vrot.lane.b32.xlu0 %v7860, 127
      %v7896 = vpop.permute.xlu0 %7895
      %v7901 = vsel %vm7793, %v7890, 0.0
      %v7902 = vsel %vm7793, %v7892, 0.0
      %v7903 = vsel %vm7793, %v7894, 0.0
      %v7904 = vsel %vm7793, %v7896, 0.0
      %7906 = vset.pattern.permute.xlu0 0
      %7907 = vperm.xlu0 %7906, %v7865
      %v7908 = vpop.permute.xlu0 %7907
      %7911 = vset.pattern.permute.xlu0 0
      %7912 = vperm.xlu0 %7911, %v7866
      %v7913 = vpop.permute.xlu0 %7912
      %7916 = vset.pattern.permute.xlu0 0
      %7917 = vperm.xlu0 %7916, %v7867
      %v7918 = vpop.permute.xlu0 %7917
      %7921 = vset.pattern.permute.xlu0 0
      %7922 = vperm.xlu0 %7921, %v7868
      %v7923 = vpop.permute.xlu0 %7922
      %vm7925 = vcmask 785408
      %v7927 = vsel %vm7925, %v7861, 0
      %v7930 = vsel %vm7925, %v7862, 0
      %v7933 = vsel %vm7925, %v7863, 0
      %v7936 = vsel %vm7925, %v7864, 0
      %7938 = vmatpush.msra.mxu0 0.0
      %7939 = vmatpush.msra.mxu0 0.0
      %7940 = vmatpush.msra.mxu0 0.0
      %7941 = vmatpush.msra.mxu0 0.0
      %7942 = vmatpush.msra.mxu0 %v7904
      %7943 = vmatpush.msra.mxu0 %v7903
      %7944 = vmatpush.msra.mxu0 %v7902
      %7945 = vmatpush.msra.mxu0 %v7901
      %7946 = vmatpush.msra.mxu0 %v7860
      %7947 = vmatpush.msra.mxu0 %v7859
      %7948 = vmatpush.msra.mxu0 %v7858
      %7949 = vmatpush.msra.mxu0 %v7857
      %7950 = vmatpush.msra.mxu0 %v7888
      %7951 = vmatpush.msra.mxu0 %v7887
      %7952 = vmatpush.msra.mxu0 %v7886
      %7953 = vmatpush.msra.mxu0 %v7885
      %7954 = vmatmul.f32.gmra.mxu0 %v7927
      %v7955 = vpop.f32.mrf.mxu0
      %v7956 = vadd.f32 %v7908, %v7955
      %7957 = vmatmul.f32.gmra.mxu0 %v7930
      %v7958 = vpop.f32.mrf.mxu0
      %v7959 = vadd.f32 %v7913, %v7958
      %7960 = vmatmul.f32.gmra.mxu0 %v7933
      %v7961 = vpop.f32.mrf.mxu0
      %v7962 = vadd.f32 %v7918, %v7961
      %7963 = vmatmul.f32.gmra.mxu0 %v7936
      %v7964 = vpop.f32.mrf.mxu0
      %v7965 = vadd.f32 %v7923, %v7964
      %7966 = vdwg.mxu0
      %v7967 = vmax.f32 %v7956, 0.0
      %v7968 = vmax.f32 %v7959, 0.0
      %v7969 = vmax.f32 %v7962, 0.0
      %v7970 = vmax.f32 %v7965, 0.0
      %v7971 = vld [vmem:[%s47] sm:$0xff]
      %v7972 = vld [vmem:[%s47 + $0x8] sm:$0xff]
      %v7973 = vld [vmem:[%s47 + $0x10] sm:$0xff]
      %v7974 = vld [vmem:[%s47 + $0x18] sm:$0xff]
      %v7975 = vld [vmem:[%s49] sm:$0xff]
      %v7976 = vld [vmem:[%s49 + $0x8] sm:$0xff]
      %v7977 = vld [vmem:[%s49 + $0x10] sm:$0xff]
      %v7978 = vld [vmem:[%s49 + $0x18] sm:$0xff]
      %7983 = vrot.lane.b32.xlu0 %v7967, 1
      %v7984 = vpop.permute.xlu0 %7983
      %7985 = vrot.lane.b32.xlu0 %v7968, 1
      %v7986 = vpop.permute.xlu0 %7985
      %7987 = vrot.lane.b32.xlu0 %v7969, 1
      %v7988 = vpop.permute.xlu0 %7987
      %7989 = vrot.lane.b32.xlu0 %v7970, 1
      %v7990 = vpop.permute.xlu0 %7989
      %v7995 = vsel %vm7114, 0.0, %v7984
      %v7996 = vsel %vm7114, 0.0, %v7986
      %v7997 = vsel %vm7114, 0.0, %v7988
      %v7998 = vsel %vm7114, 0.0, %v7990
      %7999 = vrot.lane.b32.xlu0 %v7967, 127
      %v8000 = vpop.permute.xlu0 %7999
      %8001 = vrot.lane.b32.xlu0 %v7968, 127
      %v8002 = vpop.permute.xlu0 %8001
      %8003 = vrot.lane.b32.xlu0 %v7969, 127
      %v8004 = vpop.permute.xlu0 %8003
      %8005 = vrot.lane.b32.xlu0 %v7970, 127
      %v8006 = vpop.permute.xlu0 %8005
      %v8011 = vsel %vm7793, %v8000, 0.0
      %v8012 = vsel %vm7793, %v8002, 0.0
      %v8013 = vsel %vm7793, %v8004, 0.0
      %v8014 = vsel %vm7793, %v8006, 0.0
      %8016 = vset.pattern.permute.xlu0 0
      %8017 = vperm.xlu0 %8016, %v7975
      %v8018 = vpop.permute.xlu0 %8017
      %8021 = vset.pattern.permute.xlu0 0
      %8022 = vperm.xlu0 %8021, %v7976
      %v8023 = vpop.permute.xlu0 %8022
      %8026 = vset.pattern.permute.xlu0 0
      %8027 = vperm.xlu0 %8026, %v7977
      %v8028 = vpop.permute.xlu0 %8027
      %8031 = vset.pattern.permute.xlu0 0
      %8032 = vperm.xlu0 %8031, %v7978
      %v8033 = vpop.permute.xlu0 %8032
      %v8036 = vsel %vm7925, %v7971, 0
      %v8039 = vsel %vm7925, %v7972, 0
      %v8042 = vsel %vm7925, %v7973, 0
      %v8045 = vsel %vm7925, %v7974, 0
      %8047 = vmatpush.msra.mxu0 0.0
      %8048 = vmatpush.msra.mxu0 0.0
      %8049 = vmatpush.msra.mxu0 0.0
      %8050 = vmatpush.msra.mxu0 0.0
      %8051 = vmatpush.msra.mxu0 %v8014
      %8052 = vmatpush.msra.mxu0 %v8013
      %8053 = vmatpush.msra.mxu0 %v8012
      %8054 = vmatpush.msra.mxu0 %v8011
      %8055 = vmatpush.msra.mxu0 %v7970
      %8056 = vmatpush.msra.mxu0 %v7969
      %8057 = vmatpush.msra.mxu0 %v7968
      %8058 = vmatpush.msra.mxu0 %v7967
      %8059 = vmatpush.msra.mxu0 %v7998
      %8060 = vmatpush.msra.mxu0 %v7997
      %8061 = vmatpush.msra.mxu0 %v7996
      %8062 = vmatpush.msra.mxu0 %v7995
      %8063 = vmatmul.f32.gmra.mxu0 %v8036
      %v8064 = vpop.f32.mrf.mxu0
      %v8065 = vadd.f32 %v8018, %v8064
      %8066 = vmatmul.f32.gmra.mxu0 %v8039
      %v8067 = vpop.f32.mrf.mxu0
      %v8068 = vadd.f32 %v8023, %v8067
      %8069 = vmatmul.f32.gmra.mxu0 %v8042
      %v8070 = vpop.f32.mrf.mxu0
      %v8071 = vadd.f32 %v8028, %v8070
      %8072 = vmatmul.f32.gmra.mxu0 %v8045
      %v8073 = vpop.f32.mrf.mxu0
      %v8074 = vadd.f32 %v8033, %v8073
      %8075 = vdwg.mxu0
      %v8076 = vmax.f32 %v8065, 0.0
      %v8077 = vmax.f32 %v8068, 0.0
      %v8078 = vmax.f32 %v8071, 0.0
      %v8079 = vmax.f32 %v8074, 0.0
      %v8080 = vld [vmem:[%s51] sm:$0xff]
      %v8081 = vld [vmem:[%s51 + $0x8] sm:$0xff]
      %v8082 = vld [vmem:[%s51 + $0x10] sm:$0xff]
      %v8083 = vld [vmem:[%s51 + $0x18] sm:$0xff]
      %v8084 = vld [vmem:[%s53] sm:$0xff]
      %v8085 = vld [vmem:[%s53 + $0x8] sm:$0xff]
      %v8086 = vld [vmem:[%s53 + $0x10] sm:$0xff]
      %v8087 = vld [vmem:[%s53 + $0x18] sm:$0xff]
      %8092 = vrot.lane.b32.xlu0 %v8076, 1
      %v8093 = vpop.permute.xlu0 %8092
      %8094 = vrot.lane.b32.xlu0 %v8077, 1
      %v8095 = vpop.permute.xlu0 %8094
      %8096 = vrot.lane.b32.xlu0 %v8078, 1
      %v8097 = vpop.permute.xlu0 %8096
      %8098 = vrot.lane.b32.xlu0 %v8079, 1
      %v8099 = vpop.permute.xlu0 %8098
      %v8104 = vsel %vm7114, 0.0, %v8093
      %v8105 = vsel %vm7114, 0.0, %v8095
      %v8106 = vsel %vm7114, 0.0, %v8097
      %v8107 = vsel %vm7114, 0.0, %v8099
      %8108 = vrot.lane.b32.xlu0 %v8076, 127
      %v8109 = vpop.permute.xlu0 %8108
      %8110 = vrot.lane.b32.xlu0 %v8077, 127
      %v8111 = vpop.permute.xlu0 %8110
      %8112 = vrot.lane.b32.xlu0 %v8078, 127
      %v8113 = vpop.permute.xlu0 %8112
      %8114 = vrot.lane.b32.xlu0 %v8079, 127
      %v8115 = vpop.permute.xlu0 %8114
      %v8120 = vsel %vm7793, %v8109, 0.0
      %v8121 = vsel %vm7793, %v8111, 0.0
      %v8122 = vsel %vm7793, %v8113, 0.0
      %v8123 = vsel %vm7793, %v8115, 0.0
      %8125 = vset.pattern.permute.xlu0 0
      %8126 = vperm.xlu0 %8125, %v8084
      %v8127 = vpop.permute.xlu0 %8126
      %8130 = vset.pattern.permute.xlu0 0
      %8131 = vperm.xlu0 %8130, %v8085
      %v8132 = vpop.permute.xlu0 %8131
      %8135 = vset.pattern.permute.xlu0 0
      %8136 = vperm.xlu0 %8135, %v8086
      %v8137 = vpop.permute.xlu0 %8136
      %8140 = vset.pattern.permute.xlu0 0
      %8141 = vperm.xlu0 %8140, %v8087
      %v8142 = vpop.permute.xlu0 %8141
      %v8145 = vsel %vm7925, %v8080, 0
      %v8148 = vsel %vm7925, %v8081, 0
      %v8151 = vsel %vm7925, %v8082, 0
      %v8154 = vsel %vm7925, %v8083, 0
      %8156 = vmatpush.msra.mxu0 0.0
      %8157 = vmatpush.msra.mxu0 0.0
      %8158 = vmatpush.msra.mxu0 0.0
      %8159 = vmatpush.msra.mxu0 0.0
      %8160 = vmatpush.msra.mxu0 %v8123
      %8161 = vmatpush.msra.mxu0 %v8122
      %8162 = vmatpush.msra.mxu0 %v8121
      %8163 = vmatpush.msra.mxu0 %v8120
      %8164 = vmatpush.msra.mxu0 %v8079
      %8165 = vmatpush.msra.mxu0 %v8078
      %8166 = vmatpush.msra.mxu0 %v8077
      %8167 = vmatpush.msra.mxu0 %v8076
      %8168 = vmatpush.msra.mxu0 %v8107
      %8169 = vmatpush.msra.mxu0 %v8106
      %8170 = vmatpush.msra.mxu0 %v8105
      %8171 = vmatpush.msra.mxu0 %v8104
      %8172 = vmatmul.f32.gmra.mxu0 %v8145
      %v8173 = vpop.f32.mrf.mxu0
      %v8174 = vadd.f32 %v8127, %v8173
      %8175 = vmatmul.f32.gmra.mxu0 %v8148
      %v8176 = vpop.f32.mrf.mxu0
      %v8177 = vadd.f32 %v8132, %v8176
      %8178 = vmatmul.f32.gmra.mxu0 %v8151
      %v8179 = vpop.f32.mrf.mxu0
      %v8180 = vadd.f32 %v8137, %v8179
      %8181 = vmatmul.f32.gmra.mxu0 %v8154
      %v8182 = vpop.f32.mrf.mxu0
      %v8183 = vadd.f32 %v8142, %v8182
      %8184 = vdwg.mxu0
      %v8185 = vmax.f32 %v8174, 0.0
      %v8186 = vmax.f32 %v8177, 0.0
      %v8187 = vmax.f32 %v8180, 0.0
      %v8188 = vmax.f32 %v8183, 0.0
      %8193 = vrot.lane.b32.xlu0 %v8185, 127
      %v8194 = vpop.permute.xlu0 %8193
      %8195 = vrot.lane.b32.xlu0 %v8186, 127
      %v8196 = vpop.permute.xlu0 %8195
      %8197 = vrot.lane.b32.xlu0 %v8187, 127
      %v8198 = vpop.permute.xlu0 %8197
      %8199 = vrot.lane.b32.xlu0 %v8188, 127
      %v8200 = vpop.permute.xlu0 %8199
      %v8205 = vsel %vm7793, %v8194, 0.0
      %v8206 = vsel %vm7793, %v8196, 0.0
      %v8207 = vsel %vm7793, %v8198, 0.0
      %v8208 = vsel %vm7793, %v8200, 0.0
      %v8209 = vmax.f32 %v8185, %v8205
      %v8210 = vmax.f32 %v8186, %v8206
      %v8211 = vmax.f32 %v8187, %v8207
      %v8212 = vmax.f32 %v8188, %v8208
      %8213 = vrot.lane.b32.xlu0 %v8185, 126
      %v8214 = vpop.permute.xlu0 %8213
      %8215 = vrot.lane.b32.xlu0 %v8186, 126
      %v8216 = vpop.permute.xlu0 %8215
      %8217 = vrot.lane.b32.xlu0 %v8187, 126
      %v8218 = vpop.permute.xlu0 %8217
      %8219 = vrot.lane.b32.xlu0 %v8188, 126
      %v8220 = vpop.permute.xlu0 %8219
      %vm8225 = vcmask 113664
      %v8226 = vsel %vm8225, %v8214, 0.0
      %v8227 = vsel %vm8225, %v8216, 0.0
      %v8228 = vsel %vm8225, %v8218, 0.0
      %v8229 = vsel %vm8225, %v8220, 0.0
      %8230 = vrot.lane.b32.xlu0 %v8185, 125
      %v8231 = vpop.permute.xlu0 %8230
      %8232 = vrot.lane.b32.xlu0 %v8186, 125
      %v8233 = vpop.permute.xlu0 %8232
      %8234 = vrot.lane.b32.xlu0 %v8187, 125
      %v8235 = vpop.permute.xlu0 %8234
      %8236 = vrot.lane.b32.xlu0 %v8188, 125
      %v8237 = vpop.permute.xlu0 %8236
      %vm8242 = vcmask 105472
      %v8243 = vsel %vm8242, %v8231, 0.0
      %v8244 = vsel %vm8242, %v8233, 0.0
      %v8245 = vsel %vm8242, %v8235, 0.0
      %v8246 = vsel %vm8242, %v8237, 0.0
      %v8247 = vmax.f32 %v8226, %v8243
      %v8248 = vmax.f32 %v8227, %v8244
      %v8249 = vmax.f32 %v8228, %v8245
      %v8250 = vmax.f32 %v8229, %v8246
      %v8251 = vmax.f32 %v8209, %v8247
      %v8252 = vmax.f32 %v8210, %v8248
      %v8253 = vmax.f32 %v8211, %v8249
      %v8254 = vmax.f32 %v8212, %v8250
      %vm8255 = vcmask 130048
      %v8257 = vsel %vm8255, %v8251, 0
      %v8260 = vsel %vm8255, %v8252, 0
      %v8263 = vsel %vm8255, %v8253, 0
      %v8266 = vsel %vm8255, %v8254, 0
      %8268 = vmatpush.msra.mxu0 0.0
      %8269 = vmatpush.msra.mxu0 0.0
      %8270 = vmatpush.msra.mxu0 0.0
      %8271 = vmatpush.msra.mxu0 0.0
      %8272 = vmatpush.msra.mxu0 0.0
      %8273 = vmatpush.msra.mxu0 0.0
      %8274 = vmatpush.msra.mxu0 0.0
      %8275 = vmatpush.msra.mxu0 0.0
      %8276 = vmatpush.msra.mxu0 0.0
      %8277 = vmatpush.msra.mxu0 0.0
      %8278 = vmatpush.msra.mxu0 0.0
      %8279 = vmatpush.msra.mxu0 0.0
      %8280 = vmatpush.msra.mxu0 0.0
      %8281 = vmatpush.msra.mxu0 0.0
      %8282 = vmatpush.msra.mxu0 %v6532
      %8283 = vmatpush.msra.mxu0 %v6530
      %8284 = vmatmul.f32.gmra.mxu0 %v8257
      %v8285 = vpop.f32.mrf.mxu0
      %v8286 = vadd.f32 0.0, %v8285
      %8287 = vmatmul.f32.gmra.mxu0 %v8260
      %v8288 = vpop.f32.mrf.mxu0
      %v8289 = vadd.f32 0.0, %v8288
      %8290 = vmatmul.f32.gmra.mxu0 %v8263
      %v8291 = vpop.f32.mrf.mxu0
      %v8292 = vadd.f32 0.0, %v8291
      %8293 = vmatmul.f32.gmra.mxu0 %v8266
      %v8294 = vpop.f32.mrf.mxu0
      %v8295 = vadd.f32 0.0, %v8294
      %8296 = vdwg.mxu0
      %v8297 = vld [vmem:[%s55] sm:$0xff]
      %v8298 = vld [vmem:[%s55 + $0x8] sm:$0xff]
      %v8299 = vld [vmem:[%s55 + $0x10] sm:$0xff]
      %v8300 = vld [vmem:[%s55 + $0x18] sm:$0xff]
      %v8301 = vld [vmem:[%s55 + $0x20] sm:$0xff]
      %v8302 = vld [vmem:[%s55 + $0x28] sm:$0xff]
      %v8303 = vld [vmem:[%s55 + $0x30] sm:$0xff]
      %v8304 = vld [vmem:[%s55 + $0x38] sm:$0xff]
      %v8305 = vld [vmem:[%s57] sm:$0xff]
      %v8306 = vld [vmem:[%s57 + $0x8] sm:$0xff]
      %v8307 = vld [vmem:[%s57 + $0x10] sm:$0xff]
      %v8308 = vld [vmem:[%s57 + $0x18] sm:$0xff]
      %v8309 = vld [vmem:[%s57 + $0x20] sm:$0xff]
      %v8310 = vld [vmem:[%s57 + $0x28] sm:$0xff]
      %v8311 = vld [vmem:[%s57 + $0x30] sm:$0xff]
      %v8312 = vld [vmem:[%s57 + $0x38] sm:$0xff]
      %8317 = vrot.lane.b32.xlu0 %v8286, 1
      %v8318 = vpop.permute.xlu0 %8317
      %8319 = vrot.lane.b32.xlu0 %v8289, 1
      %v8320 = vpop.permute.xlu0 %8319
      %8321 = vrot.lane.b32.xlu0 %v8292, 1
      %v8322 = vpop.permute.xlu0 %8321
      %8323 = vrot.lane.b32.xlu0 %v8295, 1
      %v8324 = vpop.permute.xlu0 %8323
      %v8329 = vsel %vm7114, 0.0, %v8318
      %v8330 = vsel %vm7114, 0.0, %v8320
      %v8331 = vsel %vm7114, 0.0, %v8322
      %v8332 = vsel %vm7114, 0.0, %v8324
      %8333 = vrot.lane.b32.xlu0 %v8286, 127
      %v8334 = vpop.permute.xlu0 %8333
      %8335 = vrot.lane.b32.xlu0 %v8289, 127
      %v8336 = vpop.permute.xlu0 %8335
      %8337 = vrot.lane.b32.xlu0 %v8292, 127
      %v8338 = vpop.permute.xlu0 %8337
      %8339 = vrot.lane.b32.xlu0 %v8295, 127
      %v8340 = vpop.permute.xlu0 %8339
      %vm8345 = vcmask 23552
      %v8346 = vsel %vm8345, %v8334, 0.0
      %v8347 = vsel %vm8345, %v8336, 0.0
      %v8348 = vsel %vm8345, %v8338, 0.0
      %v8349 = vsel %vm8345, %v8340, 0.0
      %8351 = vset.pattern.permute.xlu0 0
      %8352 = vperm.xlu0 %8351, %v8305
      %v8353 = vpop.permute.xlu0 %8352
      %8356 = vset.pattern.permute.xlu0 0
      %8357 = vperm.xlu0 %8356, %v8306
      %v8358 = vpop.permute.xlu0 %8357
      %8361 = vset.pattern.permute.xlu0 0
      %8362 = vperm.xlu0 %8361, %v8307
      %v8363 = vpop.permute.xlu0 %8362
      %8366 = vset.pattern.permute.xlu0 0
      %8367 = vperm.xlu0 %8366, %v8308
      %v8368 = vpop.permute.xlu0 %8367
      %8371 = vset.pattern.permute.xlu0 0
      %8372 = vperm.xlu0 %8371, %v8309
      %v8373 = vpop.permute.xlu0 %8372
      %8376 = vset.pattern.permute.xlu0 0
      %8377 = vperm.xlu0 %8376, %v8310
      %v8378 = vpop.permute.xlu0 %8377
      %8381 = vset.pattern.permute.xlu0 0
      %8382 = vperm.xlu0 %8381, %v8311
      %v8383 = vpop.permute.xlu0 %8382
      %8386 = vset.pattern.permute.xlu0 0
      %8387 = vperm.xlu0 %8386, %v8312
      %v8388 = vpop.permute.xlu0 %8387
      %v8391 = vsel %vm7925, %v8297, 0
      %v8394 = vsel %vm7925, %v8298, 0
      %v8397 = vsel %vm7925, %v8299, 0
      %v8400 = vsel %vm7925, %v8300, 0
      %v8403 = vsel %vm7925, %v8301, 0
      %v8406 = vsel %vm7925, %v8302, 0
      %v8409 = vsel %vm7925, %v8303, 0
      %v8412 = vsel %vm7925, %v8304, 0
      %8414 = vmatpush.msra.mxu0 0.0
      %8415 = vmatpush.msra.mxu0 0.0
      %8416 = vmatpush.msra.mxu0 0.0
      %8417 = vmatpush.msra.mxu0 0.0
      %8418 = vmatpush.msra.mxu0 %v8349
      %8419 = vmatpush.msra.mxu0 %v8348
      %8420 = vmatpush.msra.mxu0 %v8347
      %8421 = vmatpush.msra.mxu0 %v8346
      %8422 = vmatpush.msra.mxu0 %v8295
      %8423 = vmatpush.msra.mxu0 %v8292
      %8424 = vmatpush.msra.mxu0 %v8289
      %8425 = vmatpush.msra.mxu0 %v8286
      %8426 = vmatpush.msra.mxu0 %v8332
      %8427 = vmatpush.msra.mxu0 %v8331
      %8428 = vmatpush.msra.mxu0 %v8330
      %8429 = vmatpush.msra.mxu0 %v8329
      %8430 = vmatmul.f32.gmra.mxu0 %v8391
      %v8431 = vpop.f32.mrf.mxu0
      %v8432 = vadd.f32 %v8353, %v8431
      %8433 = vmatmul.f32.gmra.mxu0 %v8394
      %v8434 = vpop.f32.mrf.mxu0
      %v8435 = vadd.f32 %v8358, %v8434
      %8436 = vmatmul.f32.gmra.mxu0 %v8397
      %v8437 = vpop.f32.mrf.mxu0
      %v8438 = vadd.f32 %v8363, %v8437
      %8439 = vmatmul.f32.gmra.mxu0 %v8400
      %v8440 = vpop.f32.mrf.mxu0
      %v8441 = vadd.f32 %v8368, %v8440
      %8442 = vmatmul.f32.gmra.mxu0 %v8403
      %v8443 = vpop.f32.mrf.mxu0
      %v8444 = vadd.f32 %v8373, %v8443
      %8445 = vmatmul.f32.gmra.mxu0 %v8406
      %v8446 = vpop.f32.mrf.mxu0
      %v8447 = vadd.f32 %v8378, %v8446
      %8448 = vmatmul.f32.gmra.mxu0 %v8409
      %v8449 = vpop.f32.mrf.mxu0
      %v8450 = vadd.f32 %v8383, %v8449
      %8451 = vmatmul.f32.gmra.mxu0 %v8412
      %v8452 = vpop.f32.mrf.mxu0
      %v8453 = vadd.f32 %v8388, %v8452
      %8454 = vdwg.mxu0
      %v8455 = vmax.f32 %v8432, 0.0
      %v8456 = vmax.f32 %v8435, 0.0
      %v8457 = vmax.f32 %v8438, 0.0
      %v8458 = vmax.f32 %v8441, 0.0
      %v8459 = vmax.f32 %v8444, 0.0
      %v8460 = vmax.f32 %v8447, 0.0
      %v8461 = vmax.f32 %v8450, 0.0
      %v8462 = vmax.f32 %v8453, 0.0
      %v8463 = vld [vmem:[%s59] sm:$0xff]
      %v8464 = vld [vmem:[%s59 + $0x8] sm:$0xff]
      %v8465 = vld [vmem:[%s59 + $0x10] sm:$0xff]
      %v8466 = vld [vmem:[%s59 + $0x18] sm:$0xff]
      %v8467 = vld [vmem:[%s59 + $0x20] sm:$0xff]
      %v8468 = vld [vmem:[%s59 + $0x28] sm:$0xff]
      %v8469 = vld [vmem:[%s59 + $0x30] sm:$0xff]
      %v8470 = vld [vmem:[%s59 + $0x38] sm:$0xff]
      %v8471 = vld [vmem:[%s59 + $0x40] sm:$0xff]
      %v8472 = vld [vmem:[%s59 + $0x48] sm:$0xff]
      %v8473 = vld [vmem:[%s59 + $0x50] sm:$0xff]
      %v8474 = vld [vmem:[%s59 + $0x58] sm:$0xff]
      %v8475 = vld [vmem:[%s59 + $0x60] sm:$0xff]
      %v8476 = vld [vmem:[%s59 + $0x68] sm:$0xff]
      %v8477 = vld [vmem:[%s59 + $0x70] sm:$0xff]
      %v8478 = vld [vmem:[%s59 + $0x78] sm:$0xff]
      %v8479 = vld [vmem:[%s61] sm:$0xff]
      %v8480 = vld [vmem:[%s61 + $0x8] sm:$0xff]
      %v8481 = vld [vmem:[%s61 + $0x10] sm:$0xff]
      %v8482 = vld [vmem:[%s61 + $0x18] sm:$0xff]
      %v8483 = vld [vmem:[%s61 + $0x20] sm:$0xff]
      %v8484 = vld [vmem:[%s61 + $0x28] sm:$0xff]
      %v8485 = vld [vmem:[%s61 + $0x30] sm:$0xff]
      %v8486 = vld [vmem:[%s61 + $0x38] sm:$0xff]
      %8495 = vrot.lane.b32.xlu0 %v8455, 1
      %v8496 = vpop.permute.xlu0 %8495
      %8497 = vrot.lane.b32.xlu0 %v8456, 1
      %v8498 = vpop.permute.xlu0 %8497
      %8499 = vrot.lane.b32.xlu0 %v8457, 1
      %v8500 = vpop.permute.xlu0 %8499
      %8501 = vrot.lane.b32.xlu0 %v8458, 1
      %v8502 = vpop.permute.xlu0 %8501
      %8503 = vrot.lane.b32.xlu0 %v8459, 1
      %v8504 = vpop.permute.xlu0 %8503
      %8505 = vrot.lane.b32.xlu0 %v8460, 1
      %v8506 = vpop.permute.xlu0 %8505
      %8507 = vrot.lane.b32.xlu0 %v8461, 1
      %v8508 = vpop.permute.xlu0 %8507
      %8509 = vrot.lane.b32.xlu0 %v8462, 1
      %v8510 = vpop.permute.xlu0 %8509
      %v8519 = vsel %vm7114, 0.0, %v8496
      %v8520 = vsel %vm7114, 0.0, %v8498
      %v8521 = vsel %vm7114, 0.0, %v8500
      %v8522 = vsel %vm7114, 0.0, %v8502
      %v8523 = vsel %vm7114, 0.0, %v8504
      %v8524 = vsel %vm7114, 0.0, %v8506
      %v8525 = vsel %vm7114, 0.0, %v8508
      %v8526 = vsel %vm7114, 0.0, %v8510
      %8527 = vrot.lane.b32.xlu0 %v8455, 127
      %v8528 = vpop.permute.xlu0 %8527
      %8529 = vrot.lane.b32.xlu0 %v8456, 127
      %v8530 = vpop.permute.xlu0 %8529
      %8531 = vrot.lane.b32.xlu0 %v8457, 127
      %v8532 = vpop.permute.xlu0 %8531
      %8533 = vrot.lane.b32.xlu0 %v8458, 127
      %v8534 = vpop.permute.xlu0 %8533
      %8535 = vrot.lane.b32.xlu0 %v8459, 127
      %v8536 = vpop.permute.xlu0 %8535
      %8537 = vrot.lane.b32.xlu0 %v8460, 127
      %v8538 = vpop.permute.xlu0 %8537
      %8539 = vrot.lane.b32.xlu0 %v8461, 127
      %v8540 = vpop.permute.xlu0 %8539
      %8541 = vrot.lane.b32.xlu0 %v8462, 127
      %v8542 = vpop.permute.xlu0 %8541
      %v8551 = vsel %vm8345, %v8528, 0.0
      %v8552 = vsel %vm8345, %v8530, 0.0
      %v8553 = vsel %vm8345, %v8532, 0.0
      %v8554 = vsel %vm8345, %v8534, 0.0
      %v8555 = vsel %vm8345, %v8536, 0.0
      %v8556 = vsel %vm8345, %v8538, 0.0
      %v8557 = vsel %vm8345, %v8540, 0.0
      %v8558 = vsel %vm8345, %v8542, 0.0
      %8560 = vset.pattern.permute.xlu0 0
      %8561 = vperm.xlu0 %8560, %v8479
      %v8562 = vpop.permute.xlu0 %8561
      %8565 = vset.pattern.permute.xlu0 0
      %8566 = vperm.xlu0 %8565, %v8480
      %v8567 = vpop.permute.xlu0 %8566
      %8570 = vset.pattern.permute.xlu0 0
      %8571 = vperm.xlu0 %8570, %v8481
      %v8572 = vpop.permute.xlu0 %8571
      %8575 = vset.pattern.permute.xlu0 0
      %8576 = vperm.xlu0 %8575, %v8482
      %v8577 = vpop.permute.xlu0 %8576
      %8580 = vset.pattern.permute.xlu0 0
      %8581 = vperm.xlu0 %8580, %v8483
      %v8582 = vpop.permute.xlu0 %8581
      %8585 = vset.pattern.permute.xlu0 0
      %8586 = vperm.xlu0 %8585, %v8484
      %v8587 = vpop.permute.xlu0 %8586
      %8590 = vset.pattern.permute.xlu0 0
      %8591 = vperm.xlu0 %8590, %v8485
      %v8592 = vpop.permute.xlu0 %8591
      %8595 = vset.pattern.permute.xlu0 0
      %8596 = vperm.xlu0 %8595, %v8486
      %v8597 = vpop.permute.xlu0 %8596
      %v8600 = vsel %vm7739, %v8464, 0
      %v8603 = vsel %vm7739, %v8466, 0
      %v8606 = vsel %vm7739, %v8468, 0
      %v8609 = vsel %vm7739, %v8470, 0
      %v8612 = vsel %vm7739, %v8472, 0
      %v8615 = vsel %vm7739, %v8474, 0
      %v8618 = vsel %vm7739, %v8476, 0
      %v8621 = vsel %vm7739, %v8478, 0
      %8623 = vmatpush.msra.mxu0 %v8462
      %8624 = vmatpush.msra.mxu0 %v8461
      %8625 = vmatpush.msra.mxu0 %v8460
      %8626 = vmatpush.msra.mxu0 %v8459
      %8627 = vmatpush.msra.mxu0 %v8458
      %8628 = vmatpush.msra.mxu0 %v8457
      %8629 = vmatpush.msra.mxu0 %v8456
      %8630 = vmatpush.msra.mxu0 %v8455
      %8631 = vmatpush.msra.mxu0 %v8526
      %8632 = vmatpush.msra.mxu0 %v8525
      %8633 = vmatpush.msra.mxu0 %v8524
      %8634 = vmatpush.msra.mxu0 %v8523
      %8635 = vmatpush.msra.mxu0 %v8522
      %8636 = vmatpush.msra.mxu0 %v8521
      %8637 = vmatpush.msra.mxu0 %v8520
      %8638 = vmatpush.msra.mxu0 %v8519
      %8639 = vmatmul.f32.gmra.mxu0 %v8463
      %v8640 = vpop.f32.mrf.mxu0
      %v8641 = vadd.f32 %v8562, %v8640
      %8642 = vmatmul.f32.gmra.mxu0 %v8465
      %v8643 = vpop.f32.mrf.mxu0
      %v8644 = vadd.f32 %v8567, %v8643
      %8645 = vmatmul.f32.gmra.mxu0 %v8467
      %v8646 = vpop.f32.mrf.mxu0
      %v8647 = vadd.f32 %v8572, %v8646
      %8648 = vmatmul.f32.gmra.mxu0 %v8469
      %v8649 = vpop.f32.mrf.mxu0
      %v8650 = vadd.f32 %v8577, %v8649
      %8651 = vmatmul.f32.gmra.mxu0 %v8471
      %v8652 = vpop.f32.mrf.mxu0
      %v8653 = vadd.f32 %v8582, %v8652
      %8654 = vmatmul.f32.gmra.mxu0 %v8473
      %v8655 = vpop.f32.mrf.mxu0
      %v8656 = vadd.f32 %v8587, %v8655
      %8657 = vmatmul.f32.gmra.mxu0 %v8475
      %v8658 = vpop.f32.mrf.mxu0
      %v8659 = vadd.f32 %v8592, %v8658
      %8660 = vmatmul.f32.gmra.mxu0 %v8477
      %v8661 = vpop.f32.mrf.mxu0
      %v8662 = vadd.f32 %v8597, %v8661
      %8663 = vdwg.mxu0
      %8664 = vmatpush.msra.mxu0 0.0
      %8665 = vmatpush.msra.mxu0 0.0
      %8666 = vmatpush.msra.mxu0 0.0
      %8667 = vmatpush.msra.mxu0 0.0
      %8668 = vmatpush.msra.mxu0 0.0
      %8669 = vmatpush.msra.mxu0 0.0
      %8670 = vmatpush.msra.mxu0 0.0
      %8671 = vmatpush.msra.mxu0 0.0
      %8672 = vmatpush.msra.mxu0 %v8558
      %8673 = vmatpush.msra.mxu0 %v8557
      %8674 = vmatpush.msra.mxu0 %v8556
      %8675 = vmatpush.msra.mxu0 %v8555
      %8676 = vmatpush.msra.mxu0 %v8554
      %8677 = vmatpush.msra.mxu0 %v8553
      %8678 = vmatpush.msra.mxu0 %v8552
      %8679 = vmatpush.msra.mxu0 %v8551
      %8680 = vmatmul.f32.gmra.mxu0 %v8600
      %v8681 = vpop.f32.mrf.mxu0
      %v8682 = vadd.f32 %v8641, %v8681
      %8683 = vmatmul.f32.gmra.mxu0 %v8603
      %v8684 = vpop.f32.mrf.mxu0
      %v8685 = vadd.f32 %v8644, %v8684
      %8686 = vmatmul.f32.gmra.mxu0 %v8606
      %v8687 = vpop.f32.mrf.mxu0
      %v8688 = vadd.f32 %v8647, %v8687
      %8689 = vmatmul.f32.gmra.mxu0 %v8609
      %v8690 = vpop.f32.mrf.mxu0
      %v8691 = vadd.f32 %v8650, %v8690
      %8692 = vmatmul.f32.gmra.mxu0 %v8612
      %v8693 = vpop.f32.mrf.mxu0
      %v8694 = vadd.f32 %v8653, %v8693
      %8695 = vmatmul.f32.gmra.mxu0 %v8615
      %v8696 = vpop.f32.mrf.mxu0
      %v8697 = vadd.f32 %v8656, %v8696
      %8698 = vmatmul.f32.gmra.mxu0 %v8618
      %v8699 = vpop.f32.mrf.mxu0
      %v8700 = vadd.f32 %v8659, %v8699
      %8701 = vmatmul.f32.gmra.mxu0 %v8621
      %v8702 = vpop.f32.mrf.mxu0
      %v8703 = vadd.f32 %v8662, %v8702
      %8704 = vdwg.mxu0
      %v8705 = vmax.f32 %v8682, 0.0
      %v8706 = vmax.f32 %v8685, 0.0
      %v8707 = vmax.f32 %v8688, 0.0
      %v8708 = vmax.f32 %v8691, 0.0
      %v8709 = vmax.f32 %v8694, 0.0
      %v8710 = vmax.f32 %v8697, 0.0
      %v8711 = vmax.f32 %v8700, 0.0
      %v8712 = vmax.f32 %v8703, 0.0
      %v8713 = vld [vmem:[%s63] sm:$0xff]
      %v8714 = vld [vmem:[%s63 + $0x8] sm:$0xff]
      %v8715 = vld [vmem:[%s63 + $0x10] sm:$0xff]
      %v8716 = vld [vmem:[%s63 + $0x18] sm:$0xff]
      %v8717 = vld [vmem:[%s63 + $0x20] sm:$0xff]
      %v8718 = vld [vmem:[%s63 + $0x28] sm:$0xff]
      %v8719 = vld [vmem:[%s63 + $0x30] sm:$0xff]
      %v8720 = vld [vmem:[%s63 + $0x38] sm:$0xff]
      %v8721 = vld [vmem:[%s63 + $0x40] sm:$0xff]
      %v8722 = vld [vmem:[%s63 + $0x48] sm:$0xff]
      %v8723 = vld [vmem:[%s63 + $0x50] sm:$0xff]
      %v8724 = vld [vmem:[%s63 + $0x58] sm:$0xff]
      %v8725 = vld [vmem:[%s63 + $0x60] sm:$0xff]
      %v8726 = vld [vmem:[%s63 + $0x68] sm:$0xff]
      %v8727 = vld [vmem:[%s63 + $0x70] sm:$0xff]
      %v8728 = vld [vmem:[%s63 + $0x78] sm:$0xff]
      %v8729 = vld [vmem:[%s65] sm:$0xff]
      %v8730 = vld [vmem:[%s65 + $0x8] sm:$0xff]
      %v8731 = vld [vmem:[%s65 + $0x10] sm:$0xff]
      %v8732 = vld [vmem:[%s65 + $0x18] sm:$0xff]
      %v8733 = vld [vmem:[%s65 + $0x20] sm:$0xff]
      %v8734 = vld [vmem:[%s65 + $0x28] sm:$0xff]
      %v8735 = vld [vmem:[%s65 + $0x30] sm:$0xff]
      %v8736 = vld [vmem:[%s65 + $0x38] sm:$0xff]
      %8745 = vrot.lane.b32.xlu0 %v8705, 1
      %v8746 = vpop.permute.xlu0 %8745
      %8747 = vrot.lane.b32.xlu0 %v8706, 1
      %v8748 = vpop.permute.xlu0 %8747
      %8749 = vrot.lane.b32.xlu0 %v8707, 1
      %v8750 = vpop.permute.xlu0 %8749
      %8751 = vrot.lane.b32.xlu0 %v8708, 1
      %v8752 = vpop.permute.xlu0 %8751
      %8753 = vrot.lane.b32.xlu0 %v8709, 1
      %v8754 = vpop.permute.xlu0 %8753
      %8755 = vrot.lane.b32.xlu0 %v8710, 1
      %v8756 = vpop.permute.xlu0 %8755
      %8757 = vrot.lane.b32.xlu0 %v8711, 1
      %v8758 = vpop.permute.xlu0 %8757
      %8759 = vrot.lane.b32.xlu0 %v8712, 1
      %v8760 = vpop.permute.xlu0 %8759
      %v8769 = vsel %vm7114, 0.0, %v8746
      %v8770 = vsel %vm7114, 0.0, %v8748
      %v8771 = vsel %vm7114, 0.0, %v8750
      %v8772 = vsel %vm7114, 0.0, %v8752
      %v8773 = vsel %vm7114, 0.0, %v8754
      %v8774 = vsel %vm7114, 0.0, %v8756
      %v8775 = vsel %vm7114, 0.0, %v8758
      %v8776 = vsel %vm7114, 0.0, %v8760
      %8777 = vrot.lane.b32.xlu0 %v8705, 127
      %v8778 = vpop.permute.xlu0 %8777
      %8779 = vrot.lane.b32.xlu0 %v8706, 127
      %v8780 = vpop.permute.xlu0 %8779
      %8781 = vrot.lane.b32.xlu0 %v8707, 127
      %v8782 = vpop.permute.xlu0 %8781
      %8783 = vrot.lane.b32.xlu0 %v8708, 127
      %v8784 = vpop.permute.xlu0 %8783
      %8785 = vrot.lane.b32.xlu0 %v8709, 127
      %v8786 = vpop.permute.xlu0 %8785
      %8787 = vrot.lane.b32.xlu0 %v8710, 127
      %v8788 = vpop.permute.xlu0 %8787
      %8789 = vrot.lane.b32.xlu0 %v8711, 127
      %v8790 = vpop.permute.xlu0 %8789
      %8791 = vrot.lane.b32.xlu0 %v8712, 127
      %v8792 = vpop.permute.xlu0 %8791
      %v8801 = vsel %vm8345, %v8778, 0.0
      %v8802 = vsel %vm8345, %v8780, 0.0
      %v8803 = vsel %vm8345, %v8782, 0.0
      %v8804 = vsel %vm8345, %v8784, 0.0
      %v8805 = vsel %vm8345, %v8786, 0.0
      %v8806 = vsel %vm8345, %v8788, 0.0
      %v8807 = vsel %vm8345, %v8790, 0.0
      %v8808 = vsel %vm8345, %v8792, 0.0
      %8810 = vset.pattern.permute.xlu0 0
      %8811 = vperm.xlu0 %8810, %v8729
      %v8812 = vpop.permute.xlu0 %8811
      %8815 = vset.pattern.permute.xlu0 0
      %8816 = vperm.xlu0 %8815, %v8730
      %v8817 = vpop.permute.xlu0 %8816
      %8820 = vset.pattern.permute.xlu0 0
      %8821 = vperm.xlu0 %8820, %v8731
      %v8822 = vpop.permute.xlu0 %8821
      %8825 = vset.pattern.permute.xlu0 0
      %8826 = vperm.xlu0 %8825, %v8732
      %v8827 = vpop.permute.xlu0 %8826
      %8830 = vset.pattern.permute.xlu0 0
      %8831 = vperm.xlu0 %8830, %v8733
      %v8832 = vpop.permute.xlu0 %8831
      %8835 = vset.pattern.permute.xlu0 0
      %8836 = vperm.xlu0 %8835, %v8734
      %v8837 = vpop.permute.xlu0 %8836
      %8840 = vset.pattern.permute.xlu0 0
      %8841 = vperm.xlu0 %8840, %v8735
      %v8842 = vpop.permute.xlu0 %8841
      %8845 = vset.pattern.permute.xlu0 0
      %8846 = vperm.xlu0 %8845, %v8736
      %v8847 = vpop.permute.xlu0 %8846
      %v8850 = vsel %vm7739, %v8714, 0
      %v8853 = vsel %vm7739, %v8716, 0
      %v8856 = vsel %vm7739, %v8718, 0
      %v8859 = vsel %vm7739, %v8720, 0
      %v8862 = vsel %vm7739, %v8722, 0
      %v8865 = vsel %vm7739, %v8724, 0
      %v8868 = vsel %vm7739, %v8726, 0
      %v8871 = vsel %vm7739, %v8728, 0
      %8873 = vmatpush.msra.mxu0 %v8712
      %8874 = vmatpush.msra.mxu0 %v8711
      %8875 = vmatpush.msra.mxu0 %v8710
      %8876 = vmatpush.msra.mxu0 %v8709
      %8877 = vmatpush.msra.mxu0 %v8708
      %8878 = vmatpush.msra.mxu0 %v8707
      %8879 = vmatpush.msra.mxu0 %v8706
      %8880 = vmatpush.msra.mxu0 %v8705
      %8881 = vmatpush.msra.mxu0 %v8776
      %8882 = vmatpush.msra.mxu0 %v8775
      %8883 = vmatpush.msra.mxu0 %v8774
      %8884 = vmatpush.msra.mxu0 %v8773
      %8885 = vmatpush.msra.mxu0 %v8772
      %8886 = vmatpush.msra.mxu0 %v8771
      %8887 = vmatpush.msra.mxu0 %v8770
      %8888 = vmatpush.msra.mxu0 %v8769
      %8889 = vmatmul.f32.gmra.mxu0 %v8713
      %v8890 = vpop.f32.mrf.mxu0
      %v8891 = vadd.f32 %v8812, %v8890
      %8892 = vmatmul.f32.gmra.mxu0 %v8715
      %v8893 = vpop.f32.mrf.mxu0
      %v8894 = vadd.f32 %v8817, %v8893
      %8895 = vmatmul.f32.gmra.mxu0 %v8717
      %v8896 = vpop.f32.mrf.mxu0
      %v8897 = vadd.f32 %v8822, %v8896
      %8898 = vmatmul.f32.gmra.mxu0 %v8719
      %v8899 = vpop.f32.mrf.mxu0
      %v8900 = vadd.f32 %v8827, %v8899
      %8901 = vmatmul.f32.gmra.mxu0 %v8721
      %v8902 = vpop.f32.mrf.mxu0
      %v8903 = vadd.f32 %v8832, %v8902
      %8904 = vmatmul.f32.gmra.mxu0 %v8723
      %v8905 = vpop.f32.mrf.mxu0
      %v8906 = vadd.f32 %v8837, %v8905
      %8907 = vmatmul.f32.gmra.mxu0 %v8725
      %v8908 = vpop.f32.mrf.mxu0
      %v8909 = vadd.f32 %v8842, %v8908
      %8910 = vmatmul.f32.gmra.mxu0 %v8727
      %v8911 = vpop.f32.mrf.mxu0
      %v8912 = vadd.f32 %v8847, %v8911
      %8913 = vdwg.mxu0
      %8914 = vmatpush.msra.mxu0 0.0
      %8915 = vmatpush.msra.mxu0 0.0
      %8916 = vmatpush.msra.mxu0 0.0
      %8917 = vmatpush.msra.mxu0 0.0
      %8918 = vmatpush.msra.mxu0 0.0
      %8919 = vmatpush.msra.mxu0 0.0
      %8920 = vmatpush.msra.mxu0 0.0
      %8921 = vmatpush.msra.mxu0 0.0
      %8922 = vmatpush.msra.mxu0 %v8808
      %8923 = vmatpush.msra.mxu0 %v8807
      %8924 = vmatpush.msra.mxu0 %v8806
      %8925 = vmatpush.msra.mxu0 %v8805
      %8926 = vmatpush.msra.mxu0 %v8804
      %8927 = vmatpush.msra.mxu0 %v8803
      %8928 = vmatpush.msra.mxu0 %v8802
      %8929 = vmatpush.msra.mxu0 %v8801
      %8930 = vmatmul.f32.gmra.mxu0 %v8850
      %v8931 = vpop.f32.mrf.mxu0
      %v8932 = vadd.f32 %v8891, %v8931
      %8933 = vmatmul.f32.gmra.mxu0 %v8853
      %v8934 = vpop.f32.mrf.mxu0
      %v8935 = vadd.f32 %v8894, %v8934
      %8936 = vmatmul.f32.gmra.mxu0 %v8856
      %v8937 = vpop.f32.mrf.mxu0
      %v8938 = vadd.f32 %v8897, %v8937
      %8939 = vmatmul.f32.gmra.mxu0 %v8859
      %v8940 = vpop.f32.mrf.mxu0
      %v8941 = vadd.f32 %v8900, %v8940
      %8942 = vmatmul.f32.gmra.mxu0 %v8862
      %v8943 = vpop.f32.mrf.mxu0
      %v8944 = vadd.f32 %v8903, %v8943
      %8945 = vmatmul.f32.gmra.mxu0 %v8865
      %v8946 = vpop.f32.mrf.mxu0
      %v8947 = vadd.f32 %v8906, %v8946
      %8948 = vmatmul.f32.gmra.mxu0 %v8868
      %v8949 = vpop.f32.mrf.mxu0
      %v8950 = vadd.f32 %v8909, %v8949
      %8951 = vmatmul.f32.gmra.mxu0 %v8871
      %v8952 = vpop.f32.mrf.mxu0
      %v8953 = vadd.f32 %v8912, %v8952
      %8954 = vdwg.mxu0
      %v8955 = vmax.f32 %v8932, 0.0
      %v8956 = vmax.f32 %v8935, 0.0
      %v8957 = vmax.f32 %v8938, 0.0
      %v8958 = vmax.f32 %v8941, 0.0
      %v8959 = vmax.f32 %v8944, 0.0
      %v8960 = vmax.f32 %v8947, 0.0
      %v8961 = vmax.f32 %v8950, 0.0
      %v8962 = vmax.f32 %v8953, 0.0
      %v8963 = vld [vmem:[%s67] sm:$0xff]
      %v8964 = vld [vmem:[%s67 + $0x8] sm:$0xff]
      %v8965 = vld [vmem:[%s67 + $0x10] sm:$0xff]
      %v8966 = vld [vmem:[%s67 + $0x18] sm:$0xff]
      %v8967 = vld [vmem:[%s67 + $0x20] sm:$0xff]
      %v8968 = vld [vmem:[%s67 + $0x28] sm:$0xff]
      %v8969 = vld [vmem:[%s67 + $0x30] sm:$0xff]
      %v8970 = vld [vmem:[%s67 + $0x38] sm:$0xff]
      %v8971 = vld [vmem:[%s67 + $0x40] sm:$0xff]
      %v8972 = vld [vmem:[%s67 + $0x48] sm:$0xff]
      %v8973 = vld [vmem:[%s67 + $0x50] sm:$0xff]
      %v8974 = vld [vmem:[%s67 + $0x58] sm:$0xff]
      %v8975 = vld [vmem:[%s67 + $0x60] sm:$0xff]
      %v8976 = vld [vmem:[%s67 + $0x68] sm:$0xff]
      %v8977 = vld [vmem:[%s67 + $0x70] sm:$0xff]
      %v8978 = vld [vmem:[%s67 + $0x78] sm:$0xff]
      %v8979 = vld [vmem:[%s69] sm:$0xff]
      %v8980 = vld [vmem:[%s69 + $0x8] sm:$0xff]
      %v8981 = vld [vmem:[%s69 + $0x10] sm:$0xff]
      %v8982 = vld [vmem:[%s69 + $0x18] sm:$0xff]
      %v8983 = vld [vmem:[%s69 + $0x20] sm:$0xff]
      %v8984 = vld [vmem:[%s69 + $0x28] sm:$0xff]
      %v8985 = vld [vmem:[%s69 + $0x30] sm:$0xff]
      %v8986 = vld [vmem:[%s69 + $0x38] sm:$0xff]
      %8995 = vrot.lane.b32.xlu0 %v8955, 1
      %v8996 = vpop.permute.xlu0 %8995
      %8997 = vrot.lane.b32.xlu0 %v8956, 1
      %v8998 = vpop.permute.xlu0 %8997
      %8999 = vrot.lane.b32.xlu0 %v8957, 1
      %v9000 = vpop.permute.xlu0 %8999
      %9001 = vrot.lane.b32.xlu0 %v8958, 1
      %v9002 = vpop.permute.xlu0 %9001
      %9003 = vrot.lane.b32.xlu0 %v8959, 1
      %v9004 = vpop.permute.xlu0 %9003
      %9005 = vrot.lane.b32.xlu0 %v8960, 1
      %v9006 = vpop.permute.xlu0 %9005
      %9007 = vrot.lane.b32.xlu0 %v8961, 1
      %v9008 = vpop.permute.xlu0 %9007
      %9009 = vrot.lane.b32.xlu0 %v8962, 1
      %v9010 = vpop.permute.xlu0 %9009
      %v9019 = vsel %vm7114, 0.0, %v8996
      %v9020 = vsel %vm7114, 0.0, %v8998
      %v9021 = vsel %vm7114, 0.0, %v9000
      %v9022 = vsel %vm7114, 0.0, %v9002
      %v9023 = vsel %vm7114, 0.0, %v9004
      %v9024 = vsel %vm7114, 0.0, %v9006
      %v9025 = vsel %vm7114, 0.0, %v9008
      %v9026 = vsel %vm7114, 0.0, %v9010
      %9027 = vrot.lane.b32.xlu0 %v8955, 127
      %v9028 = vpop.permute.xlu0 %9027
      %9029 = vrot.lane.b32.xlu0 %v8956, 127
      %v9030 = vpop.permute.xlu0 %9029
      %9031 = vrot.lane.b32.xlu0 %v8957, 127
      %v9032 = vpop.permute.xlu0 %9031
      %9033 = vrot.lane.b32.xlu0 %v8958, 127
      %v9034 = vpop.permute.xlu0 %9033
      %9035 = vrot.lane.b32.xlu0 %v8959, 127
      %v9036 = vpop.permute.xlu0 %9035
      %9037 = vrot.lane.b32.xlu0 %v8960, 127
      %v9038 = vpop.permute.xlu0 %9037
      %9039 = vrot.lane.b32.xlu0 %v8961, 127
      %v9040 = vpop.permute.xlu0 %9039
      %9041 = vrot.lane.b32.xlu0 %v8962, 127
      %v9042 = vpop.permute.xlu0 %9041
      %v9051 = vsel %vm8345, %v9028, 0.0
      %v9052 = vsel %vm8345, %v9030, 0.0
      %v9053 = vsel %vm8345, %v9032, 0.0
      %v9054 = vsel %vm8345, %v9034, 0.0
      %v9055 = vsel %vm8345, %v9036, 0.0
      %v9056 = vsel %vm8345, %v9038, 0.0
      %v9057 = vsel %vm8345, %v9040, 0.0
      %v9058 = vsel %vm8345, %v9042, 0.0
      %9060 = vset.pattern.permute.xlu0 0
      %9061 = vperm.xlu0 %9060, %v8979
      %v9062 = vpop.permute.xlu0 %9061
      %9065 = vset.pattern.permute.xlu0 0
      %9066 = vperm.xlu0 %9065, %v8980
      %v9067 = vpop.permute.xlu0 %9066
      %9070 = vset.pattern.permute.xlu0 0
      %9071 = vperm.xlu0 %9070, %v8981
      %v9072 = vpop.permute.xlu0 %9071
      %9075 = vset.pattern.permute.xlu0 0
      %9076 = vperm.xlu0 %9075, %v8982
      %v9077 = vpop.permute.xlu0 %9076
      %9080 = vset.pattern.permute.xlu0 0
      %9081 = vperm.xlu0 %9080, %v8983
      %v9082 = vpop.permute.xlu0 %9081
      %9085 = vset.pattern.permute.xlu0 0
      %9086 = vperm.xlu0 %9085, %v8984
      %v9087 = vpop.permute.xlu0 %9086
      %9090 = vset.pattern.permute.xlu0 0
      %9091 = vperm.xlu0 %9090, %v8985
      %v9092 = vpop.permute.xlu0 %9091
      %9095 = vset.pattern.permute.xlu0 0
      %9096 = vperm.xlu0 %9095, %v8986
      %v9097 = vpop.permute.xlu0 %9096
      %v9100 = vsel %vm7739, %v8964, 0
      %v9103 = vsel %vm7739, %v8966, 0
      %v9106 = vsel %vm7739, %v8968, 0
      %v9109 = vsel %vm7739, %v8970, 0
      %v9112 = vsel %vm7739, %v8972, 0
      %v9115 = vsel %vm7739, %v8974, 0
      %v9118 = vsel %vm7739, %v8976, 0
      %v9121 = vsel %vm7739, %v8978, 0
      %9123 = vmatpush.msra.mxu0 %v8962
      %9124 = vmatpush.msra.mxu0 %v8961
      %9125 = vmatpush.msra.mxu0 %v8960
      %9126 = vmatpush.msra.mxu0 %v8959
      %9127 = vmatpush.msra.mxu0 %v8958
      %9128 = vmatpush.msra.mxu0 %v8957
      %9129 = vmatpush.msra.mxu0 %v8956
      %9130 = vmatpush.msra.mxu0 %v8955
      %9131 = vmatpush.msra.mxu0 %v9026
      %9132 = vmatpush.msra.mxu0 %v9025
      %9133 = vmatpush.msra.mxu0 %v9024
      %9134 = vmatpush.msra.mxu0 %v9023
      %9135 = vmatpush.msra.mxu0 %v9022
      %9136 = vmatpush.msra.mxu0 %v9021
      %9137 = vmatpush.msra.mxu0 %v9020
      %9138 = vmatpush.msra.mxu0 %v9019
      %9139 = vmatmul.f32.gmra.mxu0 %v8963
      %v9140 = vpop.f32.mrf.mxu0
      %v9141 = vadd.f32 %v9062, %v9140
      %9142 = vmatmul.f32.gmra.mxu0 %v8965
      %v9143 = vpop.f32.mrf.mxu0
      %v9144 = vadd.f32 %v9067, %v9143
      %9145 = vmatmul.f32.gmra.mxu0 %v8967
      %v9146 = vpop.f32.mrf.mxu0
      %v9147 = vadd.f32 %v9072, %v9146
      %9148 = vmatmul.f32.gmra.mxu0 %v8969
      %v9149 = vpop.f32.mrf.mxu0
      %v9150 = vadd.f32 %v9077, %v9149
      %9151 = vmatmul.f32.gmra.mxu0 %v8971
      %v9152 = vpop.f32.mrf.mxu0
      %v9153 = vadd.f32 %v9082, %v9152
      %9154 = vmatmul.f32.gmra.mxu0 %v8973
      %v9155 = vpop.f32.mrf.mxu0
      %v9156 = vadd.f32 %v9087, %v9155
      %9157 = vmatmul.f32.gmra.mxu0 %v8975
      %v9158 = vpop.f32.mrf.mxu0
      %v9159 = vadd.f32 %v9092, %v9158
      %9160 = vmatmul.f32.gmra.mxu0 %v8977
      %v9161 = vpop.f32.mrf.mxu0
      %v9162 = vadd.f32 %v9097, %v9161
      %9163 = vdwg.mxu0
      %9164 = vmatpush.msra.mxu0 0.0
      %9165 = vmatpush.msra.mxu0 0.0
      %9166 = vmatpush.msra.mxu0 0.0
      %9167 = vmatpush.msra.mxu0 0.0
      %9168 = vmatpush.msra.mxu0 0.0
      %9169 = vmatpush.msra.mxu0 0.0
      %9170 = vmatpush.msra.mxu0 0.0
      %9171 = vmatpush.msra.mxu0 0.0
      %9172 = vmatpush.msra.mxu0 %v9058
      %9173 = vmatpush.msra.mxu0 %v9057
      %9174 = vmatpush.msra.mxu0 %v9056
      %9175 = vmatpush.msra.mxu0 %v9055
      %9176 = vmatpush.msra.mxu0 %v9054
      %9177 = vmatpush.msra.mxu0 %v9053
      %9178 = vmatpush.msra.mxu0 %v9052
      %9179 = vmatpush.msra.mxu0 %v9051
      %9180 = vmatmul.f32.gmra.mxu0 %v9100
      %v9181 = vpop.f32.mrf.mxu0
      %v9182 = vadd.f32 %v9141, %v9181
      %9183 = vmatmul.f32.gmra.mxu0 %v9103
      %v9184 = vpop.f32.mrf.mxu0
      %v9185 = vadd.f32 %v9144, %v9184
      %9186 = vmatmul.f32.gmra.mxu0 %v9106
      %v9187 = vpop.f32.mrf.mxu0
      %v9188 = vadd.f32 %v9147, %v9187
      %9189 = vmatmul.f32.gmra.mxu0 %v9109
      %v9190 = vpop.f32.mrf.mxu0
      %v9191 = vadd.f32 %v9150, %v9190
      %9192 = vmatmul.f32.gmra.mxu0 %v9112
      %v9193 = vpop.f32.mrf.mxu0
      %v9194 = vadd.f32 %v9153, %v9193
      %9195 = vmatmul.f32.gmra.mxu0 %v9115
      %v9196 = vpop.f32.mrf.mxu0
      %v9197 = vadd.f32 %v9156, %v9196
      %9198 = vmatmul.f32.gmra.mxu0 %v9118
      %v9199 = vpop.f32.mrf.mxu0
      %v9200 = vadd.f32 %v9159, %v9199
      %9201 = vmatmul.f32.gmra.mxu0 %v9121
      %v9202 = vpop.f32.mrf.mxu0
      %v9203 = vadd.f32 %v9162, %v9202
      %9204 = vdwg.mxu0
      %v9205 = vmax.f32 %v9182, 0.0
      %v9206 = vmax.f32 %v9185, 0.0
      %v9207 = vmax.f32 %v9188, 0.0
      %v9208 = vmax.f32 %v9191, 0.0
      %v9209 = vmax.f32 %v9194, 0.0
      %v9210 = vmax.f32 %v9197, 0.0
      %v9211 = vmax.f32 %v9200, 0.0
      %v9212 = vmax.f32 %v9203, 0.0
      %9221 = vrot.lane.b32.xlu0 %v9205, 127
      %v9222 = vpop.permute.xlu0 %9221
      %9223 = vrot.lane.b32.xlu0 %v9206, 127
      %v9224 = vpop.permute.xlu0 %9223
      %9225 = vrot.lane.b32.xlu0 %v9207, 127
      %v9226 = vpop.permute.xlu0 %9225
      %9227 = vrot.lane.b32.xlu0 %v9208, 127
      %v9228 = vpop.permute.xlu0 %9227
      %9229 = vrot.lane.b32.xlu0 %v9209, 127
      %v9230 = vpop.permute.xlu0 %9229
      %9231 = vrot.lane.b32.xlu0 %v9210, 127
      %v9232 = vpop.permute.xlu0 %9231
      %9233 = vrot.lane.b32.xlu0 %v9211, 127
      %v9234 = vpop.permute.xlu0 %9233
      %9235 = vrot.lane.b32.xlu0 %v9212, 127
      %v9236 = vpop.permute.xlu0 %9235
      %v9245 = vsel %vm8345, %v9222, 0.0
      %v9246 = vsel %vm8345, %v9224, 0.0
      %v9247 = vsel %vm8345, %v9226, 0.0
      %v9248 = vsel %vm8345, %v9228, 0.0
      %v9249 = vsel %vm8345, %v9230, 0.0
      %v9250 = vsel %vm8345, %v9232, 0.0
      %v9251 = vsel %vm8345, %v9234, 0.0
      %v9252 = vsel %vm8345, %v9236, 0.0
      %v9253 = vmax.f32 %v9205, %v9245
      %v9254 = vmax.f32 %v9206, %v9246
      %v9255 = vmax.f32 %v9207, %v9247
      %v9256 = vmax.f32 %v9208, %v9248
      %v9257 = vmax.f32 %v9209, %v9249
      %v9258 = vmax.f32 %v9210, %v9250
      %v9259 = vmax.f32 %v9211, %v9251
      %v9260 = vmax.f32 %v9212, %v9252
      %9261 = vrot.lane.b32.xlu0 %v9205, 126
      %v9262 = vpop.permute.xlu0 %9261
      %9263 = vrot.lane.b32.xlu0 %v9206, 126
      %v9264 = vpop.permute.xlu0 %9263
      %9265 = vrot.lane.b32.xlu0 %v9207, 126
      %v9266 = vpop.permute.xlu0 %9265
      %9267 = vrot.lane.b32.xlu0 %v9208, 126
      %v9268 = vpop.permute.xlu0 %9267
      %9269 = vrot.lane.b32.xlu0 %v9209, 126
      %v9270 = vpop.permute.xlu0 %9269
      %9271 = vrot.lane.b32.xlu0 %v9210, 126
      %v9272 = vpop.permute.xlu0 %9271
      %9273 = vrot.lane.b32.xlu0 %v9211, 126
      %v9274 = vpop.permute.xlu0 %9273
      %9275 = vrot.lane.b32.xlu0 %v9212, 126
      %v9276 = vpop.permute.xlu0 %9275
      %vm9285 = vcmask 15360
      %v9286 = vsel %vm9285, %v9262, 0.0
      %v9287 = vsel %vm9285, %v9264, 0.0
      %v9288 = vsel %vm9285, %v9266, 0.0
      %v9289 = vsel %vm9285, %v9268, 0.0
      %v9290 = vsel %vm9285, %v9270, 0.0
      %v9291 = vsel %vm9285, %v9272, 0.0
      %v9292 = vsel %vm9285, %v9274, 0.0
      %v9293 = vsel %vm9285, %v9276, 0.0
      %9294 = vrot.lane.b32.xlu0 %v9205, 125
      %v9295 = vpop.permute.xlu0 %9294
      %9296 = vrot.lane.b32.xlu0 %v9206, 125
      %v9297 = vpop.permute.xlu0 %9296
      %9298 = vrot.lane.b32.xlu0 %v9207, 125
      %v9299 = vpop.permute.xlu0 %9298
      %9300 = vrot.lane.b32.xlu0 %v9208, 125
      %v9301 = vpop.permute.xlu0 %9300
      %9302 = vrot.lane.b32.xlu0 %v9209, 125
      %v9303 = vpop.permute.xlu0 %9302
      %9304 = vrot.lane.b32.xlu0 %v9210, 125
      %v9305 = vpop.permute.xlu0 %9304
      %9306 = vrot.lane.b32.xlu0 %v9211, 125
      %v9307 = vpop.permute.xlu0 %9306
      %9308 = vrot.lane.b32.xlu0 %v9212, 125
      %v9309 = vpop.permute.xlu0 %9308
      %v9318 = vsel %vm7114, %v9295, 0.0
      %v9319 = vsel %vm7114, %v9297, 0.0
      %v9320 = vsel %vm7114, %v9299, 0.0
      %v9321 = vsel %vm7114, %v9301, 0.0
      %v9322 = vsel %vm7114, %v9303, 0.0
      %v9323 = vsel %vm7114, %v9305, 0.0
      %v9324 = vsel %vm7114, %v9307, 0.0
      %v9325 = vsel %vm7114, %v9309, 0.0
      %v9326 = vmax.f32 %v9286, %v9318
      %v9327 = vmax.f32 %v9287, %v9319
      %v9328 = vmax.f32 %v9288, %v9320
      %v9329 = vmax.f32 %v9289, %v9321
      %v9330 = vmax.f32 %v9290, %v9322
      %v9331 = vmax.f32 %v9291, %v9323
      %v9332 = vmax.f32 %v9292, %v9324
      %v9333 = vmax.f32 %v9293, %v9325
      %v9334 = vmax.f32 %v9253, %v9326
      %v9335 = vmax.f32 %v9254, %v9327
      %v9336 = vmax.f32 %v9255, %v9328
      %v9337 = vmax.f32 %v9256, %v9329
      %v9338 = vmax.f32 %v9257, %v9330
      %v9339 = vmax.f32 %v9258, %v9331
      %v9340 = vmax.f32 %v9259, %v9332
      %v9341 = vmax.f32 %v9260, %v9333
      %v9343 = vsel %vm1185, %v9334, 0
      %v9346 = vsel %vm1185, %v9335, 0
      %v9349 = vsel %vm1185, %v9336, 0
      %v9352 = vsel %vm1185, %v9337, 0
      %v9355 = vsel %vm1185, %v9338, 0
      %v9358 = vsel %vm1185, %v9339, 0
      %v9361 = vsel %vm1185, %v9340, 0
      %v9364 = vsel %vm1185, %v9341, 0
      %v9367 = vsel %vm1188, %v6530, 0
      %9369 = vmatpush.msra.mxu0 0.0
      %9370 = vmatpush.msra.mxu0 0.0
      %9371 = vmatpush.msra.mxu0 0.0
      %9372 = vmatpush.msra.mxu0 0.0
      %9373 = vmatpush.msra.mxu0 0.0
      %9374 = vmatpush.msra.mxu0 0.0
      %9375 = vmatpush.msra.mxu0 0.0
      %9376 = vmatpush.msra.mxu0 0.0
      %9377 = vmatpush.msra.mxu0 0.0
      %9378 = vmatpush.msra.mxu0 0.0
      %9379 = vmatpush.msra.mxu0 0.0
      %9380 = vmatpush.msra.mxu0 0.0
      %9381 = vmatpush.msra.mxu0 0.0
      %9382 = vmatpush.msra.mxu0 0.0
      %9383 = vmatpush.msra.mxu0 0.0
      %9384 = vmatpush.msra.mxu0 %v9367
      %9385 = vmatmul.f32.gmra.mxu0 %v9343
      %v9386 = vpop.f32.mrf.mxu0
      %v9387 = vadd.f32 0.0, %v9386
      %9388 = vmatmul.f32.gmra.mxu0 %v9346
      %v9389 = vpop.f32.mrf.mxu0
      %v9390 = vadd.f32 0.0, %v9389
      %9391 = vmatmul.f32.gmra.mxu0 %v9349
      %v9392 = vpop.f32.mrf.mxu0
      %v9393 = vadd.f32 0.0, %v9392
      %9394 = vmatmul.f32.gmra.mxu0 %v9352
      %v9395 = vpop.f32.mrf.mxu0
      %v9396 = vadd.f32 0.0, %v9395
      %9397 = vmatmul.f32.gmra.mxu0 %v9355
      %v9398 = vpop.f32.mrf.mxu0
      %v9399 = vadd.f32 0.0, %v9398
      %9400 = vmatmul.f32.gmra.mxu0 %v9358
      %v9401 = vpop.f32.mrf.mxu0
      %v9402 = vadd.f32 0.0, %v9401
      %9403 = vmatmul.f32.gmra.mxu0 %v9361
      %v9404 = vpop.f32.mrf.mxu0
      %v9405 = vadd.f32 0.0, %v9404
      %9406 = vmatmul.f32.gmra.mxu0 %v9364
      %v9407 = vpop.f32.mrf.mxu0
      %v9408 = vadd.f32 0.0, %v9407
      %9409 = vdwg.mxu0
      %v9410 = vadd.f32 %v9387, 0.0
      %v9411 = vadd.f32 %v9390, 0.0
      %v9412 = vadd.f32 %v9393, 0.0
      %v9413 = vadd.f32 %v9396, 0.0
      %v9414 = vadd.f32 %v9399, 0.0
      %v9415 = vadd.f32 %v9402, 0.0
      %v9416 = vadd.f32 %v9405, 0.0
      %v9417 = vadd.f32 %v9408, 0.0
      %v9418 = vld [vmem:[%s71] sm:$0xff]
      %v9419 = vld [vmem:[%s71 + $0x8] sm:$0x3]
      %v9420 = vld [vmem:[%s73] sm:$0xff]
      %v9421 = vld [vmem:[%s73 + $0x8] sm:$0x3]
      %v9423 = vsel %vm7739, %v9418, 0
      %v9426 = vsel %vm7739, %v9419, 0
      %9428 = vmatpush.msra.mxu0 0.0
      %9429 = vmatpush.msra.mxu0 0.0
      %9430 = vmatpush.msra.mxu0 0.0
      %9431 = vmatpush.msra.mxu0 0.0
      %9432 = vmatpush.msra.mxu0 0.0
      %9433 = vmatpush.msra.mxu0 0.0
      %9434 = vmatpush.msra.mxu0 0.0
      %9435 = vmatpush.msra.mxu0 0.0
      %9436 = vmatpush.msra.mxu0 %v9417
      %9437 = vmatpush.msra.mxu0 %v9416
      %9438 = vmatpush.msra.mxu0 %v9415
      %9439 = vmatpush.msra.mxu0 %v9414
      %9440 = vmatpush.msra.mxu0 %v9413
      %9441 = vmatpush.msra.mxu0 %v9412
      %9442 = vmatpush.msra.mxu0 %v9411
      %9443 = vmatpush.msra.mxu0 %v9410
      %9444 = vmatmul.f32.gmra.mxu0 %v9423
      %v9445 = vpop.f32.mrf.mxu0
      %v9446 = vadd.f32 %v9420, %v9445
      %9447 = vmatmul.f32.gmra.mxu0 %v9426
      %v9448 = vpop.f32.mrf.mxu0
      %v9449 = vadd.f32 %v9421, %v9448
      %9450 = vdwg.mxu0
      %v9451 = vsel %vm7114, %v9446, -inf
      %vm9452 = vcmask 1024
      %v9453 = vsel %vm9452, %v9449, -inf
      %v9454 = vmax.f32 %v9451, %v9453
      %v9455 = vrot.slane %v9454, 4
      %v9456 = vmax.f32 %v9454, %v9455
      %v9457 = vrot.slane %v9456, 2
      %v9458 = vmax.f32 %v9456, %v9457
      %v9459 = vrot.slane %v9458, 1
      %v9460 = vmax.f32 %v9458, %v9459
      %v9461 = vsub.f32 %v9446, %v9460
      %v9462 = vsub.f32 %v9449, %v9460
      %v9463 = vmul.f32 %v9461, 1.442695
      %v9464 = vpow.pop %v9463
      %v9465 = vmul.f32 %v9462, 1.442695
      %v9466 = vpow.pop %v9465
      %v9467 = vsel %vm7114, %v9464, 0.0
      %v9468 = vsel %vm9452, %v9466, 0.0
      %v9469 = vadd.f32 %v9467, %v9468
      %v9470 = vrot.slane %v9469, 4
      %v9471 = vadd.f32 %v9469, %v9470
      %v9472 = vrot.slane %v9471, 2
      %v9473 = vadd.f32 %v9471, %v9472
      %v9474 = vrot.slane %v9473, 1
      %v9475 = vadd.f32 %v9473, %v9474
      %v9476 = vlog2.pop %v9475
      %v9477 = vmul.f32 %v9476, 0.6931472
      %v9478 = vsub.f32 %v9461, %v9477
      %v9479 = vsub.f32 %v9462, %v9477
      %9480 = vst.msk [vmem:[%s1126] sm:$0xff] %vm7114, %v9478
      %9481 = vst.msk [vmem:[%s1126 + $0x8] sm:$0x3] %vm9452, %v9479
      %p9482 = scmp.lt.s32.totalorder %s86, 1
      %s9483 = scalar_select %p9482, %s86, 1
      %s9484 = smul.addr %s9483, 2
      %s9485 = smul.addr %s9484, 8
      %s9486 = scalar_lea.vmem %s75, %s9485
      // Predicated region
      $region169: #{_lambda_.1} parent=167 // pred_check
        %p9487 = pneg %p886
      $region170: #{_lambda_.1} parent=167 // pred_check_branch
        %9489 = sbr.rel (%p9487) target = $region172
      $region171: #{_lambda_.1} parent=167 // pred_region
        _
      $region172: #{_lambda_.1} parent=167 // pred_fallthru
        _
    $region168: #{_lambda_.1} parent=5 // pred_fallthru
      _
    %p9490 = scmp.le.s32.totalorder 2, %s81
    // Predicated region
    $region173: #{_lambda_.1} parent=5 // pred_check
      %p9491 = pneg %p9490
    $region174: #{_lambda_.1} parent=5 // pred_check_branch
      %9493 = sbr.rel (%p9491) target = $region176
    $region175: #{_lambda_.1} parent=5 // pred_region
      %s9494 = ssub.s32 %s81, 2
      // Predicated region
      $region177: #{_lambda_.1} parent=175 // pred_check
        %p9495 = pneg %p892
      $region178: #{_lambda_.1} parent=175 // pred_check_branch
        %9497 = sbr.rel (%p9495) target = $region180
      $region179: #{_lambda_.1} parent=175 // pred_region
        %p9498 = scmp.lt.s32.totalorder %s87, 1
        %s9499 = scalar_select %p9498, %s87, 1
        %s9500 = smul.addr %s9499, 2
        %s9501 = smul.addr %s9500, 8
        %s9502 = scalar_lea.vmem %s75, %s9501
      $region180: #{_lambda_.1} parent=175 // pred_fallthru
        _
    $region176: #{_lambda_.1} parent=5 // pred_fallthru
      _
  $region6: #{_lambda_.1} parent=0 // loop_footer
    %s85 = sadd.s32 1, %s81
  $region7: #{_lambda_.1} parent=0 // loop_footer_branch
    %80 = sbr.rel target = $region3
  $region8: #{_lambda_.1} parent=0 // loop_exit
    _

</llo_original>
